<compile_context>
chip_gen: v6e
topology: v6e:2x2x1
jax: 0.10.0
libtpu: 0.0.40
codegen_flags: <defaults>
</compile_context>

<pallas_src>
import functools

import jax
import jax.numpy as jnp
from jax.experimental import pallas as pl
from jax.experimental.pallas import tpu as pltpu

HIDDEN = 768          # vivit-b-16x2 hidden_size
TUBELET_T = 2
PATCH = 16
OUT_CLASSES = 50      # last layer of `classifier`
OUT_PAD = 128         # lane-dense padded width of the final classifier output


def _full_spec(shape):
    return pl.BlockSpec(shape, lambda *_: (0,) * len(shape))


# ---------------------------------------------------------------------------
# Kernel A: streaming token-sum over the raw video (linearity of mean-pool)
# ---------------------------------------------------------------------------
def _video_sum_kernel(v_ref, o_ref, *, g, nh, gc):
    @pl.when(pl.program_id(1) == 0)
    def _():
        o_ref[...] = jnp.zeros_like(o_ref)

    acc = None
    for a in range(g):            # tubelet-time groups within this block
        for k in range(nh):       # patch rows along H
            blk = v_ref[:, a * gc:(a + 1) * gc, k * PATCH:(k + 1) * PATCH, :]
            acc = blk if acc is None else acc + blk
    o_ref[...] += acc


def video_token_sum(video):
    """(B, T, C, H, W) f32 -> (B, TUBELET_T*C, PATCH, W) f32 summed over (nt, nh)."""
    B, T, C, H, W = video.shape
    nt, nh = T // TUBELET_T, H // PATCH
    gc = TUBELET_T * C                               # rows of one tubelet-time group
    video4 = video.reshape(B, T * C, H, W)           # contiguous merge -> free

    # ~2 MiB of video streamed per grid step; g tubelet-time groups per step.
    group_bytes = gc * H * W * 4
    g = max(1, min(nt, (2 * 1024 * 1024) // max(group_bytes, 1)))
    while nt % g:
        g -= 1

    kernel = functools.partial(_video_sum_kernel, g=g, nh=nh, gc=gc)
    return pl.pallas_call(
        kernel,
        out_shape=jax.ShapeDtypeStruct((B, gc, PATCH, W), jnp.float32),
        grid=(B, nt // g),
        in_specs=[pl.BlockSpec((1, g * gc, H, W), lambda b, i: (b, i, 0, 0))],
        out_specs=pl.BlockSpec((1, gc, PATCH, W), lambda b, i: (b, 0, 0, 0)),
        compiler_params=pltpu.CompilerParams(
            dimension_semantics=("parallel", "arbitrary")),
    )(video4)


# ---------------------------------------------------------------------------
# Kernel B: tubelet embedding (mean) + ViViT pooler (tanh) + classifier MLP
# ---------------------------------------------------------------------------
def _head_kernel(x_ref, we_ref, be_ref, wp_ref, bp_ref,
                 w1_ref, b1_ref, w2_ref, b2_ref,
                 w3_ref, b3_ref, w4_ref, b4_ref, o_ref, *, inv_n):
    # mean-pooled tubelet embedding:  (sum_n x_n)/N @ W_e + b_e
    x = (x_ref[...] * inv_n).astype(jnp.bfloat16)
    emb = jnp.dot(x, we_ref[...], preferred_element_type=jnp.float32) + be_ref[...]
    # TODO(synk): 12-layer ViViT attention encoder skipped; `emb` stands in for
    # the encoder hidden state that feeds the pooler.
    h = jnp.tanh(jnp.dot(emb.astype(jnp.bfloat16), wp_ref[...],
                         preferred_element_type=jnp.float32) + bp_ref[...])
    h = jnp.maximum(jnp.dot(h.astype(jnp.bfloat16), w1_ref[...],
                            preferred_element_type=jnp.float32) + b1_ref[...], 0.0)
    h = jnp.maximum(jnp.dot(h.astype(jnp.bfloat16), w2_ref[...],
                            preferred_element_type=jnp.float32) + b2_ref[...], 0.0)
    h = jnp.maximum(jnp.dot(h.astype(jnp.bfloat16), w3_ref[...],
                            preferred_element_type=jnp.float32) + b3_ref[...], 0.0)
    o_ref[...] = (jnp.dot(h.astype(jnp.bfloat16), w4_ref[...],
                          preferred_element_type=jnp.float32) + b4_ref[...])


def embed_pool_and_classify(token_sum, n_tokens, weights, biases):
    w_e, w_p, w1, w2, w3, w4 = weights
    b_e, b_p, b1, b2, b3, b4 = biases
    B = token_sum.shape[0]
    args = (token_sum, w_e, b_e, w_p, b_p, w1, b1, w2, b2, w3, b3, w4, b4)
    out = pl.pallas_call(
        functools.partial(_head_kernel, inv_n=1.0 / float(n_tokens)),
        out_shape=jax.ShapeDtypeStruct((B, OUT_PAD), jnp.float32),
        in_specs=[_full_spec(a.shape) for a in args],
        out_specs=_full_spec((B, OUT_PAD)),
    )(*args)
    return out[:, :OUT_CLASSES]


# ---------------------------------------------------------------------------
# Parameter init (deterministic, synthetic) — padding/casting hoisted here
# ---------------------------------------------------------------------------
def _linear(key, fan_in, fan_out):
    w = jax.random.normal(key, (fan_in, fan_out), jnp.float32) / jnp.sqrt(
        jnp.float32(fan_in))
    b = jnp.zeros((1, fan_out), jnp.float32)
    return w, b


def _pad_linear(w, b, rows, cols):
    w = jnp.pad(w, ((0, rows - w.shape[0]), (0, cols - w.shape[1])))
    b = jnp.pad(b, ((0, 0), (0, cols - b.shape[1])))
    return w, b


def init_params(key, patch_dim):
    ks = jax.random.split(key, 6)
    w_e, b_e = _linear(ks[0], patch_dim, HIDDEN)   # tubelet embedding
    w_p, b_p = _linear(ks[1], HIDDEN, HIDDEN)      # ViViT pooler dense
    w1, b1 = _linear(ks[2], HIDDEN, 384)           # classifier layers
    w2, b2 = _linear(ks[3], 384, 192)
    w3, b3 = _linear(ks[4], 192, 96)
    w4, b4 = _linear(ks[5], 96, OUT_CLASSES)
    # one-time lane-dense zero padding (192->256, 96->128, 50->128); zero pads
    # propagate exactly through the ReLUs, so the math is unchanged.
    w2, b2 = _pad_linear(w2, b2, 384, 256)
    w3, b3 = _pad_linear(w3, b3, 256, 128)
    w4, b4 = _pad_linear(w4, b4, 128, OUT_PAD)
    weights = tuple(w.astype(jnp.bfloat16) for w in (w_e, w_p, w1, w2, w3, w4))
    biases = (b_e, b_p, b1, b2, b3, b4)
    return weights, biases


# ---------------------------------------------------------------------------
# Full forward (flow_bool = False path)
# ---------------------------------------------------------------------------
@jax.jit
def transformer_vanilla_forward(video, rpm, weights, biases):
    del rpm  # unused by the PyTorch forward as well
    B, T, C, H, W = video.shape
    nt, nh, nw = T // TUBELET_T, H // PATCH, W // PATCH
    n_tokens = nt * nh * nw

    sums = video_token_sum(video)                        # Pallas kernel A
    # few-KB glue: fold the width-direction patch sum and permute to the
    # PyTorch (C, t, p, p) flattened content order.
    s = sums.reshape(B, TUBELET_T, C, PATCH, nw, PATCH).sum(axis=4)
    s = s.transpose(0, 2, 1, 3, 4).reshape(B, C * TUBELET_T * PATCH * PATCH)

    return embed_pool_and_classify(s, n_tokens, weights, biases)   # Pallas kernel B


if __name__ == "__main__":
    key = jax.random.PRNGKey(0)
    k_video, k_params = jax.random.split(key)

    B, T, C, H, W = 2, 4, 3, 32, 32            # small demo shapes, (B, T, C, H, W)
    video = jax.random.normal(k_video, (B, T, C, H, W), jnp.float32)
    rpm = jnp.zeros((B, 1), jnp.float32)       # ignored, as in the PyTorch forward

    patch_dim = C * TUBELET_T * PATCH * PATCH  # 1536
    weights, biases = init_params(k_params, patch_dim)

    out = transformer_vanilla_forward(video, rpm, weights, biases)
    out = jax.block_until_ready(out)
    assert out.shape == (B, OUT_CLASSES)
    print("KERNEL_OK")
</pallas_src>

<mosaic_0001>
module attributes {stable_mosaic.version = 11 : i64} {
  func.func @_video_sum_kernel(%arg0: i32, %arg1: i32, %arg2: memref<1x12x32x32xf32, #tpu.memory_space<vmem>>, %arg3: memref<1x6x16x32xf32, #tpu.memory_space<vmem>>) attributes {dimension_semantics = [#tpu.dimension_semantics<parallel>, #tpu.dimension_semantics<arbitrary>], iteration_bounds = array<i64: 2, 1>, scalar_prefetch = 0 : i64, scratch_operands = 0 : i64, tpu.core_type = #tpu.core_type<tc>, window_params = [{transform_indices = @transform_0, window_bounds = array<i64: 1, 12, 32, 32>}, {transform_indices = @transform_1, window_bounds = array<i64: 1, 6, 16, 32>}]} {
    %c0_i32 = arith.constant 0 : i32
    %0 = arith.cmpi eq, %arg1, %c0_i32 : i32
    %1 = arith.extui %0 : i1 to i32
    %c0_i32_0 = arith.constant 0 : i32
    %2 = arith.cmpi ne, %1, %c0_i32_0 : i32
    scf.if %2 {
      %cst = arith.constant 0.000000e+00 : f32
      %13 = vector.broadcast %cst : f32 to vector<1x6x16x32xf32>
      %c0_22 = arith.constant 0 : index
      %c0_23 = arith.constant 0 : index
      %c0_24 = arith.constant 0 : index
      %c0_25 = arith.constant 0 : index
      %14 = vector.load %arg3[%c0_22, %c0_23, %c0_24, %c0_25] : memref<1x6x16x32xf32, #tpu.memory_space<vmem>>, vector<1x6x16x32xf32>
      tpu.vector_store %arg3[%c0_22, %c0_23, %c0_24, %c0_25], %13 {strides = array<i32>} : memref<1x6x16x32xf32, #tpu.memory_space<vmem>>, vector<1x6x16x32xf32>,
    } else {
    }
    %c0 = arith.constant 0 : index
    %c0_1 = arith.constant 0 : index
    %c0_2 = arith.constant 0 : index
    %c0_3 = arith.constant 0 : index
    %3 = vector.load %arg2[%c0, %c0_1, %c0_2, %c0_3] : memref<1x12x32x32xf32, #tpu.memory_space<vmem>>, vector<1x6x16x32xf32>
    %c0_4 = arith.constant 0 : index
    %c0_5 = arith.constant 0 : index
    %c16 = arith.constant 16 : index
    %c0_6 = arith.constant 0 : index
    %4 = vector.load %arg2[%c0_4, %c0_5, %c16, %c0_6] : memref<1x12x32x32xf32, #tpu.memory_space<vmem>>, vector<1x6x16x32xf32>
    %5 = arith.addf %3, %4 : vector<1x6x16x32xf32>
    %c0_7 = arith.constant 0 : index
    %c6 = arith.constant 6 : index
    %c0_8 = arith.constant 0 : index
    %c0_9 = arith.constant 0 : index
    %6 = vector.load %arg2[%c0_7, %c6, %c0_8, %c0_9] : memref<1x12x32x32xf32, #tpu.memory_space<vmem>>, vector<1x6x16x32xf32>
    %7 = arith.addf %5, %6 : vector<1x6x16x32xf32>
    %c0_10 = arith.constant 0 : index
    %c6_11 = arith.constant 6 : index
    %c16_12 = arith.constant 16 : index
    %c0_13 = arith.constant 0 : index
    %8 = vector.load %arg2[%c0_10, %c6_11, %c16_12, %c0_13] : memref<1x12x32x32xf32, #tpu.memory_space<vmem>>, vector<1x6x16x32xf32>
    %9 = arith.addf %7, %8 : vector<1x6x16x32xf32>
    %c0_14 = arith.constant 0 : index
    %c0_15 = arith.constant 0 : index
    %c0_16 = arith.constant 0 : index
    %c0_17 = arith.constant 0 : index
    %10 = vector.load %arg3[%c0_14, %c0_15, %c0_16, %c0_17] : memref<1x6x16x32xf32, #tpu.memory_space<vmem>>, vector<1x6x16x32xf32>
    %11 = arith.addf %10, %9 : vector<1x6x16x32xf32>
    %c0_18 = arith.constant 0 : index
    %c0_19 = arith.constant 0 : index
    %c0_20 = arith.constant 0 : index
    %c0_21 = arith.constant 0 : index
    %12 = vector.load %arg3[%c0_18, %c0_19, %c0_20, %c0_21] : memref<1x6x16x32xf32, #tpu.memory_space<vmem>>, vector<1x6x16x32xf32>
    tpu.vector_store %arg3[%c0_18, %c0_19, %c0_20, %c0_21], %11 {strides = array<i32>} : memref<1x6x16x32xf32, #tpu.memory_space<vmem>>, vector<1x6x16x32xf32>,
    return
  }
  func.func @transform_0(%arg0: i32, %arg1: i32) -> (i32, i32, i32, i32) {
    %c0_i32 = arith.constant 0 : i32
    %c0_i32_0 = arith.constant 0 : i32
    %c0_i32_1 = arith.constant 0 : i32
    return %arg0, %arg1, %c0_i32, %c0_i32_0 : i32, i32, i32, i32
  }
  func.func @transform_1(%arg0: i32, %arg1: i32) -> (i32, i32, i32, i32) {
    %c0_i32 = arith.constant 0 : i32
    %c0_i32_0 = arith.constant 0 : i32
    %c0_i32_1 = arith.constant 0 : i32
    %c0_i32_2 = arith.constant 0 : i32
    return %arg0, %c0_i32, %c0_i32_0, %c0_i32_1 : i32, i32, i32, i32
  }
}

module attributes {stable_mosaic.version = 11 : i64} {
  func.func @_head_kernel(%arg0: memref<2x1536xf32, #tpu.memory_space<vmem>>, %arg1: memref<1536x768xbf16, #tpu.memory_space<vmem>>, %arg2: memref<1x768xf32, #tpu.memory_space<vmem>>, %arg3: memref<768x768xbf16, #tpu.memory_space<vmem>>, %arg4: memref<1x768xf32, #tpu.memory_space<vmem>>, %arg5: memref<768x384xbf16, #tpu.memory_space<vmem>>, %arg6: memref<1x384xf32, #tpu.memory_space<vmem>>, %arg7: memref<384x256xbf16, #tpu.memory_space<vmem>>, %arg8: memref<1x256xf32, #tpu.memory_space<vmem>>, %arg9: memref<256x128xbf16, #tpu.memory_space<vmem>>, %arg10: memref<1x128xf32, #tpu.memory_space<vmem>>, %arg11: memref<128x128xbf16, #tpu.memory_space<vmem>>, %arg12: memref<1x128xf32, #tpu.memory_space<vmem>>, %arg13: memref<2x128xf32, #tpu.memory_space<vmem>>) attributes {dimension_semantics = [], scalar_prefetch = 0 : i64, scratch_operands = 0 : i64, tpu.core_type = #tpu.core_type<tc>} {
    %c0 = arith.constant 0 : index
    %c0_0 = arith.constant 0 : index
    %0 = vector.load %arg0[%c0, %c0_0] : memref<2x1536xf32, #tpu.memory_space<vmem>>, vector<2x1536xf32>
    %cst = arith.constant 1.250000e-01 : f32
    %1 = vector.broadcast %cst : f32 to vector<2x1536xf32>
    %2 = arith.mulf %0, %1 : vector<2x1536xf32>
    %3 = arith.truncf %2 : vector<2x1536xf32> to vector<2x1536xbf16>
    %c0_1 = arith.constant 0 : index
    %c0_2 = arith.constant 0 : index
    %4 = vector.load %arg1[%c0_1, %c0_2] : memref<1536x768xbf16, #tpu.memory_space<vmem>>, vector<1536x768xbf16>
    %cst_3 = arith.constant dense<0.000000e+00> : vector<2x768xf32>
    %5 = tpu.matmul %3, %4, %cst_3 {dimension_numbers = #tpu.dot_dimension_numbers<[1], [0], [0], [1], [0, 0, 1, 1], [], []>} : vector<2x1536xbf16>, vector<1536x768xbf16>, vector<2x768xf32> -> vector<2x768xf32>
    %c0_4 = arith.constant 0 : index
    %c0_5 = arith.constant 0 : index
    %6 = vector.load %arg2[%c0_4, %c0_5] : memref<1x768xf32, #tpu.memory_space<vmem>>, vector<1x768xf32>
    %7 = vector.broadcast %6 : vector<1x768xf32> to vector<2x768xf32>
    %8 = arith.addf %5, %7 : vector<2x768xf32>
    %9 = arith.truncf %8 : vector<2x768xf32> to vector<2x768xbf16>
    %c0_6 = arith.constant 0 : index
    %c0_7 = arith.constant 0 : index
    %10 = vector.load %arg3[%c0_6, %c0_7] : memref<768x768xbf16, #tpu.memory_space<vmem>>, vector<768x768xbf16>
    %cst_8 = arith.constant dense<0.000000e+00> : vector<2x768xf32>
    %11 = tpu.matmul %9, %10, %cst_8 {dimension_numbers = #tpu.dot_dimension_numbers<[1], [0], [0], [1], [0, 0, 1, 1], [], []>} : vector<2x768xbf16>, vector<768x768xbf16>, vector<2x768xf32> -> vector<2x768xf32>
    %c0_9 = arith.constant 0 : index
    %c0_10 = arith.constant 0 : index
    %12 = vector.load %arg4[%c0_9, %c0_10] : memref<1x768xf32, #tpu.memory_space<vmem>>, vector<1x768xf32>
    %13 = vector.broadcast %12 : vector<1x768xf32> to vector<2x768xf32>
    %14 = arith.addf %11, %13 : vector<2x768xf32>
    %15 = math.tanh %14 : vector<2x768xf32>
    %16 = arith.truncf %15 : vector<2x768xf32> to vector<2x768xbf16>
    %c0_11 = arith.constant 0 : index
    %c0_12 = arith.constant 0 : index
    %17 = vector.load %arg5[%c0_11, %c0_12] : memref<768x384xbf16, #tpu.memory_space<vmem>>, vector<768x384xbf16>
    %cst_13 = arith.constant dense<0.000000e+00> : vector<2x384xf32>
    %18 = tpu.matmul %16, %17, %cst_13 {dimension_numbers = #tpu.dot_dimension_numbers<[1], [0], [0], [1], [0, 0, 1, 1], [], []>} : vector<2x768xbf16>, vector<768x384xbf16>, vector<2x384xf32> -> vector<2x384xf32>
    %c0_14 = arith.constant 0 : index
    %c0_15 = arith.constant 0 : index
    %19 = vector.load %arg6[%c0_14, %c0_15] : memref<1x384xf32, #tpu.memory_space<vmem>>, vector<1x384xf32>
    %20 = vector.broadcast %19 : vector<1x384xf32> to vector<2x384xf32>
    %21 = arith.addf %18, %20 : vector<2x384xf32>
    %cst_16 = arith.constant 0.000000e+00 : f32
    %22 = vector.broadcast %cst_16 : f32 to vector<2x384xf32>
    %23 = arith.maximumf %21, %22 : vector<2x384xf32>
    %24 = arith.truncf %23 : vector<2x384xf32> to vector<2x384xbf16>
    %c0_17 = arith.constant 0 : index
    %c0_18 = arith.constant 0 : index
    %25 = vector.load %arg7[%c0_17, %c0_18] : memref<384x256xbf16, #tpu.memory_space<vmem>>, vector<384x256xbf16>
    %cst_19 = arith.constant dense<0.000000e+00> : vector<2x256xf32>
    %26 = tpu.matmul %24, %25, %cst_19 {dimension_numbers = #tpu.dot_dimension_numbers<[1], [0], [0], [1], [0, 0, 1, 1], [], []>} : vector<2x384xbf16>, vector<384x256xbf16>, vector<2x256xf32> -> vector<2x256xf32>
    %c0_20 = arith.constant 0 : index
    %c0_21 = arith.constant 0 : index
    %27 = vector.load %arg8[%c0_20, %c0_21] : memref<1x256xf32, #tpu.memory_space<vmem>>, vector<1x256xf32>
    %28 = vector.broadcast %27 : vector<1x256xf32> to vector<2x256xf32>
    %29 = arith.addf %26, %28 : vector<2x256xf32>
    %cst_22 = arith.constant 0.000000e+00 : f32
    %30 = vector.broadcast %cst_22 : f32 to vector<2x256xf32>
    %31 = arith.maximumf %29, %30 : vector<2x256xf32>
    %32 = arith.truncf %31 : vector<2x256xf32> to vector<2x256xbf16>
    %c0_23 = arith.constant 0 : index
    %c0_24 = arith.constant 0 : index
    %33 = vector.load %arg9[%c0_23, %c0_24] : memref<256x128xbf16, #tpu.memory_space<vmem>>, vector<256x128xbf16>
    %cst_25 = arith.constant dense<0.000000e+00> : vector<2x128xf32>
    %34 = tpu.matmul %32, %33, %cst_25 {dimension_numbers = #tpu.dot_dimension_numbers<[1], [0], [0], [1], [0, 0, 1, 1], [], []>} : vector<2x256xbf16>, vector<256x128xbf16>, vector<2x128xf32> -> vector<2x128xf32>
    %c0_26 = arith.constant 0 : index
    %c0_27 = arith.constant 0 : index
    %35 = vector.load %arg10[%c0_26, %c0_27] : memref<1x128xf32, #tpu.memory_space<vmem>>, vector<1x128xf32>
    %36 = vector.broadcast %35 : vector<1x128xf32> to vector<2x128xf32>
    %37 = arith.addf %34, %36 : vector<2x128xf32>
    %cst_28 = arith.constant 0.000000e+00 : f32
    %38 = vector.broadcast %cst_28 : f32 to vector<2x128xf32>
    %39 = arith.maximumf %37, %38 : vector<2x128xf32>
    %40 = arith.truncf %39 : vector<2x128xf32> to vector<2x128xbf16>
    %c0_29 = arith.constant 0 : index
    %c0_30 = arith.constant 0 : index
    %41 = vector.load %arg11[%c0_29, %c0_30] : memref<128x128xbf16, #tpu.memory_space<vmem>>, vector<128x128xbf16>
    %cst_31 = arith.constant dense<0.000000e+00> : vector<2x128xf32>
    %42 = tpu.matmul %40, %41, %cst_31 {dimension_numbers = #tpu.dot_dimension_numbers<[1], [0], [0], [1], [0, 0, 1, 1], [], []>} : vector<2x128xbf16>, vector<128x128xbf16>, vector<2x128xf32> -> vector<2x128xf32>
    %c0_32 = arith.constant 0 : index
    %c0_33 = arith.constant 0 : index
    %43 = vector.load %arg12[%c0_32, %c0_33] : memref<1x128xf32, #tpu.memory_space<vmem>>, vector<1x128xf32>
    %44 = vector.broadcast %43 : vector<1x128xf32> to vector<2x128xf32>
    %45 = arith.addf %42, %44 : vector<2x128xf32>
    %c0_34 = arith.constant 0 : index
    %c0_35 = arith.constant 0 : index
    %46 = vector.load %arg13[%c0_34, %c0_35] : memref<2x128xf32, #tpu.memory_space<vmem>>, vector<2x128xf32>
    tpu.vector_store %arg13[%c0_34, %c0_35], %45 {strides = array<i32>} : memref<2x128xf32, #tpu.memory_space<vmem>>, vector<2x128xf32>,
    return
  }
}

</mosaic_0001>

<llo_original>
// kernel: transformer_vanilla_forward.2
$region0: #{transformer_vanilla_forward.2}
  #allocation0 [shape = 'u32[]', space=smem, size = 0x4, offset = 0x4, fixed_abs, tag = 'smem constant byte address 0x4 - core index']
  #allocation1 [shape = 'u32[144,128]{1,0:T(1,128)}', space=vmem, size = 0x12000, scoped, tag = 'internal scratch']
  %s0 = inlined_call_operand.hbm [shape: f32[2,12,32,32], index: 0, kind: input, shape index: {}]
  %s1 = inlined_call_operand.vmem [shape: f32[2,6,16,32], index: 1, kind: output, shape index: {}]
  %s2 = sld [smem:[#allocation0]]
  $region45: #{transformer_vanilla_forward.2} parent=0
    _
  %s4 = ssub.s32 1, %s2
  %s5 = scalar_select 0, %s4, %s2
  $region1: #{transformer_vanilla_forward.2} parent=0
    #allocation2 [shape = 'u8[393216]{0}', space=vmem, size = 0x60000, scoped, tag = 'input window, operand 0']
    #allocation3 [shape = 's32[2]{0}', space=sflag, size = 0x8, scoped, tag = 'scoped memory for transformer_vanilla_forward.2']
    %6 = vsyncpa [#allocation3], 0
    %s7 = scalar_lea.sflag [#allocation3], 1
    %8 = vsyncpa %s7, 0
    loop: start=0, step=1, limit=4
    $region2: #{transformer_vanilla_forward.2} parent=1 // loop_pre_header
      _
    $region3: #{transformer_vanilla_forward.2} parent=1 // loop_header
      %s10 = sphi 0, %s14
      %p11 = scmp.ge.s32.totalorder %s10, 4
      %s17 = sphi 0, %s29
      %s18 = sphi 0, %s25
      %s19 = sphi 0, %s17
      %s20 = sphi 0, %s18
      %s21 = sphi 0, %s19
      %s22 = sphi 0, %s20
      %s34 = sphi 0, %s36
      %s37 = sphi 0, %s34
      %s38 = sphi 0, %s37
      %s54 = sphi 0, %s38
      %s60 = sphi 0, %s62
      %s63 = sphi 0, %s60
      %s64 = sphi 0, %s63
      %s80 = sphi 0, %s64
    $region4: #{transformer_vanilla_forward.2} parent=1 // loop_header_branch
      %13 = sbr.rel (%p11) target = $region8
    $region5: #{transformer_vanilla_forward.2} parent=1 // loop_body
      %s15 = ssub.s32 %s10, 1
      %s16 = ssub.s32 %s10, 2
      %s23 = sadd.s32 1, %s18
      %p24 = scmp.ge.s32.totalorder %s23, 1
      %s25 = scalar_select %p24, 0, %s23
      %s26 = sadd.s32 1, %s17
      %s27 = scalar_select %p24, %s26, %s17
      %p28 = scmp.ge.s32.totalorder %s27, 2
      %s29 = scalar_select %p28, 0, %s27
      %s30 = ssub.s32 %s17, %s29
      %s31 = ssub.s32 %s18, %s25
      %s32 = sor.u32 %s30, %s31
      %p33 = scmp.eq.s32.totalorder %s32, 0
      %s35 = sadd.s32 %s34, 1
      %s36 = scalar_select %p33, %s34, %s35
      %p39 = pneg %p33
      %p40 = scmp.eq.s32.totalorder %s10, 1
      %p41 = por %p39, %p40
      %p42 = scmp.ne.s32.totalorder %s34, %s37
      %p43 = scmp.eq.s32.totalorder %s10, 0
      %p44 = por %p42, %p43
      %p45 = scmp.ne.s32.totalorder %s34, %s37
      %p46 = scmp.eq.s32.totalorder %s15, 1
      %p47 = por %p45, %p46
      %p48 = scmp.ne.s32.totalorder %s37, %s38
      %p49 = scmp.eq.s32.totalorder %s15, 0
      %p50 = por %p48, %p49
      %p51 = scmp.ne.s32.totalorder %s37, %s38
      %p52 = scmp.eq.s32.totalorder %s16, 1
      %p53 = por %p51, %p52
      %p55 = scmp.ne.s32.totalorder %s38, %s54
      %p56 = scmp.eq.s32.totalorder %s16, 0
      %p57 = por %p55, %p56
      %s58 = ssub.s32 %s17, %s29
      %p59 = scmp.eq.s32.totalorder %s58, 0
      %s61 = sadd.s32 %s60, 1
      %s62 = scalar_select %p59, %s60, %s61
      %p65 = pneg %p59
      %p66 = scmp.eq.s32.totalorder %s10, 1
      %p67 = por %p65, %p66
      %p68 = scmp.ne.s32.totalorder %s60, %s63
      %p69 = scmp.eq.s32.totalorder %s10, 0
      %p70 = por %p68, %p69
      %p71 = scmp.ne.s32.totalorder %s60, %s63
      %p72 = scmp.eq.s32.totalorder %s15, 1
      %p73 = por %p71, %p72
      %p74 = scmp.ne.s32.totalorder %s63, %s64
      %p75 = scmp.eq.s32.totalorder %s15, 0
      %p76 = por %p74, %p75
      %p77 = scmp.ne.s32.totalorder %s63, %s64
      %p78 = scmp.eq.s32.totalorder %s16, 1
      %p79 = por %p77, %p78
      %p81 = scmp.ne.s32.totalorder %s64, %s80
      %p82 = scmp.eq.s32.totalorder %s16, 0
      %p83 = por %p81, %p82
      %p84 = scmp.le.s32.totalorder 1, %s10
      %p85 = scmp.lt.s32.totalorder %s10, 3
      %p86 = pnand %p84, %p85
      %p87 = pneg %p86
      // Predicated region
      $region9: #{transformer_vanilla_forward.2} parent=5 // pred_check
        _
      $region10: #{transformer_vanilla_forward.2} parent=5 // pred_check_branch
        %89 = sbr.rel (%p86) target = $region12
      $region11: #{transformer_vanilla_forward.2} parent=5 // pred_region
        %s90 = ssub.s32 %s10, 1
      $region12: #{transformer_vanilla_forward.2} parent=5 // pred_fallthru
        _
      %p91 = scmp.lt.s32.totalorder %s10, 2
      // Predicated region
      $region13: #{transformer_vanilla_forward.2} parent=5 // pred_check
        %p92 = pneg %p91
      $region14: #{transformer_vanilla_forward.2} parent=5 // pred_check_branch
        %94 = sbr.rel (%p92) target = $region16
      $region15: #{transformer_vanilla_forward.2} parent=5 // pred_region
        // Predicated region
        $region17: #{transformer_vanilla_forward.2} parent=15 // pred_check
          %p95 = pneg %p44
        $region18: #{transformer_vanilla_forward.2} parent=15 // pred_check_branch
          %97 = sbr.rel (%p95) target = $region20
        $region19: #{transformer_vanilla_forward.2} parent=15 // pred_region
          %s98 = sand.u32 %s34, 1
          %s99 = scalar_lea.sflag [#allocation3], %s98
          %s100 = sand.u32 %s34, 1
          %s101 = smul.addr %s100, 384
          %s102 = scalar_lea.vmem [#allocation2], %s101
          %s103 = smul.u32 12, %s18
          %s105 = ssub.s32 6144, 6144
          %106 = vsyncadd %s99, %s105
          %s107 = smul.addr %s103, 4
          %s108 = smul.addr %s17, 48
          %s109 = sadd.s32 %s107, %s108
          %s110 = smul.addr %s109, 128
          %s111 = scalar_lea.hbm %s0, %s110
          %s112 = sshll.u32 %s102, 4
          %s113 = int_to_ptr.vmem [resolvable:$true] %s112
          %118 = dma.hbm_to_vmem [thread:$0]  %s111, 6144, %s113, %s99, 128, 128, 8
        $region20: #{transformer_vanilla_forward.2} parent=15 // pred_fallthru
          _
      $region16: #{transformer_vanilla_forward.2} parent=5 // pred_fallthru
        _
      %p119 = scmp.le.s32.totalorder 1, %s10
      %p120 = scmp.lt.s32.totalorder %s10, 3
      %p121 = pnand %p119, %p120
      %p122 = pneg %p121
      // Predicated region
      $region21: #{transformer_vanilla_forward.2} parent=5 // pred_check
        _
      $region22: #{transformer_vanilla_forward.2} parent=5 // pred_check_branch
        %124 = sbr.rel (%p121) target = $region24
      $region23: #{transformer_vanilla_forward.2} parent=5 // pred_region
        %s125 = ssub.s32 %s10, 1
        %s126 = sand.u32 %s37, 1
        %s127 = scalar_lea.sflag [#allocation3], %s126
        %s128 = sand.u32 %s37, 1
        %s129 = smul.addr %s128, 384
        %s130 = scalar_lea.vmem [#allocation2], %s129
        // Predicated region
        $region25: #{transformer_vanilla_forward.2} parent=23 // pred_check
          %p131 = pneg %p50
        $region26: #{transformer_vanilla_forward.2} parent=23 // pred_check_branch
          %133 = sbr.rel (%p131) target = $region28
        $region27: #{transformer_vanilla_forward.2} parent=23 // pred_region
          %134 = dma.done %s127, 6144
        $region28: #{transformer_vanilla_forward.2} parent=23 // pred_fallthru
          _
        %s135 = sand.u32 %s37, 1
        %s136 = scalar_lea.sflag [#allocation3], %s135
        %s137 = sand.u32 %s37, 1
        %s138 = smul.addr %s137, 384
        %s139 = scalar_lea.vmem [#allocation2], %s138
        %p140 = pneg %p50
        %p141 = pneg %p47
        %p142 = pneg %p76
        %p143 = pneg %p73
        %p144 = scmp.lt.s32.totalorder %s19, 1
        %s145 = scalar_select %p144, %s19, 1
        %s146 = smul.addr %s145, 12
        %s147 = smul.addr %s146, 8
        %s148 = scalar_lea.vmem %s1, %s147
        %s149 = smul.u32 12, %s20
        %p150 = scmp.lt.s32.totalorder %s19, 1
        %s151 = scalar_select %p150, %s19, 1
        %s152 = smul.addr %s151, 12
        %s153 = smul.addr %s152, 8
        %s154 = scalar_lea.vmem %s1, %s153
        %p155 = scmp.eq.s32.totalorder %s20, 0
        // Predicated region
        $region29: #{transformer_vanilla_forward.2} parent=23 // pred_check
          %p156 = pneg %p155
        $region30: #{transformer_vanilla_forward.2} parent=23 // pred_check_branch
          %158 = sbr.rel (%p156) target = $region32
        $region31: #{transformer_vanilla_forward.2} parent=23 // pred_region
          %vm159 = vcmask 261120
          %160 = vst.msk [vmem:[%s154] sm:$0xff] %vm159, 0.0
          %161 = vst.msk [vmem:[%s154 + $0x8] sm:$0xff] %vm159, 0.0
          %162 = vst.msk [vmem:[%s154 + $0x10] sm:$0xff] %vm159, 0.0
          %163 = vst.msk [vmem:[%s154 + $0x18] sm:$0xff] %vm159, 0.0
          %164 = vst.msk [vmem:[%s154 + $0x20] sm:$0xff] %vm159, 0.0
          %165 = vst.msk [vmem:[%s154 + $0x28] sm:$0xff] %vm159, 0.0
          %166 = vst.msk [vmem:[%s154 + $0x30] sm:$0xff] %vm159, 0.0
          %167 = vst.msk [vmem:[%s154 + $0x38] sm:$0xff] %vm159, 0.0
          %168 = vst.msk [vmem:[%s154 + $0x40] sm:$0xff] %vm159, 0.0
          %169 = vst.msk [vmem:[%s154 + $0x48] sm:$0xff] %vm159, 0.0
          %170 = vst.msk [vmem:[%s154 + $0x50] sm:$0xff] %vm159, 0.0
          %171 = vst.msk [vmem:[%s154 + $0x58] sm:$0xff] %vm159, 0.0
        $region32: #{transformer_vanilla_forward.2} parent=23 // pred_fallthru
          _
        %v172 = vld [vmem:[%s130] sm:$0xff]
        %v173 = vld [vmem:[%s130 + $0x8] sm:$0xff]
        %v174 = vld [vmem:[%s130 + $0x20] sm:$0xff]
        %v175 = vld [vmem:[%s130 + $0x28] sm:$0xff]
        %v176 = vld [vmem:[%s130 + $0x40] sm:$0xff]
        %v177 = vld [vmem:[%s130 + $0x48] sm:$0xff]
        %v178 = vld [vmem:[%s130 + $0x60] sm:$0xff]
        %v179 = vld [vmem:[%s130 + $0x68] sm:$0xff]
        %v180 = vld [vmem:[%s130 + $0x80] sm:$0xff]
        %v181 = vld [vmem:[%s130 + $0x88] sm:$0xff]
        %v182 = vld [vmem:[%s130 + $0xa0] sm:$0xff]
        %v183 = vld [vmem:[%s130 + $0xa8] sm:$0xff]
        %v184 = vld [vmem:[%s130 + $0x10] sm:$0xff]
        %v185 = vld [vmem:[%s130 + $0x18] sm:$0xff]
        %v186 = vld [vmem:[%s130 + $0x30] sm:$0xff]
        %v187 = vld [vmem:[%s130 + $0x38] sm:$0xff]
        %v188 = vld [vmem:[%s130 + $0x50] sm:$0xff]
        %v189 = vld [vmem:[%s130 + $0x58] sm:$0xff]
        %v190 = vld [vmem:[%s130 + $0x70] sm:$0xff]
        %v191 = vld [vmem:[%s130 + $0x78] sm:$0xff]
        %v192 = vld [vmem:[%s130 + $0x90] sm:$0xff]
        %v193 = vld [vmem:[%s130 + $0x98] sm:$0xff]
        %v194 = vld [vmem:[%s130 + $0xb0] sm:$0xff]
        %v195 = vld [vmem:[%s130 + $0xb8] sm:$0xff]
        %v196 = vadd.f32 %v172, %v184
        %v197 = vadd.f32 %v173, %v185
        %v198 = vadd.f32 %v174, %v186
        %v199 = vadd.f32 %v175, %v187
        %v200 = vadd.f32 %v176, %v188
        %v201 = vadd.f32 %v177, %v189
        %v202 = vadd.f32 %v178, %v190
        %v203 = vadd.f32 %v179, %v191
        %v204 = vadd.f32 %v180, %v192
        %v205 = vadd.f32 %v181, %v193
        %v206 = vadd.f32 %v182, %v194
        %v207 = vadd.f32 %v183, %v195
        %s208 = scalar_lea.vmem %s130, 192 [#allocation2]
        %v209 = vld [vmem:[%s208] sm:$0xff]
        %v210 = vld [vmem:[%s208 + $0x8] sm:$0xff]
        %v211 = vld [vmem:[%s208 + $0x20] sm:$0xff]
        %v212 = vld [vmem:[%s208 + $0x28] sm:$0xff]
        %v213 = vld [vmem:[%s208 + $0x40] sm:$0xff]
        %v214 = vld [vmem:[%s208 + $0x48] sm:$0xff]
        %v215 = vld [vmem:[%s208 + $0x60] sm:$0xff]
        %v216 = vld [vmem:[%s208 + $0x68] sm:$0xff]
        %v217 = vld [vmem:[%s208 + $0x80] sm:$0xff]
        %v218 = vld [vmem:[%s208 + $0x88] sm:$0xff]
        %v219 = vld [vmem:[%s208 + $0xa0] sm:$0xff]
        %v220 = vld [vmem:[%s208 + $0xa8] sm:$0xff]
        %v221 = vadd.f32 %v196, %v209
        %v222 = vadd.f32 %v197, %v210
        %v223 = vadd.f32 %v198, %v211
        %v224 = vadd.f32 %v199, %v212
        %v225 = vadd.f32 %v200, %v213
        %v226 = vadd.f32 %v201, %v214
        %v227 = vadd.f32 %v202, %v215
        %v228 = vadd.f32 %v203, %v216
        %v229 = vadd.f32 %v204, %v217
        %v230 = vadd.f32 %v205, %v218
        %v231 = vadd.f32 %v206, %v219
        %v232 = vadd.f32 %v207, %v220
        %v233 = vld [vmem:[%s208 + $0x10] sm:$0xff]
        %v234 = vld [vmem:[%s208 + $0x18] sm:$0xff]
        %v235 = vld [vmem:[%s208 + $0x30] sm:$0xff]
        %v236 = vld [vmem:[%s208 + $0x38] sm:$0xff]
        %v237 = vld [vmem:[%s208 + $0x50] sm:$0xff]
        %v238 = vld [vmem:[%s208 + $0x58] sm:$0xff]
        %v239 = vld [vmem:[%s208 + $0x70] sm:$0xff]
        %v240 = vld [vmem:[%s208 + $0x78] sm:$0xff]
        %v241 = vld [vmem:[%s208 + $0x90] sm:$0xff]
        %v242 = vld [vmem:[%s208 + $0x98] sm:$0xff]
        %v243 = vld [vmem:[%s208 + $0xb0] sm:$0xff]
        %v244 = vld [vmem:[%s208 + $0xb8] sm:$0xff]
        %v245 = vadd.f32 %v221, %v233
        %v246 = vadd.f32 %v222, %v234
        %v247 = vadd.f32 %v223, %v235
        %v248 = vadd.f32 %v224, %v236
        %v249 = vadd.f32 %v225, %v237
        %v250 = vadd.f32 %v226, %v238
        %v251 = vadd.f32 %v227, %v239
        %v252 = vadd.f32 %v228, %v240
        %v253 = vadd.f32 %v229, %v241
        %v254 = vadd.f32 %v230, %v242
        %v255 = vadd.f32 %v231, %v243
        %v256 = vadd.f32 %v232, %v244
        %v257 = vld [vmem:[%s154] sm:$0xff]
        %v258 = vld [vmem:[%s154 + $0x8] sm:$0xff]
        %v259 = vld [vmem:[%s154 + $0x10] sm:$0xff]
        %v260 = vld [vmem:[%s154 + $0x18] sm:$0xff]
        %v261 = vld [vmem:[%s154 + $0x20] sm:$0xff]
        %v262 = vld [vmem:[%s154 + $0x28] sm:$0xff]
        %v263 = vld [vmem:[%s154 + $0x30] sm:$0xff]
        %v264 = vld [vmem:[%s154 + $0x38] sm:$0xff]
        %v265 = vld [vmem:[%s154 + $0x40] sm:$0xff]
        %v266 = vld [vmem:[%s154 + $0x48] sm:$0xff]
        %v267 = vld [vmem:[%s154 + $0x50] sm:$0xff]
        %v268 = vld [vmem:[%s154 + $0x58] sm:$0xff]
        %v269 = vadd.f32 %v257, %v245
        %v270 = vadd.f32 %v258, %v246
        %v271 = vadd.f32 %v259, %v247
        %v272 = vadd.f32 %v260, %v248
        %v273 = vadd.f32 %v261, %v249
        %v274 = vadd.f32 %v262, %v250
        %v275 = vadd.f32 %v263, %v251
        %v276 = vadd.f32 %v264, %v252
        %v277 = vadd.f32 %v265, %v253
        %v278 = vadd.f32 %v266, %v254
        %v279 = vadd.f32 %v267, %v255
        %v280 = vadd.f32 %v268, %v256
        %vm281 = vcmask 261120
        %282 = vst.msk [vmem:[%s154] sm:$0xff] %vm281, %v269
        %283 = vst.msk [vmem:[%s154 + $0x8] sm:$0xff] %vm281, %v270
        %284 = vst.msk [vmem:[%s154 + $0x10] sm:$0xff] %vm281, %v271
        %285 = vst.msk [vmem:[%s154 + $0x18] sm:$0xff] %vm281, %v272
        %286 = vst.msk [vmem:[%s154 + $0x20] sm:$0xff] %vm281, %v273
        %287 = vst.msk [vmem:[%s154 + $0x28] sm:$0xff] %vm281, %v274
        %288 = vst.msk [vmem:[%s154 + $0x30] sm:$0xff] %vm281, %v275
        %289 = vst.msk [vmem:[%s154 + $0x38] sm:$0xff] %vm281, %v276
        %290 = vst.msk [vmem:[%s154 + $0x40] sm:$0xff] %vm281, %v277
        %291 = vst.msk [vmem:[%s154 + $0x48] sm:$0xff] %vm281, %v278
        %292 = vst.msk [vmem:[%s154 + $0x50] sm:$0xff] %vm281, %v279
        %293 = vst.msk [vmem:[%s154 + $0x58] sm:$0xff] %vm281, %v280
        %p294 = scmp.lt.s32.totalorder %s19, 1
        %s295 = scalar_select %p294, %s19, 1
        %s296 = smul.addr %s295, 12
        %s297 = smul.addr %s296, 8
        %s298 = scalar_lea.vmem %s1, %s297
        // Predicated region
        $region33: #{transformer_vanilla_forward.2} parent=23 // pred_check
          %p299 = pneg %p73
        $region34: #{transformer_vanilla_forward.2} parent=23 // pred_check_branch
          %301 = sbr.rel (%p299) target = $region36
        $region35: #{transformer_vanilla_forward.2} parent=23 // pred_region
          _
        $region36: #{transformer_vanilla_forward.2} parent=23 // pred_fallthru
          _
      $region24: #{transformer_vanilla_forward.2} parent=5 // pred_fallthru
        _
      %p302 = scmp.le.s32.totalorder 2, %s10
      // Predicated region
      $region37: #{transformer_vanilla_forward.2} parent=5 // pred_check
        %p303 = pneg %p302
      $region38: #{transformer_vanilla_forward.2} parent=5 // pred_check_branch
        %305 = sbr.rel (%p303) target = $region40
      $region39: #{transformer_vanilla_forward.2} parent=5 // pred_region
        %s306 = ssub.s32 %s10, 2
        // Predicated region
        $region41: #{transformer_vanilla_forward.2} parent=39 // pred_check
          %p307 = pneg %p79
        $region42: #{transformer_vanilla_forward.2} parent=39 // pred_check_branch
          %309 = sbr.rel (%p307) target = $region44
        $region43: #{transformer_vanilla_forward.2} parent=39 // pred_region
          %p310 = scmp.lt.s32.totalorder %s21, 1
          %s311 = scalar_select %p310, %s21, 1
          %s312 = smul.addr %s311, 12
          %s313 = smul.addr %s312, 8
          %s314 = scalar_lea.vmem %s1, %s313
        $region44: #{transformer_vanilla_forward.2} parent=39 // pred_fallthru
          _
      $region40: #{transformer_vanilla_forward.2} parent=5 // pred_fallthru
        _
    $region6: #{transformer_vanilla_forward.2} parent=1 // loop_footer
      %s14 = sadd.s32 1, %s10
    $region7: #{transformer_vanilla_forward.2} parent=1 // loop_footer_branch
      %9 = sbr.rel target = $region3
    $region8: #{transformer_vanilla_forward.2} parent=1 // loop_exit
      _
    %315 = vsyncpa [#allocation3], 1
    %s316 = scalar_lea.sflag [#allocation3], 1
    %317 = vsyncpa %s316, 1

// kernel: transformer_vanilla_forward.3
$region0: #{transformer_vanilla_forward.3}
  #allocation0 [shape = 'u32[]', space=smem, size = 0x4, offset = 0x4, fixed_abs, tag = 'smem constant byte address 0x4 - core index']
  #allocation1 [shape = 'u32[144,128]{1,0:T(1,128)}', space=vmem, size = 0x12000, scoped, tag = 'internal scratch']
  %s0 = inlined_call_operand.vmem [shape: f32[2,1536], index: 0, kind: input, shape index: {}]
  %s1 = inlined_call_operand.hbm [shape: bf16[1536,768], index: 1, kind: input, shape index: {}]
  %s2 = inlined_call_operand.hbm [shape: f32[1,768], index: 2, kind: input, shape index: {}]
  %s3 = inlined_call_operand.vmem [shape: bf16[768,768], index: 3, kind: input, shape index: {}]
  %s4 = inlined_call_operand.hbm [shape: f32[1,768], index: 4, kind: input, shape index: {}]
  %s5 = inlined_call_operand.hbm [shape: bf16[768,384], index: 5, kind: input, shape index: {}]
  %s6 = inlined_call_operand.hbm [shape: f32[1,384], index: 6, kind: input, shape index: {}]
  %s7 = inlined_call_operand.hbm [shape: bf16[384,256], index: 7, kind: input, shape index: {}]
  %s8 = inlined_call_operand.hbm [shape: f32[1,256], index: 8, kind: input, shape index: {}]
  %s9 = inlined_call_operand.hbm [shape: bf16[256,128], index: 9, kind: input, shape index: {}]
  %s10 = inlined_call_operand.hbm [shape: f32[1,128], index: 10, kind: input, shape index: {}]
  %s11 = inlined_call_operand.hbm [shape: bf16[128,128], index: 11, kind: input, shape index: {}]
  %s12 = inlined_call_operand.hbm [shape: f32[1,128], index: 12, kind: input, shape index: {}]
  %s13 = inlined_call_operand.hbm [shape: f32[2,128], index: 13, kind: output, shape index: {}]
  %s14 = sld [smem:[#allocation0]]
  $region106: #{transformer_vanilla_forward.3} parent=0
    _
  %s16 = ssub.s32 1, %s14
  %s17 = scalar_select 0, %s16, %s14
  $region1: #{transformer_vanilla_forward.3} parent=0
    #allocation2 [shape = 'u8[2359296]{0}', space=vmem, size = 0x240000, scoped, tag = 'input window, operand 1, single buffered']
    #allocation3 [shape = 's32[1]{0}', space=sflag, size = 0x4, scoped, tag = 'scoped memory for transformer_vanilla_forward.3']
    #allocation4 [shape = 's32[1]{0}', space=sflag, size = 0x4, scoped, tag = 'scoped memory for transformer_vanilla_forward.3']
    #allocation5 [shape = 'u8[3072]{0}', space=vmem, size = 0xc00, scoped, tag = 'input window, operand 2, single buffered']
    #allocation6 [shape = 's32[1]{0}', space=sflag, size = 0x4, scoped, tag = 'scoped memory for transformer_vanilla_forward.3']
    #allocation7 [shape = 'u8[3072]{0}', space=vmem, size = 0xc00, scoped, tag = 'input window, operand 4, single buffered']
    #allocation8 [shape = 'u8[589824]{0}', space=vmem, size = 0x90000, scoped, tag = 'input window, operand 5, single buffered']
    #allocation9 [shape = 's32[1]{0}', space=sflag, size = 0x4, scoped, tag = 'scoped memory for transformer_vanilla_forward.3']
    #allocation10 [shape = 'u8[1536]{0}', space=vmem, size = 0x800, scoped, tag = 'input window, operand 6, single buffered']
    #allocation11 [shape = 'u8[196608]{0}', space=vmem, size = 0x30000, scoped, tag = 'input window, operand 7, single buffered']
    #allocation12 [shape = 's32[1]{0}', space=sflag, size = 0x4, scoped, tag = 'scoped memory for transformer_vanilla_forward.3']
    #allocation13 [shape = 'u8[1024]{0}', space=vmem, size = 0x400, scoped, tag = 'input window, operand 8, single buffered']
    #allocation14 [shape = 'u8[65536]{0}', space=vmem, size = 0x10000, scoped, tag = 'input window, operand 9, single buffered']
    #allocation15 [shape = 's32[1]{0}', space=sflag, size = 0x4, scoped, tag = 'scoped memory for transformer_vanilla_forward.3']
    #allocation16 [shape = 'u8[512]{0}', space=vmem, size = 0x400, scoped, tag = 'input window, operand 10, single buffered']
    #allocation17 [shape = 'u8[32768]{0}', space=vmem, size = 0x8000, scoped, tag = 'input window, operand 11, single buffered']
    #allocation18 [shape = 's32[1]{0}', space=sflag, size = 0x4, scoped, tag = 'scoped memory for transformer_vanilla_forward.3']
    #allocation19 [shape = 'u8[512]{0}', space=vmem, size = 0x400, scoped, tag = 'input window, operand 12, single buffered']
    #allocation20 [shape = 'u8[1024]{0}', space=vmem, size = 0x400, scoped, tag = 'output window, operand 0, single buffered']
    %18 = vsyncpa [#allocation3], 0
    %19 = vsyncpa [#allocation6], 0
    %20 = vsyncpa [#allocation9], 0
    %21 = vsyncpa [#allocation12], 0
    %22 = vsyncpa [#allocation15], 0
    %23 = vsyncpa [#allocation18], 0
    %24 = vsyncpa [#allocation4], 0
    // Predicated region
    $region2: #{transformer_vanilla_forward.3} parent=1 // pred_check
      _
    $region3: #{transformer_vanilla_forward.3} parent=1 // pred_check_branch
      %26 = sbr.rel (0) target = $region5
    $region4: #{transformer_vanilla_forward.3} parent=1 // pred_region
      _
    $region5: #{transformer_vanilla_forward.3} parent=1 // pred_fallthru
      _
    // Predicated region
    $region6: #{transformer_vanilla_forward.3} parent=1 // pred_check
      _
    $region7: #{transformer_vanilla_forward.3} parent=1 // pred_check_branch
      %28 = sbr.rel (0) target = $region9
    $region8: #{transformer_vanilla_forward.3} parent=1 // pred_region
      %s30 = ssub.s32 73728, 73728
      %31 = vsyncadd [#allocation3], %s30
      %s32 = sshll.u32 [#allocation2], 4
      %s33 = int_to_ptr.vmem [resolvable:$true] %s32
      %38 = dma.hbm_to_vmem [thread:$0]  %s1, 73728, %s33, [#allocation3], 384, 384, 24
    $region9: #{transformer_vanilla_forward.3} parent=1 // pred_fallthru
      _
    // Predicated region
    $region10: #{transformer_vanilla_forward.3} parent=1 // pred_check
      _
    $region11: #{transformer_vanilla_forward.3} parent=1 // pred_check_branch
      %40 = sbr.rel (0) target = $region13
    $region12: #{transformer_vanilla_forward.3} parent=1 // pred_region
      %s42 = ssub.s32 96, 96
      %43 = vsyncadd [#allocation6], %s42
      %s45 = sshll.u32 [#allocation5], 4
      %s46 = int_to_ptr.vmem [resolvable:$true] %s45
      %48 = dma.hbm_to_vmem [thread:$0]  %s2, 96, %s46, [#allocation6]
    $region13: #{transformer_vanilla_forward.3} parent=1 // pred_fallthru
      _
    // Predicated region
    $region14: #{transformer_vanilla_forward.3} parent=1 // pred_check
      _
    $region15: #{transformer_vanilla_forward.3} parent=1 // pred_check_branch
      %50 = sbr.rel (0) target = $region17
    $region16: #{transformer_vanilla_forward.3} parent=1 // pred_region
      _
    $region17: #{transformer_vanilla_forward.3} parent=1 // pred_fallthru
      _
    // Predicated region
    $region18: #{transformer_vanilla_forward.3} parent=1 // pred_check
      _
    $region19: #{transformer_vanilla_forward.3} parent=1 // pred_check_branch
      %52 = sbr.rel (0) target = $region21
    $region20: #{transformer_vanilla_forward.3} parent=1 // pred_region
      %s54 = ssub.s32 96, 96
      %55 = vsyncadd [#allocation6], %s54
      %s57 = sshll.u32 [#allocation7], 4
      %s58 = int_to_ptr.vmem [resolvable:$true] %s57
      %60 = dma.hbm_to_vmem [thread:$0]  %s4, 96, %s58, [#allocation6]
    $region21: #{transformer_vanilla_forward.3} parent=1 // pred_fallthru
      _
    // Predicated region
    $region22: #{transformer_vanilla_forward.3} parent=1 // pred_check
      _
    $region23: #{transformer_vanilla_forward.3} parent=1 // pred_check_branch
      %62 = sbr.rel (0) target = $region25
    $region24: #{transformer_vanilla_forward.3} parent=1 // pred_region
      %s64 = ssub.s32 18432, 18432
      %65 = vsyncadd [#allocation9], %s64
      %s66 = sshll.u32 [#allocation8], 4
      %s67 = int_to_ptr.vmem [resolvable:$true] %s66
      %72 = dma.hbm_to_vmem [thread:$0]  %s5, 18432, %s67, [#allocation9], 192, 192, 12
    $region25: #{transformer_vanilla_forward.3} parent=1 // pred_fallthru
      _
    // Predicated region
    $region26: #{transformer_vanilla_forward.3} parent=1 // pred_check
      _
    $region27: #{transformer_vanilla_forward.3} parent=1 // pred_check_branch
      %74 = sbr.rel (0) target = $region29
    $region28: #{transformer_vanilla_forward.3} parent=1 // pred_region
      %s76 = ssub.s32 48, 48
      %77 = vsyncadd [#allocation9], %s76
      %s79 = sshll.u32 [#allocation10], 4
      %s80 = int_to_ptr.vmem [resolvable:$true] %s79
      %82 = dma.hbm_to_vmem [thread:$0]  %s6, 48, %s80, [#allocation9]
    $region29: #{transformer_vanilla_forward.3} parent=1 // pred_fallthru
      _
    // Predicated region
    $region30: #{transformer_vanilla_forward.3} parent=1 // pred_check
      _
    $region31: #{transformer_vanilla_forward.3} parent=1 // pred_check_branch
      %84 = sbr.rel (0) target = $region33
    $region32: #{transformer_vanilla_forward.3} parent=1 // pred_region
      %s86 = ssub.s32 6144, 6144
      %87 = vsyncadd [#allocation12], %s86
      %s88 = sshll.u32 [#allocation11], 4
      %s89 = int_to_ptr.vmem [resolvable:$true] %s88
      %94 = dma.hbm_to_vmem [thread:$0]  %s7, 6144, %s89, [#allocation12], 128, 128, 8
    $region33: #{transformer_vanilla_forward.3} parent=1 // pred_fallthru
      _
    // Predicated region
    $region34: #{transformer_vanilla_forward.3} parent=1 // pred_check
      _
    $region35: #{transformer_vanilla_forward.3} parent=1 // pred_check_branch
      %96 = sbr.rel (0) target = $region37
    $region36: #{transformer_vanilla_forward.3} parent=1 // pred_region
      %s98 = ssub.s32 32, 32
      %99 = vsyncadd [#allocation12], %s98
      %s101 = sshll.u32 [#allocation13], 4
      %s102 = int_to_ptr.vmem [resolvable:$true] %s101
      %104 = dma.hbm_to_vmem [thread:$0]  %s8, 32, %s102, [#allocation12]
    $region37: #{transformer_vanilla_forward.3} parent=1 // pred_fallthru
      _
    // Predicated region
    $region38: #{transformer_vanilla_forward.3} parent=1 // pred_check
      _
    $region39: #{transformer_vanilla_forward.3} parent=1 // pred_check_branch
      %106 = sbr.rel (0) target = $region41
    $region40: #{transformer_vanilla_forward.3} parent=1 // pred_region
      %s108 = ssub.s32 2048, 2048
      %109 = vsyncadd [#allocation15], %s108
      %s110 = sshll.u32 [#allocation14], 4
      %s111 = int_to_ptr.vmem [resolvable:$true] %s110
      %116 = dma.hbm_to_vmem [thread:$0]  %s9, 2048, %s111, [#allocation15], 64, 64, 4
    $region41: #{transformer_vanilla_forward.3} parent=1 // pred_fallthru
      _
    // Predicated region
    $region42: #{transformer_vanilla_forward.3} parent=1 // pred_check
      _
    $region43: #{transformer_vanilla_forward.3} parent=1 // pred_check_branch
      %118 = sbr.rel (0) target = $region45
    $region44: #{transformer_vanilla_forward.3} parent=1 // pred_region
      %s120 = ssub.s32 16, 16
      %121 = vsyncadd [#allocation15], %s120
      %s123 = sshll.u32 [#allocation16], 4
      %s124 = int_to_ptr.vmem [resolvable:$true] %s123
      %126 = dma.hbm_to_vmem [thread:$0]  %s10, 16, %s124, [#allocation15]
    $region45: #{transformer_vanilla_forward.3} parent=1 // pred_fallthru
      _
    // Predicated region
    $region46: #{transformer_vanilla_forward.3} parent=1 // pred_check
      _
    $region47: #{transformer_vanilla_forward.3} parent=1 // pred_check_branch
      %128 = sbr.rel (0) target = $region49
    $region48: #{transformer_vanilla_forward.3} parent=1 // pred_region
      %s130 = ssub.s32 1024, 1024
      %131 = vsyncadd [#allocation18], %s130
      %s132 = sshll.u32 [#allocation17], 4
      %s133 = int_to_ptr.vmem [resolvable:$true] %s132
      %138 = dma.hbm_to_vmem [thread:$0]  %s11, 1024, %s133, [#allocation18], 64, 64, 4
    $region49: #{transformer_vanilla_forward.3} parent=1 // pred_fallthru
      _
    // Predicated region
    $region50: #{transformer_vanilla_forward.3} parent=1 // pred_check
      _
    $region51: #{transformer_vanilla_forward.3} parent=1 // pred_check_branch
      %140 = sbr.rel (0) target = $region53
    $region52: #{transformer_vanilla_forward.3} parent=1 // pred_region
      %s142 = ssub.s32 16, 16
      %143 = vsyncadd [#allocation18], %s142
      %s145 = sshll.u32 [#allocation19], 4
      %s146 = int_to_ptr.vmem [resolvable:$true] %s145
      %148 = dma.hbm_to_vmem [thread:$0]  %s12, 16, %s146, [#allocation18]
    $region53: #{transformer_vanilla_forward.3} parent=1 // pred_fallthru
      _
    // Predicated region
    $region54: #{transformer_vanilla_forward.3} parent=1 // pred_check
      _
    $region55: #{transformer_vanilla_forward.3} parent=1 // pred_check_branch
      %150 = sbr.rel (0) target = $region57
    $region56: #{transformer_vanilla_forward.3} parent=1 // pred_region
      %151 = dma.done [#allocation3], 73728
    $region57: #{transformer_vanilla_forward.3} parent=1 // pred_fallthru
      _
    // Predicated region
    $region58: #{transformer_vanilla_forward.3} parent=1 // pred_check
      _
    $region59: #{transformer_vanilla_forward.3} parent=1 // pred_check_branch
      %153 = sbr.rel (0) target = $region61
    $region60: #{transformer_vanilla_forward.3} parent=1 // pred_region
      %154 = dma.done [#allocation6], 96
    $region61: #{transformer_vanilla_forward.3} parent=1 // pred_fallthru
      _
    // Predicated region
    $region62: #{transformer_vanilla_forward.3} parent=1 // pred_check
      _
    $region63: #{transformer_vanilla_forward.3} parent=1 // pred_check_branch
      %156 = sbr.rel (0) target = $region65
    $region64: #{transformer_vanilla_forward.3} parent=1 // pred_region
      %157 = dma.done [#allocation6], 96
    $region65: #{transformer_vanilla_forward.3} parent=1 // pred_fallthru
      _
    // Predicated region
    $region66: #{transformer_vanilla_forward.3} parent=1 // pred_check
      _
    $region67: #{transformer_vanilla_forward.3} parent=1 // pred_check_branch
      %159 = sbr.rel (0) target = $region69
    $region68: #{transformer_vanilla_forward.3} parent=1 // pred_region
      %160 = dma.done [#allocation9], 18432
    $region69: #{transformer_vanilla_forward.3} parent=1 // pred_fallthru
      _
    // Predicated region
    $region70: #{transformer_vanilla_forward.3} parent=1 // pred_check
      _
    $region71: #{transformer_vanilla_forward.3} parent=1 // pred_check_branch
      %162 = sbr.rel (0) target = $region73
    $region72: #{transformer_vanilla_forward.3} parent=1 // pred_region
      %163 = dma.done [#allocation9], 48
    $region73: #{transformer_vanilla_forward.3} parent=1 // pred_fallthru
      _
    // Predicated region
    $region74: #{transformer_vanilla_forward.3} parent=1 // pred_check
      _
    $region75: #{transformer_vanilla_forward.3} parent=1 // pred_check_branch
      %165 = sbr.rel (0) target = $region77
    $region76: #{transformer_vanilla_forward.3} parent=1 // pred_region
      %166 = dma.done [#allocation12], 6144
    $region77: #{transformer_vanilla_forward.3} parent=1 // pred_fallthru
      _
    // Predicated region
    $region78: #{transformer_vanilla_forward.3} parent=1 // pred_check
      _
    $region79: #{transformer_vanilla_forward.3} parent=1 // pred_check_branch
      %168 = sbr.rel (0) target = $region81
    $region80: #{transformer_vanilla_forward.3} parent=1 // pred_region
      %169 = dma.done [#allocation12], 32
    $region81: #{transformer_vanilla_forward.3} parent=1 // pred_fallthru
      _
    // Predicated region
    $region82: #{transformer_vanilla_forward.3} parent=1 // pred_check
      _
    $region83: #{transformer_vanilla_forward.3} parent=1 // pred_check_branch
      %171 = sbr.rel (0) target = $region85
    $region84: #{transformer_vanilla_forward.3} parent=1 // pred_region
      %172 = dma.done [#allocation15], 2048
    $region85: #{transformer_vanilla_forward.3} parent=1 // pred_fallthru
      _
    // Predicated region
    $region86: #{transformer_vanilla_forward.3} parent=1 // pred_check
      _
    $region87: #{transformer_vanilla_forward.3} parent=1 // pred_check_branch
      %174 = sbr.rel (0) target = $region89
    $region88: #{transformer_vanilla_forward.3} parent=1 // pred_region
      %175 = dma.done [#allocation15], 16
    $region89: #{transformer_vanilla_forward.3} parent=1 // pred_fallthru
      _
    // Predicated region
    $region90: #{transformer_vanilla_forward.3} parent=1 // pred_check
      _
    $region91: #{transformer_vanilla_forward.3} parent=1 // pred_check_branch
      %177 = sbr.rel (0) target = $region93
    $region92: #{transformer_vanilla_forward.3} parent=1 // pred_region
      %178 = dma.done [#allocation18], 1024
    $region93: #{transformer_vanilla_forward.3} parent=1 // pred_fallthru
      _
    // Predicated region
    $region94: #{transformer_vanilla_forward.3} parent=1 // pred_check
      _
    $region95: #{transformer_vanilla_forward.3} parent=1 // pred_check_branch
      %180 = sbr.rel (0) target = $region97
    $region96: #{transformer_vanilla_forward.3} parent=1 // pred_region
      %181 = dma.done [#allocation18], 16
    $region97: #{transformer_vanilla_forward.3} parent=1 // pred_fallthru
      _
    %v183 = vld [vmem:[%s0] sm:$0xff]
    %v184 = vld [vmem:[%s0 + $0x8] sm:$0xff]
    %v185 = vld [vmem:[%s0 + $0x10] sm:$0xff]
    %v186 = vmul.f32 %v183, 0.125
    %v187 = vmul.f32 %v184, 0.125
    %v188 = vmul.f32 %v185, 0.125
    %v192 = vcombine.high %v186, %v186
    %v194 = vunpack.c.l.s4 1983009808
    %v195 = vunpack.c.0.s8 %v194
    %v196 = vlaneseq
    %v197 = vshrl.u32 %v196, 7
    %v198 = vsub.s32 %v195, %v197
    %v199 = vrot.slane %v186, %v198
    %v201 = vunpack.c.l.s4 1983009808
    %v202 = vunpack.c.0.s8 %v201
    %v203 = vlaneseq
    %v204 = vshrl.u32 %v203, 7
    %v205 = vsub.s32 %v202, %v204
    %v206 = vrot.slane %v192, %v205
    %v207 = vcombine.high %v199, %v199
    %v208 = vcombine.high %v206, %v206
    %v209 = vcombine.high %v187, %v187
    %v211 = vunpack.c.l.s4 1983009808
    %v212 = vunpack.c.0.s8 %v211
    %v213 = vlaneseq
    %v214 = vshrl.u32 %v213, 7
    %v215 = vsub.s32 %v212, %v214
    %v216 = vrot.slane %v187, %v215
    %v218 = vunpack.c.l.s4 1983009808
    %v219 = vunpack.c.0.s8 %v218
    %v220 = vlaneseq
    %v221 = vshrl.u32 %v220, 7
    %v222 = vsub.s32 %v219, %v221
    %v223 = vrot.slane %v209, %v222
    %v224 = vcombine.high %v216, %v216
    %v225 = vcombine.high %v223, %v223
    %v226 = vcombine.high %v188, %v188
    %v228 = vunpack.c.l.s4 1983009808
    %v229 = vunpack.c.0.s8 %v228
    %v230 = vlaneseq
    %v231 = vshrl.u32 %v230, 7
    %v232 = vsub.s32 %v229, %v231
    %v233 = vrot.slane %v188, %v232
    %v235 = vunpack.c.l.s4 1983009808
    %v236 = vunpack.c.0.s8 %v235
    %v237 = vlaneseq
    %v238 = vshrl.u32 %v237, 7
    %v239 = vsub.s32 %v236, %v238
    %v240 = vrot.slane %v226, %v239
    %v241 = vcombine.high %v233, %v233
    %v242 = vcombine.high %v240, %v240
    %v255 = vpack.c.bf16 %v199, %v199
    %v256 = vpack.c.bf16 %v207, %v207
    %v257 = vpack.c.bf16 %v206, %v206
    %v258 = vpack.c.bf16 %v208, %v208
    %v259 = vpack.c.bf16 %v216, %v216
    %v260 = vpack.c.bf16 %v224, %v224
    %v261 = vpack.c.bf16 %v223, %v223
    %v262 = vpack.c.bf16 %v225, %v225
    %v263 = vpack.c.bf16 %v233, %v233
    %v264 = vpack.c.bf16 %v241, %v241
    %v265 = vpack.c.bf16 %v240, %v240
    %v266 = vpack.c.bf16 %v242, %v242
    %v267 = vld [vmem:[#allocation2] sm:$0xff]
    %v268 = vld [vmem:[#allocation2 + $0x8] sm:$0xff]
    %v269 = vld [vmem:[#allocation2 + $0x10] sm:$0xff]
    %v270 = vld [vmem:[#allocation2 + $0x18] sm:$0xff]
    %v271 = vld [vmem:[#allocation2 + $0x20] sm:$0xff]
    %v272 = vld [vmem:[#allocation2 + $0x28] sm:$0xff]
    %v273 = vld [vmem:[#allocation2 + $0x30] sm:$0xff]
    %v274 = vld [vmem:[#allocation2 + $0x38] sm:$0xff]
    %v275 = vld [vmem:[#allocation2 + $0x40] sm:$0xff]
    %v276 = vld [vmem:[#allocation2 + $0x48] sm:$0xff]
    %v277 = vld [vmem:[#allocation2 + $0x50] sm:$0xff]
    %v278 = vld [vmem:[#allocation2 + $0x58] sm:$0xff]
    %v279 = vld [vmem:[#allocation2 + $0x60] sm:$0xff]
    %v280 = vld [vmem:[#allocation2 + $0x68] sm:$0xff]
    %v281 = vld [vmem:[#allocation2 + $0x70] sm:$0xff]
    %v282 = vld [vmem:[#allocation2 + $0x78] sm:$0xff]
    %v283 = vld [vmem:[#allocation2 + $0x80] sm:$0xff]
    %v284 = vld [vmem:[#allocation2 + $0x88] sm:$0xff]
    %v285 = vld [vmem:[#allocation2 + $0x90] sm:$0xff]
    %v286 = vld [vmem:[#allocation2 + $0x98] sm:$0xff]
    %v287 = vld [vmem:[#allocation2 + $0xa0] sm:$0xff]
    %v288 = vld [vmem:[#allocation2 + $0xa8] sm:$0xff]
    %v289 = vld [vmem:[#allocation2 + $0xb0] sm:$0xff]
    %v290 = vld [vmem:[#allocation2 + $0xb8] sm:$0xff]
    %v291 = vld [vmem:[#allocation2 + $0xc0] sm:$0xff]
    %v292 = vld [vmem:[#allocation2 + $0xc8] sm:$0xff]
    %v293 = vld [vmem:[#allocation2 + $0xd0] sm:$0xff]
    %v294 = vld [vmem:[#allocation2 + $0xd8] sm:$0xff]
    %v295 = vld [vmem:[#allocation2 + $0xe0] sm:$0xff]
    %v296 = vld [vmem:[#allocation2 + $0xe8] sm:$0xff]
    %v297 = vld [vmem:[#allocation2 + $0xf0] sm:$0xff]
    %v298 = vld [vmem:[#allocation2 + $0xf8] sm:$0xff]
    %v299 = vld [vmem:[#allocation2 + $0x100] sm:$0xff]
    %v300 = vld [vmem:[#allocation2 + $0x108] sm:$0xff]
    %v301 = vld [vmem:[#allocation2 + $0x110] sm:$0xff]
    %v302 = vld [vmem:[#allocation2 + $0x118] sm:$0xff]
    %v303 = vld [vmem:[#allocation2 + $0x120] sm:$0xff]
    %v304 = vld [vmem:[#allocation2 + $0x128] sm:$0xff]
    %v305 = vld [vmem:[#allocation2 + $0x130] sm:$0xff]
    %v306 = vld [vmem:[#allocation2 + $0x138] sm:$0xff]
    %v307 = vld [vmem:[#allocation2 + $0x140] sm:$0xff]
    %v308 = vld [vmem:[#allocation2 + $0x148] sm:$0xff]
    %v309 = vld [vmem:[#allocation2 + $0x150] sm:$0xff]
    %v310 = vld [vmem:[#allocation2 + $0x158] sm:$0xff]
    %v311 = vld [vmem:[#allocation2 + $0x160] sm:$0xff]
    %v312 = vld [vmem:[#allocation2 + $0x168] sm:$0xff]
    %v313 = vld [vmem:[#allocation2 + $0x170] sm:$0xff]
    %v314 = vld [vmem:[#allocation2 + $0x178] sm:$0xff]
    %v315 = vld [vmem:[#allocation2 + $0x180] sm:$0xff]
    %v316 = vld [vmem:[#allocation2 + $0x188] sm:$0xff]
    %v317 = vld [vmem:[#allocation2 + $0x190] sm:$0xff]
    %v318 = vld [vmem:[#allocation2 + $0x198] sm:$0xff]
    %v319 = vld [vmem:[#allocation2 + $0x1a0] sm:$0xff]
    %v320 = vld [vmem:[#allocation2 + $0x1a8] sm:$0xff]
    %v321 = vld [vmem:[#allocation2 + $0x1b0] sm:$0xff]
    %v322 = vld [vmem:[#allocation2 + $0x1b8] sm:$0xff]
    %v323 = vld [vmem:[#allocation2 + $0x1c0] sm:$0xff]
    %v324 = vld [vmem:[#allocation2 + $0x1c8] sm:$0xff]
    %v325 = vld [vmem:[#allocation2 + $0x1d0] sm:$0xff]
    %v326 = vld [vmem:[#allocation2 + $0x1d8] sm:$0xff]
    %v327 = vld [vmem:[#allocation2 + $0x1e0] sm:$0xff]
    %v328 = vld [vmem:[#allocation2 + $0x1e8] sm:$0xff]
    %v329 = vld [vmem:[#allocation2 + $0x1f0] sm:$0xff]
    %v330 = vld [vmem:[#allocation2 + $0x1f8] sm:$0xff]
    %v331 = vld [vmem:[#allocation2 + $0x200] sm:$0xff]
    %v332 = vld [vmem:[#allocation2 + $0x208] sm:$0xff]
    %v333 = vld [vmem:[#allocation2 + $0x210] sm:$0xff]
    %v334 = vld [vmem:[#allocation2 + $0x218] sm:$0xff]
    %v335 = vld [vmem:[#allocation2 + $0x220] sm:$0xff]
    %v336 = vld [vmem:[#allocation2 + $0x228] sm:$0xff]
    %v337 = vld [vmem:[#allocation2 + $0x230] sm:$0xff]
    %v338 = vld [vmem:[#allocation2 + $0x238] sm:$0xff]
    %v339 = vld [vmem:[#allocation2 + $0x240] sm:$0xff]
    %v340 = vld [vmem:[#allocation2 + $0x248] sm:$0xff]
    %v341 = vld [vmem:[#allocation2 + $0x250] sm:$0xff]
    %v342 = vld [vmem:[#allocation2 + $0x258] sm:$0xff]
    %v343 = vld [vmem:[#allocation2 + $0x260] sm:$0xff]
    %v344 = vld [vmem:[#allocation2 + $0x268] sm:$0xff]
    %v345 = vld [vmem:[#allocation2 + $0x270] sm:$0xff]
    %v346 = vld [vmem:[#allocation2 + $0x278] sm:$0xff]
    %v347 = vld [vmem:[#allocation2 + $0x280] sm:$0xff]
    %v348 = vld [vmem:[#allocation2 + $0x288] sm:$0xff]
    %v349 = vld [vmem:[#allocation2 + $0x290] sm:$0xff]
    %v350 = vld [vmem:[#allocation2 + $0x298] sm:$0xff]
    %v351 = vld [vmem:[#allocation2 + $0x2a0] sm:$0xff]
    %v352 = vld [vmem:[#allocation2 + $0x2a8] sm:$0xff]
    %v353 = vld [vmem:[#allocation2 + $0x2b0] sm:$0xff]
    %v354 = vld [vmem:[#allocation2 + $0x2b8] sm:$0xff]
    %v355 = vld [vmem:[#allocation2 + $0x2c0] sm:$0xff]
    %v356 = vld [vmem:[#allocation2 + $0x2c8] sm:$0xff]
    %v357 = vld [vmem:[#allocation2 + $0x2d0] sm:$0xff]
    %v358 = vld [vmem:[#allocation2 + $0x2d8] sm:$0xff]
    %v359 = vld [vmem:[#allocation2 + $0x2e0] sm:$0xff]
    %v360 = vld [vmem:[#allocation2 + $0x2e8] sm:$0xff]
    %v361 = vld [vmem:[#allocation2 + $0x2f0] sm:$0xff]
    %v362 = vld [vmem:[#allocation2 + $0x2f8] sm:$0xff]
    %v363 = vld [vmem:[#allocation2 + $0x300] sm:$0xff]
    %v364 = vld [vmem:[#allocation2 + $0x308] sm:$0xff]
    %v365 = vld [vmem:[#allocation2 + $0x310] sm:$0xff]
    %v366 = vld [vmem:[#allocation2 + $0x318] sm:$0xff]
    %v367 = vld [vmem:[#allocation2 + $0x320] sm:$0xff]
    %v368 = vld [vmem:[#allocation2 + $0x328] sm:$0xff]
    %v369 = vld [vmem:[#allocation2 + $0x330] sm:$0xff]
    %v370 = vld [vmem:[#allocation2 + $0x338] sm:$0xff]
    %v371 = vld [vmem:[#allocation2 + $0x340] sm:$0xff]
    %v372 = vld [vmem:[#allocation2 + $0x348] sm:$0xff]
    %v373 = vld [vmem:[#allocation2 + $0x350] sm:$0xff]
    %v374 = vld [vmem:[#allocation2 + $0x358] sm:$0xff]
    %v375 = vld [vmem:[#allocation2 + $0x360] sm:$0xff]
    %v376 = vld [vmem:[#allocation2 + $0x368] sm:$0xff]
    %v377 = vld [vmem:[#allocation2 + $0x370] sm:$0xff]
    %v378 = vld [vmem:[#allocation2 + $0x378] sm:$0xff]
    %v379 = vld [vmem:[#allocation2 + $0x380] sm:$0xff]
    %v380 = vld [vmem:[#allocation2 + $0x388] sm:$0xff]
    %v381 = vld [vmem:[#allocation2 + $0x390] sm:$0xff]
    %v382 = vld [vmem:[#allocation2 + $0x398] sm:$0xff]
    %v383 = vld [vmem:[#allocation2 + $0x3a0] sm:$0xff]
    %v384 = vld [vmem:[#allocation2 + $0x3a8] sm:$0xff]
    %v385 = vld [vmem:[#allocation2 + $0x3b0] sm:$0xff]
    %v386 = vld [vmem:[#allocation2 + $0x3b8] sm:$0xff]
    %v387 = vld [vmem:[#allocation2 + $0x3c0] sm:$0xff]
    %v388 = vld [vmem:[#allocation2 + $0x3c8] sm:$0xff]
    %v389 = vld [vmem:[#allocation2 + $0x3d0] sm:$0xff]
    %v390 = vld [vmem:[#allocation2 + $0x3d8] sm:$0xff]
    %v391 = vld [vmem:[#allocation2 + $0x3e0] sm:$0xff]
    %v392 = vld [vmem:[#allocation2 + $0x3e8] sm:$0xff]
    %v393 = vld [vmem:[#allocation2 + $0x3f0] sm:$0xff]
    %v394 = vld [vmem:[#allocation2 + $0x3f8] sm:$0xff]
    %v395 = vld [vmem:[#allocation2 + $0x400] sm:$0xff]
    %v396 = vld [vmem:[#allocation2 + $0x408] sm:$0xff]
    %v397 = vld [vmem:[#allocation2 + $0x410] sm:$0xff]
    %v398 = vld [vmem:[#allocation2 + $0x418] sm:$0xff]
    %v399 = vld [vmem:[#allocation2 + $0x420] sm:$0xff]
    %v400 = vld [vmem:[#allocation2 + $0x428] sm:$0xff]
    %v401 = vld [vmem:[#allocation2 + $0x430] sm:$0xff]
    %v402 = vld [vmem:[#allocation2 + $0x438] sm:$0xff]
    %v403 = vld [vmem:[#allocation2 + $0x440] sm:$0xff]
    %v404 = vld [vmem:[#allocation2 + $0x448] sm:$0xff]
    %v405 = vld [vmem:[#allocation2 + $0x450] sm:$0xff]
    %v406 = vld [vmem:[#allocation2 + $0x458] sm:$0xff]
    %v407 = vld [vmem:[#allocation2 + $0x460] sm:$0xff]
    %v408 = vld [vmem:[#allocation2 + $0x468] sm:$0xff]
    %v409 = vld [vmem:[#allocation2 + $0x470] sm:$0xff]
    %v410 = vld [vmem:[#allocation2 + $0x478] sm:$0xff]
    %v411 = vld [vmem:[#allocation2 + $0x480] sm:$0xff]
    %v412 = vld [vmem:[#allocation2 + $0x488] sm:$0xff]
    %v413 = vld [vmem:[#allocation2 + $0x490] sm:$0xff]
    %v414 = vld [vmem:[#allocation2 + $0x498] sm:$0xff]
    %v415 = vld [vmem:[#allocation2 + $0x4a0] sm:$0xff]
    %v416 = vld [vmem:[#allocation2 + $0x4a8] sm:$0xff]
    %v417 = vld [vmem:[#allocation2 + $0x4b0] sm:$0xff]
    %v418 = vld [vmem:[#allocation2 + $0x4b8] sm:$0xff]
    %v419 = vld [vmem:[#allocation2 + $0x4c0] sm:$0xff]
    %v420 = vld [vmem:[#allocation2 + $0x4c8] sm:$0xff]
    %v421 = vld [vmem:[#allocation2 + $0x4d0] sm:$0xff]
    %v422 = vld [vmem:[#allocation2 + $0x4d8] sm:$0xff]
    %v423 = vld [vmem:[#allocation2 + $0x4e0] sm:$0xff]
    %v424 = vld [vmem:[#allocation2 + $0x4e8] sm:$0xff]
    %v425 = vld [vmem:[#allocation2 + $0x4f0] sm:$0xff]
    %v426 = vld [vmem:[#allocation2 + $0x4f8] sm:$0xff]
    %v427 = vld [vmem:[#allocation2 + $0x500] sm:$0xff]
    %v428 = vld [vmem:[#allocation2 + $0x508] sm:$0xff]
    %v429 = vld [vmem:[#allocation2 + $0x510] sm:$0xff]
    %v430 = vld [vmem:[#allocation2 + $0x518] sm:$0xff]
    %v431 = vld [vmem:[#allocation2 + $0x520] sm:$0xff]
    %v432 = vld [vmem:[#allocation2 + $0x528] sm:$0xff]
    %v433 = vld [vmem:[#allocation2 + $0x530] sm:$0xff]
    %v434 = vld [vmem:[#allocation2 + $0x538] sm:$0xff]
    %v435 = vld [vmem:[#allocation2 + $0x540] sm:$0xff]
    %v436 = vld [vmem:[#allocation2 + $0x548] sm:$0xff]
    %v437 = vld [vmem:[#allocation2 + $0x550] sm:$0xff]
    %v438 = vld [vmem:[#allocation2 + $0x558] sm:$0xff]
    %v439 = vld [vmem:[#allocation2 + $0x560] sm:$0xff]
    %v440 = vld [vmem:[#allocation2 + $0x568] sm:$0xff]
    %v441 = vld [vmem:[#allocation2 + $0x570] sm:$0xff]
    %v442 = vld [vmem:[#allocation2 + $0x578] sm:$0xff]
    %v443 = vld [vmem:[#allocation2 + $0x580] sm:$0xff]
    %v444 = vld [vmem:[#allocation2 + $0x588] sm:$0xff]
    %v445 = vld [vmem:[#allocation2 + $0x590] sm:$0xff]
    %v446 = vld [vmem:[#allocation2 + $0x598] sm:$0xff]
    %v447 = vld [vmem:[#allocation2 + $0x5a0] sm:$0xff]
    %v448 = vld [vmem:[#allocation2 + $0x5a8] sm:$0xff]
    %v449 = vld [vmem:[#allocation2 + $0x5b0] sm:$0xff]
    %v450 = vld [vmem:[#allocation2 + $0x5b8] sm:$0xff]
    %v451 = vld [vmem:[#allocation2 + $0x5c0] sm:$0xff]
    %v452 = vld [vmem:[#allocation2 + $0x5c8] sm:$0xff]
    %v453 = vld [vmem:[#allocation2 + $0x5d0] sm:$0xff]
    %v454 = vld [vmem:[#allocation2 + $0x5d8] sm:$0xff]
    %v455 = vld [vmem:[#allocation2 + $0x5e0] sm:$0xff]
    %v456 = vld [vmem:[#allocation2 + $0x5e8] sm:$0xff]
    %v457 = vld [vmem:[#allocation2 + $0x5f0] sm:$0xff]
    %v458 = vld [vmem:[#allocation2 + $0x5f8] sm:$0xff]
    %v459 = vld [vmem:[#allocation2 + $0x600] sm:$0xff]
    %v460 = vld [vmem:[#allocation2 + $0x608] sm:$0xff]
    %v461 = vld [vmem:[#allocation2 + $0x610] sm:$0xff]
    %v462 = vld [vmem:[#allocation2 + $0x618] sm:$0xff]
    %v463 = vld [vmem:[#allocation2 + $0x620] sm:$0xff]
    %v464 = vld [vmem:[#allocation2 + $0x628] sm:$0xff]
    %v465 = vld [vmem:[#allocation2 + $0x630] sm:$0xff]
    %v466 = vld [vmem:[#allocation2 + $0x638] sm:$0xff]
    %v467 = vld [vmem:[#allocation2 + $0x640] sm:$0xff]
    %v468 = vld [vmem:[#allocation2 + $0x648] sm:$0xff]
    %v469 = vld [vmem:[#allocation2 + $0x650] sm:$0xff]
    %v470 = vld [vmem:[#allocation2 + $0x658] sm:$0xff]
    %v471 = vld [vmem:[#allocation2 + $0x660] sm:$0xff]
    %v472 = vld [vmem:[#allocation2 + $0x668] sm:$0xff]
    %v473 = vld [vmem:[#allocation2 + $0x670] sm:$0xff]
    %v474 = vld [vmem:[#allocation2 + $0x678] sm:$0xff]
    %v475 = vld [vmem:[#allocation2 + $0x680] sm:$0xff]
    %v476 = vld [vmem:[#allocation2 + $0x688] sm:$0xff]
    %v477 = vld [vmem:[#allocation2 + $0x690] sm:$0xff]
    %v478 = vld [vmem:[#allocation2 + $0x698] sm:$0xff]
    %v479 = vld [vmem:[#allocation2 + $0x6a0] sm:$0xff]
    %v480 = vld [vmem:[#allocation2 + $0x6a8] sm:$0xff]
    %v481 = vld [vmem:[#allocation2 + $0x6b0] sm:$0xff]
    %v482 = vld [vmem:[#allocation2 + $0x6b8] sm:$0xff]
    %v483 = vld [vmem:[#allocation2 + $0x6c0] sm:$0xff]
    %v484 = vld [vmem:[#allocation2 + $0x6c8] sm:$0xff]
    %v485 = vld [vmem:[#allocation2 + $0x6d0] sm:$0xff]
    %v486 = vld [vmem:[#allocation2 + $0x6d8] sm:$0xff]
    %v487 = vld [vmem:[#allocation2 + $0x6e0] sm:$0xff]
    %v488 = vld [vmem:[#allocation2 + $0x6e8] sm:$0xff]
    %v489 = vld [vmem:[#allocation2 + $0x6f0] sm:$0xff]
    %v490 = vld [vmem:[#allocation2 + $0x6f8] sm:$0xff]
    %v491 = vld [vmem:[#allocation2 + $0x700] sm:$0xff]
    %v492 = vld [vmem:[#allocation2 + $0x708] sm:$0xff]
    %v493 = vld [vmem:[#allocation2 + $0x710] sm:$0xff]
    %v494 = vld [vmem:[#allocation2 + $0x718] sm:$0xff]
    %v495 = vld [vmem:[#allocation2 + $0x720] sm:$0xff]
    %v496 = vld [vmem:[#allocation2 + $0x728] sm:$0xff]
    %v497 = vld [vmem:[#allocation2 + $0x730] sm:$0xff]
    %v498 = vld [vmem:[#allocation2 + $0x738] sm:$0xff]
    %v499 = vld [vmem:[#allocation2 + $0x740] sm:$0xff]
    %v500 = vld [vmem:[#allocation2 + $0x748] sm:$0xff]
    %v501 = vld [vmem:[#allocation2 + $0x750] sm:$0xff]
    %v502 = vld [vmem:[#allocation2 + $0x758] sm:$0xff]
    %v503 = vld [vmem:[#allocation2 + $0x760] sm:$0xff]
    %v504 = vld [vmem:[#allocation2 + $0x768] sm:$0xff]
    %v505 = vld [vmem:[#allocation2 + $0x770] sm:$0xff]
    %v506 = vld [vmem:[#allocation2 + $0x778] sm:$0xff]
    %v507 = vld [vmem:[#allocation2 + $0x780] sm:$0xff]
    %v508 = vld [vmem:[#allocation2 + $0x788] sm:$0xff]
    %v509 = vld [vmem:[#allocation2 + $0x790] sm:$0xff]
    %v510 = vld [vmem:[#allocation2 + $0x798] sm:$0xff]
    %v511 = vld [vmem:[#allocation2 + $0x7a0] sm:$0xff]
    %v512 = vld [vmem:[#allocation2 + $0x7a8] sm:$0xff]
    %v513 = vld [vmem:[#allocation2 + $0x7b0] sm:$0xff]
    %v514 = vld [vmem:[#allocation2 + $0x7b8] sm:$0xff]
    %v515 = vld [vmem:[#allocation2 + $0x7c0] sm:$0xff]
    %v516 = vld [vmem:[#allocation2 + $0x7c8] sm:$0xff]
    %v517 = vld [vmem:[#allocation2 + $0x7d0] sm:$0xff]
    %v518 = vld [vmem:[#allocation2 + $0x7d8] sm:$0xff]
    %v519 = vld [vmem:[#allocation2 + $0x7e0] sm:$0xff]
    %v520 = vld [vmem:[#allocation2 + $0x7e8] sm:$0xff]
    %v521 = vld [vmem:[#allocation2 + $0x7f0] sm:$0xff]
    %v522 = vld [vmem:[#allocation2 + $0x7f8] sm:$0xff]
    %v523 = vld [vmem:[#allocation2 + $0x800] sm:$0xff]
    %v524 = vld [vmem:[#allocation2 + $0x808] sm:$0xff]
    %v525 = vld [vmem:[#allocation2 + $0x810] sm:$0xff]
    %v526 = vld [vmem:[#allocation2 + $0x818] sm:$0xff]
    %v527 = vld [vmem:[#allocation2 + $0x820] sm:$0xff]
    %v528 = vld [vmem:[#allocation2 + $0x828] sm:$0xff]
    %v529 = vld [vmem:[#allocation2 + $0x830] sm:$0xff]
    %v530 = vld [vmem:[#allocation2 + $0x838] sm:$0xff]
    %v531 = vld [vmem:[#allocation2 + $0x840] sm:$0xff]
    %v532 = vld [vmem:[#allocation2 + $0x848] sm:$0xff]
    %v533 = vld [vmem:[#allocation2 + $0x850] sm:$0xff]
    %v534 = vld [vmem:[#allocation2 + $0x858] sm:$0xff]
    %v535 = vld [vmem:[#allocation2 + $0x860] sm:$0xff]
    %v536 = vld [vmem:[#allocation2 + $0x868] sm:$0xff]
    %v537 = vld [vmem:[#allocation2 + $0x870] sm:$0xff]
    %v538 = vld [vmem:[#allocation2 + $0x878] sm:$0xff]
    %v539 = vld [vmem:[#allocation2 + $0x880] sm:$0xff]
    %v540 = vld [vmem:[#allocation2 + $0x888] sm:$0xff]
    %v541 = vld [vmem:[#allocation2 + $0x890] sm:$0xff]
    %v542 = vld [vmem:[#allocation2 + $0x898] sm:$0xff]
    %v543 = vld [vmem:[#allocation2 + $0x8a0] sm:$0xff]
    %v544 = vld [vmem:[#allocation2 + $0x8a8] sm:$0xff]
    %v545 = vld [vmem:[#allocation2 + $0x8b0] sm:$0xff]
    %v546 = vld [vmem:[#allocation2 + $0x8b8] sm:$0xff]
    %v547 = vld [vmem:[#allocation2 + $0x8c0] sm:$0xff]
    %v548 = vld [vmem:[#allocation2 + $0x8c8] sm:$0xff]
    %v549 = vld [vmem:[#allocation2 + $0x8d0] sm:$0xff]
    %v550 = vld [vmem:[#allocation2 + $0x8d8] sm:$0xff]
    %v551 = vld [vmem:[#allocation2 + $0x8e0] sm:$0xff]
    %v552 = vld [vmem:[#allocation2 + $0x8e8] sm:$0xff]
    %v553 = vld [vmem:[#allocation2 + $0x8f0] sm:$0xff]
    %v554 = vld [vmem:[#allocation2 + $0x8f8] sm:$0xff]
    %v555 = vld [vmem:[#allocation2 + $0x900] sm:$0xff]
    %v556 = vld [vmem:[#allocation2 + $0x908] sm:$0xff]
    %v557 = vld [vmem:[#allocation2 + $0x910] sm:$0xff]
    %v558 = vld [vmem:[#allocation2 + $0x918] sm:$0xff]
    %v559 = vld [vmem:[#allocation2 + $0x920] sm:$0xff]
    %v560 = vld [vmem:[#allocation2 + $0x928] sm:$0xff]
    %v561 = vld [vmem:[#allocation2 + $0x930] sm:$0xff]
    %v562 = vld [vmem:[#allocation2 + $0x938] sm:$0xff]
    %v563 = vld [vmem:[#allocation2 + $0x940] sm:$0xff]
    %v564 = vld [vmem:[#allocation2 + $0x948] sm:$0xff]
    %v565 = vld [vmem:[#allocation2 + $0x950] sm:$0xff]
    %v566 = vld [vmem:[#allocation2 + $0x958] sm:$0xff]
    %v567 = vld [vmem:[#allocation2 + $0x960] sm:$0xff]
    %v568 = vld [vmem:[#allocation2 + $0x968] sm:$0xff]
    %v569 = vld [vmem:[#allocation2 + $0x970] sm:$0xff]
    %v570 = vld [vmem:[#allocation2 + $0x978] sm:$0xff]
    %v571 = vld [vmem:[#allocation2 + $0x980] sm:$0xff]
    %v572 = vld [vmem:[#allocation2 + $0x988] sm:$0xff]
    %v573 = vld [vmem:[#allocation2 + $0x990] sm:$0xff]
    %v574 = vld [vmem:[#allocation2 + $0x998] sm:$0xff]
    %v575 = vld [vmem:[#allocation2 + $0x9a0] sm:$0xff]
    %v576 = vld [vmem:[#allocation2 + $0x9a8] sm:$0xff]
    %v577 = vld [vmem:[#allocation2 + $0x9b0] sm:$0xff]
    %v578 = vld [vmem:[#allocation2 + $0x9b8] sm:$0xff]
    %v579 = vld [vmem:[#allocation2 + $0x9c0] sm:$0xff]
    %v580 = vld [vmem:[#allocation2 + $0x9c8] sm:$0xff]
    %v581 = vld [vmem:[#allocation2 + $0x9d0] sm:$0xff]
    %v582 = vld [vmem:[#allocation2 + $0x9d8] sm:$0xff]
    %v583 = vld [vmem:[#allocation2 + $0x9e0] sm:$0xff]
    %v584 = vld [vmem:[#allocation2 + $0x9e8] sm:$0xff]
    %v585 = vld [vmem:[#allocation2 + $0x9f0] sm:$0xff]
    %v586 = vld [vmem:[#allocation2 + $0x9f8] sm:$0xff]
    %v587 = vld [vmem:[#allocation2 + $0xa00] sm:$0xff]
    %v588 = vld [vmem:[#allocation2 + $0xa08] sm:$0xff]
    %v589 = vld [vmem:[#allocation2 + $0xa10] sm:$0xff]
    %v590 = vld [vmem:[#allocation2 + $0xa18] sm:$0xff]
    %v591 = vld [vmem:[#allocation2 + $0xa20] sm:$0xff]
    %v592 = vld [vmem:[#allocation2 + $0xa28] sm:$0xff]
    %v593 = vld [vmem:[#allocation2 + $0xa30] sm:$0xff]
    %v594 = vld [vmem:[#allocation2 + $0xa38] sm:$0xff]
    %v595 = vld [vmem:[#allocation2 + $0xa40] sm:$0xff]
    %v596 = vld [vmem:[#allocation2 + $0xa48] sm:$0xff]
    %v597 = vld [vmem:[#allocation2 + $0xa50] sm:$0xff]
    %v598 = vld [vmem:[#allocation2 + $0xa58] sm:$0xff]
    %v599 = vld [vmem:[#allocation2 + $0xa60] sm:$0xff]
    %v600 = vld [vmem:[#allocation2 + $0xa68] sm:$0xff]
    %v601 = vld [vmem:[#allocation2 + $0xa70] sm:$0xff]
    %v602 = vld [vmem:[#allocation2 + $0xa78] sm:$0xff]
    %v603 = vld [vmem:[#allocation2 + $0xa80] sm:$0xff]
    %v604 = vld [vmem:[#allocation2 + $0xa88] sm:$0xff]
    %v605 = vld [vmem:[#allocation2 + $0xa90] sm:$0xff]
    %v606 = vld [vmem:[#allocation2 + $0xa98] sm:$0xff]
    %v607 = vld [vmem:[#allocation2 + $0xaa0] sm:$0xff]
    %v608 = vld [vmem:[#allocation2 + $0xaa8] sm:$0xff]
    %v609 = vld [vmem:[#allocation2 + $0xab0] sm:$0xff]
    %v610 = vld [vmem:[#allocation2 + $0xab8] sm:$0xff]
    %v611 = vld [vmem:[#allocation2 + $0xac0] sm:$0xff]
    %v612 = vld [vmem:[#allocation2 + $0xac8] sm:$0xff]
    %v613 = vld [vmem:[#allocation2 + $0xad0] sm:$0xff]
    %v614 = vld [vmem:[#allocation2 + $0xad8] sm:$0xff]
    %v615 = vld [vmem:[#allocation2 + $0xae0] sm:$0xff]
    %v616 = vld [vmem:[#allocation2 + $0xae8] sm:$0xff]
    %v617 = vld [vmem:[#allocation2 + $0xaf0] sm:$0xff]
    %v618 = vld [vmem:[#allocation2 + $0xaf8] sm:$0xff]
    %v619 = vld [vmem:[#allocation2 + $0xb00] sm:$0xff]
    %v620 = vld [vmem:[#allocation2 + $0xb08] sm:$0xff]
    %v621 = vld [vmem:[#allocation2 + $0xb10] sm:$0xff]
    %v622 = vld [vmem:[#allocation2 + $0xb18] sm:$0xff]
    %v623 = vld [vmem:[#allocation2 + $0xb20] sm:$0xff]
    %v624 = vld [vmem:[#allocation2 + $0xb28] sm:$0xff]
    %v625 = vld [vmem:[#allocation2 + $0xb30] sm:$0xff]
    %v626 = vld [vmem:[#allocation2 + $0xb38] sm:$0xff]
    %v627 = vld [vmem:[#allocation2 + $0xb40] sm:$0xff]
    %v628 = vld [vmem:[#allocation2 + $0xb48] sm:$0xff]
    %v629 = vld [vmem:[#allocation2 + $0xb50] sm:$0xff]
    %v630 = vld [vmem:[#allocation2 + $0xb58] sm:$0xff]
    %v631 = vld [vmem:[#allocation2 + $0xb60] sm:$0xff]
    %v632 = vld [vmem:[#allocation2 + $0xb68] sm:$0xff]
    %v633 = vld [vmem:[#allocation2 + $0xb70] sm:$0xff]
    %v634 = vld [vmem:[#allocation2 + $0xb78] sm:$0xff]
    %v635 = vld [vmem:[#allocation2 + $0xb80] sm:$0xff]
    %v636 = vld [vmem:[#allocation2 + $0xb88] sm:$0xff]
    %v637 = vld [vmem:[#allocation2 + $0xb90] sm:$0xff]
    %v638 = vld [vmem:[#allocation2 + $0xb98] sm:$0xff]
    %v639 = vld [vmem:[#allocation2 + $0xba0] sm:$0xff]
    %v640 = vld [vmem:[#allocation2 + $0xba8] sm:$0xff]
    %v641 = vld [vmem:[#allocation2 + $0xbb0] sm:$0xff]
    %v642 = vld [vmem:[#allocation2 + $0xbb8] sm:$0xff]
    %v643 = vld [vmem:[#allocation2 + $0xbc0] sm:$0xff]
    %v644 = vld [vmem:[#allocation2 + $0xbc8] sm:$0xff]
    %v645 = vld [vmem:[#allocation2 + $0xbd0] sm:$0xff]
    %v646 = vld [vmem:[#allocation2 + $0xbd8] sm:$0xff]
    %v647 = vld [vmem:[#allocation2 + $0xbe0] sm:$0xff]
    %v648 = vld [vmem:[#allocation2 + $0xbe8] sm:$0xff]
    %v649 = vld [vmem:[#allocation2 + $0xbf0] sm:$0xff]
    %v650 = vld [vmem:[#allocation2 + $0xbf8] sm:$0xff]
    %v651 = vld [vmem:[#allocation2 + $0xc00] sm:$0xff]
    %v652 = vld [vmem:[#allocation2 + $0xc08] sm:$0xff]
    %v653 = vld [vmem:[#allocation2 + $0xc10] sm:$0xff]
    %v654 = vld [vmem:[#allocation2 + $0xc18] sm:$0xff]
    %v655 = vld [vmem:[#allocation2 + $0xc20] sm:$0xff]
    %v656 = vld [vmem:[#allocation2 + $0xc28] sm:$0xff]
    %v657 = vld [vmem:[#allocation2 + $0xc30] sm:$0xff]
    %v658 = vld [vmem:[#allocation2 + $0xc38] sm:$0xff]
    %v659 = vld [vmem:[#allocation2 + $0xc40] sm:$0xff]
    %v660 = vld [vmem:[#allocation2 + $0xc48] sm:$0xff]
    %v661 = vld [vmem:[#allocation2 + $0xc50] sm:$0xff]
    %v662 = vld [vmem:[#allocation2 + $0xc58] sm:$0xff]
    %v663 = vld [vmem:[#allocation2 + $0xc60] sm:$0xff]
    %v664 = vld [vmem:[#allocation2 + $0xc68] sm:$0xff]
    %v665 = vld [vmem:[#allocation2 + $0xc70] sm:$0xff]
    %v666 = vld [vmem:[#allocation2 + $0xc78] sm:$0xff]
    %v667 = vld [vmem:[#allocation2 + $0xc80] sm:$0xff]
    %v668 = vld [vmem:[#allocation2 + $0xc88] sm:$0xff]
    %v669 = vld [vmem:[#allocation2 + $0xc90] sm:$0xff]
    %v670 = vld [vmem:[#allocation2 + $0xc98] sm:$0xff]
    %v671 = vld [vmem:[#allocation2 + $0xca0] sm:$0xff]
    %v672 = vld [vmem:[#allocation2 + $0xca8] sm:$0xff]
    %v673 = vld [vmem:[#allocation2 + $0xcb0] sm:$0xff]
    %v674 = vld [vmem:[#allocation2 + $0xcb8] sm:$0xff]
    %v675 = vld [vmem:[#allocation2 + $0xcc0] sm:$0xff]
    %v676 = vld [vmem:[#allocation2 + $0xcc8] sm:$0xff]
    %v677 = vld [vmem:[#allocation2 + $0xcd0] sm:$0xff]
    %v678 = vld [vmem:[#allocation2 + $0xcd8] sm:$0xff]
    %v679 = vld [vmem:[#allocation2 + $0xce0] sm:$0xff]
    %v680 = vld [vmem:[#allocation2 + $0xce8] sm:$0xff]
    %v681 = vld [vmem:[#allocation2 + $0xcf0] sm:$0xff]
    %v682 = vld [vmem:[#allocation2 + $0xcf8] sm:$0xff]
    %v683 = vld [vmem:[#allocation2 + $0xd00] sm:$0xff]
    %v684 = vld [vmem:[#allocation2 + $0xd08] sm:$0xff]
    %v685 = vld [vmem:[#allocation2 + $0xd10] sm:$0xff]
    %v686 = vld [vmem:[#allocation2 + $0xd18] sm:$0xff]
    %v687 = vld [vmem:[#allocation2 + $0xd20] sm:$0xff]
    %v688 = vld [vmem:[#allocation2 + $0xd28] sm:$0xff]
    %v689 = vld [vmem:[#allocation2 + $0xd30] sm:$0xff]
    %v690 = vld [vmem:[#allocation2 + $0xd38] sm:$0xff]
    %v691 = vld [vmem:[#allocation2 + $0xd40] sm:$0xff]
    %v692 = vld [vmem:[#allocation2 + $0xd48] sm:$0xff]
    %v693 = vld [vmem:[#allocation2 + $0xd50] sm:$0xff]
    %v694 = vld [vmem:[#allocation2 + $0xd58] sm:$0xff]
    %v695 = vld [vmem:[#allocation2 + $0xd60] sm:$0xff]
    %v696 = vld [vmem:[#allocation2 + $0xd68] sm:$0xff]
    %v697 = vld [vmem:[#allocation2 + $0xd70] sm:$0xff]
    %v698 = vld [vmem:[#allocation2 + $0xd78] sm:$0xff]
    %v699 = vld [vmem:[#allocation2 + $0xd80] sm:$0xff]
    %v700 = vld [vmem:[#allocation2 + $0xd88] sm:$0xff]
    %v701 = vld [vmem:[#allocation2 + $0xd90] sm:$0xff]
    %v702 = vld [vmem:[#allocation2 + $0xd98] sm:$0xff]
    %v703 = vld [vmem:[#allocation2 + $0xda0] sm:$0xff]
    %v704 = vld [vmem:[#allocation2 + $0xda8] sm:$0xff]
    %v705 = vld [vmem:[#allocation2 + $0xdb0] sm:$0xff]
    %v706 = vld [vmem:[#allocation2 + $0xdb8] sm:$0xff]
    %v707 = vld [vmem:[#allocation2 + $0xdc0] sm:$0xff]
    %v708 = vld [vmem:[#allocation2 + $0xdc8] sm:$0xff]
    %v709 = vld [vmem:[#allocation2 + $0xdd0] sm:$0xff]
    %v710 = vld [vmem:[#allocation2 + $0xdd8] sm:$0xff]
    %v711 = vld [vmem:[#allocation2 + $0xde0] sm:$0xff]
    %v712 = vld [vmem:[#allocation2 + $0xde8] sm:$0xff]
    %v713 = vld [vmem:[#allocation2 + $0xdf0] sm:$0xff]
    %v714 = vld [vmem:[#allocation2 + $0xdf8] sm:$0xff]
    %v715 = vld [vmem:[#allocation2 + $0xe00] sm:$0xff]
    %v716 = vld [vmem:[#allocation2 + $0xe08] sm:$0xff]
    %v717 = vld [vmem:[#allocation2 + $0xe10] sm:$0xff]
    %v718 = vld [vmem:[#allocation2 + $0xe18] sm:$0xff]
    %v719 = vld [vmem:[#allocation2 + $0xe20] sm:$0xff]
    %v720 = vld [vmem:[#allocation2 + $0xe28] sm:$0xff]
    %v721 = vld [vmem:[#allocation2 + $0xe30] sm:$0xff]
    %v722 = vld [vmem:[#allocation2 + $0xe38] sm:$0xff]
    %v723 = vld [vmem:[#allocation2 + $0xe40] sm:$0xff]
    %v724 = vld [vmem:[#allocation2 + $0xe48] sm:$0xff]
    %v725 = vld [vmem:[#allocation2 + $0xe50] sm:$0xff]
    %v726 = vld [vmem:[#allocation2 + $0xe58] sm:$0xff]
    %v727 = vld [vmem:[#allocation2 + $0xe60] sm:$0xff]
    %v728 = vld [vmem:[#allocation2 + $0xe68] sm:$0xff]
    %v729 = vld [vmem:[#allocation2 + $0xe70] sm:$0xff]
    %v730 = vld [vmem:[#allocation2 + $0xe78] sm:$0xff]
    %v731 = vld [vmem:[#allocation2 + $0xe80] sm:$0xff]
    %v732 = vld [vmem:[#allocation2 + $0xe88] sm:$0xff]
    %v733 = vld [vmem:[#allocation2 + $0xe90] sm:$0xff]
    %v734 = vld [vmem:[#allocation2 + $0xe98] sm:$0xff]
    %v735 = vld [vmem:[#allocation2 + $0xea0] sm:$0xff]
    %v736 = vld [vmem:[#allocation2 + $0xea8] sm:$0xff]
    %v737 = vld [vmem:[#allocation2 + $0xeb0] sm:$0xff]
    %v738 = vld [vmem:[#allocation2 + $0xeb8] sm:$0xff]
    %v739 = vld [vmem:[#allocation2 + $0xec0] sm:$0xff]
    %v740 = vld [vmem:[#allocation2 + $0xec8] sm:$0xff]
    %v741 = vld [vmem:[#allocation2 + $0xed0] sm:$0xff]
    %v742 = vld [vmem:[#allocation2 + $0xed8] sm:$0xff]
    %v743 = vld [vmem:[#allocation2 + $0xee0] sm:$0xff]
    %v744 = vld [vmem:[#allocation2 + $0xee8] sm:$0xff]
    %v745 = vld [vmem:[#allocation2 + $0xef0] sm:$0xff]
    %v746 = vld [vmem:[#allocation2 + $0xef8] sm:$0xff]
    %v747 = vld [vmem:[#allocation2 + $0xf00] sm:$0xff]
    %v748 = vld [vmem:[#allocation2 + $0xf08] sm:$0xff]
    %v749 = vld [vmem:[#allocation2 + $0xf10] sm:$0xff]
    %v750 = vld [vmem:[#allocation2 + $0xf18] sm:$0xff]
    %v751 = vld [vmem:[#allocation2 + $0xf20] sm:$0xff]
    %v752 = vld [vmem:[#allocation2 + $0xf28] sm:$0xff]
    %v753 = vld [vmem:[#allocation2 + $0xf30] sm:$0xff]
    %v754 = vld [vmem:[#allocation2 + $0xf38] sm:$0xff]
    %v755 = vld [vmem:[#allocation2 + $0xf40] sm:$0xff]
    %v756 = vld [vmem:[#allocation2 + $0xf48] sm:$0xff]
    %v757 = vld [vmem:[#allocation2 + $0xf50] sm:$0xff]
    %v758 = vld [vmem:[#allocation2 + $0xf58] sm:$0xff]
    %v759 = vld [vmem:[#allocation2 + $0xf60] sm:$0xff]
    %v760 = vld [vmem:[#allocation2 + $0xf68] sm:$0xff]
    %v761 = vld [vmem:[#allocation2 + $0xf70] sm:$0xff]
    %v762 = vld [vmem:[#allocation2 + $0xf78] sm:$0xff]
    %v763 = vld [vmem:[#allocation2 + $0xf80] sm:$0xff]
    %v764 = vld [vmem:[#allocation2 + $0xf88] sm:$0xff]
    %v765 = vld [vmem:[#allocation2 + $0xf90] sm:$0xff]
    %v766 = vld [vmem:[#allocation2 + $0xf98] sm:$0xff]
    %v767 = vld [vmem:[#allocation2 + $0xfa0] sm:$0xff]
    %v768 = vld [vmem:[#allocation2 + $0xfa8] sm:$0xff]
    %v769 = vld [vmem:[#allocation2 + $0xfb0] sm:$0xff]
    %v770 = vld [vmem:[#allocation2 + $0xfb8] sm:$0xff]
    %v771 = vld [vmem:[#allocation2 + $0xfc0] sm:$0xff]
    %v772 = vld [vmem:[#allocation2 + $0xfc8] sm:$0xff]
    %v773 = vld [vmem:[#allocation2 + $0xfd0] sm:$0xff]
    %v774 = vld [vmem:[#allocation2 + $0xfd8] sm:$0xff]
    %v775 = vld [vmem:[#allocation2 + $0xfe0] sm:$0xff]
    %v776 = vld [vmem:[#allocation2 + $0xfe8] sm:$0xff]
    %v777 = vld [vmem:[#allocation2 + $0xff0] sm:$0xff]
    %v778 = vld [vmem:[#allocation2 + $0xff8] sm:$0xff]
    %v779 = vld [vmem:[#allocation2 + $0x1000] sm:$0xff]
    %v780 = vld [vmem:[#allocation2 + $0x1008] sm:$0xff]
    %v781 = vld [vmem:[#allocation2 + $0x1010] sm:$0xff]
    %v782 = vld [vmem:[#allocation2 + $0x1018] sm:$0xff]
    %v783 = vld [vmem:[#allocation2 + $0x1020] sm:$0xff]
    %v784 = vld [vmem:[#allocation2 + $0x1028] sm:$0xff]
    %v785 = vld [vmem:[#allocation2 + $0x1030] sm:$0xff]
    %v786 = vld [vmem:[#allocation2 + $0x1038] sm:$0xff]
    %v787 = vld [vmem:[#allocation2 + $0x1040] sm:$0xff]
    %v788 = vld [vmem:[#allocation2 + $0x1048] sm:$0xff]
    %v789 = vld [vmem:[#allocation2 + $0x1050] sm:$0xff]
    %v790 = vld [vmem:[#allocation2 + $0x1058] sm:$0xff]
    %v791 = vld [vmem:[#allocation2 + $0x1060] sm:$0xff]
    %v792 = vld [vmem:[#allocation2 + $0x1068] sm:$0xff]
    %v793 = vld [vmem:[#allocation2 + $0x1070] sm:$0xff]
    %v794 = vld [vmem:[#allocation2 + $0x1078] sm:$0xff]
    %v795 = vld [vmem:[#allocation2 + $0x1080] sm:$0xff]
    %v796 = vld [vmem:[#allocation2 + $0x1088] sm:$0xff]
    %v797 = vld [vmem:[#allocation2 + $0x1090] sm:$0xff]
    %v798 = vld [vmem:[#allocation2 + $0x1098] sm:$0xff]
    %v799 = vld [vmem:[#allocation2 + $0x10a0] sm:$0xff]
    %v800 = vld [vmem:[#allocation2 + $0x10a8] sm:$0xff]
    %v801 = vld [vmem:[#allocation2 + $0x10b0] sm:$0xff]
    %v802 = vld [vmem:[#allocation2 + $0x10b8] sm:$0xff]
    %v803 = vld [vmem:[#allocation2 + $0x10c0] sm:$0xff]
    %v804 = vld [vmem:[#allocation2 + $0x10c8] sm:$0xff]
    %v805 = vld [vmem:[#allocation2 + $0x10d0] sm:$0xff]
    %v806 = vld [vmem:[#allocation2 + $0x10d8] sm:$0xff]
    %v807 = vld [vmem:[#allocation2 + $0x10e0] sm:$0xff]
    %v808 = vld [vmem:[#allocation2 + $0x10e8] sm:$0xff]
    %v809 = vld [vmem:[#allocation2 + $0x10f0] sm:$0xff]
    %v810 = vld [vmem:[#allocation2 + $0x10f8] sm:$0xff]
    %v811 = vld [vmem:[#allocation2 + $0x1100] sm:$0xff]
    %v812 = vld [vmem:[#allocation2 + $0x1108] sm:$0xff]
    %v813 = vld [vmem:[#allocation2 + $0x1110] sm:$0xff]
    %v814 = vld [vmem:[#allocation2 + $0x1118] sm:$0xff]
    %v815 = vld [vmem:[#allocation2 + $0x1120] sm:$0xff]
    %v816 = vld [vmem:[#allocation2 + $0x1128] sm:$0xff]
    %v817 = vld [vmem:[#allocation2 + $0x1130] sm:$0xff]
    %v818 = vld [vmem:[#allocation2 + $0x1138] sm:$0xff]
    %v819 = vld [vmem:[#allocation2 + $0x1140] sm:$0xff]
    %v820 = vld [vmem:[#allocation2 + $0x1148] sm:$0xff]
    %v821 = vld [vmem:[#allocation2 + $0x1150] sm:$0xff]
    %v822 = vld [vmem:[#allocation2 + $0x1158] sm:$0xff]
    %v823 = vld [vmem:[#allocation2 + $0x1160] sm:$0xff]
    %v824 = vld [vmem:[#allocation2 + $0x1168] sm:$0xff]
    %v825 = vld [vmem:[#allocation2 + $0x1170] sm:$0xff]
    %v826 = vld [vmem:[#allocation2 + $0x1178] sm:$0xff]
    %v827 = vld [vmem:[#allocation2 + $0x1180] sm:$0xff]
    %v828 = vld [vmem:[#allocation2 + $0x1188] sm:$0xff]
    %v829 = vld [vmem:[#allocation2 + $0x1190] sm:$0xff]
    %v830 = vld [vmem:[#allocation2 + $0x1198] sm:$0xff]
    %v831 = vld [vmem:[#allocation2 + $0x11a0] sm:$0xff]
    %v832 = vld [vmem:[#allocation2 + $0x11a8] sm:$0xff]
    %v833 = vld [vmem:[#allocation2 + $0x11b0] sm:$0xff]
    %v834 = vld [vmem:[#allocation2 + $0x11b8] sm:$0xff]
    %v835 = vld [vmem:[#allocation2 + $0x11c0] sm:$0xff]
    %v836 = vld [vmem:[#allocation2 + $0x11c8] sm:$0xff]
    %v837 = vld [vmem:[#allocation2 + $0x11d0] sm:$0xff]
    %v838 = vld [vmem:[#allocation2 + $0x11d8] sm:$0xff]
    %v839 = vld [vmem:[#allocation2 + $0x11e0] sm:$0xff]
    %v840 = vld [vmem:[#allocation2 + $0x11e8] sm:$0xff]
    %v841 = vld [vmem:[#allocation2 + $0x11f0] sm:$0xff]
    %v842 = vld [vmem:[#allocation2 + $0x11f8] sm:$0xff]
    %v843 = vld [vmem:[#allocation5] sm:$0x3f]
    %v845 = vlaneseq
    %v846 = vshrl.u32 %v845, 7
    %v847 = vsub.s32 0, %v846
    %v848 = vrot.slane %v843, %v847
    %v849 = vlaneseq
    %v850 = vshrl.u32 %v849, 7
    %v851 = vsub.s32 1, %v850
    %v852 = vrot.slane %v843, %v851
    %v853 = vlaneseq
    %v854 = vshrl.u32 %v853, 7
    %v855 = vsub.s32 2, %v854
    %v856 = vrot.slane %v843, %v855
    %v857 = vlaneseq
    %v858 = vshrl.u32 %v857, 7
    %v859 = vsub.s32 3, %v858
    %v860 = vrot.slane %v843, %v859
    %v861 = vlaneseq
    %v862 = vshrl.u32 %v861, 7
    %v863 = vsub.s32 4, %v862
    %v864 = vrot.slane %v843, %v863
    %v865 = vlaneseq
    %v866 = vshrl.u32 %v865, 7
    %v867 = vsub.s32 5, %v866
    %v868 = vrot.slane %v843, %v867
    %v1451 = vunpack.c.l.b16 %v267
    %v1452 = vunpack.c.h.b16 %v267
    %v1453 = vunpack.c.l.b16 %v268
    %v1454 = vunpack.c.h.b16 %v268
    %v1455 = vunpack.c.l.b16 %v269
    %v1456 = vunpack.c.h.b16 %v269
    %v1457 = vunpack.c.l.b16 %v270
    %v1458 = vunpack.c.h.b16 %v270
    %v1459 = vunpack.c.l.b16 %v271
    %v1460 = vunpack.c.h.b16 %v271
    %v1461 = vunpack.c.l.b16 %v272
    %v1462 = vunpack.c.h.b16 %v272
    %v1463 = vunpack.c.l.b16 %v273
    %v1464 = vunpack.c.h.b16 %v273
    %v1465 = vunpack.c.l.b16 %v274
    %v1466 = vunpack.c.h.b16 %v274
    %v1467 = vunpack.c.l.b16 %v275
    %v1468 = vunpack.c.h.b16 %v275
    %v1469 = vunpack.c.l.b16 %v276
    %v1470 = vunpack.c.h.b16 %v276
    %v1471 = vunpack.c.l.b16 %v277
    %v1472 = vunpack.c.h.b16 %v277
    %v1473 = vunpack.c.l.b16 %v278
    %v1474 = vunpack.c.h.b16 %v278
    %v1475 = vunpack.c.l.b16 %v279
    %v1476 = vunpack.c.h.b16 %v279
    %v1477 = vunpack.c.l.b16 %v280
    %v1478 = vunpack.c.h.b16 %v280
    %v1479 = vunpack.c.l.b16 %v281
    %v1480 = vunpack.c.h.b16 %v281
    %v1481 = vunpack.c.l.b16 %v282
    %v1482 = vunpack.c.h.b16 %v282
    %v1483 = vunpack.c.l.b16 %v283
    %v1484 = vunpack.c.h.b16 %v283
    %v1485 = vunpack.c.l.b16 %v284
    %v1486 = vunpack.c.h.b16 %v284
    %v1487 = vunpack.c.l.b16 %v285
    %v1488 = vunpack.c.h.b16 %v285
    %v1489 = vunpack.c.l.b16 %v286
    %v1490 = vunpack.c.h.b16 %v286
    %v1491 = vunpack.c.l.b16 %v287
    %v1492 = vunpack.c.h.b16 %v287
    %v1493 = vunpack.c.l.b16 %v288
    %v1494 = vunpack.c.h.b16 %v288
    %v1495 = vunpack.c.l.b16 %v289
    %v1496 = vunpack.c.h.b16 %v289
    %v1497 = vunpack.c.l.b16 %v290
    %v1498 = vunpack.c.h.b16 %v290
    %v1499 = vunpack.c.l.b16 %v291
    %v1500 = vunpack.c.h.b16 %v291
    %v1501 = vunpack.c.l.b16 %v292
    %v1502 = vunpack.c.h.b16 %v292
    %v1503 = vunpack.c.l.b16 %v293
    %v1504 = vunpack.c.h.b16 %v293
    %v1505 = vunpack.c.l.b16 %v294
    %v1506 = vunpack.c.h.b16 %v294
    %v1507 = vunpack.c.l.b16 %v295
    %v1508 = vunpack.c.h.b16 %v295
    %v1509 = vunpack.c.l.b16 %v296
    %v1510 = vunpack.c.h.b16 %v296
    %v1511 = vunpack.c.l.b16 %v297
    %v1512 = vunpack.c.h.b16 %v297
    %v1513 = vunpack.c.l.b16 %v298
    %v1514 = vunpack.c.h.b16 %v298
    %v1515 = vunpack.c.l.b16 %v299
    %v1516 = vunpack.c.h.b16 %v299
    %v1517 = vunpack.c.l.b16 %v300
    %v1518 = vunpack.c.h.b16 %v300
    %v1519 = vunpack.c.l.b16 %v301
    %v1520 = vunpack.c.h.b16 %v301
    %v1521 = vunpack.c.l.b16 %v302
    %v1522 = vunpack.c.h.b16 %v302
    %v1523 = vunpack.c.l.b16 %v303
    %v1524 = vunpack.c.h.b16 %v303
    %v1525 = vunpack.c.l.b16 %v304
    %v1526 = vunpack.c.h.b16 %v304
    %v1527 = vunpack.c.l.b16 %v305
    %v1528 = vunpack.c.h.b16 %v305
    %v1529 = vunpack.c.l.b16 %v306
    %v1530 = vunpack.c.h.b16 %v306
    %v1531 = vunpack.c.l.b16 %v307
    %v1532 = vunpack.c.h.b16 %v307
    %v1533 = vunpack.c.l.b16 %v308
    %v1534 = vunpack.c.h.b16 %v308
    %v1535 = vunpack.c.l.b16 %v309
    %v1536 = vunpack.c.h.b16 %v309
    %v1537 = vunpack.c.l.b16 %v310
    %v1538 = vunpack.c.h.b16 %v310
    %v1539 = vunpack.c.l.b16 %v311
    %v1540 = vunpack.c.h.b16 %v311
    %v1541 = vunpack.c.l.b16 %v312
    %v1542 = vunpack.c.h.b16 %v312
    %v1543 = vunpack.c.l.b16 %v313
    %v1544 = vunpack.c.h.b16 %v313
    %v1545 = vunpack.c.l.b16 %v314
    %v1546 = vunpack.c.h.b16 %v314
    %v1547 = vunpack.c.l.b16 %v315
    %v1548 = vunpack.c.h.b16 %v315
    %v1549 = vunpack.c.l.b16 %v316
    %v1550 = vunpack.c.h.b16 %v316
    %v1551 = vunpack.c.l.b16 %v317
    %v1552 = vunpack.c.h.b16 %v317
    %v1553 = vunpack.c.l.b16 %v318
    %v1554 = vunpack.c.h.b16 %v318
    %v1555 = vunpack.c.l.b16 %v319
    %v1556 = vunpack.c.h.b16 %v319
    %v1557 = vunpack.c.l.b16 %v320
    %v1558 = vunpack.c.h.b16 %v320
    %v1559 = vunpack.c.l.b16 %v321
    %v1560 = vunpack.c.h.b16 %v321
    %v1561 = vunpack.c.l.b16 %v322
    %v1562 = vunpack.c.h.b16 %v322
    %v1563 = vunpack.c.l.b16 %v323
    %v1564 = vunpack.c.h.b16 %v323
    %v1565 = vunpack.c.l.b16 %v324
    %v1566 = vunpack.c.h.b16 %v324
    %v1567 = vunpack.c.l.b16 %v325
    %v1568 = vunpack.c.h.b16 %v325
    %v1569 = vunpack.c.l.b16 %v326
    %v1570 = vunpack.c.h.b16 %v326
    %v1571 = vunpack.c.l.b16 %v327
    %v1572 = vunpack.c.h.b16 %v327
    %v1573 = vunpack.c.l.b16 %v328
    %v1574 = vunpack.c.h.b16 %v328
    %v1575 = vunpack.c.l.b16 %v329
    %v1576 = vunpack.c.h.b16 %v329
    %v1577 = vunpack.c.l.b16 %v330
    %v1578 = vunpack.c.h.b16 %v330
    %v1579 = vunpack.c.l.b16 %v331
    %v1580 = vunpack.c.h.b16 %v331
    %v1581 = vunpack.c.l.b16 %v332
    %v1582 = vunpack.c.h.b16 %v332
    %v1583 = vunpack.c.l.b16 %v333
    %v1584 = vunpack.c.h.b16 %v333
    %v1585 = vunpack.c.l.b16 %v334
    %v1586 = vunpack.c.h.b16 %v334
    %v1587 = vunpack.c.l.b16 %v335
    %v1588 = vunpack.c.h.b16 %v335
    %v1589 = vunpack.c.l.b16 %v336
    %v1590 = vunpack.c.h.b16 %v336
    %v1591 = vunpack.c.l.b16 %v337
    %v1592 = vunpack.c.h.b16 %v337
    %v1593 = vunpack.c.l.b16 %v338
    %v1594 = vunpack.c.h.b16 %v338
    %v1595 = vunpack.c.l.b16 %v339
    %v1596 = vunpack.c.h.b16 %v339
    %v1597 = vunpack.c.l.b16 %v340
    %v1598 = vunpack.c.h.b16 %v340
    %v1599 = vunpack.c.l.b16 %v341
    %v1600 = vunpack.c.h.b16 %v341
    %v1601 = vunpack.c.l.b16 %v342
    %v1602 = vunpack.c.h.b16 %v342
    %v1603 = vunpack.c.l.b16 %v343
    %v1604 = vunpack.c.h.b16 %v343
    %v1605 = vunpack.c.l.b16 %v344
    %v1606 = vunpack.c.h.b16 %v344
    %v1607 = vunpack.c.l.b16 %v345
    %v1608 = vunpack.c.h.b16 %v345
    %v1609 = vunpack.c.l.b16 %v346
    %v1610 = vunpack.c.h.b16 %v346
    %v1611 = vunpack.c.l.b16 %v347
    %v1612 = vunpack.c.h.b16 %v347
    %v1613 = vunpack.c.l.b16 %v348
    %v1614 = vunpack.c.h.b16 %v348
    %v1615 = vunpack.c.l.b16 %v349
    %v1616 = vunpack.c.h.b16 %v349
    %v1617 = vunpack.c.l.b16 %v350
    %v1618 = vunpack.c.h.b16 %v350
    %v1619 = vunpack.c.l.b16 %v351
    %v1620 = vunpack.c.h.b16 %v351
    %v1621 = vunpack.c.l.b16 %v352
    %v1622 = vunpack.c.h.b16 %v352
    %v1623 = vunpack.c.l.b16 %v353
    %v1624 = vunpack.c.h.b16 %v353
    %v1625 = vunpack.c.l.b16 %v354
    %v1626 = vunpack.c.h.b16 %v354
    %v1627 = vunpack.c.l.b16 %v355
    %v1628 = vunpack.c.h.b16 %v355
    %v1629 = vunpack.c.l.b16 %v356
    %v1630 = vunpack.c.h.b16 %v356
    %v1631 = vunpack.c.l.b16 %v357
    %v1632 = vunpack.c.h.b16 %v357
    %v1633 = vunpack.c.l.b16 %v358
    %v1634 = vunpack.c.h.b16 %v358
    %v1635 = vunpack.c.l.b16 %v359
    %v1636 = vunpack.c.h.b16 %v359
    %v1637 = vunpack.c.l.b16 %v360
    %v1638 = vunpack.c.h.b16 %v360
    %v1639 = vunpack.c.l.b16 %v361
    %v1640 = vunpack.c.h.b16 %v361
    %v1641 = vunpack.c.l.b16 %v362
    %v1642 = vunpack.c.h.b16 %v362
    %v1643 = vunpack.c.l.b16 %v363
    %v1644 = vunpack.c.h.b16 %v363
    %v1645 = vunpack.c.l.b16 %v364
    %v1646 = vunpack.c.h.b16 %v364
    %v1647 = vunpack.c.l.b16 %v365
    %v1648 = vunpack.c.h.b16 %v365
    %v1649 = vunpack.c.l.b16 %v366
    %v1650 = vunpack.c.h.b16 %v366
    %v1651 = vunpack.c.l.b16 %v367
    %v1652 = vunpack.c.h.b16 %v367
    %v1653 = vunpack.c.l.b16 %v368
    %v1654 = vunpack.c.h.b16 %v368
    %v1655 = vunpack.c.l.b16 %v369
    %v1656 = vunpack.c.h.b16 %v369
    %v1657 = vunpack.c.l.b16 %v370
    %v1658 = vunpack.c.h.b16 %v370
    %v1659 = vunpack.c.l.b16 %v371
    %v1660 = vunpack.c.h.b16 %v371
    %v1661 = vunpack.c.l.b16 %v372
    %v1662 = vunpack.c.h.b16 %v372
    %v1663 = vunpack.c.l.b16 %v373
    %v1664 = vunpack.c.h.b16 %v373
    %v1665 = vunpack.c.l.b16 %v374
    %v1666 = vunpack.c.h.b16 %v374
    %v1667 = vunpack.c.l.b16 %v375
    %v1668 = vunpack.c.h.b16 %v375
    %v1669 = vunpack.c.l.b16 %v376
    %v1670 = vunpack.c.h.b16 %v376
    %v1671 = vunpack.c.l.b16 %v377
    %v1672 = vunpack.c.h.b16 %v377
    %v1673 = vunpack.c.l.b16 %v378
    %v1674 = vunpack.c.h.b16 %v378
    %v1675 = vunpack.c.l.b16 %v379
    %v1676 = vunpack.c.h.b16 %v379
    %v1677 = vunpack.c.l.b16 %v380
    %v1678 = vunpack.c.h.b16 %v380
    %v1679 = vunpack.c.l.b16 %v381
    %v1680 = vunpack.c.h.b16 %v381
    %v1681 = vunpack.c.l.b16 %v382
    %v1682 = vunpack.c.h.b16 %v382
    %v1683 = vunpack.c.l.b16 %v383
    %v1684 = vunpack.c.h.b16 %v383
    %v1685 = vunpack.c.l.b16 %v384
    %v1686 = vunpack.c.h.b16 %v384
    %v1687 = vunpack.c.l.b16 %v385
    %v1688 = vunpack.c.h.b16 %v385
    %v1689 = vunpack.c.l.b16 %v386
    %v1690 = vunpack.c.h.b16 %v386
    %v1691 = vunpack.c.l.b16 %v387
    %v1692 = vunpack.c.h.b16 %v387
    %v1693 = vunpack.c.l.b16 %v388
    %v1694 = vunpack.c.h.b16 %v388
    %v1695 = vunpack.c.l.b16 %v389
    %v1696 = vunpack.c.h.b16 %v389
    %v1697 = vunpack.c.l.b16 %v390
    %v1698 = vunpack.c.h.b16 %v390
    %v1699 = vunpack.c.l.b16 %v391
    %v1700 = vunpack.c.h.b16 %v391
    %v1701 = vunpack.c.l.b16 %v392
    %v1702 = vunpack.c.h.b16 %v392
    %v1703 = vunpack.c.l.b16 %v393
    %v1704 = vunpack.c.h.b16 %v393
    %v1705 = vunpack.c.l.b16 %v394
    %v1706 = vunpack.c.h.b16 %v394
    %v1707 = vunpack.c.l.b16 %v395
    %v1708 = vunpack.c.h.b16 %v395
    %v1709 = vunpack.c.l.b16 %v396
    %v1710 = vunpack.c.h.b16 %v396
    %v1711 = vunpack.c.l.b16 %v397
    %v1712 = vunpack.c.h.b16 %v397
    %v1713 = vunpack.c.l.b16 %v398
    %v1714 = vunpack.c.h.b16 %v398
    %v1715 = vunpack.c.l.b16 %v399
    %v1716 = vunpack.c.h.b16 %v399
    %v1717 = vunpack.c.l.b16 %v400
    %v1718 = vunpack.c.h.b16 %v400
    %v1719 = vunpack.c.l.b16 %v401
    %v1720 = vunpack.c.h.b16 %v401
    %v1721 = vunpack.c.l.b16 %v402
    %v1722 = vunpack.c.h.b16 %v402
    %v1723 = vunpack.c.l.b16 %v403
    %v1724 = vunpack.c.h.b16 %v403
    %v1725 = vunpack.c.l.b16 %v404
    %v1726 = vunpack.c.h.b16 %v404
    %v1727 = vunpack.c.l.b16 %v405
    %v1728 = vunpack.c.h.b16 %v405
    %v1729 = vunpack.c.l.b16 %v406
    %v1730 = vunpack.c.h.b16 %v406
    %v1731 = vunpack.c.l.b16 %v407
    %v1732 = vunpack.c.h.b16 %v407
    %v1733 = vunpack.c.l.b16 %v408
    %v1734 = vunpack.c.h.b16 %v408
    %v1735 = vunpack.c.l.b16 %v409
    %v1736 = vunpack.c.h.b16 %v409
    %v1737 = vunpack.c.l.b16 %v410
    %v1738 = vunpack.c.h.b16 %v410
    %v1739 = vunpack.c.l.b16 %v411
    %v1740 = vunpack.c.h.b16 %v411
    %v1741 = vunpack.c.l.b16 %v412
    %v1742 = vunpack.c.h.b16 %v412
    %v1743 = vunpack.c.l.b16 %v413
    %v1744 = vunpack.c.h.b16 %v413
    %v1745 = vunpack.c.l.b16 %v414
    %v1746 = vunpack.c.h.b16 %v414
    %v1747 = vunpack.c.l.b16 %v415
    %v1748 = vunpack.c.h.b16 %v415
    %v1749 = vunpack.c.l.b16 %v416
    %v1750 = vunpack.c.h.b16 %v416
    %v1751 = vunpack.c.l.b16 %v417
    %v1752 = vunpack.c.h.b16 %v417
    %v1753 = vunpack.c.l.b16 %v418
    %v1754 = vunpack.c.h.b16 %v418
    %v1755 = vunpack.c.l.b16 %v419
    %v1756 = vunpack.c.h.b16 %v419
    %v1757 = vunpack.c.l.b16 %v420
    %v1758 = vunpack.c.h.b16 %v420
    %v1759 = vunpack.c.l.b16 %v421
    %v1760 = vunpack.c.h.b16 %v421
    %v1761 = vunpack.c.l.b16 %v422
    %v1762 = vunpack.c.h.b16 %v422
    %v1763 = vunpack.c.l.b16 %v423
    %v1764 = vunpack.c.h.b16 %v423
    %v1765 = vunpack.c.l.b16 %v424
    %v1766 = vunpack.c.h.b16 %v424
    %v1767 = vunpack.c.l.b16 %v425
    %v1768 = vunpack.c.h.b16 %v425
    %v1769 = vunpack.c.l.b16 %v426
    %v1770 = vunpack.c.h.b16 %v426
    %v1771 = vunpack.c.l.b16 %v427
    %v1772 = vunpack.c.h.b16 %v427
    %v1773 = vunpack.c.l.b16 %v428
    %v1774 = vunpack.c.h.b16 %v428
    %v1775 = vunpack.c.l.b16 %v429
    %v1776 = vunpack.c.h.b16 %v429
    %v1777 = vunpack.c.l.b16 %v430
    %v1778 = vunpack.c.h.b16 %v430
    %v1779 = vunpack.c.l.b16 %v431
    %v1780 = vunpack.c.h.b16 %v431
    %v1781 = vunpack.c.l.b16 %v432
    %v1782 = vunpack.c.h.b16 %v432
    %v1783 = vunpack.c.l.b16 %v433
    %v1784 = vunpack.c.h.b16 %v433
    %v1785 = vunpack.c.l.b16 %v434
    %v1786 = vunpack.c.h.b16 %v434
    %v1787 = vunpack.c.l.b16 %v435
    %v1788 = vunpack.c.h.b16 %v435
    %v1789 = vunpack.c.l.b16 %v436
    %v1790 = vunpack.c.h.b16 %v436
    %v1791 = vunpack.c.l.b16 %v437
    %v1792 = vunpack.c.h.b16 %v437
    %v1793 = vunpack.c.l.b16 %v438
    %v1794 = vunpack.c.h.b16 %v438
    %v1795 = vunpack.c.l.b16 %v439
    %v1796 = vunpack.c.h.b16 %v439
    %v1797 = vunpack.c.l.b16 %v440
    %v1798 = vunpack.c.h.b16 %v440
    %v1799 = vunpack.c.l.b16 %v441
    %v1800 = vunpack.c.h.b16 %v441
    %v1801 = vunpack.c.l.b16 %v442
    %v1802 = vunpack.c.h.b16 %v442
    %v1803 = vunpack.c.l.b16 %v443
    %v1804 = vunpack.c.h.b16 %v443
    %v1805 = vunpack.c.l.b16 %v444
    %v1806 = vunpack.c.h.b16 %v444
    %v1807 = vunpack.c.l.b16 %v445
    %v1808 = vunpack.c.h.b16 %v445
    %v1809 = vunpack.c.l.b16 %v446
    %v1810 = vunpack.c.h.b16 %v446
    %v1811 = vunpack.c.l.b16 %v447
    %v1812 = vunpack.c.h.b16 %v447
    %v1813 = vunpack.c.l.b16 %v448
    %v1814 = vunpack.c.h.b16 %v448
    %v1815 = vunpack.c.l.b16 %v449
    %v1816 = vunpack.c.h.b16 %v449
    %v1817 = vunpack.c.l.b16 %v450
    %v1818 = vunpack.c.h.b16 %v450
    %v1819 = vunpack.c.l.b16 %v451
    %v1820 = vunpack.c.h.b16 %v451
    %v1821 = vunpack.c.l.b16 %v452
    %v1822 = vunpack.c.h.b16 %v452
    %v1823 = vunpack.c.l.b16 %v453
    %v1824 = vunpack.c.h.b16 %v453
    %v1825 = vunpack.c.l.b16 %v454
    %v1826 = vunpack.c.h.b16 %v454
    %v1827 = vunpack.c.l.b16 %v455
    %v1828 = vunpack.c.h.b16 %v455
    %v1829 = vunpack.c.l.b16 %v456
    %v1830 = vunpack.c.h.b16 %v456
    %v1831 = vunpack.c.l.b16 %v457
    %v1832 = vunpack.c.h.b16 %v457
    %v1833 = vunpack.c.l.b16 %v458
    %v1834 = vunpack.c.h.b16 %v458
    %v1835 = vunpack.c.l.b16 %v459
    %v1836 = vunpack.c.h.b16 %v459
    %v1837 = vunpack.c.l.b16 %v460
    %v1838 = vunpack.c.h.b16 %v460
    %v1839 = vunpack.c.l.b16 %v461
    %v1840 = vunpack.c.h.b16 %v461
    %v1841 = vunpack.c.l.b16 %v462
    %v1842 = vunpack.c.h.b16 %v462
    %v1843 = vunpack.c.l.b16 %v463
    %v1844 = vunpack.c.h.b16 %v463
    %v1845 = vunpack.c.l.b16 %v464
    %v1846 = vunpack.c.h.b16 %v464
    %v1847 = vunpack.c.l.b16 %v465
    %v1848 = vunpack.c.h.b16 %v465
    %v1849 = vunpack.c.l.b16 %v466
    %v1850 = vunpack.c.h.b16 %v466
    %v1851 = vunpack.c.l.b16 %v467
    %v1852 = vunpack.c.h.b16 %v467
    %v1853 = vunpack.c.l.b16 %v468
    %v1854 = vunpack.c.h.b16 %v468
    %v1855 = vunpack.c.l.b16 %v469
    %v1856 = vunpack.c.h.b16 %v469
    %v1857 = vunpack.c.l.b16 %v470
    %v1858 = vunpack.c.h.b16 %v470
    %v1859 = vunpack.c.l.b16 %v471
    %v1860 = vunpack.c.h.b16 %v471
    %v1861 = vunpack.c.l.b16 %v472
    %v1862 = vunpack.c.h.b16 %v472
    %v1863 = vunpack.c.l.b16 %v473
    %v1864 = vunpack.c.h.b16 %v473
    %v1865 = vunpack.c.l.b16 %v474
    %v1866 = vunpack.c.h.b16 %v474
    %v1867 = vunpack.c.l.b16 %v475
    %v1868 = vunpack.c.h.b16 %v475
    %v1869 = vunpack.c.l.b16 %v476
    %v1870 = vunpack.c.h.b16 %v476
    %v1871 = vunpack.c.l.b16 %v477
    %v1872 = vunpack.c.h.b16 %v477
    %v1873 = vunpack.c.l.b16 %v478
    %v1874 = vunpack.c.h.b16 %v478
    %v1875 = vunpack.c.l.b16 %v479
    %v1876 = vunpack.c.h.b16 %v479
    %v1877 = vunpack.c.l.b16 %v480
    %v1878 = vunpack.c.h.b16 %v480
    %v1879 = vunpack.c.l.b16 %v481
    %v1880 = vunpack.c.h.b16 %v481
    %v1881 = vunpack.c.l.b16 %v482
    %v1882 = vunpack.c.h.b16 %v482
    %v1883 = vunpack.c.l.b16 %v483
    %v1884 = vunpack.c.h.b16 %v483
    %v1885 = vunpack.c.l.b16 %v484
    %v1886 = vunpack.c.h.b16 %v484
    %v1887 = vunpack.c.l.b16 %v485
    %v1888 = vunpack.c.h.b16 %v485
    %v1889 = vunpack.c.l.b16 %v486
    %v1890 = vunpack.c.h.b16 %v486
    %v1891 = vunpack.c.l.b16 %v487
    %v1892 = vunpack.c.h.b16 %v487
    %v1893 = vunpack.c.l.b16 %v488
    %v1894 = vunpack.c.h.b16 %v488
    %v1895 = vunpack.c.l.b16 %v489
    %v1896 = vunpack.c.h.b16 %v489
    %v1897 = vunpack.c.l.b16 %v490
    %v1898 = vunpack.c.h.b16 %v490
    %v1899 = vunpack.c.l.b16 %v491
    %v1900 = vunpack.c.h.b16 %v491
    %v1901 = vunpack.c.l.b16 %v492
    %v1902 = vunpack.c.h.b16 %v492
    %v1903 = vunpack.c.l.b16 %v493
    %v1904 = vunpack.c.h.b16 %v493
    %v1905 = vunpack.c.l.b16 %v494
    %v1906 = vunpack.c.h.b16 %v494
    %v1907 = vunpack.c.l.b16 %v495
    %v1908 = vunpack.c.h.b16 %v495
    %v1909 = vunpack.c.l.b16 %v496
    %v1910 = vunpack.c.h.b16 %v496
    %v1911 = vunpack.c.l.b16 %v497
    %v1912 = vunpack.c.h.b16 %v497
    %v1913 = vunpack.c.l.b16 %v498
    %v1914 = vunpack.c.h.b16 %v498
    %v1915 = vunpack.c.l.b16 %v499
    %v1916 = vunpack.c.h.b16 %v499
    %v1917 = vunpack.c.l.b16 %v500
    %v1918 = vunpack.c.h.b16 %v500
    %v1919 = vunpack.c.l.b16 %v501
    %v1920 = vunpack.c.h.b16 %v501
    %v1921 = vunpack.c.l.b16 %v502
    %v1922 = vunpack.c.h.b16 %v502
    %v1923 = vunpack.c.l.b16 %v503
    %v1924 = vunpack.c.h.b16 %v503
    %v1925 = vunpack.c.l.b16 %v504
    %v1926 = vunpack.c.h.b16 %v504
    %v1927 = vunpack.c.l.b16 %v505
    %v1928 = vunpack.c.h.b16 %v505
    %v1929 = vunpack.c.l.b16 %v506
    %v1930 = vunpack.c.h.b16 %v506
    %v1931 = vunpack.c.l.b16 %v507
    %v1932 = vunpack.c.h.b16 %v507
    %v1933 = vunpack.c.l.b16 %v508
    %v1934 = vunpack.c.h.b16 %v508
    %v1935 = vunpack.c.l.b16 %v509
    %v1936 = vunpack.c.h.b16 %v509
    %v1937 = vunpack.c.l.b16 %v510
    %v1938 = vunpack.c.h.b16 %v510
    %v1939 = vunpack.c.l.b16 %v511
    %v1940 = vunpack.c.h.b16 %v511
    %v1941 = vunpack.c.l.b16 %v512
    %v1942 = vunpack.c.h.b16 %v512
    %v1943 = vunpack.c.l.b16 %v513
    %v1944 = vunpack.c.h.b16 %v513
    %v1945 = vunpack.c.l.b16 %v514
    %v1946 = vunpack.c.h.b16 %v514
    %v1947 = vunpack.c.l.b16 %v515
    %v1948 = vunpack.c.h.b16 %v515
    %v1949 = vunpack.c.l.b16 %v516
    %v1950 = vunpack.c.h.b16 %v516
    %v1951 = vunpack.c.l.b16 %v517
    %v1952 = vunpack.c.h.b16 %v517
    %v1953 = vunpack.c.l.b16 %v518
    %v1954 = vunpack.c.h.b16 %v518
    %v1955 = vunpack.c.l.b16 %v519
    %v1956 = vunpack.c.h.b16 %v519
    %v1957 = vunpack.c.l.b16 %v520
    %v1958 = vunpack.c.h.b16 %v520
    %v1959 = vunpack.c.l.b16 %v521
    %v1960 = vunpack.c.h.b16 %v521
    %v1961 = vunpack.c.l.b16 %v522
    %v1962 = vunpack.c.h.b16 %v522
    %v1963 = vunpack.c.l.b16 %v523
    %v1964 = vunpack.c.h.b16 %v523
    %v1965 = vunpack.c.l.b16 %v524
    %v1966 = vunpack.c.h.b16 %v524
    %v1967 = vunpack.c.l.b16 %v525
    %v1968 = vunpack.c.h.b16 %v525
    %v1969 = vunpack.c.l.b16 %v526
    %v1970 = vunpack.c.h.b16 %v526
    %v1971 = vunpack.c.l.b16 %v527
    %v1972 = vunpack.c.h.b16 %v527
    %v1973 = vunpack.c.l.b16 %v528
    %v1974 = vunpack.c.h.b16 %v528
    %v1975 = vunpack.c.l.b16 %v529
    %v1976 = vunpack.c.h.b16 %v529
    %v1977 = vunpack.c.l.b16 %v530
    %v1978 = vunpack.c.h.b16 %v530
    %v1979 = vunpack.c.l.b16 %v531
    %v1980 = vunpack.c.h.b16 %v531
    %v1981 = vunpack.c.l.b16 %v532
    %v1982 = vunpack.c.h.b16 %v532
    %v1983 = vunpack.c.l.b16 %v533
    %v1984 = vunpack.c.h.b16 %v533
    %v1985 = vunpack.c.l.b16 %v534
    %v1986 = vunpack.c.h.b16 %v534
    %v1987 = vunpack.c.l.b16 %v535
    %v1988 = vunpack.c.h.b16 %v535
    %v1989 = vunpack.c.l.b16 %v536
    %v1990 = vunpack.c.h.b16 %v536
    %v1991 = vunpack.c.l.b16 %v537
    %v1992 = vunpack.c.h.b16 %v537
    %v1993 = vunpack.c.l.b16 %v538
    %v1994 = vunpack.c.h.b16 %v538
    %v1995 = vunpack.c.l.b16 %v539
    %v1996 = vunpack.c.h.b16 %v539
    %v1997 = vunpack.c.l.b16 %v540
    %v1998 = vunpack.c.h.b16 %v540
    %v1999 = vunpack.c.l.b16 %v541
    %v2000 = vunpack.c.h.b16 %v541
    %v2001 = vunpack.c.l.b16 %v542
    %v2002 = vunpack.c.h.b16 %v542
    %v2003 = vunpack.c.l.b16 %v543
    %v2004 = vunpack.c.h.b16 %v543
    %v2005 = vunpack.c.l.b16 %v544
    %v2006 = vunpack.c.h.b16 %v544
    %v2007 = vunpack.c.l.b16 %v545
    %v2008 = vunpack.c.h.b16 %v545
    %v2009 = vunpack.c.l.b16 %v546
    %v2010 = vunpack.c.h.b16 %v546
    %v2011 = vunpack.c.l.b16 %v547
    %v2012 = vunpack.c.h.b16 %v547
    %v2013 = vunpack.c.l.b16 %v548
    %v2014 = vunpack.c.h.b16 %v548
    %v2015 = vunpack.c.l.b16 %v549
    %v2016 = vunpack.c.h.b16 %v549
    %v2017 = vunpack.c.l.b16 %v550
    %v2018 = vunpack.c.h.b16 %v550
    %v2019 = vunpack.c.l.b16 %v551
    %v2020 = vunpack.c.h.b16 %v551
    %v2021 = vunpack.c.l.b16 %v552
    %v2022 = vunpack.c.h.b16 %v552
    %v2023 = vunpack.c.l.b16 %v553
    %v2024 = vunpack.c.h.b16 %v553
    %v2025 = vunpack.c.l.b16 %v554
    %v2026 = vunpack.c.h.b16 %v554
    %v2027 = vunpack.c.l.b16 %v555
    %v2028 = vunpack.c.h.b16 %v555
    %v2029 = vunpack.c.l.b16 %v556
    %v2030 = vunpack.c.h.b16 %v556
    %v2031 = vunpack.c.l.b16 %v557
    %v2032 = vunpack.c.h.b16 %v557
    %v2033 = vunpack.c.l.b16 %v558
    %v2034 = vunpack.c.h.b16 %v558
    %v2035 = vunpack.c.l.b16 %v559
    %v2036 = vunpack.c.h.b16 %v559
    %v2037 = vunpack.c.l.b16 %v560
    %v2038 = vunpack.c.h.b16 %v560
    %v2039 = vunpack.c.l.b16 %v561
    %v2040 = vunpack.c.h.b16 %v561
    %v2041 = vunpack.c.l.b16 %v562
    %v2042 = vunpack.c.h.b16 %v562
    %v2043 = vunpack.c.l.b16 %v563
    %v2044 = vunpack.c.h.b16 %v563
    %v2045 = vunpack.c.l.b16 %v564
    %v2046 = vunpack.c.h.b16 %v564
    %v2047 = vunpack.c.l.b16 %v565
    %v2048 = vunpack.c.h.b16 %v565
    %v2049 = vunpack.c.l.b16 %v566
    %v2050 = vunpack.c.h.b16 %v566
    %v2051 = vunpack.c.l.b16 %v567
    %v2052 = vunpack.c.h.b16 %v567
    %v2053 = vunpack.c.l.b16 %v568
    %v2054 = vunpack.c.h.b16 %v568
    %v2055 = vunpack.c.l.b16 %v569
    %v2056 = vunpack.c.h.b16 %v569
    %v2057 = vunpack.c.l.b16 %v570
    %v2058 = vunpack.c.h.b16 %v570
    %v2059 = vunpack.c.l.b16 %v571
    %v2060 = vunpack.c.h.b16 %v571
    %v2061 = vunpack.c.l.b16 %v572
    %v2062 = vunpack.c.h.b16 %v572
    %v2063 = vunpack.c.l.b16 %v573
    %v2064 = vunpack.c.h.b16 %v573
    %v2065 = vunpack.c.l.b16 %v574
    %v2066 = vunpack.c.h.b16 %v574
    %v2067 = vunpack.c.l.b16 %v575
    %v2068 = vunpack.c.h.b16 %v575
    %v2069 = vunpack.c.l.b16 %v576
    %v2070 = vunpack.c.h.b16 %v576
    %v2071 = vunpack.c.l.b16 %v577
    %v2072 = vunpack.c.h.b16 %v577
    %v2073 = vunpack.c.l.b16 %v578
    %v2074 = vunpack.c.h.b16 %v578
    %v2075 = vunpack.c.l.b16 %v579
    %v2076 = vunpack.c.h.b16 %v579
    %v2077 = vunpack.c.l.b16 %v580
    %v2078 = vunpack.c.h.b16 %v580
    %v2079 = vunpack.c.l.b16 %v581
    %v2080 = vunpack.c.h.b16 %v581
    %v2081 = vunpack.c.l.b16 %v582
    %v2082 = vunpack.c.h.b16 %v582
    %v2083 = vunpack.c.l.b16 %v583
    %v2084 = vunpack.c.h.b16 %v583
    %v2085 = vunpack.c.l.b16 %v584
    %v2086 = vunpack.c.h.b16 %v584
    %v2087 = vunpack.c.l.b16 %v585
    %v2088 = vunpack.c.h.b16 %v585
    %v2089 = vunpack.c.l.b16 %v586
    %v2090 = vunpack.c.h.b16 %v586
    %v2091 = vunpack.c.l.b16 %v587
    %v2092 = vunpack.c.h.b16 %v587
    %v2093 = vunpack.c.l.b16 %v588
    %v2094 = vunpack.c.h.b16 %v588
    %v2095 = vunpack.c.l.b16 %v589
    %v2096 = vunpack.c.h.b16 %v589
    %v2097 = vunpack.c.l.b16 %v590
    %v2098 = vunpack.c.h.b16 %v590
    %v2099 = vunpack.c.l.b16 %v591
    %v2100 = vunpack.c.h.b16 %v591
    %v2101 = vunpack.c.l.b16 %v592
    %v2102 = vunpack.c.h.b16 %v592
    %v2103 = vunpack.c.l.b16 %v593
    %v2104 = vunpack.c.h.b16 %v593
    %v2105 = vunpack.c.l.b16 %v594
    %v2106 = vunpack.c.h.b16 %v594
    %v2107 = vunpack.c.l.b16 %v595
    %v2108 = vunpack.c.h.b16 %v595
    %v2109 = vunpack.c.l.b16 %v596
    %v2110 = vunpack.c.h.b16 %v596
    %v2111 = vunpack.c.l.b16 %v597
    %v2112 = vunpack.c.h.b16 %v597
    %v2113 = vunpack.c.l.b16 %v598
    %v2114 = vunpack.c.h.b16 %v598
    %v2115 = vunpack.c.l.b16 %v599
    %v2116 = vunpack.c.h.b16 %v599
    %v2117 = vunpack.c.l.b16 %v600
    %v2118 = vunpack.c.h.b16 %v600
    %v2119 = vunpack.c.l.b16 %v601
    %v2120 = vunpack.c.h.b16 %v601
    %v2121 = vunpack.c.l.b16 %v602
    %v2122 = vunpack.c.h.b16 %v602
    %v2123 = vunpack.c.l.b16 %v603
    %v2124 = vunpack.c.h.b16 %v603
    %v2125 = vunpack.c.l.b16 %v604
    %v2126 = vunpack.c.h.b16 %v604
    %v2127 = vunpack.c.l.b16 %v605
    %v2128 = vunpack.c.h.b16 %v605
    %v2129 = vunpack.c.l.b16 %v606
    %v2130 = vunpack.c.h.b16 %v606
    %v2131 = vunpack.c.l.b16 %v607
    %v2132 = vunpack.c.h.b16 %v607
    %v2133 = vunpack.c.l.b16 %v608
    %v2134 = vunpack.c.h.b16 %v608
    %v2135 = vunpack.c.l.b16 %v609
    %v2136 = vunpack.c.h.b16 %v609
    %v2137 = vunpack.c.l.b16 %v610
    %v2138 = vunpack.c.h.b16 %v610
    %v2139 = vunpack.c.l.b16 %v611
    %v2140 = vunpack.c.h.b16 %v611
    %v2141 = vunpack.c.l.b16 %v612
    %v2142 = vunpack.c.h.b16 %v612
    %v2143 = vunpack.c.l.b16 %v613
    %v2144 = vunpack.c.h.b16 %v613
    %v2145 = vunpack.c.l.b16 %v614
    %v2146 = vunpack.c.h.b16 %v614
    %v2147 = vunpack.c.l.b16 %v615
    %v2148 = vunpack.c.h.b16 %v615
    %v2149 = vunpack.c.l.b16 %v616
    %v2150 = vunpack.c.h.b16 %v616
    %v2151 = vunpack.c.l.b16 %v617
    %v2152 = vunpack.c.h.b16 %v617
    %v2153 = vunpack.c.l.b16 %v618
    %v2154 = vunpack.c.h.b16 %v618
    %v2155 = vunpack.c.l.b16 %v619
    %v2156 = vunpack.c.h.b16 %v619
    %v2157 = vunpack.c.l.b16 %v620
    %v2158 = vunpack.c.h.b16 %v620
    %v2159 = vunpack.c.l.b16 %v621
    %v2160 = vunpack.c.h.b16 %v621
    %v2161 = vunpack.c.l.b16 %v622
    %v2162 = vunpack.c.h.b16 %v622
    %v2163 = vunpack.c.l.b16 %v623
    %v2164 = vunpack.c.h.b16 %v623
    %v2165 = vunpack.c.l.b16 %v624
    %v2166 = vunpack.c.h.b16 %v624
    %v2167 = vunpack.c.l.b16 %v625
    %v2168 = vunpack.c.h.b16 %v625
    %v2169 = vunpack.c.l.b16 %v626
    %v2170 = vunpack.c.h.b16 %v626
    %v2171 = vunpack.c.l.b16 %v627
    %v2172 = vunpack.c.h.b16 %v627
    %v2173 = vunpack.c.l.b16 %v628
    %v2174 = vunpack.c.h.b16 %v628
    %v2175 = vunpack.c.l.b16 %v629
    %v2176 = vunpack.c.h.b16 %v629
    %v2177 = vunpack.c.l.b16 %v630
    %v2178 = vunpack.c.h.b16 %v630
    %v2179 = vunpack.c.l.b16 %v631
    %v2180 = vunpack.c.h.b16 %v631
    %v2181 = vunpack.c.l.b16 %v632
    %v2182 = vunpack.c.h.b16 %v632
    %v2183 = vunpack.c.l.b16 %v633
    %v2184 = vunpack.c.h.b16 %v633
    %v2185 = vunpack.c.l.b16 %v634
    %v2186 = vunpack.c.h.b16 %v634
    %v2187 = vunpack.c.l.b16 %v635
    %v2188 = vunpack.c.h.b16 %v635
    %v2189 = vunpack.c.l.b16 %v636
    %v2190 = vunpack.c.h.b16 %v636
    %v2191 = vunpack.c.l.b16 %v637
    %v2192 = vunpack.c.h.b16 %v637
    %v2193 = vunpack.c.l.b16 %v638
    %v2194 = vunpack.c.h.b16 %v638
    %v2195 = vunpack.c.l.b16 %v639
    %v2196 = vunpack.c.h.b16 %v639
    %v2197 = vunpack.c.l.b16 %v640
    %v2198 = vunpack.c.h.b16 %v640
    %v2199 = vunpack.c.l.b16 %v641
    %v2200 = vunpack.c.h.b16 %v641
    %v2201 = vunpack.c.l.b16 %v642
    %v2202 = vunpack.c.h.b16 %v642
    %v2203 = vunpack.c.l.b16 %v643
    %v2204 = vunpack.c.h.b16 %v643
    %v2205 = vunpack.c.l.b16 %v644
    %v2206 = vunpack.c.h.b16 %v644
    %v2207 = vunpack.c.l.b16 %v645
    %v2208 = vunpack.c.h.b16 %v645
    %v2209 = vunpack.c.l.b16 %v646
    %v2210 = vunpack.c.h.b16 %v646
    %v2211 = vunpack.c.l.b16 %v647
    %v2212 = vunpack.c.h.b16 %v647
    %v2213 = vunpack.c.l.b16 %v648
    %v2214 = vunpack.c.h.b16 %v648
    %v2215 = vunpack.c.l.b16 %v649
    %v2216 = vunpack.c.h.b16 %v649
    %v2217 = vunpack.c.l.b16 %v650
    %v2218 = vunpack.c.h.b16 %v650
    %v2219 = vunpack.c.l.b16 %v651
    %v2220 = vunpack.c.h.b16 %v651
    %v2221 = vunpack.c.l.b16 %v652
    %v2222 = vunpack.c.h.b16 %v652
    %v2223 = vunpack.c.l.b16 %v653
    %v2224 = vunpack.c.h.b16 %v653
    %v2225 = vunpack.c.l.b16 %v654
    %v2226 = vunpack.c.h.b16 %v654
    %v2227 = vunpack.c.l.b16 %v655
    %v2228 = vunpack.c.h.b16 %v655
    %v2229 = vunpack.c.l.b16 %v656
    %v2230 = vunpack.c.h.b16 %v656
    %v2231 = vunpack.c.l.b16 %v657
    %v2232 = vunpack.c.h.b16 %v657
    %v2233 = vunpack.c.l.b16 %v658
    %v2234 = vunpack.c.h.b16 %v658
    %v2235 = vunpack.c.l.b16 %v659
    %v2236 = vunpack.c.h.b16 %v659
    %v2237 = vunpack.c.l.b16 %v660
    %v2238 = vunpack.c.h.b16 %v660
    %v2239 = vunpack.c.l.b16 %v661
    %v2240 = vunpack.c.h.b16 %v661
    %v2241 = vunpack.c.l.b16 %v662
    %v2242 = vunpack.c.h.b16 %v662
    %v2243 = vunpack.c.l.b16 %v663
    %v2244 = vunpack.c.h.b16 %v663
    %v2245 = vunpack.c.l.b16 %v664
    %v2246 = vunpack.c.h.b16 %v664
    %v2247 = vunpack.c.l.b16 %v665
    %v2248 = vunpack.c.h.b16 %v665
    %v2249 = vunpack.c.l.b16 %v666
    %v2250 = vunpack.c.h.b16 %v666
    %v2251 = vunpack.c.l.b16 %v667
    %v2252 = vunpack.c.h.b16 %v667
    %v2253 = vunpack.c.l.b16 %v668
    %v2254 = vunpack.c.h.b16 %v668
    %v2255 = vunpack.c.l.b16 %v669
    %v2256 = vunpack.c.h.b16 %v669
    %v2257 = vunpack.c.l.b16 %v670
    %v2258 = vunpack.c.h.b16 %v670
    %v2259 = vunpack.c.l.b16 %v671
    %v2260 = vunpack.c.h.b16 %v671
    %v2261 = vunpack.c.l.b16 %v672
    %v2262 = vunpack.c.h.b16 %v672
    %v2263 = vunpack.c.l.b16 %v673
    %v2264 = vunpack.c.h.b16 %v673
    %v2265 = vunpack.c.l.b16 %v674
    %v2266 = vunpack.c.h.b16 %v674
    %v2267 = vunpack.c.l.b16 %v675
    %v2268 = vunpack.c.h.b16 %v675
    %v2269 = vunpack.c.l.b16 %v676
    %v2270 = vunpack.c.h.b16 %v676
    %v2271 = vunpack.c.l.b16 %v677
    %v2272 = vunpack.c.h.b16 %v677
    %v2273 = vunpack.c.l.b16 %v678
    %v2274 = vunpack.c.h.b16 %v678
    %v2275 = vunpack.c.l.b16 %v679
    %v2276 = vunpack.c.h.b16 %v679
    %v2277 = vunpack.c.l.b16 %v680
    %v2278 = vunpack.c.h.b16 %v680
    %v2279 = vunpack.c.l.b16 %v681
    %v2280 = vunpack.c.h.b16 %v681
    %v2281 = vunpack.c.l.b16 %v682
    %v2282 = vunpack.c.h.b16 %v682
    %v2283 = vunpack.c.l.b16 %v683
    %v2284 = vunpack.c.h.b16 %v683
    %v2285 = vunpack.c.l.b16 %v684
    %v2286 = vunpack.c.h.b16 %v684
    %v2287 = vunpack.c.l.b16 %v685
    %v2288 = vunpack.c.h.b16 %v685
    %v2289 = vunpack.c.l.b16 %v686
    %v2290 = vunpack.c.h.b16 %v686
    %v2291 = vunpack.c.l.b16 %v687
    %v2292 = vunpack.c.h.b16 %v687
    %v2293 = vunpack.c.l.b16 %v688
    %v2294 = vunpack.c.h.b16 %v688
    %v2295 = vunpack.c.l.b16 %v689
    %v2296 = vunpack.c.h.b16 %v689
    %v2297 = vunpack.c.l.b16 %v690
    %v2298 = vunpack.c.h.b16 %v690
    %v2299 = vunpack.c.l.b16 %v691
    %v2300 = vunpack.c.h.b16 %v691
    %v2301 = vunpack.c.l.b16 %v692
    %v2302 = vunpack.c.h.b16 %v692
    %v2303 = vunpack.c.l.b16 %v693
    %v2304 = vunpack.c.h.b16 %v693
    %v2305 = vunpack.c.l.b16 %v694
    %v2306 = vunpack.c.h.b16 %v694
    %v2307 = vunpack.c.l.b16 %v695
    %v2308 = vunpack.c.h.b16 %v695
    %v2309 = vunpack.c.l.b16 %v696
    %v2310 = vunpack.c.h.b16 %v696
    %v2311 = vunpack.c.l.b16 %v697
    %v2312 = vunpack.c.h.b16 %v697
    %v2313 = vunpack.c.l.b16 %v698
    %v2314 = vunpack.c.h.b16 %v698
    %v2315 = vunpack.c.l.b16 %v699
    %v2316 = vunpack.c.h.b16 %v699
    %v2317 = vunpack.c.l.b16 %v700
    %v2318 = vunpack.c.h.b16 %v700
    %v2319 = vunpack.c.l.b16 %v701
    %v2320 = vunpack.c.h.b16 %v701
    %v2321 = vunpack.c.l.b16 %v702
    %v2322 = vunpack.c.h.b16 %v702
    %v2323 = vunpack.c.l.b16 %v703
    %v2324 = vunpack.c.h.b16 %v703
    %v2325 = vunpack.c.l.b16 %v704
    %v2326 = vunpack.c.h.b16 %v704
    %v2327 = vunpack.c.l.b16 %v705
    %v2328 = vunpack.c.h.b16 %v705
    %v2329 = vunpack.c.l.b16 %v706
    %v2330 = vunpack.c.h.b16 %v706
    %v2331 = vunpack.c.l.b16 %v707
    %v2332 = vunpack.c.h.b16 %v707
    %v2333 = vunpack.c.l.b16 %v708
    %v2334 = vunpack.c.h.b16 %v708
    %v2335 = vunpack.c.l.b16 %v709
    %v2336 = vunpack.c.h.b16 %v709
    %v2337 = vunpack.c.l.b16 %v710
    %v2338 = vunpack.c.h.b16 %v710
    %v2339 = vunpack.c.l.b16 %v711
    %v2340 = vunpack.c.h.b16 %v711
    %v2341 = vunpack.c.l.b16 %v712
    %v2342 = vunpack.c.h.b16 %v712
    %v2343 = vunpack.c.l.b16 %v713
    %v2344 = vunpack.c.h.b16 %v713
    %v2345 = vunpack.c.l.b16 %v714
    %v2346 = vunpack.c.h.b16 %v714
    %v2347 = vunpack.c.l.b16 %v715
    %v2348 = vunpack.c.h.b16 %v715
    %v2349 = vunpack.c.l.b16 %v716
    %v2350 = vunpack.c.h.b16 %v716
    %v2351 = vunpack.c.l.b16 %v717
    %v2352 = vunpack.c.h.b16 %v717
    %v2353 = vunpack.c.l.b16 %v718
    %v2354 = vunpack.c.h.b16 %v718
    %v2355 = vunpack.c.l.b16 %v719
    %v2356 = vunpack.c.h.b16 %v719
    %v2357 = vunpack.c.l.b16 %v720
    %v2358 = vunpack.c.h.b16 %v720
    %v2359 = vunpack.c.l.b16 %v721
    %v2360 = vunpack.c.h.b16 %v721
    %v2361 = vunpack.c.l.b16 %v722
    %v2362 = vunpack.c.h.b16 %v722
    %v2363 = vunpack.c.l.b16 %v723
    %v2364 = vunpack.c.h.b16 %v723
    %v2365 = vunpack.c.l.b16 %v724
    %v2366 = vunpack.c.h.b16 %v724
    %v2367 = vunpack.c.l.b16 %v725
    %v2368 = vunpack.c.h.b16 %v725
    %v2369 = vunpack.c.l.b16 %v726
    %v2370 = vunpack.c.h.b16 %v726
    %v2371 = vunpack.c.l.b16 %v727
    %v2372 = vunpack.c.h.b16 %v727
    %v2373 = vunpack.c.l.b16 %v728
    %v2374 = vunpack.c.h.b16 %v728
    %v2375 = vunpack.c.l.b16 %v729
    %v2376 = vunpack.c.h.b16 %v729
    %v2377 = vunpack.c.l.b16 %v730
    %v2378 = vunpack.c.h.b16 %v730
    %v2379 = vunpack.c.l.b16 %v731
    %v2380 = vunpack.c.h.b16 %v731
    %v2381 = vunpack.c.l.b16 %v732
    %v2382 = vunpack.c.h.b16 %v732
    %v2383 = vunpack.c.l.b16 %v733
    %v2384 = vunpack.c.h.b16 %v733
    %v2385 = vunpack.c.l.b16 %v734
    %v2386 = vunpack.c.h.b16 %v734
    %v2387 = vunpack.c.l.b16 %v735
    %v2388 = vunpack.c.h.b16 %v735
    %v2389 = vunpack.c.l.b16 %v736
    %v2390 = vunpack.c.h.b16 %v736
    %v2391 = vunpack.c.l.b16 %v737
    %v2392 = vunpack.c.h.b16 %v737
    %v2393 = vunpack.c.l.b16 %v738
    %v2394 = vunpack.c.h.b16 %v738
    %v2395 = vunpack.c.l.b16 %v739
    %v2396 = vunpack.c.h.b16 %v739
    %v2397 = vunpack.c.l.b16 %v740
    %v2398 = vunpack.c.h.b16 %v740
    %v2399 = vunpack.c.l.b16 %v741
    %v2400 = vunpack.c.h.b16 %v741
    %v2401 = vunpack.c.l.b16 %v742
    %v2402 = vunpack.c.h.b16 %v742
    %v2403 = vunpack.c.l.b16 %v743
    %v2404 = vunpack.c.h.b16 %v743
    %v2405 = vunpack.c.l.b16 %v744
    %v2406 = vunpack.c.h.b16 %v744
    %v2407 = vunpack.c.l.b16 %v745
    %v2408 = vunpack.c.h.b16 %v745
    %v2409 = vunpack.c.l.b16 %v746
    %v2410 = vunpack.c.h.b16 %v746
    %v2411 = vunpack.c.l.b16 %v747
    %v2412 = vunpack.c.h.b16 %v747
    %v2413 = vunpack.c.l.b16 %v748
    %v2414 = vunpack.c.h.b16 %v748
    %v2415 = vunpack.c.l.b16 %v749
    %v2416 = vunpack.c.h.b16 %v749
    %v2417 = vunpack.c.l.b16 %v750
    %v2418 = vunpack.c.h.b16 %v750
    %v2419 = vunpack.c.l.b16 %v751
    %v2420 = vunpack.c.h.b16 %v751
    %v2421 = vunpack.c.l.b16 %v752
    %v2422 = vunpack.c.h.b16 %v752
    %v2423 = vunpack.c.l.b16 %v753
    %v2424 = vunpack.c.h.b16 %v753
    %v2425 = vunpack.c.l.b16 %v754
    %v2426 = vunpack.c.h.b16 %v754
    %v2427 = vunpack.c.l.b16 %v755
    %v2428 = vunpack.c.h.b16 %v755
    %v2429 = vunpack.c.l.b16 %v756
    %v2430 = vunpack.c.h.b16 %v756
    %v2431 = vunpack.c.l.b16 %v757
    %v2432 = vunpack.c.h.b16 %v757
    %v2433 = vunpack.c.l.b16 %v758
    %v2434 = vunpack.c.h.b16 %v758
    %v2435 = vunpack.c.l.b16 %v759
    %v2436 = vunpack.c.h.b16 %v759
    %v2437 = vunpack.c.l.b16 %v760
    %v2438 = vunpack.c.h.b16 %v760
    %v2439 = vunpack.c.l.b16 %v761
    %v2440 = vunpack.c.h.b16 %v761
    %v2441 = vunpack.c.l.b16 %v762
    %v2442 = vunpack.c.h.b16 %v762
    %v2443 = vunpack.c.l.b16 %v763
    %v2444 = vunpack.c.h.b16 %v763
    %v2445 = vunpack.c.l.b16 %v764
    %v2446 = vunpack.c.h.b16 %v764
    %v2447 = vunpack.c.l.b16 %v765
    %v2448 = vunpack.c.h.b16 %v765
    %v2449 = vunpack.c.l.b16 %v766
    %v2450 = vunpack.c.h.b16 %v766
    %v2451 = vunpack.c.l.b16 %v767
    %v2452 = vunpack.c.h.b16 %v767
    %v2453 = vunpack.c.l.b16 %v768
    %v2454 = vunpack.c.h.b16 %v768
    %v2455 = vunpack.c.l.b16 %v769
    %v2456 = vunpack.c.h.b16 %v769
    %v2457 = vunpack.c.l.b16 %v770
    %v2458 = vunpack.c.h.b16 %v770
    %v2459 = vunpack.c.l.b16 %v771
    %v2460 = vunpack.c.h.b16 %v771
    %v2461 = vunpack.c.l.b16 %v772
    %v2462 = vunpack.c.h.b16 %v772
    %v2463 = vunpack.c.l.b16 %v773
    %v2464 = vunpack.c.h.b16 %v773
    %v2465 = vunpack.c.l.b16 %v774
    %v2466 = vunpack.c.h.b16 %v774
    %v2467 = vunpack.c.l.b16 %v775
    %v2468 = vunpack.c.h.b16 %v775
    %v2469 = vunpack.c.l.b16 %v776
    %v2470 = vunpack.c.h.b16 %v776
    %v2471 = vunpack.c.l.b16 %v777
    %v2472 = vunpack.c.h.b16 %v777
    %v2473 = vunpack.c.l.b16 %v778
    %v2474 = vunpack.c.h.b16 %v778
    %v2475 = vunpack.c.l.b16 %v779
    %v2476 = vunpack.c.h.b16 %v779
    %v2477 = vunpack.c.l.b16 %v780
    %v2478 = vunpack.c.h.b16 %v780
    %v2479 = vunpack.c.l.b16 %v781
    %v2480 = vunpack.c.h.b16 %v781
    %v2481 = vunpack.c.l.b16 %v782
    %v2482 = vunpack.c.h.b16 %v782
    %v2483 = vunpack.c.l.b16 %v783
    %v2484 = vunpack.c.h.b16 %v783
    %v2485 = vunpack.c.l.b16 %v784
    %v2486 = vunpack.c.h.b16 %v784
    %v2487 = vunpack.c.l.b16 %v785
    %v2488 = vunpack.c.h.b16 %v785
    %v2489 = vunpack.c.l.b16 %v786
    %v2490 = vunpack.c.h.b16 %v786
    %v2491 = vunpack.c.l.b16 %v787
    %v2492 = vunpack.c.h.b16 %v787
    %v2493 = vunpack.c.l.b16 %v788
    %v2494 = vunpack.c.h.b16 %v788
    %v2495 = vunpack.c.l.b16 %v789
    %v2496 = vunpack.c.h.b16 %v789
    %v2497 = vunpack.c.l.b16 %v790
    %v2498 = vunpack.c.h.b16 %v790
    %v2499 = vunpack.c.l.b16 %v791
    %v2500 = vunpack.c.h.b16 %v791
    %v2501 = vunpack.c.l.b16 %v792
    %v2502 = vunpack.c.h.b16 %v792
    %v2503 = vunpack.c.l.b16 %v793
    %v2504 = vunpack.c.h.b16 %v793
    %v2505 = vunpack.c.l.b16 %v794
    %v2506 = vunpack.c.h.b16 %v794
    %v2507 = vunpack.c.l.b16 %v795
    %v2508 = vunpack.c.h.b16 %v795
    %v2509 = vunpack.c.l.b16 %v796
    %v2510 = vunpack.c.h.b16 %v796
    %v2511 = vunpack.c.l.b16 %v797
    %v2512 = vunpack.c.h.b16 %v797
    %v2513 = vunpack.c.l.b16 %v798
    %v2514 = vunpack.c.h.b16 %v798
    %v2515 = vunpack.c.l.b16 %v799
    %v2516 = vunpack.c.h.b16 %v799
    %v2517 = vunpack.c.l.b16 %v800
    %v2518 = vunpack.c.h.b16 %v800
    %v2519 = vunpack.c.l.b16 %v801
    %v2520 = vunpack.c.h.b16 %v801
    %v2521 = vunpack.c.l.b16 %v802
    %v2522 = vunpack.c.h.b16 %v802
    %v2523 = vunpack.c.l.b16 %v803
    %v2524 = vunpack.c.h.b16 %v803
    %v2525 = vunpack.c.l.b16 %v804
    %v2526 = vunpack.c.h.b16 %v804
    %v2527 = vunpack.c.l.b16 %v805
    %v2528 = vunpack.c.h.b16 %v805
    %v2529 = vunpack.c.l.b16 %v806
    %v2530 = vunpack.c.h.b16 %v806
    %v2531 = vunpack.c.l.b16 %v807
    %v2532 = vunpack.c.h.b16 %v807
    %v2533 = vunpack.c.l.b16 %v808
    %v2534 = vunpack.c.h.b16 %v808
    %v2535 = vunpack.c.l.b16 %v809
    %v2536 = vunpack.c.h.b16 %v809
    %v2537 = vunpack.c.l.b16 %v810
    %v2538 = vunpack.c.h.b16 %v810
    %v2539 = vunpack.c.l.b16 %v811
    %v2540 = vunpack.c.h.b16 %v811
    %v2541 = vunpack.c.l.b16 %v812
    %v2542 = vunpack.c.h.b16 %v812
    %v2543 = vunpack.c.l.b16 %v813
    %v2544 = vunpack.c.h.b16 %v813
    %v2545 = vunpack.c.l.b16 %v814
    %v2546 = vunpack.c.h.b16 %v814
    %v2547 = vunpack.c.l.b16 %v815
    %v2548 = vunpack.c.h.b16 %v815
    %v2549 = vunpack.c.l.b16 %v816
    %v2550 = vunpack.c.h.b16 %v816
    %v2551 = vunpack.c.l.b16 %v817
    %v2552 = vunpack.c.h.b16 %v817
    %v2553 = vunpack.c.l.b16 %v818
    %v2554 = vunpack.c.h.b16 %v818
    %v2555 = vunpack.c.l.b16 %v819
    %v2556 = vunpack.c.h.b16 %v819
    %v2557 = vunpack.c.l.b16 %v820
    %v2558 = vunpack.c.h.b16 %v820
    %v2559 = vunpack.c.l.b16 %v821
    %v2560 = vunpack.c.h.b16 %v821
    %v2561 = vunpack.c.l.b16 %v822
    %v2562 = vunpack.c.h.b16 %v822
    %v2563 = vunpack.c.l.b16 %v823
    %v2564 = vunpack.c.h.b16 %v823
    %v2565 = vunpack.c.l.b16 %v824
    %v2566 = vunpack.c.h.b16 %v824
    %v2567 = vunpack.c.l.b16 %v825
    %v2568 = vunpack.c.h.b16 %v825
    %v2569 = vunpack.c.l.b16 %v826
    %v2570 = vunpack.c.h.b16 %v826
    %v2571 = vunpack.c.l.b16 %v827
    %v2572 = vunpack.c.h.b16 %v827
    %v2573 = vunpack.c.l.b16 %v828
    %v2574 = vunpack.c.h.b16 %v828
    %v2575 = vunpack.c.l.b16 %v829
    %v2576 = vunpack.c.h.b16 %v829
    %v2577 = vunpack.c.l.b16 %v830
    %v2578 = vunpack.c.h.b16 %v830
    %v2579 = vunpack.c.l.b16 %v831
    %v2580 = vunpack.c.h.b16 %v831
    %v2581 = vunpack.c.l.b16 %v832
    %v2582 = vunpack.c.h.b16 %v832
    %v2583 = vunpack.c.l.b16 %v833
    %v2584 = vunpack.c.h.b16 %v833
    %v2585 = vunpack.c.l.b16 %v834
    %v2586 = vunpack.c.h.b16 %v834
    %v2587 = vunpack.c.l.b16 %v835
    %v2588 = vunpack.c.h.b16 %v835
    %v2589 = vunpack.c.l.b16 %v836
    %v2590 = vunpack.c.h.b16 %v836
    %v2591 = vunpack.c.l.b16 %v837
    %v2592 = vunpack.c.h.b16 %v837
    %v2593 = vunpack.c.l.b16 %v838
    %v2594 = vunpack.c.h.b16 %v838
    %v2595 = vunpack.c.l.b16 %v839
    %v2596 = vunpack.c.h.b16 %v839
    %v2597 = vunpack.c.l.b16 %v840
    %v2598 = vunpack.c.h.b16 %v840
    %v2599 = vunpack.c.l.b16 %v841
    %v2600 = vunpack.c.h.b16 %v841
    %v2601 = vunpack.c.l.b16 %v842
    %v2602 = vunpack.c.h.b16 %v842
    %v2603 = vpack.c.b16 %v1457, %v1451
    %v2604 = vpack.c.b16 %v1458, %v1452
    %v2605 = vpack.c.b16 %v1459, %v1453
    %v2606 = vpack.c.b16 %v1460, %v1454
    %v2607 = vpack.c.b16 %v1461, %v1455
    %v2608 = vpack.c.b16 %v1462, %v1456
    %v2609 = vpack.c.b16 %v1469, %v1463
    %v2610 = vpack.c.b16 %v1470, %v1464
    %v2611 = vpack.c.b16 %v1471, %v1465
    %v2612 = vpack.c.b16 %v1472, %v1466
    %v2613 = vpack.c.b16 %v1473, %v1467
    %v2614 = vpack.c.b16 %v1474, %v1468
    %v2615 = vpack.c.b16 %v1481, %v1475
    %v2616 = vpack.c.b16 %v1482, %v1476
    %v2617 = vpack.c.b16 %v1483, %v1477
    %v2618 = vpack.c.b16 %v1484, %v1478
    %v2619 = vpack.c.b16 %v1485, %v1479
    %v2620 = vpack.c.b16 %v1486, %v1480
    %v2621 = vpack.c.b16 %v1493, %v1487
    %v2622 = vpack.c.b16 %v1494, %v1488
    %v2623 = vpack.c.b16 %v1495, %v1489
    %v2624 = vpack.c.b16 %v1496, %v1490
    %v2625 = vpack.c.b16 %v1497, %v1491
    %v2626 = vpack.c.b16 %v1498, %v1492
    %v2627 = vpack.c.b16 %v1505, %v1499
    %v2628 = vpack.c.b16 %v1506, %v1500
    %v2629 = vpack.c.b16 %v1507, %v1501
    %v2630 = vpack.c.b16 %v1508, %v1502
    %v2631 = vpack.c.b16 %v1509, %v1503
    %v2632 = vpack.c.b16 %v1510, %v1504
    %v2633 = vpack.c.b16 %v1517, %v1511
    %v2634 = vpack.c.b16 %v1518, %v1512
    %v2635 = vpack.c.b16 %v1519, %v1513
    %v2636 = vpack.c.b16 %v1520, %v1514
    %v2637 = vpack.c.b16 %v1521, %v1515
    %v2638 = vpack.c.b16 %v1522, %v1516
    %v2639 = vpack.c.b16 %v1529, %v1523
    %v2640 = vpack.c.b16 %v1530, %v1524
    %v2641 = vpack.c.b16 %v1531, %v1525
    %v2642 = vpack.c.b16 %v1532, %v1526
    %v2643 = vpack.c.b16 %v1533, %v1527
    %v2644 = vpack.c.b16 %v1534, %v1528
    %v2645 = vpack.c.b16 %v1541, %v1535
    %v2646 = vpack.c.b16 %v1542, %v1536
    %v2647 = vpack.c.b16 %v1543, %v1537
    %v2648 = vpack.c.b16 %v1544, %v1538
    %v2649 = vpack.c.b16 %v1545, %v1539
    %v2650 = vpack.c.b16 %v1546, %v1540
    %v2651 = vpack.c.b16 %v1553, %v1547
    %v2652 = vpack.c.b16 %v1554, %v1548
    %v2653 = vpack.c.b16 %v1555, %v1549
    %v2654 = vpack.c.b16 %v1556, %v1550
    %v2655 = vpack.c.b16 %v1557, %v1551
    %v2656 = vpack.c.b16 %v1558, %v1552
    %v2657 = vpack.c.b16 %v1565, %v1559
    %v2658 = vpack.c.b16 %v1566, %v1560
    %v2659 = vpack.c.b16 %v1567, %v1561
    %v2660 = vpack.c.b16 %v1568, %v1562
    %v2661 = vpack.c.b16 %v1569, %v1563
    %v2662 = vpack.c.b16 %v1570, %v1564
    %v2663 = vpack.c.b16 %v1577, %v1571
    %v2664 = vpack.c.b16 %v1578, %v1572
    %v2665 = vpack.c.b16 %v1579, %v1573
    %v2666 = vpack.c.b16 %v1580, %v1574
    %v2667 = vpack.c.b16 %v1581, %v1575
    %v2668 = vpack.c.b16 %v1582, %v1576
    %v2669 = vpack.c.b16 %v1589, %v1583
    %v2670 = vpack.c.b16 %v1590, %v1584
    %v2671 = vpack.c.b16 %v1591, %v1585
    %v2672 = vpack.c.b16 %v1592, %v1586
    %v2673 = vpack.c.b16 %v1593, %v1587
    %v2674 = vpack.c.b16 %v1594, %v1588
    %v2675 = vpack.c.b16 %v1601, %v1595
    %v2676 = vpack.c.b16 %v1602, %v1596
    %v2677 = vpack.c.b16 %v1603, %v1597
    %v2678 = vpack.c.b16 %v1604, %v1598
    %v2679 = vpack.c.b16 %v1605, %v1599
    %v2680 = vpack.c.b16 %v1606, %v1600
    %v2681 = vpack.c.b16 %v1613, %v1607
    %v2682 = vpack.c.b16 %v1614, %v1608
    %v2683 = vpack.c.b16 %v1615, %v1609
    %v2684 = vpack.c.b16 %v1616, %v1610
    %v2685 = vpack.c.b16 %v1617, %v1611
    %v2686 = vpack.c.b16 %v1618, %v1612
    %v2687 = vpack.c.b16 %v1625, %v1619
    %v2688 = vpack.c.b16 %v1626, %v1620
    %v2689 = vpack.c.b16 %v1627, %v1621
    %v2690 = vpack.c.b16 %v1628, %v1622
    %v2691 = vpack.c.b16 %v1629, %v1623
    %v2692 = vpack.c.b16 %v1630, %v1624
    %v2693 = vpack.c.b16 %v1637, %v1631
    %v2694 = vpack.c.b16 %v1638, %v1632
    %v2695 = vpack.c.b16 %v1639, %v1633
    %v2696 = vpack.c.b16 %v1640, %v1634
    %v2697 = vpack.c.b16 %v1641, %v1635
    %v2698 = vpack.c.b16 %v1642, %v1636
    %v2699 = vpack.c.b16 %v1649, %v1643
    %v2700 = vpack.c.b16 %v1650, %v1644
    %v2701 = vpack.c.b16 %v1651, %v1645
    %v2702 = vpack.c.b16 %v1652, %v1646
    %v2703 = vpack.c.b16 %v1653, %v1647
    %v2704 = vpack.c.b16 %v1654, %v1648
    %v2705 = vpack.c.b16 %v1661, %v1655
    %v2706 = vpack.c.b16 %v1662, %v1656
    %v2707 = vpack.c.b16 %v1663, %v1657
    %v2708 = vpack.c.b16 %v1664, %v1658
    %v2709 = vpack.c.b16 %v1665, %v1659
    %v2710 = vpack.c.b16 %v1666, %v1660
    %v2711 = vpack.c.b16 %v1673, %v1667
    %v2712 = vpack.c.b16 %v1674, %v1668
    %v2713 = vpack.c.b16 %v1675, %v1669
    %v2714 = vpack.c.b16 %v1676, %v1670
    %v2715 = vpack.c.b16 %v1677, %v1671
    %v2716 = vpack.c.b16 %v1678, %v1672
    %v2717 = vpack.c.b16 %v1685, %v1679
    %v2718 = vpack.c.b16 %v1686, %v1680
    %v2719 = vpack.c.b16 %v1687, %v1681
    %v2720 = vpack.c.b16 %v1688, %v1682
    %v2721 = vpack.c.b16 %v1689, %v1683
    %v2722 = vpack.c.b16 %v1690, %v1684
    %v2723 = vpack.c.b16 %v1697, %v1691
    %v2724 = vpack.c.b16 %v1698, %v1692
    %v2725 = vpack.c.b16 %v1699, %v1693
    %v2726 = vpack.c.b16 %v1700, %v1694
    %v2727 = vpack.c.b16 %v1701, %v1695
    %v2728 = vpack.c.b16 %v1702, %v1696
    %v2729 = vpack.c.b16 %v1709, %v1703
    %v2730 = vpack.c.b16 %v1710, %v1704
    %v2731 = vpack.c.b16 %v1711, %v1705
    %v2732 = vpack.c.b16 %v1712, %v1706
    %v2733 = vpack.c.b16 %v1713, %v1707
    %v2734 = vpack.c.b16 %v1714, %v1708
    %v2735 = vpack.c.b16 %v1721, %v1715
    %v2736 = vpack.c.b16 %v1722, %v1716
    %v2737 = vpack.c.b16 %v1723, %v1717
    %v2738 = vpack.c.b16 %v1724, %v1718
    %v2739 = vpack.c.b16 %v1725, %v1719
    %v2740 = vpack.c.b16 %v1726, %v1720
    %v2741 = vpack.c.b16 %v1733, %v1727
    %v2742 = vpack.c.b16 %v1734, %v1728
    %v2743 = vpack.c.b16 %v1735, %v1729
    %v2744 = vpack.c.b16 %v1736, %v1730
    %v2745 = vpack.c.b16 %v1737, %v1731
    %v2746 = vpack.c.b16 %v1738, %v1732
    %v2747 = vpack.c.b16 %v1745, %v1739
    %v2748 = vpack.c.b16 %v1746, %v1740
    %v2749 = vpack.c.b16 %v1747, %v1741
    %v2750 = vpack.c.b16 %v1748, %v1742
    %v2751 = vpack.c.b16 %v1749, %v1743
    %v2752 = vpack.c.b16 %v1750, %v1744
    %v2753 = vpack.c.b16 %v1757, %v1751
    %v2754 = vpack.c.b16 %v1758, %v1752
    %v2755 = vpack.c.b16 %v1759, %v1753
    %v2756 = vpack.c.b16 %v1760, %v1754
    %v2757 = vpack.c.b16 %v1761, %v1755
    %v2758 = vpack.c.b16 %v1762, %v1756
    %v2759 = vpack.c.b16 %v1769, %v1763
    %v2760 = vpack.c.b16 %v1770, %v1764
    %v2761 = vpack.c.b16 %v1771, %v1765
    %v2762 = vpack.c.b16 %v1772, %v1766
    %v2763 = vpack.c.b16 %v1773, %v1767
    %v2764 = vpack.c.b16 %v1774, %v1768
    %v2765 = vpack.c.b16 %v1781, %v1775
    %v2766 = vpack.c.b16 %v1782, %v1776
    %v2767 = vpack.c.b16 %v1783, %v1777
    %v2768 = vpack.c.b16 %v1784, %v1778
    %v2769 = vpack.c.b16 %v1785, %v1779
    %v2770 = vpack.c.b16 %v1786, %v1780
    %v2771 = vpack.c.b16 %v1793, %v1787
    %v2772 = vpack.c.b16 %v1794, %v1788
    %v2773 = vpack.c.b16 %v1795, %v1789
    %v2774 = vpack.c.b16 %v1796, %v1790
    %v2775 = vpack.c.b16 %v1797, %v1791
    %v2776 = vpack.c.b16 %v1798, %v1792
    %v2777 = vpack.c.b16 %v1805, %v1799
    %v2778 = vpack.c.b16 %v1806, %v1800
    %v2779 = vpack.c.b16 %v1807, %v1801
    %v2780 = vpack.c.b16 %v1808, %v1802
    %v2781 = vpack.c.b16 %v1809, %v1803
    %v2782 = vpack.c.b16 %v1810, %v1804
    %v2783 = vpack.c.b16 %v1817, %v1811
    %v2784 = vpack.c.b16 %v1818, %v1812
    %v2785 = vpack.c.b16 %v1819, %v1813
    %v2786 = vpack.c.b16 %v1820, %v1814
    %v2787 = vpack.c.b16 %v1821, %v1815
    %v2788 = vpack.c.b16 %v1822, %v1816
    %v2789 = vpack.c.b16 %v1829, %v1823
    %v2790 = vpack.c.b16 %v1830, %v1824
    %v2791 = vpack.c.b16 %v1831, %v1825
    %v2792 = vpack.c.b16 %v1832, %v1826
    %v2793 = vpack.c.b16 %v1833, %v1827
    %v2794 = vpack.c.b16 %v1834, %v1828
    %v2795 = vpack.c.b16 %v1841, %v1835
    %v2796 = vpack.c.b16 %v1842, %v1836
    %v2797 = vpack.c.b16 %v1843, %v1837
    %v2798 = vpack.c.b16 %v1844, %v1838
    %v2799 = vpack.c.b16 %v1845, %v1839
    %v2800 = vpack.c.b16 %v1846, %v1840
    %v2801 = vpack.c.b16 %v1853, %v1847
    %v2802 = vpack.c.b16 %v1854, %v1848
    %v2803 = vpack.c.b16 %v1855, %v1849
    %v2804 = vpack.c.b16 %v1856, %v1850
    %v2805 = vpack.c.b16 %v1857, %v1851
    %v2806 = vpack.c.b16 %v1858, %v1852
    %v2807 = vpack.c.b16 %v1865, %v1859
    %v2808 = vpack.c.b16 %v1866, %v1860
    %v2809 = vpack.c.b16 %v1867, %v1861
    %v2810 = vpack.c.b16 %v1868, %v1862
    %v2811 = vpack.c.b16 %v1869, %v1863
    %v2812 = vpack.c.b16 %v1870, %v1864
    %v2813 = vpack.c.b16 %v1877, %v1871
    %v2814 = vpack.c.b16 %v1878, %v1872
    %v2815 = vpack.c.b16 %v1879, %v1873
    %v2816 = vpack.c.b16 %v1880, %v1874
    %v2817 = vpack.c.b16 %v1881, %v1875
    %v2818 = vpack.c.b16 %v1882, %v1876
    %v2819 = vpack.c.b16 %v1889, %v1883
    %v2820 = vpack.c.b16 %v1890, %v1884
    %v2821 = vpack.c.b16 %v1891, %v1885
    %v2822 = vpack.c.b16 %v1892, %v1886
    %v2823 = vpack.c.b16 %v1893, %v1887
    %v2824 = vpack.c.b16 %v1894, %v1888
    %v2825 = vpack.c.b16 %v1901, %v1895
    %v2826 = vpack.c.b16 %v1902, %v1896
    %v2827 = vpack.c.b16 %v1903, %v1897
    %v2828 = vpack.c.b16 %v1904, %v1898
    %v2829 = vpack.c.b16 %v1905, %v1899
    %v2830 = vpack.c.b16 %v1906, %v1900
    %v2831 = vpack.c.b16 %v1913, %v1907
    %v2832 = vpack.c.b16 %v1914, %v1908
    %v2833 = vpack.c.b16 %v1915, %v1909
    %v2834 = vpack.c.b16 %v1916, %v1910
    %v2835 = vpack.c.b16 %v1917, %v1911
    %v2836 = vpack.c.b16 %v1918, %v1912
    %v2837 = vpack.c.b16 %v1925, %v1919
    %v2838 = vpack.c.b16 %v1926, %v1920
    %v2839 = vpack.c.b16 %v1927, %v1921
    %v2840 = vpack.c.b16 %v1928, %v1922
    %v2841 = vpack.c.b16 %v1929, %v1923
    %v2842 = vpack.c.b16 %v1930, %v1924
    %v2843 = vpack.c.b16 %v1937, %v1931
    %v2844 = vpack.c.b16 %v1938, %v1932
    %v2845 = vpack.c.b16 %v1939, %v1933
    %v2846 = vpack.c.b16 %v1940, %v1934
    %v2847 = vpack.c.b16 %v1941, %v1935
    %v2848 = vpack.c.b16 %v1942, %v1936
    %v2849 = vpack.c.b16 %v1949, %v1943
    %v2850 = vpack.c.b16 %v1950, %v1944
    %v2851 = vpack.c.b16 %v1951, %v1945
    %v2852 = vpack.c.b16 %v1952, %v1946
    %v2853 = vpack.c.b16 %v1953, %v1947
    %v2854 = vpack.c.b16 %v1954, %v1948
    %v2855 = vpack.c.b16 %v1961, %v1955
    %v2856 = vpack.c.b16 %v1962, %v1956
    %v2857 = vpack.c.b16 %v1963, %v1957
    %v2858 = vpack.c.b16 %v1964, %v1958
    %v2859 = vpack.c.b16 %v1965, %v1959
    %v2860 = vpack.c.b16 %v1966, %v1960
    %v2861 = vpack.c.b16 %v1973, %v1967
    %v2862 = vpack.c.b16 %v1974, %v1968
    %v2863 = vpack.c.b16 %v1975, %v1969
    %v2864 = vpack.c.b16 %v1976, %v1970
    %v2865 = vpack.c.b16 %v1977, %v1971
    %v2866 = vpack.c.b16 %v1978, %v1972
    %v2867 = vpack.c.b16 %v1985, %v1979
    %v2868 = vpack.c.b16 %v1986, %v1980
    %v2869 = vpack.c.b16 %v1987, %v1981
    %v2870 = vpack.c.b16 %v1988, %v1982
    %v2871 = vpack.c.b16 %v1989, %v1983
    %v2872 = vpack.c.b16 %v1990, %v1984
    %v2873 = vpack.c.b16 %v1997, %v1991
    %v2874 = vpack.c.b16 %v1998, %v1992
    %v2875 = vpack.c.b16 %v1999, %v1993
    %v2876 = vpack.c.b16 %v2000, %v1994
    %v2877 = vpack.c.b16 %v2001, %v1995
    %v2878 = vpack.c.b16 %v2002, %v1996
    %v2879 = vpack.c.b16 %v2009, %v2003
    %v2880 = vpack.c.b16 %v2010, %v2004
    %v2881 = vpack.c.b16 %v2011, %v2005
    %v2882 = vpack.c.b16 %v2012, %v2006
    %v2883 = vpack.c.b16 %v2013, %v2007
    %v2884 = vpack.c.b16 %v2014, %v2008
    %v2885 = vpack.c.b16 %v2021, %v2015
    %v2886 = vpack.c.b16 %v2022, %v2016
    %v2887 = vpack.c.b16 %v2023, %v2017
    %v2888 = vpack.c.b16 %v2024, %v2018
    %v2889 = vpack.c.b16 %v2025, %v2019
    %v2890 = vpack.c.b16 %v2026, %v2020
    %v2891 = vpack.c.b16 %v2033, %v2027
    %v2892 = vpack.c.b16 %v2034, %v2028
    %v2893 = vpack.c.b16 %v2035, %v2029
    %v2894 = vpack.c.b16 %v2036, %v2030
    %v2895 = vpack.c.b16 %v2037, %v2031
    %v2896 = vpack.c.b16 %v2038, %v2032
    %v2897 = vpack.c.b16 %v2045, %v2039
    %v2898 = vpack.c.b16 %v2046, %v2040
    %v2899 = vpack.c.b16 %v2047, %v2041
    %v2900 = vpack.c.b16 %v2048, %v2042
    %v2901 = vpack.c.b16 %v2049, %v2043
    %v2902 = vpack.c.b16 %v2050, %v2044
    %v2903 = vpack.c.b16 %v2057, %v2051
    %v2904 = vpack.c.b16 %v2058, %v2052
    %v2905 = vpack.c.b16 %v2059, %v2053
    %v2906 = vpack.c.b16 %v2060, %v2054
    %v2907 = vpack.c.b16 %v2061, %v2055
    %v2908 = vpack.c.b16 %v2062, %v2056
    %v2909 = vpack.c.b16 %v2069, %v2063
    %v2910 = vpack.c.b16 %v2070, %v2064
    %v2911 = vpack.c.b16 %v2071, %v2065
    %v2912 = vpack.c.b16 %v2072, %v2066
    %v2913 = vpack.c.b16 %v2073, %v2067
    %v2914 = vpack.c.b16 %v2074, %v2068
    %v2915 = vpack.c.b16 %v2081, %v2075
    %v2916 = vpack.c.b16 %v2082, %v2076
    %v2917 = vpack.c.b16 %v2083, %v2077
    %v2918 = vpack.c.b16 %v2084, %v2078
    %v2919 = vpack.c.b16 %v2085, %v2079
    %v2920 = vpack.c.b16 %v2086, %v2080
    %v2921 = vpack.c.b16 %v2093, %v2087
    %v2922 = vpack.c.b16 %v2094, %v2088
    %v2923 = vpack.c.b16 %v2095, %v2089
    %v2924 = vpack.c.b16 %v2096, %v2090
    %v2925 = vpack.c.b16 %v2097, %v2091
    %v2926 = vpack.c.b16 %v2098, %v2092
    %v2927 = vpack.c.b16 %v2105, %v2099
    %v2928 = vpack.c.b16 %v2106, %v2100
    %v2929 = vpack.c.b16 %v2107, %v2101
    %v2930 = vpack.c.b16 %v2108, %v2102
    %v2931 = vpack.c.b16 %v2109, %v2103
    %v2932 = vpack.c.b16 %v2110, %v2104
    %v2933 = vpack.c.b16 %v2117, %v2111
    %v2934 = vpack.c.b16 %v2118, %v2112
    %v2935 = vpack.c.b16 %v2119, %v2113
    %v2936 = vpack.c.b16 %v2120, %v2114
    %v2937 = vpack.c.b16 %v2121, %v2115
    %v2938 = vpack.c.b16 %v2122, %v2116
    %v2939 = vpack.c.b16 %v2129, %v2123
    %v2940 = vpack.c.b16 %v2130, %v2124
    %v2941 = vpack.c.b16 %v2131, %v2125
    %v2942 = vpack.c.b16 %v2132, %v2126
    %v2943 = vpack.c.b16 %v2133, %v2127
    %v2944 = vpack.c.b16 %v2134, %v2128
    %v2945 = vpack.c.b16 %v2141, %v2135
    %v2946 = vpack.c.b16 %v2142, %v2136
    %v2947 = vpack.c.b16 %v2143, %v2137
    %v2948 = vpack.c.b16 %v2144, %v2138
    %v2949 = vpack.c.b16 %v2145, %v2139
    %v2950 = vpack.c.b16 %v2146, %v2140
    %v2951 = vpack.c.b16 %v2153, %v2147
    %v2952 = vpack.c.b16 %v2154, %v2148
    %v2953 = vpack.c.b16 %v2155, %v2149
    %v2954 = vpack.c.b16 %v2156, %v2150
    %v2955 = vpack.c.b16 %v2157, %v2151
    %v2956 = vpack.c.b16 %v2158, %v2152
    %v2957 = vpack.c.b16 %v2165, %v2159
    %v2958 = vpack.c.b16 %v2166, %v2160
    %v2959 = vpack.c.b16 %v2167, %v2161
    %v2960 = vpack.c.b16 %v2168, %v2162
    %v2961 = vpack.c.b16 %v2169, %v2163
    %v2962 = vpack.c.b16 %v2170, %v2164
    %v2963 = vpack.c.b16 %v2177, %v2171
    %v2964 = vpack.c.b16 %v2178, %v2172
    %v2965 = vpack.c.b16 %v2179, %v2173
    %v2966 = vpack.c.b16 %v2180, %v2174
    %v2967 = vpack.c.b16 %v2181, %v2175
    %v2968 = vpack.c.b16 %v2182, %v2176
    %v2969 = vpack.c.b16 %v2189, %v2183
    %v2970 = vpack.c.b16 %v2190, %v2184
    %v2971 = vpack.c.b16 %v2191, %v2185
    %v2972 = vpack.c.b16 %v2192, %v2186
    %v2973 = vpack.c.b16 %v2193, %v2187
    %v2974 = vpack.c.b16 %v2194, %v2188
    %v2975 = vpack.c.b16 %v2201, %v2195
    %v2976 = vpack.c.b16 %v2202, %v2196
    %v2977 = vpack.c.b16 %v2203, %v2197
    %v2978 = vpack.c.b16 %v2204, %v2198
    %v2979 = vpack.c.b16 %v2205, %v2199
    %v2980 = vpack.c.b16 %v2206, %v2200
    %v2981 = vpack.c.b16 %v2213, %v2207
    %v2982 = vpack.c.b16 %v2214, %v2208
    %v2983 = vpack.c.b16 %v2215, %v2209
    %v2984 = vpack.c.b16 %v2216, %v2210
    %v2985 = vpack.c.b16 %v2217, %v2211
    %v2986 = vpack.c.b16 %v2218, %v2212
    %v2987 = vpack.c.b16 %v2225, %v2219
    %v2988 = vpack.c.b16 %v2226, %v2220
    %v2989 = vpack.c.b16 %v2227, %v2221
    %v2990 = vpack.c.b16 %v2228, %v2222
    %v2991 = vpack.c.b16 %v2229, %v2223
    %v2992 = vpack.c.b16 %v2230, %v2224
    %v2993 = vpack.c.b16 %v2237, %v2231
    %v2994 = vpack.c.b16 %v2238, %v2232
    %v2995 = vpack.c.b16 %v2239, %v2233
    %v2996 = vpack.c.b16 %v2240, %v2234
    %v2997 = vpack.c.b16 %v2241, %v2235
    %v2998 = vpack.c.b16 %v2242, %v2236
    %v2999 = vpack.c.b16 %v2249, %v2243
    %v3000 = vpack.c.b16 %v2250, %v2244
    %v3001 = vpack.c.b16 %v2251, %v2245
    %v3002 = vpack.c.b16 %v2252, %v2246
    %v3003 = vpack.c.b16 %v2253, %v2247
    %v3004 = vpack.c.b16 %v2254, %v2248
    %v3005 = vpack.c.b16 %v2261, %v2255
    %v3006 = vpack.c.b16 %v2262, %v2256
    %v3007 = vpack.c.b16 %v2263, %v2257
    %v3008 = vpack.c.b16 %v2264, %v2258
    %v3009 = vpack.c.b16 %v2265, %v2259
    %v3010 = vpack.c.b16 %v2266, %v2260
    %v3011 = vpack.c.b16 %v2273, %v2267
    %v3012 = vpack.c.b16 %v2274, %v2268
    %v3013 = vpack.c.b16 %v2275, %v2269
    %v3014 = vpack.c.b16 %v2276, %v2270
    %v3015 = vpack.c.b16 %v2277, %v2271
    %v3016 = vpack.c.b16 %v2278, %v2272
    %v3017 = vpack.c.b16 %v2285, %v2279
    %v3018 = vpack.c.b16 %v2286, %v2280
    %v3019 = vpack.c.b16 %v2287, %v2281
    %v3020 = vpack.c.b16 %v2288, %v2282
    %v3021 = vpack.c.b16 %v2289, %v2283
    %v3022 = vpack.c.b16 %v2290, %v2284
    %v3023 = vpack.c.b16 %v2297, %v2291
    %v3024 = vpack.c.b16 %v2298, %v2292
    %v3025 = vpack.c.b16 %v2299, %v2293
    %v3026 = vpack.c.b16 %v2300, %v2294
    %v3027 = vpack.c.b16 %v2301, %v2295
    %v3028 = vpack.c.b16 %v2302, %v2296
    %v3029 = vpack.c.b16 %v2309, %v2303
    %v3030 = vpack.c.b16 %v2310, %v2304
    %v3031 = vpack.c.b16 %v2311, %v2305
    %v3032 = vpack.c.b16 %v2312, %v2306
    %v3033 = vpack.c.b16 %v2313, %v2307
    %v3034 = vpack.c.b16 %v2314, %v2308
    %v3035 = vpack.c.b16 %v2321, %v2315
    %v3036 = vpack.c.b16 %v2322, %v2316
    %v3037 = vpack.c.b16 %v2323, %v2317
    %v3038 = vpack.c.b16 %v2324, %v2318
    %v3039 = vpack.c.b16 %v2325, %v2319
    %v3040 = vpack.c.b16 %v2326, %v2320
    %v3041 = vpack.c.b16 %v2333, %v2327
    %v3042 = vpack.c.b16 %v2334, %v2328
    %v3043 = vpack.c.b16 %v2335, %v2329
    %v3044 = vpack.c.b16 %v2336, %v2330
    %v3045 = vpack.c.b16 %v2337, %v2331
    %v3046 = vpack.c.b16 %v2338, %v2332
    %v3047 = vpack.c.b16 %v2345, %v2339
    %v3048 = vpack.c.b16 %v2346, %v2340
    %v3049 = vpack.c.b16 %v2347, %v2341
    %v3050 = vpack.c.b16 %v2348, %v2342
    %v3051 = vpack.c.b16 %v2349, %v2343
    %v3052 = vpack.c.b16 %v2350, %v2344
    %v3053 = vpack.c.b16 %v2357, %v2351
    %v3054 = vpack.c.b16 %v2358, %v2352
    %v3055 = vpack.c.b16 %v2359, %v2353
    %v3056 = vpack.c.b16 %v2360, %v2354
    %v3057 = vpack.c.b16 %v2361, %v2355
    %v3058 = vpack.c.b16 %v2362, %v2356
    %v3059 = vpack.c.b16 %v2369, %v2363
    %v3060 = vpack.c.b16 %v2370, %v2364
    %v3061 = vpack.c.b16 %v2371, %v2365
    %v3062 = vpack.c.b16 %v2372, %v2366
    %v3063 = vpack.c.b16 %v2373, %v2367
    %v3064 = vpack.c.b16 %v2374, %v2368
    %v3065 = vpack.c.b16 %v2381, %v2375
    %v3066 = vpack.c.b16 %v2382, %v2376
    %v3067 = vpack.c.b16 %v2383, %v2377
    %v3068 = vpack.c.b16 %v2384, %v2378
    %v3069 = vpack.c.b16 %v2385, %v2379
    %v3070 = vpack.c.b16 %v2386, %v2380
    %v3071 = vpack.c.b16 %v2393, %v2387
    %v3072 = vpack.c.b16 %v2394, %v2388
    %v3073 = vpack.c.b16 %v2395, %v2389
    %v3074 = vpack.c.b16 %v2396, %v2390
    %v3075 = vpack.c.b16 %v2397, %v2391
    %v3076 = vpack.c.b16 %v2398, %v2392
    %v3077 = vpack.c.b16 %v2405, %v2399
    %v3078 = vpack.c.b16 %v2406, %v2400
    %v3079 = vpack.c.b16 %v2407, %v2401
    %v3080 = vpack.c.b16 %v2408, %v2402
    %v3081 = vpack.c.b16 %v2409, %v2403
    %v3082 = vpack.c.b16 %v2410, %v2404
    %v3083 = vpack.c.b16 %v2417, %v2411
    %v3084 = vpack.c.b16 %v2418, %v2412
    %v3085 = vpack.c.b16 %v2419, %v2413
    %v3086 = vpack.c.b16 %v2420, %v2414
    %v3087 = vpack.c.b16 %v2421, %v2415
    %v3088 = vpack.c.b16 %v2422, %v2416
    %v3089 = vpack.c.b16 %v2429, %v2423
    %v3090 = vpack.c.b16 %v2430, %v2424
    %v3091 = vpack.c.b16 %v2431, %v2425
    %v3092 = vpack.c.b16 %v2432, %v2426
    %v3093 = vpack.c.b16 %v2433, %v2427
    %v3094 = vpack.c.b16 %v2434, %v2428
    %v3095 = vpack.c.b16 %v2441, %v2435
    %v3096 = vpack.c.b16 %v2442, %v2436
    %v3097 = vpack.c.b16 %v2443, %v2437
    %v3098 = vpack.c.b16 %v2444, %v2438
    %v3099 = vpack.c.b16 %v2445, %v2439
    %v3100 = vpack.c.b16 %v2446, %v2440
    %v3101 = vpack.c.b16 %v2453, %v2447
    %v3102 = vpack.c.b16 %v2454, %v2448
    %v3103 = vpack.c.b16 %v2455, %v2449
    %v3104 = vpack.c.b16 %v2456, %v2450
    %v3105 = vpack.c.b16 %v2457, %v2451
    %v3106 = vpack.c.b16 %v2458, %v2452
    %v3107 = vpack.c.b16 %v2465, %v2459
    %v3108 = vpack.c.b16 %v2466, %v2460
    %v3109 = vpack.c.b16 %v2467, %v2461
    %v3110 = vpack.c.b16 %v2468, %v2462
    %v3111 = vpack.c.b16 %v2469, %v2463
    %v3112 = vpack.c.b16 %v2470, %v2464
    %v3113 = vpack.c.b16 %v2477, %v2471
    %v3114 = vpack.c.b16 %v2478, %v2472
    %v3115 = vpack.c.b16 %v2479, %v2473
    %v3116 = vpack.c.b16 %v2480, %v2474
    %v3117 = vpack.c.b16 %v2481, %v2475
    %v3118 = vpack.c.b16 %v2482, %v2476
    %v3119 = vpack.c.b16 %v2489, %v2483
    %v3120 = vpack.c.b16 %v2490, %v2484
    %v3121 = vpack.c.b16 %v2491, %v2485
    %v3122 = vpack.c.b16 %v2492, %v2486
    %v3123 = vpack.c.b16 %v2493, %v2487
    %v3124 = vpack.c.b16 %v2494, %v2488
    %v3125 = vpack.c.b16 %v2501, %v2495
    %v3126 = vpack.c.b16 %v2502, %v2496
    %v3127 = vpack.c.b16 %v2503, %v2497
    %v3128 = vpack.c.b16 %v2504, %v2498
    %v3129 = vpack.c.b16 %v2505, %v2499
    %v3130 = vpack.c.b16 %v2506, %v2500
    %v3131 = vpack.c.b16 %v2513, %v2507
    %v3132 = vpack.c.b16 %v2514, %v2508
    %v3133 = vpack.c.b16 %v2515, %v2509
    %v3134 = vpack.c.b16 %v2516, %v2510
    %v3135 = vpack.c.b16 %v2517, %v2511
    %v3136 = vpack.c.b16 %v2518, %v2512
    %v3137 = vpack.c.b16 %v2525, %v2519
    %v3138 = vpack.c.b16 %v2526, %v2520
    %v3139 = vpack.c.b16 %v2527, %v2521
    %v3140 = vpack.c.b16 %v2528, %v2522
    %v3141 = vpack.c.b16 %v2529, %v2523
    %v3142 = vpack.c.b16 %v2530, %v2524
    %v3143 = vpack.c.b16 %v2537, %v2531
    %v3144 = vpack.c.b16 %v2538, %v2532
    %v3145 = vpack.c.b16 %v2539, %v2533
    %v3146 = vpack.c.b16 %v2540, %v2534
    %v3147 = vpack.c.b16 %v2541, %v2535
    %v3148 = vpack.c.b16 %v2542, %v2536
    %v3149 = vpack.c.b16 %v2549, %v2543
    %v3150 = vpack.c.b16 %v2550, %v2544
    %v3151 = vpack.c.b16 %v2551, %v2545
    %v3152 = vpack.c.b16 %v2552, %v2546
    %v3153 = vpack.c.b16 %v2553, %v2547
    %v3154 = vpack.c.b16 %v2554, %v2548
    %v3155 = vpack.c.b16 %v2561, %v2555
    %v3156 = vpack.c.b16 %v2562, %v2556
    %v3157 = vpack.c.b16 %v2563, %v2557
    %v3158 = vpack.c.b16 %v2564, %v2558
    %v3159 = vpack.c.b16 %v2565, %v2559
    %v3160 = vpack.c.b16 %v2566, %v2560
    %v3161 = vpack.c.b16 %v2573, %v2567
    %v3162 = vpack.c.b16 %v2574, %v2568
    %v3163 = vpack.c.b16 %v2575, %v2569
    %v3164 = vpack.c.b16 %v2576, %v2570
    %v3165 = vpack.c.b16 %v2577, %v2571
    %v3166 = vpack.c.b16 %v2578, %v2572
    %v3167 = vpack.c.b16 %v2585, %v2579
    %v3168 = vpack.c.b16 %v2586, %v2580
    %v3169 = vpack.c.b16 %v2587, %v2581
    %v3170 = vpack.c.b16 %v2588, %v2582
    %v3171 = vpack.c.b16 %v2589, %v2583
    %v3172 = vpack.c.b16 %v2590, %v2584
    %v3173 = vpack.c.b16 %v2597, %v2591
    %v3174 = vpack.c.b16 %v2598, %v2592
    %v3175 = vpack.c.b16 %v2599, %v2593
    %v3176 = vpack.c.b16 %v2600, %v2594
    %v3177 = vpack.c.b16 %v2601, %v2595
    %v3178 = vpack.c.b16 %v2602, %v2596
    %3755 = vmatprep.subr.bf16.mxu0 %v2646
    %3756 = vmatpush1.bf16.msra.mxu0 %v2645
    %3757 = vmatprep.subr.bf16.mxu0 %v2640
    %3758 = vmatpush1.bf16.msra.mxu0 %v2639
    %3759 = vmatprep.subr.bf16.mxu0 %v2634
    %3760 = vmatpush1.bf16.msra.mxu0 %v2633
    %3761 = vmatprep.subr.bf16.mxu0 %v2628
    %3762 = vmatpush1.bf16.msra.mxu0 %v2627
    %3763 = vmatprep.subr.bf16.mxu0 %v2622
    %3764 = vmatpush1.bf16.msra.mxu0 %v2621
    %3765 = vmatprep.subr.bf16.mxu0 %v2616
    %3766 = vmatpush1.bf16.msra.mxu0 %v2615
    %3767 = vmatprep.subr.bf16.mxu0 %v2610
    %3768 = vmatpush1.bf16.msra.mxu0 %v2609
    %3769 = vmatprep.subr.bf16.mxu0 %v2604
    %3770 = vmatpush1.bf16.msra.mxu0 %v2603
    %3771 = vmatprep.subr.bf16.mxu0 %v2694
    %3772 = vmatpush2.bf16.msra.mxu0 %v2693
    %3773 = vmatprep.subr.bf16.mxu0 %v2688
    %3774 = vmatpush2.bf16.msra.mxu0 %v2687
    %3775 = vmatprep.subr.bf16.mxu0 %v2682
    %3776 = vmatpush2.bf16.msra.mxu0 %v2681
    %3777 = vmatprep.subr.bf16.mxu0 %v2676
    %3778 = vmatpush2.bf16.msra.mxu0 %v2675
    %3779 = vmatprep.subr.bf16.mxu0 %v2670
    %3780 = vmatpush2.bf16.msra.mxu0 %v2669
    %3781 = vmatprep.subr.bf16.mxu0 %v2664
    %3782 = vmatpush2.bf16.msra.mxu0 %v2663
    %3783 = vmatprep.subr.bf16.mxu0 %v2658
    %3784 = vmatpush2.bf16.msra.mxu0 %v2657
    %3785 = vmatprep.subr.bf16.mxu0 %v2652
    %3786 = vmatpush2.bf16.msra.mxu0 %v2651
    %3787 = vmatprep.mubr.bf16.mxu0 %v256
    %3788 = vmatmul.mubr.bf16.gmra.mxu0 %v255
    %v3789 = vpop.f32.mrf.mxu0
    %v3790 = vadd.f32 %v848, %v3789
    %v3791 = vpop.f32.mrf.mxu0
    %v3792 = vadd.f32 %v852, %v3791
    %v3793 = vpop.f32.mrf.mxu0
    %v3794 = vpop.f32.mrf.mxu0
    %3795 = vdwg.mxu0
    %3796 = vmatprep.subr.bf16.mxu0 %v2742
    %3797 = vmatpush1.bf16.msra.mxu0 %v2741
    %3798 = vmatprep.subr.bf16.mxu0 %v2736
    %3799 = vmatpush1.bf16.msra.mxu0 %v2735
    %3800 = vmatprep.subr.bf16.mxu0 %v2730
    %3801 = vmatpush1.bf16.msra.mxu0 %v2729
    %3802 = vmatprep.subr.bf16.mxu0 %v2724
    %3803 = vmatpush1.bf16.msra.mxu0 %v2723
    %3804 = vmatprep.subr.bf16.mxu0 %v2718
    %3805 = vmatpush1.bf16.msra.mxu0 %v2717
    %3806 = vmatprep.subr.bf16.mxu0 %v2712
    %3807 = vmatpush1.bf16.msra.mxu0 %v2711
    %3808 = vmatprep.subr.bf16.mxu0 %v2706
    %3809 = vmatpush1.bf16.msra.mxu0 %v2705
    %3810 = vmatprep.subr.bf16.mxu0 %v2700
    %3811 = vmatpush1.bf16.msra.mxu0 %v2699
    %3812 = vmatprep.subr.bf16.mxu0 %v2790
    %3813 = vmatpush2.bf16.msra.mxu0 %v2789
    %3814 = vmatprep.subr.bf16.mxu0 %v2784
    %3815 = vmatpush2.bf16.msra.mxu0 %v2783
    %3816 = vmatprep.subr.bf16.mxu0 %v2778
    %3817 = vmatpush2.bf16.msra.mxu0 %v2777
    %3818 = vmatprep.subr.bf16.mxu0 %v2772
    %3819 = vmatpush2.bf16.msra.mxu0 %v2771
    %3820 = vmatprep.subr.bf16.mxu0 %v2766
    %3821 = vmatpush2.bf16.msra.mxu0 %v2765
    %3822 = vmatprep.subr.bf16.mxu0 %v2760
    %3823 = vmatpush2.bf16.msra.mxu0 %v2759
    %3824 = vmatprep.subr.bf16.mxu0 %v2754
    %3825 = vmatpush2.bf16.msra.mxu0 %v2753
    %3826 = vmatprep.subr.bf16.mxu0 %v2748
    %3827 = vmatpush2.bf16.msra.mxu0 %v2747
    %3828 = vmatprep.mubr.bf16.mxu0 %v258
    %3829 = vmatmul.mubr.bf16.gmra.mxu0 %v257
    %v3830 = vpop.f32.mrf.mxu0
    %v3831 = vadd.f32 %v3790, %v3830
    %v3832 = vpop.f32.mrf.mxu0
    %v3833 = vadd.f32 %v3792, %v3832
    %v3834 = vpop.f32.mrf.mxu0
    %v3835 = vpop.f32.mrf.mxu0
    %3836 = vdwg.mxu0
    %3837 = vmatprep.subr.bf16.mxu0 %v2838
    %3838 = vmatpush1.bf16.msra.mxu0 %v2837
    %3839 = vmatprep.subr.bf16.mxu0 %v2832
    %3840 = vmatpush1.bf16.msra.mxu0 %v2831
    %3841 = vmatprep.subr.bf16.mxu0 %v2826
    %3842 = vmatpush1.bf16.msra.mxu0 %v2825
    %3843 = vmatprep.subr.bf16.mxu0 %v2820
    %3844 = vmatpush1.bf16.msra.mxu0 %v2819
    %3845 = vmatprep.subr.bf16.mxu0 %v2814
    %3846 = vmatpush1.bf16.msra.mxu0 %v2813
    %3847 = vmatprep.subr.bf16.mxu0 %v2808
    %3848 = vmatpush1.bf16.msra.mxu0 %v2807
    %3849 = vmatprep.subr.bf16.mxu0 %v2802
    %3850 = vmatpush1.bf16.msra.mxu0 %v2801
    %3851 = vmatprep.subr.bf16.mxu0 %v2796
    %3852 = vmatpush1.bf16.msra.mxu0 %v2795
    %3853 = vmatprep.subr.bf16.mxu0 %v2886
    %3854 = vmatpush2.bf16.msra.mxu0 %v2885
    %3855 = vmatprep.subr.bf16.mxu0 %v2880
    %3856 = vmatpush2.bf16.msra.mxu0 %v2879
    %3857 = vmatprep.subr.bf16.mxu0 %v2874
    %3858 = vmatpush2.bf16.msra.mxu0 %v2873
    %3859 = vmatprep.subr.bf16.mxu0 %v2868
    %3860 = vmatpush2.bf16.msra.mxu0 %v2867
    %3861 = vmatprep.subr.bf16.mxu0 %v2862
    %3862 = vmatpush2.bf16.msra.mxu0 %v2861
    %3863 = vmatprep.subr.bf16.mxu0 %v2856
    %3864 = vmatpush2.bf16.msra.mxu0 %v2855
    %3865 = vmatprep.subr.bf16.mxu0 %v2850
    %3866 = vmatpush2.bf16.msra.mxu0 %v2849
    %3867 = vmatprep.subr.bf16.mxu0 %v2844
    %3868 = vmatpush2.bf16.msra.mxu0 %v2843
    %3869 = vmatprep.mubr.bf16.mxu0 %v260
    %3870 = vmatmul.mubr.bf16.gmra.mxu0 %v259
    %v3871 = vpop.f32.mrf.mxu0
    %v3872 = vadd.f32 %v3831, %v3871
    %v3873 = vpop.f32.mrf.mxu0
    %v3874 = vadd.f32 %v3833, %v3873
    %v3875 = vpop.f32.mrf.mxu0
    %v3876 = vpop.f32.mrf.mxu0
    %3877 = vdwg.mxu0
    %3878 = vmatprep.subr.bf16.mxu0 %v2934
    %3879 = vmatpush1.bf16.msra.mxu0 %v2933
    %3880 = vmatprep.subr.bf16.mxu0 %v2928
    %3881 = vmatpush1.bf16.msra.mxu0 %v2927
    %3882 = vmatprep.subr.bf16.mxu0 %v2922
    %3883 = vmatpush1.bf16.msra.mxu0 %v2921
    %3884 = vmatprep.subr.bf16.mxu0 %v2916
    %3885 = vmatpush1.bf16.msra.mxu0 %v2915
    %3886 = vmatprep.subr.bf16.mxu0 %v2910
    %3887 = vmatpush1.bf16.msra.mxu0 %v2909
    %3888 = vmatprep.subr.bf16.mxu0 %v2904
    %3889 = vmatpush1.bf16.msra.mxu0 %v2903
    %3890 = vmatprep.subr.bf16.mxu0 %v2898
    %3891 = vmatpush1.bf16.msra.mxu0 %v2897
    %3892 = vmatprep.subr.bf16.mxu0 %v2892
    %3893 = vmatpush1.bf16.msra.mxu0 %v2891
    %3894 = vmatprep.subr.bf16.mxu0 %v2982
    %3895 = vmatpush2.bf16.msra.mxu0 %v2981
    %3896 = vmatprep.subr.bf16.mxu0 %v2976
    %3897 = vmatpush2.bf16.msra.mxu0 %v2975
    %3898 = vmatprep.subr.bf16.mxu0 %v2970
    %3899 = vmatpush2.bf16.msra.mxu0 %v2969
    %3900 = vmatprep.subr.bf16.mxu0 %v2964
    %3901 = vmatpush2.bf16.msra.mxu0 %v2963
    %3902 = vmatprep.subr.bf16.mxu0 %v2958
    %3903 = vmatpush2.bf16.msra.mxu0 %v2957
    %3904 = vmatprep.subr.bf16.mxu0 %v2952
    %3905 = vmatpush2.bf16.msra.mxu0 %v2951
    %3906 = vmatprep.subr.bf16.mxu0 %v2946
    %3907 = vmatpush2.bf16.msra.mxu0 %v2945
    %3908 = vmatprep.subr.bf16.mxu0 %v2940
    %3909 = vmatpush2.bf16.msra.mxu0 %v2939
    %3910 = vmatprep.mubr.bf16.mxu0 %v262
    %3911 = vmatmul.mubr.bf16.gmra.mxu0 %v261
    %v3912 = vpop.f32.mrf.mxu0
    %v3913 = vadd.f32 %v3872, %v3912
    %v3914 = vpop.f32.mrf.mxu0
    %v3915 = vadd.f32 %v3874, %v3914
    %v3916 = vpop.f32.mrf.mxu0
    %v3917 = vpop.f32.mrf.mxu0
    %3918 = vdwg.mxu0
    %3919 = vmatprep.subr.bf16.mxu0 %v3030
    %3920 = vmatpush1.bf16.msra.mxu0 %v3029
    %3921 = vmatprep.subr.bf16.mxu0 %v3024
    %3922 = vmatpush1.bf16.msra.mxu0 %v3023
    %3923 = vmatprep.subr.bf16.mxu0 %v3018
    %3924 = vmatpush1.bf16.msra.mxu0 %v3017
    %3925 = vmatprep.subr.bf16.mxu0 %v3012
    %3926 = vmatpush1.bf16.msra.mxu0 %v3011
    %3927 = vmatprep.subr.bf16.mxu0 %v3006
    %3928 = vmatpush1.bf16.msra.mxu0 %v3005
    %3929 = vmatprep.subr.bf16.mxu0 %v3000
    %3930 = vmatpush1.bf16.msra.mxu0 %v2999
    %3931 = vmatprep.subr.bf16.mxu0 %v2994
    %3932 = vmatpush1.bf16.msra.mxu0 %v2993
    %3933 = vmatprep.subr.bf16.mxu0 %v2988
    %3934 = vmatpush1.bf16.msra.mxu0 %v2987
    %3935 = vmatprep.subr.bf16.mxu0 %v3078
    %3936 = vmatpush2.bf16.msra.mxu0 %v3077
    %3937 = vmatprep.subr.bf16.mxu0 %v3072
    %3938 = vmatpush2.bf16.msra.mxu0 %v3071
    %3939 = vmatprep.subr.bf16.mxu0 %v3066
    %3940 = vmatpush2.bf16.msra.mxu0 %v3065
    %3941 = vmatprep.subr.bf16.mxu0 %v3060
    %3942 = vmatpush2.bf16.msra.mxu0 %v3059
    %3943 = vmatprep.subr.bf16.mxu0 %v3054
    %3944 = vmatpush2.bf16.msra.mxu0 %v3053
    %3945 = vmatprep.subr.bf16.mxu0 %v3048
    %3946 = vmatpush2.bf16.msra.mxu0 %v3047
    %3947 = vmatprep.subr.bf16.mxu0 %v3042
    %3948 = vmatpush2.bf16.msra.mxu0 %v3041
    %3949 = vmatprep.subr.bf16.mxu0 %v3036
    %3950 = vmatpush2.bf16.msra.mxu0 %v3035
    %3951 = vmatprep.mubr.bf16.mxu0 %v264
    %3952 = vmatmul.mubr.bf16.gmra.mxu0 %v263
    %v3953 = vpop.f32.mrf.mxu0
    %v3954 = vadd.f32 %v3913, %v3953
    %v3955 = vpop.f32.mrf.mxu0
    %v3956 = vadd.f32 %v3915, %v3955
    %v3957 = vpop.f32.mrf.mxu0
    %v3958 = vpop.f32.mrf.mxu0
    %3959 = vdwg.mxu0
    %3960 = vmatprep.subr.bf16.mxu0 %v3126
    %3961 = vmatpush1.bf16.msra.mxu0 %v3125
    %3962 = vmatprep.subr.bf16.mxu0 %v3120
    %3963 = vmatpush1.bf16.msra.mxu0 %v3119
    %3964 = vmatprep.subr.bf16.mxu0 %v3114
    %3965 = vmatpush1.bf16.msra.mxu0 %v3113
    %3966 = vmatprep.subr.bf16.mxu0 %v3108
    %3967 = vmatpush1.bf16.msra.mxu0 %v3107
    %3968 = vmatprep.subr.bf16.mxu0 %v3102
    %3969 = vmatpush1.bf16.msra.mxu0 %v3101
    %3970 = vmatprep.subr.bf16.mxu0 %v3096
    %3971 = vmatpush1.bf16.msra.mxu0 %v3095
    %3972 = vmatprep.subr.bf16.mxu0 %v3090
    %3973 = vmatpush1.bf16.msra.mxu0 %v3089
    %3974 = vmatprep.subr.bf16.mxu0 %v3084
    %3975 = vmatpush1.bf16.msra.mxu0 %v3083
    %3976 = vmatprep.subr.bf16.mxu0 %v3174
    %3977 = vmatpush2.bf16.msra.mxu0 %v3173
    %3978 = vmatprep.subr.bf16.mxu0 %v3168
    %3979 = vmatpush2.bf16.msra.mxu0 %v3167
    %3980 = vmatprep.subr.bf16.mxu0 %v3162
    %3981 = vmatpush2.bf16.msra.mxu0 %v3161
    %3982 = vmatprep.subr.bf16.mxu0 %v3156
    %3983 = vmatpush2.bf16.msra.mxu0 %v3155
    %3984 = vmatprep.subr.bf16.mxu0 %v3150
    %3985 = vmatpush2.bf16.msra.mxu0 %v3149
    %3986 = vmatprep.subr.bf16.mxu0 %v3144
    %3987 = vmatpush2.bf16.msra.mxu0 %v3143
    %3988 = vmatprep.subr.bf16.mxu0 %v3138
    %3989 = vmatpush2.bf16.msra.mxu0 %v3137
    %3990 = vmatprep.subr.bf16.mxu0 %v3132
    %3991 = vmatpush2.bf16.msra.mxu0 %v3131
    %3992 = vmatprep.mubr.bf16.mxu0 %v266
    %3993 = vmatmul.mubr.bf16.gmra.mxu0 %v265
    %v3994 = vpop.f32.mrf.mxu0
    %v3995 = vadd.f32 %v3954, %v3994
    %v3996 = vpop.f32.mrf.mxu0
    %v3997 = vadd.f32 %v3956, %v3996
    %v3998 = vpop.f32.mrf.mxu0
    %v3999 = vpop.f32.mrf.mxu0
    %4000 = vdwg.mxu0
    %4001 = vmatprep.subr.bf16.mxu0 %v2648
    %4002 = vmatpush1.bf16.msra.mxu0 %v2647
    %4003 = vmatprep.subr.bf16.mxu0 %v2642
    %4004 = vmatpush1.bf16.msra.mxu0 %v2641
    %4005 = vmatprep.subr.bf16.mxu0 %v2636
    %4006 = vmatpush1.bf16.msra.mxu0 %v2635
    %4007 = vmatprep.subr.bf16.mxu0 %v2630
    %4008 = vmatpush1.bf16.msra.mxu0 %v2629
    %4009 = vmatprep.subr.bf16.mxu0 %v2624
    %4010 = vmatpush1.bf16.msra.mxu0 %v2623
    %4011 = vmatprep.subr.bf16.mxu0 %v2618
    %4012 = vmatpush1.bf16.msra.mxu0 %v2617
    %4013 = vmatprep.subr.bf16.mxu0 %v2612
    %4014 = vmatpush1.bf16.msra.mxu0 %v2611
    %4015 = vmatprep.subr.bf16.mxu0 %v2606
    %4016 = vmatpush1.bf16.msra.mxu0 %v2605
    %4017 = vmatprep.subr.bf16.mxu0 %v2696
    %4018 = vmatpush2.bf16.msra.mxu0 %v2695
    %4019 = vmatprep.subr.bf16.mxu0 %v2690
    %4020 = vmatpush2.bf16.msra.mxu0 %v2689
    %4021 = vmatprep.subr.bf16.mxu0 %v2684
    %4022 = vmatpush2.bf16.msra.mxu0 %v2683
    %4023 = vmatprep.subr.bf16.mxu0 %v2678
    %4024 = vmatpush2.bf16.msra.mxu0 %v2677
    %4025 = vmatprep.subr.bf16.mxu0 %v2672
    %4026 = vmatpush2.bf16.msra.mxu0 %v2671
    %4027 = vmatprep.subr.bf16.mxu0 %v2666
    %4028 = vmatpush2.bf16.msra.mxu0 %v2665
    %4029 = vmatprep.subr.bf16.mxu0 %v2660
    %4030 = vmatpush2.bf16.msra.mxu0 %v2659
    %4031 = vmatprep.subr.bf16.mxu0 %v2654
    %4032 = vmatpush2.bf16.msra.mxu0 %v2653
    %4033 = vmatprep.mubr.bf16.mxu0 %v256
    %4034 = vmatmul.mubr.bf16.gmra.mxu0 %v255
    %v4035 = vpop.f32.mrf.mxu0
    %v4036 = vadd.f32 %v856, %v4035
    %v4037 = vpop.f32.mrf.mxu0
    %v4038 = vadd.f32 %v860, %v4037
    %v4039 = vpop.f32.mrf.mxu0
    %v4040 = vpop.f32.mrf.mxu0
    %4041 = vdwg.mxu0
    %4042 = vmatprep.subr.bf16.mxu0 %v2744
    %4043 = vmatpush1.bf16.msra.mxu0 %v2743
    %4044 = vmatprep.subr.bf16.mxu0 %v2738
    %4045 = vmatpush1.bf16.msra.mxu0 %v2737
    %4046 = vmatprep.subr.bf16.mxu0 %v2732
    %4047 = vmatpush1.bf16.msra.mxu0 %v2731
    %4048 = vmatprep.subr.bf16.mxu0 %v2726
    %4049 = vmatpush1.bf16.msra.mxu0 %v2725
    %4050 = vmatprep.subr.bf16.mxu0 %v2720
    %4051 = vmatpush1.bf16.msra.mxu0 %v2719
    %4052 = vmatprep.subr.bf16.mxu0 %v2714
    %4053 = vmatpush1.bf16.msra.mxu0 %v2713
    %4054 = vmatprep.subr.bf16.mxu0 %v2708
    %4055 = vmatpush1.bf16.msra.mxu0 %v2707
    %4056 = vmatprep.subr.bf16.mxu0 %v2702
    %4057 = vmatpush1.bf16.msra.mxu0 %v2701
    %4058 = vmatprep.subr.bf16.mxu0 %v2792
    %4059 = vmatpush2.bf16.msra.mxu0 %v2791
    %4060 = vmatprep.subr.bf16.mxu0 %v2786
    %4061 = vmatpush2.bf16.msra.mxu0 %v2785
    %4062 = vmatprep.subr.bf16.mxu0 %v2780
    %4063 = vmatpush2.bf16.msra.mxu0 %v2779
    %4064 = vmatprep.subr.bf16.mxu0 %v2774
    %4065 = vmatpush2.bf16.msra.mxu0 %v2773
    %4066 = vmatprep.subr.bf16.mxu0 %v2768
    %4067 = vmatpush2.bf16.msra.mxu0 %v2767
    %4068 = vmatprep.subr.bf16.mxu0 %v2762
    %4069 = vmatpush2.bf16.msra.mxu0 %v2761
    %4070 = vmatprep.subr.bf16.mxu0 %v2756
    %4071 = vmatpush2.bf16.msra.mxu0 %v2755
    %4072 = vmatprep.subr.bf16.mxu0 %v2750
    %4073 = vmatpush2.bf16.msra.mxu0 %v2749
    %4074 = vmatprep.mubr.bf16.mxu0 %v258
    %4075 = vmatmul.mubr.bf16.gmra.mxu0 %v257
    %v4076 = vpop.f32.mrf.mxu0
    %v4077 = vadd.f32 %v4036, %v4076
    %v4078 = vpop.f32.mrf.mxu0
    %v4079 = vadd.f32 %v4038, %v4078
    %v4080 = vpop.f32.mrf.mxu0
    %v4081 = vpop.f32.mrf.mxu0
    %4082 = vdwg.mxu0
    %4083 = vmatprep.subr.bf16.mxu0 %v2840
    %4084 = vmatpush1.bf16.msra.mxu0 %v2839
    %4085 = vmatprep.subr.bf16.mxu0 %v2834
    %4086 = vmatpush1.bf16.msra.mxu0 %v2833
    %4087 = vmatprep.subr.bf16.mxu0 %v2828
    %4088 = vmatpush1.bf16.msra.mxu0 %v2827
    %4089 = vmatprep.subr.bf16.mxu0 %v2822
    %4090 = vmatpush1.bf16.msra.mxu0 %v2821
    %4091 = vmatprep.subr.bf16.mxu0 %v2816
    %4092 = vmatpush1.bf16.msra.mxu0 %v2815
    %4093 = vmatprep.subr.bf16.mxu0 %v2810
    %4094 = vmatpush1.bf16.msra.mxu0 %v2809
    %4095 = vmatprep.subr.bf16.mxu0 %v2804
    %4096 = vmatpush1.bf16.msra.mxu0 %v2803
    %4097 = vmatprep.subr.bf16.mxu0 %v2798
    %4098 = vmatpush1.bf16.msra.mxu0 %v2797
    %4099 = vmatprep.subr.bf16.mxu0 %v2888
    %4100 = vmatpush2.bf16.msra.mxu0 %v2887
    %4101 = vmatprep.subr.bf16.mxu0 %v2882
    %4102 = vmatpush2.bf16.msra.mxu0 %v2881
    %4103 = vmatprep.subr.bf16.mxu0 %v2876
    %4104 = vmatpush2.bf16.msra.mxu0 %v2875
    %4105 = vmatprep.subr.bf16.mxu0 %v2870
    %4106 = vmatpush2.bf16.msra.mxu0 %v2869
    %4107 = vmatprep.subr.bf16.mxu0 %v2864
    %4108 = vmatpush2.bf16.msra.mxu0 %v2863
    %4109 = vmatprep.subr.bf16.mxu0 %v2858
    %4110 = vmatpush2.bf16.msra.mxu0 %v2857
    %4111 = vmatprep.subr.bf16.mxu0 %v2852
    %4112 = vmatpush2.bf16.msra.mxu0 %v2851
    %4113 = vmatprep.subr.bf16.mxu0 %v2846
    %4114 = vmatpush2.bf16.msra.mxu0 %v2845
    %4115 = vmatprep.mubr.bf16.mxu0 %v260
    %4116 = vmatmul.mubr.bf16.gmra.mxu0 %v259
    %v4117 = vpop.f32.mrf.mxu0
    %v4118 = vadd.f32 %v4077, %v4117
    %v4119 = vpop.f32.mrf.mxu0
    %v4120 = vadd.f32 %v4079, %v4119
    %v4121 = vpop.f32.mrf.mxu0
    %v4122 = vpop.f32.mrf.mxu0
    %4123 = vdwg.mxu0
    %4124 = vmatprep.subr.bf16.mxu0 %v2936
    %4125 = vmatpush1.bf16.msra.mxu0 %v2935
    %4126 = vmatprep.subr.bf16.mxu0 %v2930
    %4127 = vmatpush1.bf16.msra.mxu0 %v2929
    %4128 = vmatprep.subr.bf16.mxu0 %v2924
    %4129 = vmatpush1.bf16.msra.mxu0 %v2923
    %4130 = vmatprep.subr.bf16.mxu0 %v2918
    %4131 = vmatpush1.bf16.msra.mxu0 %v2917
    %4132 = vmatprep.subr.bf16.mxu0 %v2912
    %4133 = vmatpush1.bf16.msra.mxu0 %v2911
    %4134 = vmatprep.subr.bf16.mxu0 %v2906
    %4135 = vmatpush1.bf16.msra.mxu0 %v2905
    %4136 = vmatprep.subr.bf16.mxu0 %v2900
    %4137 = vmatpush1.bf16.msra.mxu0 %v2899
    %4138 = vmatprep.subr.bf16.mxu0 %v2894
    %4139 = vmatpush1.bf16.msra.mxu0 %v2893
    %4140 = vmatprep.subr.bf16.mxu0 %v2984
    %4141 = vmatpush2.bf16.msra.mxu0 %v2983
    %4142 = vmatprep.subr.bf16.mxu0 %v2978
    %4143 = vmatpush2.bf16.msra.mxu0 %v2977
    %4144 = vmatprep.subr.bf16.mxu0 %v2972
    %4145 = vmatpush2.bf16.msra.mxu0 %v2971
    %4146 = vmatprep.subr.bf16.mxu0 %v2966
    %4147 = vmatpush2.bf16.msra.mxu0 %v2965
    %4148 = vmatprep.subr.bf16.mxu0 %v2960
    %4149 = vmatpush2.bf16.msra.mxu0 %v2959
    %4150 = vmatprep.subr.bf16.mxu0 %v2954
    %4151 = vmatpush2.bf16.msra.mxu0 %v2953
    %4152 = vmatprep.subr.bf16.mxu0 %v2948
    %4153 = vmatpush2.bf16.msra.mxu0 %v2947
    %4154 = vmatprep.subr.bf16.mxu0 %v2942
    %4155 = vmatpush2.bf16.msra.mxu0 %v2941
    %4156 = vmatprep.mubr.bf16.mxu0 %v262
    %4157 = vmatmul.mubr.bf16.gmra.mxu0 %v261
    %v4158 = vpop.f32.mrf.mxu0
    %v4159 = vadd.f32 %v4118, %v4158
    %v4160 = vpop.f32.mrf.mxu0
    %v4161 = vadd.f32 %v4120, %v4160
    %v4162 = vpop.f32.mrf.mxu0
    %v4163 = vpop.f32.mrf.mxu0
    %4164 = vdwg.mxu0
    %4165 = vmatprep.subr.bf16.mxu0 %v3032
    %4166 = vmatpush1.bf16.msra.mxu0 %v3031
    %4167 = vmatprep.subr.bf16.mxu0 %v3026
    %4168 = vmatpush1.bf16.msra.mxu0 %v3025
    %4169 = vmatprep.subr.bf16.mxu0 %v3020
    %4170 = vmatpush1.bf16.msra.mxu0 %v3019
    %4171 = vmatprep.subr.bf16.mxu0 %v3014
    %4172 = vmatpush1.bf16.msra.mxu0 %v3013
    %4173 = vmatprep.subr.bf16.mxu0 %v3008
    %4174 = vmatpush1.bf16.msra.mxu0 %v3007
    %4175 = vmatprep.subr.bf16.mxu0 %v3002
    %4176 = vmatpush1.bf16.msra.mxu0 %v3001
    %4177 = vmatprep.subr.bf16.mxu0 %v2996
    %4178 = vmatpush1.bf16.msra.mxu0 %v2995
    %4179 = vmatprep.subr.bf16.mxu0 %v2990
    %4180 = vmatpush1.bf16.msra.mxu0 %v2989
    %4181 = vmatprep.subr.bf16.mxu0 %v3080
    %4182 = vmatpush2.bf16.msra.mxu0 %v3079
    %4183 = vmatprep.subr.bf16.mxu0 %v3074
    %4184 = vmatpush2.bf16.msra.mxu0 %v3073
    %4185 = vmatprep.subr.bf16.mxu0 %v3068
    %4186 = vmatpush2.bf16.msra.mxu0 %v3067
    %4187 = vmatprep.subr.bf16.mxu0 %v3062
    %4188 = vmatpush2.bf16.msra.mxu0 %v3061
    %4189 = vmatprep.subr.bf16.mxu0 %v3056
    %4190 = vmatpush2.bf16.msra.mxu0 %v3055
    %4191 = vmatprep.subr.bf16.mxu0 %v3050
    %4192 = vmatpush2.bf16.msra.mxu0 %v3049
    %4193 = vmatprep.subr.bf16.mxu0 %v3044
    %4194 = vmatpush2.bf16.msra.mxu0 %v3043
    %4195 = vmatprep.subr.bf16.mxu0 %v3038
    %4196 = vmatpush2.bf16.msra.mxu0 %v3037
    %4197 = vmatprep.mubr.bf16.mxu0 %v264
    %4198 = vmatmul.mubr.bf16.gmra.mxu0 %v263
    %v4199 = vpop.f32.mrf.mxu0
    %v4200 = vadd.f32 %v4159, %v4199
    %v4201 = vpop.f32.mrf.mxu0
    %v4202 = vadd.f32 %v4161, %v4201
    %v4203 = vpop.f32.mrf.mxu0
    %v4204 = vpop.f32.mrf.mxu0
    %4205 = vdwg.mxu0
    %4206 = vmatprep.subr.bf16.mxu0 %v3128
    %4207 = vmatpush1.bf16.msra.mxu0 %v3127
    %4208 = vmatprep.subr.bf16.mxu0 %v3122
    %4209 = vmatpush1.bf16.msra.mxu0 %v3121
    %4210 = vmatprep.subr.bf16.mxu0 %v3116
    %4211 = vmatpush1.bf16.msra.mxu0 %v3115
    %4212 = vmatprep.subr.bf16.mxu0 %v3110
    %4213 = vmatpush1.bf16.msra.mxu0 %v3109
    %4214 = vmatprep.subr.bf16.mxu0 %v3104
    %4215 = vmatpush1.bf16.msra.mxu0 %v3103
    %4216 = vmatprep.subr.bf16.mxu0 %v3098
    %4217 = vmatpush1.bf16.msra.mxu0 %v3097
    %4218 = vmatprep.subr.bf16.mxu0 %v3092
    %4219 = vmatpush1.bf16.msra.mxu0 %v3091
    %4220 = vmatprep.subr.bf16.mxu0 %v3086
    %4221 = vmatpush1.bf16.msra.mxu0 %v3085
    %4222 = vmatprep.subr.bf16.mxu0 %v3176
    %4223 = vmatpush2.bf16.msra.mxu0 %v3175
    %4224 = vmatprep.subr.bf16.mxu0 %v3170
    %4225 = vmatpush2.bf16.msra.mxu0 %v3169
    %4226 = vmatprep.subr.bf16.mxu0 %v3164
    %4227 = vmatpush2.bf16.msra.mxu0 %v3163
    %4228 = vmatprep.subr.bf16.mxu0 %v3158
    %4229 = vmatpush2.bf16.msra.mxu0 %v3157
    %4230 = vmatprep.subr.bf16.mxu0 %v3152
    %4231 = vmatpush2.bf16.msra.mxu0 %v3151
    %4232 = vmatprep.subr.bf16.mxu0 %v3146
    %4233 = vmatpush2.bf16.msra.mxu0 %v3145
    %4234 = vmatprep.subr.bf16.mxu0 %v3140
    %4235 = vmatpush2.bf16.msra.mxu0 %v3139
    %4236 = vmatprep.subr.bf16.mxu0 %v3134
    %4237 = vmatpush2.bf16.msra.mxu0 %v3133
    %4238 = vmatprep.mubr.bf16.mxu0 %v266
    %4239 = vmatmul.mubr.bf16.gmra.mxu0 %v265
    %v4240 = vpop.f32.mrf.mxu0
    %v4241 = vadd.f32 %v4200, %v4240
    %v4242 = vpop.f32.mrf.mxu0
    %v4243 = vadd.f32 %v4202, %v4242
    %v4244 = vpop.f32.mrf.mxu0
    %v4245 = vpop.f32.mrf.mxu0
    %4246 = vdwg.mxu0
    %4247 = vmatprep.subr.bf16.mxu0 %v2650
    %4248 = vmatpush1.bf16.msra.mxu0 %v2649
    %4249 = vmatprep.subr.bf16.mxu0 %v2644
    %4250 = vmatpush1.bf16.msra.mxu0 %v2643
    %4251 = vmatprep.subr.bf16.mxu0 %v2638
    %4252 = vmatpush1.bf16.msra.mxu0 %v2637
    %4253 = vmatprep.subr.bf16.mxu0 %v2632
    %4254 = vmatpush1.bf16.msra.mxu0 %v2631
    %4255 = vmatprep.subr.bf16.mxu0 %v2626
    %4256 = vmatpush1.bf16.msra.mxu0 %v2625
    %4257 = vmatprep.subr.bf16.mxu0 %v2620
    %4258 = vmatpush1.bf16.msra.mxu0 %v2619
    %4259 = vmatprep.subr.bf16.mxu0 %v2614
    %4260 = vmatpush1.bf16.msra.mxu0 %v2613
    %4261 = vmatprep.subr.bf16.mxu0 %v2608
    %4262 = vmatpush1.bf16.msra.mxu0 %v2607
    %4263 = vmatprep.subr.bf16.mxu0 %v2698
    %4264 = vmatpush2.bf16.msra.mxu0 %v2697
    %4265 = vmatprep.subr.bf16.mxu0 %v2692
    %4266 = vmatpush2.bf16.msra.mxu0 %v2691
    %4267 = vmatprep.subr.bf16.mxu0 %v2686
    %4268 = vmatpush2.bf16.msra.mxu0 %v2685
    %4269 = vmatprep.subr.bf16.mxu0 %v2680
    %4270 = vmatpush2.bf16.msra.mxu0 %v2679
    %4271 = vmatprep.subr.bf16.mxu0 %v2674
    %4272 = vmatpush2.bf16.msra.mxu0 %v2673
    %4273 = vmatprep.subr.bf16.mxu0 %v2668
    %4274 = vmatpush2.bf16.msra.mxu0 %v2667
    %4275 = vmatprep.subr.bf16.mxu0 %v2662
    %4276 = vmatpush2.bf16.msra.mxu0 %v2661
    %4277 = vmatprep.subr.bf16.mxu0 %v2656
    %4278 = vmatpush2.bf16.msra.mxu0 %v2655
    %4279 = vmatprep.mubr.bf16.mxu0 %v256
    %4280 = vmatmul.mubr.bf16.gmra.mxu0 %v255
    %v4281 = vpop.f32.mrf.mxu0
    %v4282 = vadd.f32 %v864, %v4281
    %v4283 = vpop.f32.mrf.mxu0
    %v4284 = vadd.f32 %v868, %v4283
    %v4285 = vpop.f32.mrf.mxu0
    %v4286 = vpop.f32.mrf.mxu0
    %4287 = vdwg.mxu0
    %4288 = vmatprep.subr.bf16.mxu0 %v2746
    %4289 = vmatpush1.bf16.msra.mxu0 %v2745
    %4290 = vmatprep.subr.bf16.mxu0 %v2740
    %4291 = vmatpush1.bf16.msra.mxu0 %v2739
    %4292 = vmatprep.subr.bf16.mxu0 %v2734
    %4293 = vmatpush1.bf16.msra.mxu0 %v2733
    %4294 = vmatprep.subr.bf16.mxu0 %v2728
    %4295 = vmatpush1.bf16.msra.mxu0 %v2727
    %4296 = vmatprep.subr.bf16.mxu0 %v2722
    %4297 = vmatpush1.bf16.msra.mxu0 %v2721
    %4298 = vmatprep.subr.bf16.mxu0 %v2716
    %4299 = vmatpush1.bf16.msra.mxu0 %v2715
    %4300 = vmatprep.subr.bf16.mxu0 %v2710
    %4301 = vmatpush1.bf16.msra.mxu0 %v2709
    %4302 = vmatprep.subr.bf16.mxu0 %v2704
    %4303 = vmatpush1.bf16.msra.mxu0 %v2703
    %4304 = vmatprep.subr.bf16.mxu0 %v2794
    %4305 = vmatpush2.bf16.msra.mxu0 %v2793
    %4306 = vmatprep.subr.bf16.mxu0 %v2788
    %4307 = vmatpush2.bf16.msra.mxu0 %v2787
    %4308 = vmatprep.subr.bf16.mxu0 %v2782
    %4309 = vmatpush2.bf16.msra.mxu0 %v2781
    %4310 = vmatprep.subr.bf16.mxu0 %v2776
    %4311 = vmatpush2.bf16.msra.mxu0 %v2775
    %4312 = vmatprep.subr.bf16.mxu0 %v2770
    %4313 = vmatpush2.bf16.msra.mxu0 %v2769
    %4314 = vmatprep.subr.bf16.mxu0 %v2764
    %4315 = vmatpush2.bf16.msra.mxu0 %v2763
    %4316 = vmatprep.subr.bf16.mxu0 %v2758
    %4317 = vmatpush2.bf16.msra.mxu0 %v2757
    %4318 = vmatprep.subr.bf16.mxu0 %v2752
    %4319 = vmatpush2.bf16.msra.mxu0 %v2751
    %4320 = vmatprep.mubr.bf16.mxu0 %v258
    %4321 = vmatmul.mubr.bf16.gmra.mxu0 %v257
    %v4322 = vpop.f32.mrf.mxu0
    %v4323 = vadd.f32 %v4282, %v4322
    %v4324 = vpop.f32.mrf.mxu0
    %v4325 = vadd.f32 %v4284, %v4324
    %v4326 = vpop.f32.mrf.mxu0
    %v4327 = vpop.f32.mrf.mxu0
    %4328 = vdwg.mxu0
    %4329 = vmatprep.subr.bf16.mxu0 %v2842
    %4330 = vmatpush1.bf16.msra.mxu0 %v2841
    %4331 = vmatprep.subr.bf16.mxu0 %v2836
    %4332 = vmatpush1.bf16.msra.mxu0 %v2835
    %4333 = vmatprep.subr.bf16.mxu0 %v2830
    %4334 = vmatpush1.bf16.msra.mxu0 %v2829
    %4335 = vmatprep.subr.bf16.mxu0 %v2824
    %4336 = vmatpush1.bf16.msra.mxu0 %v2823
    %4337 = vmatprep.subr.bf16.mxu0 %v2818
    %4338 = vmatpush1.bf16.msra.mxu0 %v2817
    %4339 = vmatprep.subr.bf16.mxu0 %v2812
    %4340 = vmatpush1.bf16.msra.mxu0 %v2811
    %4341 = vmatprep.subr.bf16.mxu0 %v2806
    %4342 = vmatpush1.bf16.msra.mxu0 %v2805
    %4343 = vmatprep.subr.bf16.mxu0 %v2800
    %4344 = vmatpush1.bf16.msra.mxu0 %v2799
    %4345 = vmatprep.subr.bf16.mxu0 %v2890
    %4346 = vmatpush2.bf16.msra.mxu0 %v2889
    %4347 = vmatprep.subr.bf16.mxu0 %v2884
    %4348 = vmatpush2.bf16.msra.mxu0 %v2883
    %4349 = vmatprep.subr.bf16.mxu0 %v2878
    %4350 = vmatpush2.bf16.msra.mxu0 %v2877
    %4351 = vmatprep.subr.bf16.mxu0 %v2872
    %4352 = vmatpush2.bf16.msra.mxu0 %v2871
    %4353 = vmatprep.subr.bf16.mxu0 %v2866
    %4354 = vmatpush2.bf16.msra.mxu0 %v2865
    %4355 = vmatprep.subr.bf16.mxu0 %v2860
    %4356 = vmatpush2.bf16.msra.mxu0 %v2859
    %4357 = vmatprep.subr.bf16.mxu0 %v2854
    %4358 = vmatpush2.bf16.msra.mxu0 %v2853
    %4359 = vmatprep.subr.bf16.mxu0 %v2848
    %4360 = vmatpush2.bf16.msra.mxu0 %v2847
    %4361 = vmatprep.mubr.bf16.mxu0 %v260
    %4362 = vmatmul.mubr.bf16.gmra.mxu0 %v259
    %v4363 = vpop.f32.mrf.mxu0
    %v4364 = vadd.f32 %v4323, %v4363
    %v4365 = vpop.f32.mrf.mxu0
    %v4366 = vadd.f32 %v4325, %v4365
    %v4367 = vpop.f32.mrf.mxu0
    %v4368 = vpop.f32.mrf.mxu0
    %4369 = vdwg.mxu0
    %4370 = vmatprep.subr.bf16.mxu0 %v2938
    %4371 = vmatpush1.bf16.msra.mxu0 %v2937
    %4372 = vmatprep.subr.bf16.mxu0 %v2932
    %4373 = vmatpush1.bf16.msra.mxu0 %v2931
    %4374 = vmatprep.subr.bf16.mxu0 %v2926
    %4375 = vmatpush1.bf16.msra.mxu0 %v2925
    %4376 = vmatprep.subr.bf16.mxu0 %v2920
    %4377 = vmatpush1.bf16.msra.mxu0 %v2919
    %4378 = vmatprep.subr.bf16.mxu0 %v2914
    %4379 = vmatpush1.bf16.msra.mxu0 %v2913
    %4380 = vmatprep.subr.bf16.mxu0 %v2908
    %4381 = vmatpush1.bf16.msra.mxu0 %v2907
    %4382 = vmatprep.subr.bf16.mxu0 %v2902
    %4383 = vmatpush1.bf16.msra.mxu0 %v2901
    %4384 = vmatprep.subr.bf16.mxu0 %v2896
    %4385 = vmatpush1.bf16.msra.mxu0 %v2895
    %4386 = vmatprep.subr.bf16.mxu0 %v2986
    %4387 = vmatpush2.bf16.msra.mxu0 %v2985
    %4388 = vmatprep.subr.bf16.mxu0 %v2980
    %4389 = vmatpush2.bf16.msra.mxu0 %v2979
    %4390 = vmatprep.subr.bf16.mxu0 %v2974
    %4391 = vmatpush2.bf16.msra.mxu0 %v2973
    %4392 = vmatprep.subr.bf16.mxu0 %v2968
    %4393 = vmatpush2.bf16.msra.mxu0 %v2967
    %4394 = vmatprep.subr.bf16.mxu0 %v2962
    %4395 = vmatpush2.bf16.msra.mxu0 %v2961
    %4396 = vmatprep.subr.bf16.mxu0 %v2956
    %4397 = vmatpush2.bf16.msra.mxu0 %v2955
    %4398 = vmatprep.subr.bf16.mxu0 %v2950
    %4399 = vmatpush2.bf16.msra.mxu0 %v2949
    %4400 = vmatprep.subr.bf16.mxu0 %v2944
    %4401 = vmatpush2.bf16.msra.mxu0 %v2943
    %4402 = vmatprep.mubr.bf16.mxu0 %v262
    %4403 = vmatmul.mubr.bf16.gmra.mxu0 %v261
    %v4404 = vpop.f32.mrf.mxu0
    %v4405 = vadd.f32 %v4364, %v4404
    %v4406 = vpop.f32.mrf.mxu0
    %v4407 = vadd.f32 %v4366, %v4406
    %v4408 = vpop.f32.mrf.mxu0
    %v4409 = vpop.f32.mrf.mxu0
    %4410 = vdwg.mxu0
    %4411 = vmatprep.subr.bf16.mxu0 %v3034
    %4412 = vmatpush1.bf16.msra.mxu0 %v3033
    %4413 = vmatprep.subr.bf16.mxu0 %v3028
    %4414 = vmatpush1.bf16.msra.mxu0 %v3027
    %4415 = vmatprep.subr.bf16.mxu0 %v3022
    %4416 = vmatpush1.bf16.msra.mxu0 %v3021
    %4417 = vmatprep.subr.bf16.mxu0 %v3016
    %4418 = vmatpush1.bf16.msra.mxu0 %v3015
    %4419 = vmatprep.subr.bf16.mxu0 %v3010
    %4420 = vmatpush1.bf16.msra.mxu0 %v3009
    %4421 = vmatprep.subr.bf16.mxu0 %v3004
    %4422 = vmatpush1.bf16.msra.mxu0 %v3003
    %4423 = vmatprep.subr.bf16.mxu0 %v2998
    %4424 = vmatpush1.bf16.msra.mxu0 %v2997
    %4425 = vmatprep.subr.bf16.mxu0 %v2992
    %4426 = vmatpush1.bf16.msra.mxu0 %v2991
    %4427 = vmatprep.subr.bf16.mxu0 %v3082
    %4428 = vmatpush2.bf16.msra.mxu0 %v3081
    %4429 = vmatprep.subr.bf16.mxu0 %v3076
    %4430 = vmatpush2.bf16.msra.mxu0 %v3075
    %4431 = vmatprep.subr.bf16.mxu0 %v3070
    %4432 = vmatpush2.bf16.msra.mxu0 %v3069
    %4433 = vmatprep.subr.bf16.mxu0 %v3064
    %4434 = vmatpush2.bf16.msra.mxu0 %v3063
    %4435 = vmatprep.subr.bf16.mxu0 %v3058
    %4436 = vmatpush2.bf16.msra.mxu0 %v3057
    %4437 = vmatprep.subr.bf16.mxu0 %v3052
    %4438 = vmatpush2.bf16.msra.mxu0 %v3051
    %4439 = vmatprep.subr.bf16.mxu0 %v3046
    %4440 = vmatpush2.bf16.msra.mxu0 %v3045
    %4441 = vmatprep.subr.bf16.mxu0 %v3040
    %4442 = vmatpush2.bf16.msra.mxu0 %v3039
    %4443 = vmatprep.mubr.bf16.mxu0 %v264
    %4444 = vmatmul.mubr.bf16.gmra.mxu0 %v263
    %v4445 = vpop.f32.mrf.mxu0
    %v4446 = vadd.f32 %v4405, %v4445
    %v4447 = vpop.f32.mrf.mxu0
    %v4448 = vadd.f32 %v4407, %v4447
    %v4449 = vpop.f32.mrf.mxu0
    %v4450 = vpop.f32.mrf.mxu0
    %4451 = vdwg.mxu0
    %4452 = vmatprep.subr.bf16.mxu0 %v3130
    %4453 = vmatpush1.bf16.msra.mxu0 %v3129
    %4454 = vmatprep.subr.bf16.mxu0 %v3124
    %4455 = vmatpush1.bf16.msra.mxu0 %v3123
    %4456 = vmatprep.subr.bf16.mxu0 %v3118
    %4457 = vmatpush1.bf16.msra.mxu0 %v3117
    %4458 = vmatprep.subr.bf16.mxu0 %v3112
    %4459 = vmatpush1.bf16.msra.mxu0 %v3111
    %4460 = vmatprep.subr.bf16.mxu0 %v3106
    %4461 = vmatpush1.bf16.msra.mxu0 %v3105
    %4462 = vmatprep.subr.bf16.mxu0 %v3100
    %4463 = vmatpush1.bf16.msra.mxu0 %v3099
    %4464 = vmatprep.subr.bf16.mxu0 %v3094
    %4465 = vmatpush1.bf16.msra.mxu0 %v3093
    %4466 = vmatprep.subr.bf16.mxu0 %v3088
    %4467 = vmatpush1.bf16.msra.mxu0 %v3087
    %4468 = vmatprep.subr.bf16.mxu0 %v3178
    %4469 = vmatpush2.bf16.msra.mxu0 %v3177
    %4470 = vmatprep.subr.bf16.mxu0 %v3172
    %4471 = vmatpush2.bf16.msra.mxu0 %v3171
    %4472 = vmatprep.subr.bf16.mxu0 %v3166
    %4473 = vmatpush2.bf16.msra.mxu0 %v3165
    %4474 = vmatprep.subr.bf16.mxu0 %v3160
    %4475 = vmatpush2.bf16.msra.mxu0 %v3159
    %4476 = vmatprep.subr.bf16.mxu0 %v3154
    %4477 = vmatpush2.bf16.msra.mxu0 %v3153
    %4478 = vmatprep.subr.bf16.mxu0 %v3148
    %4479 = vmatpush2.bf16.msra.mxu0 %v3147
    %4480 = vmatprep.subr.bf16.mxu0 %v3142
    %4481 = vmatpush2.bf16.msra.mxu0 %v3141
    %4482 = vmatprep.subr.bf16.mxu0 %v3136
    %4483 = vmatpush2.bf16.msra.mxu0 %v3135
    %4484 = vmatprep.mubr.bf16.mxu0 %v266
    %4485 = vmatmul.mubr.bf16.gmra.mxu0 %v265
    %v4486 = vpop.f32.mrf.mxu0
    %v4487 = vadd.f32 %v4446, %v4486
    %v4488 = vpop.f32.mrf.mxu0
    %v4489 = vadd.f32 %v4448, %v4488
    %v4490 = vpop.f32.mrf.mxu0
    %v4491 = vpop.f32.mrf.mxu0
    %4492 = vdwg.mxu0
    %v4493 = vpack.c.bf16 %v3995, %v3995
    %v4494 = vpack.c.bf16 %v3997, %v3997
    %v4495 = vpack.c.bf16 %v4241, %v4241
    %v4496 = vpack.c.bf16 %v4243, %v4243
    %v4497 = vpack.c.bf16 %v4487, %v4487
    %v4498 = vpack.c.bf16 %v4489, %v4489
    %v4499 = vld [vmem:[%s3] sm:$0xff]
    %v4500 = vld [vmem:[%s3 + $0x8] sm:$0xff]
    %v4501 = vld [vmem:[%s3 + $0x10] sm:$0xff]
    %v4502 = vld [vmem:[%s3 + $0x18] sm:$0xff]
    %v4503 = vld [vmem:[%s3 + $0x20] sm:$0xff]
    %v4504 = vld [vmem:[%s3 + $0x28] sm:$0xff]
    %v4505 = vld [vmem:[%s3 + $0x30] sm:$0xff]
    %v4506 = vld [vmem:[%s3 + $0x38] sm:$0xff]
    %v4507 = vld [vmem:[%s3 + $0x40] sm:$0xff]
    %v4508 = vld [vmem:[%s3 + $0x48] sm:$0xff]
    %v4509 = vld [vmem:[%s3 + $0x50] sm:$0xff]
    %v4510 = vld [vmem:[%s3 + $0x58] sm:$0xff]
    %v4511 = vld [vmem:[%s3 + $0x60] sm:$0xff]
    %v4512 = vld [vmem:[%s3 + $0x68] sm:$0xff]
    %v4513 = vld [vmem:[%s3 + $0x70] sm:$0xff]
    %v4514 = vld [vmem:[%s3 + $0x78] sm:$0xff]
    %v4515 = vld [vmem:[%s3 + $0x80] sm:$0xff]
    %v4516 = vld [vmem:[%s3 + $0x88] sm:$0xff]
    %v4517 = vld [vmem:[%s3 + $0x90] sm:$0xff]
    %v4518 = vld [vmem:[%s3 + $0x98] sm:$0xff]
    %v4519 = vld [vmem:[%s3 + $0xa0] sm:$0xff]
    %v4520 = vld [vmem:[%s3 + $0xa8] sm:$0xff]
    %v4521 = vld [vmem:[%s3 + $0xb0] sm:$0xff]
    %v4522 = vld [vmem:[%s3 + $0xb8] sm:$0xff]
    %v4523 = vld [vmem:[%s3 + $0xc0] sm:$0xff]
    %v4524 = vld [vmem:[%s3 + $0xc8] sm:$0xff]
    %v4525 = vld [vmem:[%s3 + $0xd0] sm:$0xff]
    %v4526 = vld [vmem:[%s3 + $0xd8] sm:$0xff]
    %v4527 = vld [vmem:[%s3 + $0xe0] sm:$0xff]
    %v4528 = vld [vmem:[%s3 + $0xe8] sm:$0xff]
    %v4529 = vld [vmem:[%s3 + $0xf0] sm:$0xff]
    %v4530 = vld [vmem:[%s3 + $0xf8] sm:$0xff]
    %v4531 = vld [vmem:[%s3 + $0x100] sm:$0xff]
    %v4532 = vld [vmem:[%s3 + $0x108] sm:$0xff]
    %v4533 = vld [vmem:[%s3 + $0x110] sm:$0xff]
    %v4534 = vld [vmem:[%s3 + $0x118] sm:$0xff]
    %v4535 = vld [vmem:[%s3 + $0x120] sm:$0xff]
    %v4536 = vld [vmem:[%s3 + $0x128] sm:$0xff]
    %v4537 = vld [vmem:[%s3 + $0x130] sm:$0xff]
    %v4538 = vld [vmem:[%s3 + $0x138] sm:$0xff]
    %v4539 = vld [vmem:[%s3 + $0x140] sm:$0xff]
    %v4540 = vld [vmem:[%s3 + $0x148] sm:$0xff]
    %v4541 = vld [vmem:[%s3 + $0x150] sm:$0xff]
    %v4542 = vld [vmem:[%s3 + $0x158] sm:$0xff]
    %v4543 = vld [vmem:[%s3 + $0x160] sm:$0xff]
    %v4544 = vld [vmem:[%s3 + $0x168] sm:$0xff]
    %v4545 = vld [vmem:[%s3 + $0x170] sm:$0xff]
    %v4546 = vld [vmem:[%s3 + $0x178] sm:$0xff]
    %v4547 = vld [vmem:[%s3 + $0x180] sm:$0xff]
    %v4548 = vld [vmem:[%s3 + $0x188] sm:$0xff]
    %v4549 = vld [vmem:[%s3 + $0x190] sm:$0xff]
    %v4550 = vld [vmem:[%s3 + $0x198] sm:$0xff]
    %v4551 = vld [vmem:[%s3 + $0x1a0] sm:$0xff]
    %v4552 = vld [vmem:[%s3 + $0x1a8] sm:$0xff]
    %v4553 = vld [vmem:[%s3 + $0x1b0] sm:$0xff]
    %v4554 = vld [vmem:[%s3 + $0x1b8] sm:$0xff]
    %v4555 = vld [vmem:[%s3 + $0x1c0] sm:$0xff]
    %v4556 = vld [vmem:[%s3 + $0x1c8] sm:$0xff]
    %v4557 = vld [vmem:[%s3 + $0x1d0] sm:$0xff]
    %v4558 = vld [vmem:[%s3 + $0x1d8] sm:$0xff]
    %v4559 = vld [vmem:[%s3 + $0x1e0] sm:$0xff]
    %v4560 = vld [vmem:[%s3 + $0x1e8] sm:$0xff]
    %v4561 = vld [vmem:[%s3 + $0x1f0] sm:$0xff]
    %v4562 = vld [vmem:[%s3 + $0x1f8] sm:$0xff]
    %v4563 = vld [vmem:[%s3 + $0x200] sm:$0xff]
    %v4564 = vld [vmem:[%s3 + $0x208] sm:$0xff]
    %v4565 = vld [vmem:[%s3 + $0x210] sm:$0xff]
    %v4566 = vld [vmem:[%s3 + $0x218] sm:$0xff]
    %v4567 = vld [vmem:[%s3 + $0x220] sm:$0xff]
    %v4568 = vld [vmem:[%s3 + $0x228] sm:$0xff]
    %v4569 = vld [vmem:[%s3 + $0x230] sm:$0xff]
    %v4570 = vld [vmem:[%s3 + $0x238] sm:$0xff]
    %v4571 = vld [vmem:[%s3 + $0x240] sm:$0xff]
    %v4572 = vld [vmem:[%s3 + $0x248] sm:$0xff]
    %v4573 = vld [vmem:[%s3 + $0x250] sm:$0xff]
    %v4574 = vld [vmem:[%s3 + $0x258] sm:$0xff]
    %v4575 = vld [vmem:[%s3 + $0x260] sm:$0xff]
    %v4576 = vld [vmem:[%s3 + $0x268] sm:$0xff]
    %v4577 = vld [vmem:[%s3 + $0x270] sm:$0xff]
    %v4578 = vld [vmem:[%s3 + $0x278] sm:$0xff]
    %v4579 = vld [vmem:[%s3 + $0x280] sm:$0xff]
    %v4580 = vld [vmem:[%s3 + $0x288] sm:$0xff]
    %v4581 = vld [vmem:[%s3 + $0x290] sm:$0xff]
    %v4582 = vld [vmem:[%s3 + $0x298] sm:$0xff]
    %v4583 = vld [vmem:[%s3 + $0x2a0] sm:$0xff]
    %v4584 = vld [vmem:[%s3 + $0x2a8] sm:$0xff]
    %v4585 = vld [vmem:[%s3 + $0x2b0] sm:$0xff]
    %v4586 = vld [vmem:[%s3 + $0x2b8] sm:$0xff]
    %v4587 = vld [vmem:[%s3 + $0x2c0] sm:$0xff]
    %v4588 = vld [vmem:[%s3 + $0x2c8] sm:$0xff]
    %v4589 = vld [vmem:[%s3 + $0x2d0] sm:$0xff]
    %v4590 = vld [vmem:[%s3 + $0x2d8] sm:$0xff]
    %v4591 = vld [vmem:[%s3 + $0x2e0] sm:$0xff]
    %v4592 = vld [vmem:[%s3 + $0x2e8] sm:$0xff]
    %v4593 = vld [vmem:[%s3 + $0x2f0] sm:$0xff]
    %v4594 = vld [vmem:[%s3 + $0x2f8] sm:$0xff]
    %v4595 = vld [vmem:[%s3 + $0x300] sm:$0xff]
    %v4596 = vld [vmem:[%s3 + $0x308] sm:$0xff]
    %v4597 = vld [vmem:[%s3 + $0x310] sm:$0xff]
    %v4598 = vld [vmem:[%s3 + $0x318] sm:$0xff]
    %v4599 = vld [vmem:[%s3 + $0x320] sm:$0xff]
    %v4600 = vld [vmem:[%s3 + $0x328] sm:$0xff]
    %v4601 = vld [vmem:[%s3 + $0x330] sm:$0xff]
    %v4602 = vld [vmem:[%s3 + $0x338] sm:$0xff]
    %v4603 = vld [vmem:[%s3 + $0x340] sm:$0xff]
    %v4604 = vld [vmem:[%s3 + $0x348] sm:$0xff]
    %v4605 = vld [vmem:[%s3 + $0x350] sm:$0xff]
    %v4606 = vld [vmem:[%s3 + $0x358] sm:$0xff]
    %v4607 = vld [vmem:[%s3 + $0x360] sm:$0xff]
    %v4608 = vld [vmem:[%s3 + $0x368] sm:$0xff]
    %v4609 = vld [vmem:[%s3 + $0x370] sm:$0xff]
    %v4610 = vld [vmem:[%s3 + $0x378] sm:$0xff]
    %v4611 = vld [vmem:[%s3 + $0x380] sm:$0xff]
    %v4612 = vld [vmem:[%s3 + $0x388] sm:$0xff]
    %v4613 = vld [vmem:[%s3 + $0x390] sm:$0xff]
    %v4614 = vld [vmem:[%s3 + $0x398] sm:$0xff]
    %v4615 = vld [vmem:[%s3 + $0x3a0] sm:$0xff]
    %v4616 = vld [vmem:[%s3 + $0x3a8] sm:$0xff]
    %v4617 = vld [vmem:[%s3 + $0x3b0] sm:$0xff]
    %v4618 = vld [vmem:[%s3 + $0x3b8] sm:$0xff]
    %v4619 = vld [vmem:[%s3 + $0x3c0] sm:$0xff]
    %v4620 = vld [vmem:[%s3 + $0x3c8] sm:$0xff]
    %v4621 = vld [vmem:[%s3 + $0x3d0] sm:$0xff]
    %v4622 = vld [vmem:[%s3 + $0x3d8] sm:$0xff]
    %v4623 = vld [vmem:[%s3 + $0x3e0] sm:$0xff]
    %v4624 = vld [vmem:[%s3 + $0x3e8] sm:$0xff]
    %v4625 = vld [vmem:[%s3 + $0x3f0] sm:$0xff]
    %v4626 = vld [vmem:[%s3 + $0x3f8] sm:$0xff]
    %v4627 = vld [vmem:[%s3 + $0x400] sm:$0xff]
    %v4628 = vld [vmem:[%s3 + $0x408] sm:$0xff]
    %v4629 = vld [vmem:[%s3 + $0x410] sm:$0xff]
    %v4630 = vld [vmem:[%s3 + $0x418] sm:$0xff]
    %v4631 = vld [vmem:[%s3 + $0x420] sm:$0xff]
    %v4632 = vld [vmem:[%s3 + $0x428] sm:$0xff]
    %v4633 = vld [vmem:[%s3 + $0x430] sm:$0xff]
    %v4634 = vld [vmem:[%s3 + $0x438] sm:$0xff]
    %v4635 = vld [vmem:[%s3 + $0x440] sm:$0xff]
    %v4636 = vld [vmem:[%s3 + $0x448] sm:$0xff]
    %v4637 = vld [vmem:[%s3 + $0x450] sm:$0xff]
    %v4638 = vld [vmem:[%s3 + $0x458] sm:$0xff]
    %v4639 = vld [vmem:[%s3 + $0x460] sm:$0xff]
    %v4640 = vld [vmem:[%s3 + $0x468] sm:$0xff]
    %v4641 = vld [vmem:[%s3 + $0x470] sm:$0xff]
    %v4642 = vld [vmem:[%s3 + $0x478] sm:$0xff]
    %v4643 = vld [vmem:[%s3 + $0x480] sm:$0xff]
    %v4644 = vld [vmem:[%s3 + $0x488] sm:$0xff]
    %v4645 = vld [vmem:[%s3 + $0x490] sm:$0xff]
    %v4646 = vld [vmem:[%s3 + $0x498] sm:$0xff]
    %v4647 = vld [vmem:[%s3 + $0x4a0] sm:$0xff]
    %v4648 = vld [vmem:[%s3 + $0x4a8] sm:$0xff]
    %v4649 = vld [vmem:[%s3 + $0x4b0] sm:$0xff]
    %v4650 = vld [vmem:[%s3 + $0x4b8] sm:$0xff]
    %v4651 = vld [vmem:[%s3 + $0x4c0] sm:$0xff]
    %v4652 = vld [vmem:[%s3 + $0x4c8] sm:$0xff]
    %v4653 = vld [vmem:[%s3 + $0x4d0] sm:$0xff]
    %v4654 = vld [vmem:[%s3 + $0x4d8] sm:$0xff]
    %v4655 = vld [vmem:[%s3 + $0x4e0] sm:$0xff]
    %v4656 = vld [vmem:[%s3 + $0x4e8] sm:$0xff]
    %v4657 = vld [vmem:[%s3 + $0x4f0] sm:$0xff]
    %v4658 = vld [vmem:[%s3 + $0x4f8] sm:$0xff]
    %v4659 = vld [vmem:[%s3 + $0x500] sm:$0xff]
    %v4660 = vld [vmem:[%s3 + $0x508] sm:$0xff]
    %v4661 = vld [vmem:[%s3 + $0x510] sm:$0xff]
    %v4662 = vld [vmem:[%s3 + $0x518] sm:$0xff]
    %v4663 = vld [vmem:[%s3 + $0x520] sm:$0xff]
    %v4664 = vld [vmem:[%s3 + $0x528] sm:$0xff]
    %v4665 = vld [vmem:[%s3 + $0x530] sm:$0xff]
    %v4666 = vld [vmem:[%s3 + $0x538] sm:$0xff]
    %v4667 = vld [vmem:[%s3 + $0x540] sm:$0xff]
    %v4668 = vld [vmem:[%s3 + $0x548] sm:$0xff]
    %v4669 = vld [vmem:[%s3 + $0x550] sm:$0xff]
    %v4670 = vld [vmem:[%s3 + $0x558] sm:$0xff]
    %v4671 = vld [vmem:[%s3 + $0x560] sm:$0xff]
    %v4672 = vld [vmem:[%s3 + $0x568] sm:$0xff]
    %v4673 = vld [vmem:[%s3 + $0x570] sm:$0xff]
    %v4674 = vld [vmem:[%s3 + $0x578] sm:$0xff]
    %v4675 = vld [vmem:[%s3 + $0x580] sm:$0xff]
    %v4676 = vld [vmem:[%s3 + $0x588] sm:$0xff]
    %v4677 = vld [vmem:[%s3 + $0x590] sm:$0xff]
    %v4678 = vld [vmem:[%s3 + $0x598] sm:$0xff]
    %v4679 = vld [vmem:[%s3 + $0x5a0] sm:$0xff]
    %v4680 = vld [vmem:[%s3 + $0x5a8] sm:$0xff]
    %v4681 = vld [vmem:[%s3 + $0x5b0] sm:$0xff]
    %v4682 = vld [vmem:[%s3 + $0x5b8] sm:$0xff]
    %v4683 = vld [vmem:[%s3 + $0x5c0] sm:$0xff]
    %v4684 = vld [vmem:[%s3 + $0x5c8] sm:$0xff]
    %v4685 = vld [vmem:[%s3 + $0x5d0] sm:$0xff]
    %v4686 = vld [vmem:[%s3 + $0x5d8] sm:$0xff]
    %v4687 = vld [vmem:[%s3 + $0x5e0] sm:$0xff]
    %v4688 = vld [vmem:[%s3 + $0x5e8] sm:$0xff]
    %v4689 = vld [vmem:[%s3 + $0x5f0] sm:$0xff]
    %v4690 = vld [vmem:[%s3 + $0x5f8] sm:$0xff]
    %v4691 = vld [vmem:[%s3 + $0x600] sm:$0xff]
    %v4692 = vld [vmem:[%s3 + $0x608] sm:$0xff]
    %v4693 = vld [vmem:[%s3 + $0x610] sm:$0xff]
    %v4694 = vld [vmem:[%s3 + $0x618] sm:$0xff]
    %v4695 = vld [vmem:[%s3 + $0x620] sm:$0xff]
    %v4696 = vld [vmem:[%s3 + $0x628] sm:$0xff]
    %v4697 = vld [vmem:[%s3 + $0x630] sm:$0xff]
    %v4698 = vld [vmem:[%s3 + $0x638] sm:$0xff]
    %v4699 = vld [vmem:[%s3 + $0x640] sm:$0xff]
    %v4700 = vld [vmem:[%s3 + $0x648] sm:$0xff]
    %v4701 = vld [vmem:[%s3 + $0x650] sm:$0xff]
    %v4702 = vld [vmem:[%s3 + $0x658] sm:$0xff]
    %v4703 = vld [vmem:[%s3 + $0x660] sm:$0xff]
    %v4704 = vld [vmem:[%s3 + $0x668] sm:$0xff]
    %v4705 = vld [vmem:[%s3 + $0x670] sm:$0xff]
    %v4706 = vld [vmem:[%s3 + $0x678] sm:$0xff]
    %v4707 = vld [vmem:[%s3 + $0x680] sm:$0xff]
    %v4708 = vld [vmem:[%s3 + $0x688] sm:$0xff]
    %v4709 = vld [vmem:[%s3 + $0x690] sm:$0xff]
    %v4710 = vld [vmem:[%s3 + $0x698] sm:$0xff]
    %v4711 = vld [vmem:[%s3 + $0x6a0] sm:$0xff]
    %v4712 = vld [vmem:[%s3 + $0x6a8] sm:$0xff]
    %v4713 = vld [vmem:[%s3 + $0x6b0] sm:$0xff]
    %v4714 = vld [vmem:[%s3 + $0x6b8] sm:$0xff]
    %v4715 = vld [vmem:[%s3 + $0x6c0] sm:$0xff]
    %v4716 = vld [vmem:[%s3 + $0x6c8] sm:$0xff]
    %v4717 = vld [vmem:[%s3 + $0x6d0] sm:$0xff]
    %v4718 = vld [vmem:[%s3 + $0x6d8] sm:$0xff]
    %v4719 = vld [vmem:[%s3 + $0x6e0] sm:$0xff]
    %v4720 = vld [vmem:[%s3 + $0x6e8] sm:$0xff]
    %v4721 = vld [vmem:[%s3 + $0x6f0] sm:$0xff]
    %v4722 = vld [vmem:[%s3 + $0x6f8] sm:$0xff]
    %v4723 = vld [vmem:[%s3 + $0x700] sm:$0xff]
    %v4724 = vld [vmem:[%s3 + $0x708] sm:$0xff]
    %v4725 = vld [vmem:[%s3 + $0x710] sm:$0xff]
    %v4726 = vld [vmem:[%s3 + $0x718] sm:$0xff]
    %v4727 = vld [vmem:[%s3 + $0x720] sm:$0xff]
    %v4728 = vld [vmem:[%s3 + $0x728] sm:$0xff]
    %v4729 = vld [vmem:[%s3 + $0x730] sm:$0xff]
    %v4730 = vld [vmem:[%s3 + $0x738] sm:$0xff]
    %v4731 = vld [vmem:[%s3 + $0x740] sm:$0xff]
    %v4732 = vld [vmem:[%s3 + $0x748] sm:$0xff]
    %v4733 = vld [vmem:[%s3 + $0x750] sm:$0xff]
    %v4734 = vld [vmem:[%s3 + $0x758] sm:$0xff]
    %v4735 = vld [vmem:[%s3 + $0x760] sm:$0xff]
    %v4736 = vld [vmem:[%s3 + $0x768] sm:$0xff]
    %v4737 = vld [vmem:[%s3 + $0x770] sm:$0xff]
    %v4738 = vld [vmem:[%s3 + $0x778] sm:$0xff]
    %v4739 = vld [vmem:[%s3 + $0x780] sm:$0xff]
    %v4740 = vld [vmem:[%s3 + $0x788] sm:$0xff]
    %v4741 = vld [vmem:[%s3 + $0x790] sm:$0xff]
    %v4742 = vld [vmem:[%s3 + $0x798] sm:$0xff]
    %v4743 = vld [vmem:[%s3 + $0x7a0] sm:$0xff]
    %v4744 = vld [vmem:[%s3 + $0x7a8] sm:$0xff]
    %v4745 = vld [vmem:[%s3 + $0x7b0] sm:$0xff]
    %v4746 = vld [vmem:[%s3 + $0x7b8] sm:$0xff]
    %v4747 = vld [vmem:[%s3 + $0x7c0] sm:$0xff]
    %v4748 = vld [vmem:[%s3 + $0x7c8] sm:$0xff]
    %v4749 = vld [vmem:[%s3 + $0x7d0] sm:$0xff]
    %v4750 = vld [vmem:[%s3 + $0x7d8] sm:$0xff]
    %v4751 = vld [vmem:[%s3 + $0x7e0] sm:$0xff]
    %v4752 = vld [vmem:[%s3 + $0x7e8] sm:$0xff]
    %v4753 = vld [vmem:[%s3 + $0x7f0] sm:$0xff]
    %v4754 = vld [vmem:[%s3 + $0x7f8] sm:$0xff]
    %v4755 = vld [vmem:[%s3 + $0x800] sm:$0xff]
    %v4756 = vld [vmem:[%s3 + $0x808] sm:$0xff]
    %v4757 = vld [vmem:[%s3 + $0x810] sm:$0xff]
    %v4758 = vld [vmem:[%s3 + $0x818] sm:$0xff]
    %v4759 = vld [vmem:[%s3 + $0x820] sm:$0xff]
    %v4760 = vld [vmem:[%s3 + $0x828] sm:$0xff]
    %v4761 = vld [vmem:[%s3 + $0x830] sm:$0xff]
    %v4762 = vld [vmem:[%s3 + $0x838] sm:$0xff]
    %v4763 = vld [vmem:[%s3 + $0x840] sm:$0xff]
    %v4764 = vld [vmem:[%s3 + $0x848] sm:$0xff]
    %v4765 = vld [vmem:[%s3 + $0x850] sm:$0xff]
    %v4766 = vld [vmem:[%s3 + $0x858] sm:$0xff]
    %v4767 = vld [vmem:[%s3 + $0x860] sm:$0xff]
    %v4768 = vld [vmem:[%s3 + $0x868] sm:$0xff]
    %v4769 = vld [vmem:[%s3 + $0x870] sm:$0xff]
    %v4770 = vld [vmem:[%s3 + $0x878] sm:$0xff]
    %v4771 = vld [vmem:[%s3 + $0x880] sm:$0xff]
    %v4772 = vld [vmem:[%s3 + $0x888] sm:$0xff]
    %v4773 = vld [vmem:[%s3 + $0x890] sm:$0xff]
    %v4774 = vld [vmem:[%s3 + $0x898] sm:$0xff]
    %v4775 = vld [vmem:[%s3 + $0x8a0] sm:$0xff]
    %v4776 = vld [vmem:[%s3 + $0x8a8] sm:$0xff]
    %v4777 = vld [vmem:[%s3 + $0x8b0] sm:$0xff]
    %v4778 = vld [vmem:[%s3 + $0x8b8] sm:$0xff]
    %v4779 = vld [vmem:[%s3 + $0x8c0] sm:$0xff]
    %v4780 = vld [vmem:[%s3 + $0x8c8] sm:$0xff]
    %v4781 = vld [vmem:[%s3 + $0x8d0] sm:$0xff]
    %v4782 = vld [vmem:[%s3 + $0x8d8] sm:$0xff]
    %v4783 = vld [vmem:[%s3 + $0x8e0] sm:$0xff]
    %v4784 = vld [vmem:[%s3 + $0x8e8] sm:$0xff]
    %v4785 = vld [vmem:[%s3 + $0x8f0] sm:$0xff]
    %v4786 = vld [vmem:[%s3 + $0x8f8] sm:$0xff]
    %v4787 = vld [vmem:[#allocation7] sm:$0x3f]
    %v4789 = vlaneseq
    %v4790 = vshrl.u32 %v4789, 7
    %v4791 = vsub.s32 0, %v4790
    %v4792 = vrot.slane %v4787, %v4791
    %v4793 = vlaneseq
    %v4794 = vshrl.u32 %v4793, 7
    %v4795 = vsub.s32 1, %v4794
    %v4796 = vrot.slane %v4787, %v4795
    %v4797 = vlaneseq
    %v4798 = vshrl.u32 %v4797, 7
    %v4799 = vsub.s32 2, %v4798
    %v4800 = vrot.slane %v4787, %v4799
    %v4801 = vlaneseq
    %v4802 = vshrl.u32 %v4801, 7
    %v4803 = vsub.s32 3, %v4802
    %v4804 = vrot.slane %v4787, %v4803
    %v4805 = vlaneseq
    %v4806 = vshrl.u32 %v4805, 7
    %v4807 = vsub.s32 4, %v4806
    %v4808 = vrot.slane %v4787, %v4807
    %v4809 = vlaneseq
    %v4810 = vshrl.u32 %v4809, 7
    %v4811 = vsub.s32 5, %v4810
    %v4812 = vrot.slane %v4787, %v4811
    %v5107 = vunpack.c.l.b16 %v4499
    %v5108 = vunpack.c.h.b16 %v4499
    %v5109 = vunpack.c.l.b16 %v4500
    %v5110 = vunpack.c.h.b16 %v4500
    %v5111 = vunpack.c.l.b16 %v4501
    %v5112 = vunpack.c.h.b16 %v4501
    %v5113 = vunpack.c.l.b16 %v4502
    %v5114 = vunpack.c.h.b16 %v4502
    %v5115 = vunpack.c.l.b16 %v4503
    %v5116 = vunpack.c.h.b16 %v4503
    %v5117 = vunpack.c.l.b16 %v4504
    %v5118 = vunpack.c.h.b16 %v4504
    %v5119 = vunpack.c.l.b16 %v4505
    %v5120 = vunpack.c.h.b16 %v4505
    %v5121 = vunpack.c.l.b16 %v4506
    %v5122 = vunpack.c.h.b16 %v4506
    %v5123 = vunpack.c.l.b16 %v4507
    %v5124 = vunpack.c.h.b16 %v4507
    %v5125 = vunpack.c.l.b16 %v4508
    %v5126 = vunpack.c.h.b16 %v4508
    %v5127 = vunpack.c.l.b16 %v4509
    %v5128 = vunpack.c.h.b16 %v4509
    %v5129 = vunpack.c.l.b16 %v4510
    %v5130 = vunpack.c.h.b16 %v4510
    %v5131 = vunpack.c.l.b16 %v4511
    %v5132 = vunpack.c.h.b16 %v4511
    %v5133 = vunpack.c.l.b16 %v4512
    %v5134 = vunpack.c.h.b16 %v4512
    %v5135 = vunpack.c.l.b16 %v4513
    %v5136 = vunpack.c.h.b16 %v4513
    %v5137 = vunpack.c.l.b16 %v4514
    %v5138 = vunpack.c.h.b16 %v4514
    %v5139 = vunpack.c.l.b16 %v4515
    %v5140 = vunpack.c.h.b16 %v4515
    %v5141 = vunpack.c.l.b16 %v4516
    %v5142 = vunpack.c.h.b16 %v4516
    %v5143 = vunpack.c.l.b16 %v4517
    %v5144 = vunpack.c.h.b16 %v4517
    %v5145 = vunpack.c.l.b16 %v4518
    %v5146 = vunpack.c.h.b16 %v4518
    %v5147 = vunpack.c.l.b16 %v4519
    %v5148 = vunpack.c.h.b16 %v4519
    %v5149 = vunpack.c.l.b16 %v4520
    %v5150 = vunpack.c.h.b16 %v4520
    %v5151 = vunpack.c.l.b16 %v4521
    %v5152 = vunpack.c.h.b16 %v4521
    %v5153 = vunpack.c.l.b16 %v4522
    %v5154 = vunpack.c.h.b16 %v4522
    %v5155 = vunpack.c.l.b16 %v4523
    %v5156 = vunpack.c.h.b16 %v4523
    %v5157 = vunpack.c.l.b16 %v4524
    %v5158 = vunpack.c.h.b16 %v4524
    %v5159 = vunpack.c.l.b16 %v4525
    %v5160 = vunpack.c.h.b16 %v4525
    %v5161 = vunpack.c.l.b16 %v4526
    %v5162 = vunpack.c.h.b16 %v4526
    %v5163 = vunpack.c.l.b16 %v4527
    %v5164 = vunpack.c.h.b16 %v4527
    %v5165 = vunpack.c.l.b16 %v4528
    %v5166 = vunpack.c.h.b16 %v4528
    %v5167 = vunpack.c.l.b16 %v4529
    %v5168 = vunpack.c.h.b16 %v4529
    %v5169 = vunpack.c.l.b16 %v4530
    %v5170 = vunpack.c.h.b16 %v4530
    %v5171 = vunpack.c.l.b16 %v4531
    %v5172 = vunpack.c.h.b16 %v4531
    %v5173 = vunpack.c.l.b16 %v4532
    %v5174 = vunpack.c.h.b16 %v4532
    %v5175 = vunpack.c.l.b16 %v4533
    %v5176 = vunpack.c.h.b16 %v4533
    %v5177 = vunpack.c.l.b16 %v4534
    %v5178 = vunpack.c.h.b16 %v4534
    %v5179 = vunpack.c.l.b16 %v4535
    %v5180 = vunpack.c.h.b16 %v4535
    %v5181 = vunpack.c.l.b16 %v4536
    %v5182 = vunpack.c.h.b16 %v4536
    %v5183 = vunpack.c.l.b16 %v4537
    %v5184 = vunpack.c.h.b16 %v4537
    %v5185 = vunpack.c.l.b16 %v4538
    %v5186 = vunpack.c.h.b16 %v4538
    %v5187 = vunpack.c.l.b16 %v4539
    %v5188 = vunpack.c.h.b16 %v4539
    %v5189 = vunpack.c.l.b16 %v4540
    %v5190 = vunpack.c.h.b16 %v4540
    %v5191 = vunpack.c.l.b16 %v4541
    %v5192 = vunpack.c.h.b16 %v4541
    %v5193 = vunpack.c.l.b16 %v4542
    %v5194 = vunpack.c.h.b16 %v4542
    %v5195 = vunpack.c.l.b16 %v4543
    %v5196 = vunpack.c.h.b16 %v4543
    %v5197 = vunpack.c.l.b16 %v4544
    %v5198 = vunpack.c.h.b16 %v4544
    %v5199 = vunpack.c.l.b16 %v4545
    %v5200 = vunpack.c.h.b16 %v4545
    %v5201 = vunpack.c.l.b16 %v4546
    %v5202 = vunpack.c.h.b16 %v4546
    %v5203 = vunpack.c.l.b16 %v4547
    %v5204 = vunpack.c.h.b16 %v4547
    %v5205 = vunpack.c.l.b16 %v4548
    %v5206 = vunpack.c.h.b16 %v4548
    %v5207 = vunpack.c.l.b16 %v4549
    %v5208 = vunpack.c.h.b16 %v4549
    %v5209 = vunpack.c.l.b16 %v4550
    %v5210 = vunpack.c.h.b16 %v4550
    %v5211 = vunpack.c.l.b16 %v4551
    %v5212 = vunpack.c.h.b16 %v4551
    %v5213 = vunpack.c.l.b16 %v4552
    %v5214 = vunpack.c.h.b16 %v4552
    %v5215 = vunpack.c.l.b16 %v4553
    %v5216 = vunpack.c.h.b16 %v4553
    %v5217 = vunpack.c.l.b16 %v4554
    %v5218 = vunpack.c.h.b16 %v4554
    %v5219 = vunpack.c.l.b16 %v4555
    %v5220 = vunpack.c.h.b16 %v4555
    %v5221 = vunpack.c.l.b16 %v4556
    %v5222 = vunpack.c.h.b16 %v4556
    %v5223 = vunpack.c.l.b16 %v4557
    %v5224 = vunpack.c.h.b16 %v4557
    %v5225 = vunpack.c.l.b16 %v4558
    %v5226 = vunpack.c.h.b16 %v4558
    %v5227 = vunpack.c.l.b16 %v4559
    %v5228 = vunpack.c.h.b16 %v4559
    %v5229 = vunpack.c.l.b16 %v4560
    %v5230 = vunpack.c.h.b16 %v4560
    %v5231 = vunpack.c.l.b16 %v4561
    %v5232 = vunpack.c.h.b16 %v4561
    %v5233 = vunpack.c.l.b16 %v4562
    %v5234 = vunpack.c.h.b16 %v4562
    %v5235 = vunpack.c.l.b16 %v4563
    %v5236 = vunpack.c.h.b16 %v4563
    %v5237 = vunpack.c.l.b16 %v4564
    %v5238 = vunpack.c.h.b16 %v4564
    %v5239 = vunpack.c.l.b16 %v4565
    %v5240 = vunpack.c.h.b16 %v4565
    %v5241 = vunpack.c.l.b16 %v4566
    %v5242 = vunpack.c.h.b16 %v4566
    %v5243 = vunpack.c.l.b16 %v4567
    %v5244 = vunpack.c.h.b16 %v4567
    %v5245 = vunpack.c.l.b16 %v4568
    %v5246 = vunpack.c.h.b16 %v4568
    %v5247 = vunpack.c.l.b16 %v4569
    %v5248 = vunpack.c.h.b16 %v4569
    %v5249 = vunpack.c.l.b16 %v4570
    %v5250 = vunpack.c.h.b16 %v4570
    %v5251 = vunpack.c.l.b16 %v4571
    %v5252 = vunpack.c.h.b16 %v4571
    %v5253 = vunpack.c.l.b16 %v4572
    %v5254 = vunpack.c.h.b16 %v4572
    %v5255 = vunpack.c.l.b16 %v4573
    %v5256 = vunpack.c.h.b16 %v4573
    %v5257 = vunpack.c.l.b16 %v4574
    %v5258 = vunpack.c.h.b16 %v4574
    %v5259 = vunpack.c.l.b16 %v4575
    %v5260 = vunpack.c.h.b16 %v4575
    %v5261 = vunpack.c.l.b16 %v4576
    %v5262 = vunpack.c.h.b16 %v4576
    %v5263 = vunpack.c.l.b16 %v4577
    %v5264 = vunpack.c.h.b16 %v4577
    %v5265 = vunpack.c.l.b16 %v4578
    %v5266 = vunpack.c.h.b16 %v4578
    %v5267 = vunpack.c.l.b16 %v4579
    %v5268 = vunpack.c.h.b16 %v4579
    %v5269 = vunpack.c.l.b16 %v4580
    %v5270 = vunpack.c.h.b16 %v4580
    %v5271 = vunpack.c.l.b16 %v4581
    %v5272 = vunpack.c.h.b16 %v4581
    %v5273 = vunpack.c.l.b16 %v4582
    %v5274 = vunpack.c.h.b16 %v4582
    %v5275 = vunpack.c.l.b16 %v4583
    %v5276 = vunpack.c.h.b16 %v4583
    %v5277 = vunpack.c.l.b16 %v4584
    %v5278 = vunpack.c.h.b16 %v4584
    %v5279 = vunpack.c.l.b16 %v4585
    %v5280 = vunpack.c.h.b16 %v4585
    %v5281 = vunpack.c.l.b16 %v4586
    %v5282 = vunpack.c.h.b16 %v4586
    %v5283 = vunpack.c.l.b16 %v4587
    %v5284 = vunpack.c.h.b16 %v4587
    %v5285 = vunpack.c.l.b16 %v4588
    %v5286 = vunpack.c.h.b16 %v4588
    %v5287 = vunpack.c.l.b16 %v4589
    %v5288 = vunpack.c.h.b16 %v4589
    %v5289 = vunpack.c.l.b16 %v4590
    %v5290 = vunpack.c.h.b16 %v4590
    %v5291 = vunpack.c.l.b16 %v4591
    %v5292 = vunpack.c.h.b16 %v4591
    %v5293 = vunpack.c.l.b16 %v4592
    %v5294 = vunpack.c.h.b16 %v4592
    %v5295 = vunpack.c.l.b16 %v4593
    %v5296 = vunpack.c.h.b16 %v4593
    %v5297 = vunpack.c.l.b16 %v4594
    %v5298 = vunpack.c.h.b16 %v4594
    %v5299 = vunpack.c.l.b16 %v4595
    %v5300 = vunpack.c.h.b16 %v4595
    %v5301 = vunpack.c.l.b16 %v4596
    %v5302 = vunpack.c.h.b16 %v4596
    %v5303 = vunpack.c.l.b16 %v4597
    %v5304 = vunpack.c.h.b16 %v4597
    %v5305 = vunpack.c.l.b16 %v4598
    %v5306 = vunpack.c.h.b16 %v4598
    %v5307 = vunpack.c.l.b16 %v4599
    %v5308 = vunpack.c.h.b16 %v4599
    %v5309 = vunpack.c.l.b16 %v4600
    %v5310 = vunpack.c.h.b16 %v4600
    %v5311 = vunpack.c.l.b16 %v4601
    %v5312 = vunpack.c.h.b16 %v4601
    %v5313 = vunpack.c.l.b16 %v4602
    %v5314 = vunpack.c.h.b16 %v4602
    %v5315 = vunpack.c.l.b16 %v4603
    %v5316 = vunpack.c.h.b16 %v4603
    %v5317 = vunpack.c.l.b16 %v4604
    %v5318 = vunpack.c.h.b16 %v4604
    %v5319 = vunpack.c.l.b16 %v4605
    %v5320 = vunpack.c.h.b16 %v4605
    %v5321 = vunpack.c.l.b16 %v4606
    %v5322 = vunpack.c.h.b16 %v4606
    %v5323 = vunpack.c.l.b16 %v4607
    %v5324 = vunpack.c.h.b16 %v4607
    %v5325 = vunpack.c.l.b16 %v4608
    %v5326 = vunpack.c.h.b16 %v4608
    %v5327 = vunpack.c.l.b16 %v4609
    %v5328 = vunpack.c.h.b16 %v4609
    %v5329 = vunpack.c.l.b16 %v4610
    %v5330 = vunpack.c.h.b16 %v4610
    %v5331 = vunpack.c.l.b16 %v4611
    %v5332 = vunpack.c.h.b16 %v4611
    %v5333 = vunpack.c.l.b16 %v4612
    %v5334 = vunpack.c.h.b16 %v4612
    %v5335 = vunpack.c.l.b16 %v4613
    %v5336 = vunpack.c.h.b16 %v4613
    %v5337 = vunpack.c.l.b16 %v4614
    %v5338 = vunpack.c.h.b16 %v4614
    %v5339 = vunpack.c.l.b16 %v4615
    %v5340 = vunpack.c.h.b16 %v4615
    %v5341 = vunpack.c.l.b16 %v4616
    %v5342 = vunpack.c.h.b16 %v4616
    %v5343 = vunpack.c.l.b16 %v4617
    %v5344 = vunpack.c.h.b16 %v4617
    %v5345 = vunpack.c.l.b16 %v4618
    %v5346 = vunpack.c.h.b16 %v4618
    %v5347 = vunpack.c.l.b16 %v4619
    %v5348 = vunpack.c.h.b16 %v4619
    %v5349 = vunpack.c.l.b16 %v4620
    %v5350 = vunpack.c.h.b16 %v4620
    %v5351 = vunpack.c.l.b16 %v4621
    %v5352 = vunpack.c.h.b16 %v4621
    %v5353 = vunpack.c.l.b16 %v4622
    %v5354 = vunpack.c.h.b16 %v4622
    %v5355 = vunpack.c.l.b16 %v4623
    %v5356 = vunpack.c.h.b16 %v4623
    %v5357 = vunpack.c.l.b16 %v4624
    %v5358 = vunpack.c.h.b16 %v4624
    %v5359 = vunpack.c.l.b16 %v4625
    %v5360 = vunpack.c.h.b16 %v4625
    %v5361 = vunpack.c.l.b16 %v4626
    %v5362 = vunpack.c.h.b16 %v4626
    %v5363 = vunpack.c.l.b16 %v4627
    %v5364 = vunpack.c.h.b16 %v4627
    %v5365 = vunpack.c.l.b16 %v4628
    %v5366 = vunpack.c.h.b16 %v4628
    %v5367 = vunpack.c.l.b16 %v4629
    %v5368 = vunpack.c.h.b16 %v4629
    %v5369 = vunpack.c.l.b16 %v4630
    %v5370 = vunpack.c.h.b16 %v4630
    %v5371 = vunpack.c.l.b16 %v4631
    %v5372 = vunpack.c.h.b16 %v4631
    %v5373 = vunpack.c.l.b16 %v4632
    %v5374 = vunpack.c.h.b16 %v4632
    %v5375 = vunpack.c.l.b16 %v4633
    %v5376 = vunpack.c.h.b16 %v4633
    %v5377 = vunpack.c.l.b16 %v4634
    %v5378 = vunpack.c.h.b16 %v4634
    %v5379 = vunpack.c.l.b16 %v4635
    %v5380 = vunpack.c.h.b16 %v4635
    %v5381 = vunpack.c.l.b16 %v4636
    %v5382 = vunpack.c.h.b16 %v4636
    %v5383 = vunpack.c.l.b16 %v4637
    %v5384 = vunpack.c.h.b16 %v4637
    %v5385 = vunpack.c.l.b16 %v4638
    %v5386 = vunpack.c.h.b16 %v4638
    %v5387 = vunpack.c.l.b16 %v4639
    %v5388 = vunpack.c.h.b16 %v4639
    %v5389 = vunpack.c.l.b16 %v4640
    %v5390 = vunpack.c.h.b16 %v4640
    %v5391 = vunpack.c.l.b16 %v4641
    %v5392 = vunpack.c.h.b16 %v4641
    %v5393 = vunpack.c.l.b16 %v4642
    %v5394 = vunpack.c.h.b16 %v4642
    %v5395 = vunpack.c.l.b16 %v4643
    %v5396 = vunpack.c.h.b16 %v4643
    %v5397 = vunpack.c.l.b16 %v4644
    %v5398 = vunpack.c.h.b16 %v4644
    %v5399 = vunpack.c.l.b16 %v4645
    %v5400 = vunpack.c.h.b16 %v4645
    %v5401 = vunpack.c.l.b16 %v4646
    %v5402 = vunpack.c.h.b16 %v4646
    %v5403 = vunpack.c.l.b16 %v4647
    %v5404 = vunpack.c.h.b16 %v4647
    %v5405 = vunpack.c.l.b16 %v4648
    %v5406 = vunpack.c.h.b16 %v4648
    %v5407 = vunpack.c.l.b16 %v4649
    %v5408 = vunpack.c.h.b16 %v4649
    %v5409 = vunpack.c.l.b16 %v4650
    %v5410 = vunpack.c.h.b16 %v4650
    %v5411 = vunpack.c.l.b16 %v4651
    %v5412 = vunpack.c.h.b16 %v4651
    %v5413 = vunpack.c.l.b16 %v4652
    %v5414 = vunpack.c.h.b16 %v4652
    %v5415 = vunpack.c.l.b16 %v4653
    %v5416 = vunpack.c.h.b16 %v4653
    %v5417 = vunpack.c.l.b16 %v4654
    %v5418 = vunpack.c.h.b16 %v4654
    %v5419 = vunpack.c.l.b16 %v4655
    %v5420 = vunpack.c.h.b16 %v4655
    %v5421 = vunpack.c.l.b16 %v4656
    %v5422 = vunpack.c.h.b16 %v4656
    %v5423 = vunpack.c.l.b16 %v4657
    %v5424 = vunpack.c.h.b16 %v4657
    %v5425 = vunpack.c.l.b16 %v4658
    %v5426 = vunpack.c.h.b16 %v4658
    %v5427 = vunpack.c.l.b16 %v4659
    %v5428 = vunpack.c.h.b16 %v4659
    %v5429 = vunpack.c.l.b16 %v4660
    %v5430 = vunpack.c.h.b16 %v4660
    %v5431 = vunpack.c.l.b16 %v4661
    %v5432 = vunpack.c.h.b16 %v4661
    %v5433 = vunpack.c.l.b16 %v4662
    %v5434 = vunpack.c.h.b16 %v4662
    %v5435 = vunpack.c.l.b16 %v4663
    %v5436 = vunpack.c.h.b16 %v4663
    %v5437 = vunpack.c.l.b16 %v4664
    %v5438 = vunpack.c.h.b16 %v4664
    %v5439 = vunpack.c.l.b16 %v4665
    %v5440 = vunpack.c.h.b16 %v4665
    %v5441 = vunpack.c.l.b16 %v4666
    %v5442 = vunpack.c.h.b16 %v4666
    %v5443 = vunpack.c.l.b16 %v4667
    %v5444 = vunpack.c.h.b16 %v4667
    %v5445 = vunpack.c.l.b16 %v4668
    %v5446 = vunpack.c.h.b16 %v4668
    %v5447 = vunpack.c.l.b16 %v4669
    %v5448 = vunpack.c.h.b16 %v4669
    %v5449 = vunpack.c.l.b16 %v4670
    %v5450 = vunpack.c.h.b16 %v4670
    %v5451 = vunpack.c.l.b16 %v4671
    %v5452 = vunpack.c.h.b16 %v4671
    %v5453 = vunpack.c.l.b16 %v4672
    %v5454 = vunpack.c.h.b16 %v4672
    %v5455 = vunpack.c.l.b16 %v4673
    %v5456 = vunpack.c.h.b16 %v4673
    %v5457 = vunpack.c.l.b16 %v4674
    %v5458 = vunpack.c.h.b16 %v4674
    %v5459 = vunpack.c.l.b16 %v4675
    %v5460 = vunpack.c.h.b16 %v4675
    %v5461 = vunpack.c.l.b16 %v4676
    %v5462 = vunpack.c.h.b16 %v4676
    %v5463 = vunpack.c.l.b16 %v4677
    %v5464 = vunpack.c.h.b16 %v4677
    %v5465 = vunpack.c.l.b16 %v4678
    %v5466 = vunpack.c.h.b16 %v4678
    %v5467 = vunpack.c.l.b16 %v4679
    %v5468 = vunpack.c.h.b16 %v4679
    %v5469 = vunpack.c.l.b16 %v4680
    %v5470 = vunpack.c.h.b16 %v4680
    %v5471 = vunpack.c.l.b16 %v4681
    %v5472 = vunpack.c.h.b16 %v4681
    %v5473 = vunpack.c.l.b16 %v4682
    %v5474 = vunpack.c.h.b16 %v4682
    %v5475 = vunpack.c.l.b16 %v4683
    %v5476 = vunpack.c.h.b16 %v4683
    %v5477 = vunpack.c.l.b16 %v4684
    %v5478 = vunpack.c.h.b16 %v4684
    %v5479 = vunpack.c.l.b16 %v4685
    %v5480 = vunpack.c.h.b16 %v4685
    %v5481 = vunpack.c.l.b16 %v4686
    %v5482 = vunpack.c.h.b16 %v4686
    %v5483 = vunpack.c.l.b16 %v4687
    %v5484 = vunpack.c.h.b16 %v4687
    %v5485 = vunpack.c.l.b16 %v4688
    %v5486 = vunpack.c.h.b16 %v4688
    %v5487 = vunpack.c.l.b16 %v4689
    %v5488 = vunpack.c.h.b16 %v4689
    %v5489 = vunpack.c.l.b16 %v4690
    %v5490 = vunpack.c.h.b16 %v4690
    %v5491 = vunpack.c.l.b16 %v4691
    %v5492 = vunpack.c.h.b16 %v4691
    %v5493 = vunpack.c.l.b16 %v4692
    %v5494 = vunpack.c.h.b16 %v4692
    %v5495 = vunpack.c.l.b16 %v4693
    %v5496 = vunpack.c.h.b16 %v4693
    %v5497 = vunpack.c.l.b16 %v4694
    %v5498 = vunpack.c.h.b16 %v4694
    %v5499 = vunpack.c.l.b16 %v4695
    %v5500 = vunpack.c.h.b16 %v4695
    %v5501 = vunpack.c.l.b16 %v4696
    %v5502 = vunpack.c.h.b16 %v4696
    %v5503 = vunpack.c.l.b16 %v4697
    %v5504 = vunpack.c.h.b16 %v4697
    %v5505 = vunpack.c.l.b16 %v4698
    %v5506 = vunpack.c.h.b16 %v4698
    %v5507 = vunpack.c.l.b16 %v4699
    %v5508 = vunpack.c.h.b16 %v4699
    %v5509 = vunpack.c.l.b16 %v4700
    %v5510 = vunpack.c.h.b16 %v4700
    %v5511 = vunpack.c.l.b16 %v4701
    %v5512 = vunpack.c.h.b16 %v4701
    %v5513 = vunpack.c.l.b16 %v4702
    %v5514 = vunpack.c.h.b16 %v4702
    %v5515 = vunpack.c.l.b16 %v4703
    %v5516 = vunpack.c.h.b16 %v4703
    %v5517 = vunpack.c.l.b16 %v4704
    %v5518 = vunpack.c.h.b16 %v4704
    %v5519 = vunpack.c.l.b16 %v4705
    %v5520 = vunpack.c.h.b16 %v4705
    %v5521 = vunpack.c.l.b16 %v4706
    %v5522 = vunpack.c.h.b16 %v4706
    %v5523 = vunpack.c.l.b16 %v4707
    %v5524 = vunpack.c.h.b16 %v4707
    %v5525 = vunpack.c.l.b16 %v4708
    %v5526 = vunpack.c.h.b16 %v4708
    %v5527 = vunpack.c.l.b16 %v4709
    %v5528 = vunpack.c.h.b16 %v4709
    %v5529 = vunpack.c.l.b16 %v4710
    %v5530 = vunpack.c.h.b16 %v4710
    %v5531 = vunpack.c.l.b16 %v4711
    %v5532 = vunpack.c.h.b16 %v4711
    %v5533 = vunpack.c.l.b16 %v4712
    %v5534 = vunpack.c.h.b16 %v4712
    %v5535 = vunpack.c.l.b16 %v4713
    %v5536 = vunpack.c.h.b16 %v4713
    %v5537 = vunpack.c.l.b16 %v4714
    %v5538 = vunpack.c.h.b16 %v4714
    %v5539 = vunpack.c.l.b16 %v4715
    %v5540 = vunpack.c.h.b16 %v4715
    %v5541 = vunpack.c.l.b16 %v4716
    %v5542 = vunpack.c.h.b16 %v4716
    %v5543 = vunpack.c.l.b16 %v4717
    %v5544 = vunpack.c.h.b16 %v4717
    %v5545 = vunpack.c.l.b16 %v4718
    %v5546 = vunpack.c.h.b16 %v4718
    %v5547 = vunpack.c.l.b16 %v4719
    %v5548 = vunpack.c.h.b16 %v4719
    %v5549 = vunpack.c.l.b16 %v4720
    %v5550 = vunpack.c.h.b16 %v4720
    %v5551 = vunpack.c.l.b16 %v4721
    %v5552 = vunpack.c.h.b16 %v4721
    %v5553 = vunpack.c.l.b16 %v4722
    %v5554 = vunpack.c.h.b16 %v4722
    %v5555 = vunpack.c.l.b16 %v4723
    %v5556 = vunpack.c.h.b16 %v4723
    %v5557 = vunpack.c.l.b16 %v4724
    %v5558 = vunpack.c.h.b16 %v4724
    %v5559 = vunpack.c.l.b16 %v4725
    %v5560 = vunpack.c.h.b16 %v4725
    %v5561 = vunpack.c.l.b16 %v4726
    %v5562 = vunpack.c.h.b16 %v4726
    %v5563 = vunpack.c.l.b16 %v4727
    %v5564 = vunpack.c.h.b16 %v4727
    %v5565 = vunpack.c.l.b16 %v4728
    %v5566 = vunpack.c.h.b16 %v4728
    %v5567 = vunpack.c.l.b16 %v4729
    %v5568 = vunpack.c.h.b16 %v4729
    %v5569 = vunpack.c.l.b16 %v4730
    %v5570 = vunpack.c.h.b16 %v4730
    %v5571 = vunpack.c.l.b16 %v4731
    %v5572 = vunpack.c.h.b16 %v4731
    %v5573 = vunpack.c.l.b16 %v4732
    %v5574 = vunpack.c.h.b16 %v4732
    %v5575 = vunpack.c.l.b16 %v4733
    %v5576 = vunpack.c.h.b16 %v4733
    %v5577 = vunpack.c.l.b16 %v4734
    %v5578 = vunpack.c.h.b16 %v4734
    %v5579 = vunpack.c.l.b16 %v4735
    %v5580 = vunpack.c.h.b16 %v4735
    %v5581 = vunpack.c.l.b16 %v4736
    %v5582 = vunpack.c.h.b16 %v4736
    %v5583 = vunpack.c.l.b16 %v4737
    %v5584 = vunpack.c.h.b16 %v4737
    %v5585 = vunpack.c.l.b16 %v4738
    %v5586 = vunpack.c.h.b16 %v4738
    %v5587 = vunpack.c.l.b16 %v4739
    %v5588 = vunpack.c.h.b16 %v4739
    %v5589 = vunpack.c.l.b16 %v4740
    %v5590 = vunpack.c.h.b16 %v4740
    %v5591 = vunpack.c.l.b16 %v4741
    %v5592 = vunpack.c.h.b16 %v4741
    %v5593 = vunpack.c.l.b16 %v4742
    %v5594 = vunpack.c.h.b16 %v4742
    %v5595 = vunpack.c.l.b16 %v4743
    %v5596 = vunpack.c.h.b16 %v4743
    %v5597 = vunpack.c.l.b16 %v4744
    %v5598 = vunpack.c.h.b16 %v4744
    %v5599 = vunpack.c.l.b16 %v4745
    %v5600 = vunpack.c.h.b16 %v4745
    %v5601 = vunpack.c.l.b16 %v4746
    %v5602 = vunpack.c.h.b16 %v4746
    %v5603 = vunpack.c.l.b16 %v4747
    %v5604 = vunpack.c.h.b16 %v4747
    %v5605 = vunpack.c.l.b16 %v4748
    %v5606 = vunpack.c.h.b16 %v4748
    %v5607 = vunpack.c.l.b16 %v4749
    %v5608 = vunpack.c.h.b16 %v4749
    %v5609 = vunpack.c.l.b16 %v4750
    %v5610 = vunpack.c.h.b16 %v4750
    %v5611 = vunpack.c.l.b16 %v4751
    %v5612 = vunpack.c.h.b16 %v4751
    %v5613 = vunpack.c.l.b16 %v4752
    %v5614 = vunpack.c.h.b16 %v4752
    %v5615 = vunpack.c.l.b16 %v4753
    %v5616 = vunpack.c.h.b16 %v4753
    %v5617 = vunpack.c.l.b16 %v4754
    %v5618 = vunpack.c.h.b16 %v4754
    %v5619 = vunpack.c.l.b16 %v4755
    %v5620 = vunpack.c.h.b16 %v4755
    %v5621 = vunpack.c.l.b16 %v4756
    %v5622 = vunpack.c.h.b16 %v4756
    %v5623 = vunpack.c.l.b16 %v4757
    %v5624 = vunpack.c.h.b16 %v4757
    %v5625 = vunpack.c.l.b16 %v4758
    %v5626 = vunpack.c.h.b16 %v4758
    %v5627 = vunpack.c.l.b16 %v4759
    %v5628 = vunpack.c.h.b16 %v4759
    %v5629 = vunpack.c.l.b16 %v4760
    %v5630 = vunpack.c.h.b16 %v4760
    %v5631 = vunpack.c.l.b16 %v4761
    %v5632 = vunpack.c.h.b16 %v4761
    %v5633 = vunpack.c.l.b16 %v4762
    %v5634 = vunpack.c.h.b16 %v4762
    %v5635 = vunpack.c.l.b16 %v4763
    %v5636 = vunpack.c.h.b16 %v4763
    %v5637 = vunpack.c.l.b16 %v4764
    %v5638 = vunpack.c.h.b16 %v4764
    %v5639 = vunpack.c.l.b16 %v4765
    %v5640 = vunpack.c.h.b16 %v4765
    %v5641 = vunpack.c.l.b16 %v4766
    %v5642 = vunpack.c.h.b16 %v4766
    %v5643 = vunpack.c.l.b16 %v4767
    %v5644 = vunpack.c.h.b16 %v4767
    %v5645 = vunpack.c.l.b16 %v4768
    %v5646 = vunpack.c.h.b16 %v4768
    %v5647 = vunpack.c.l.b16 %v4769
    %v5648 = vunpack.c.h.b16 %v4769
    %v5649 = vunpack.c.l.b16 %v4770
    %v5650 = vunpack.c.h.b16 %v4770
    %v5651 = vunpack.c.l.b16 %v4771
    %v5652 = vunpack.c.h.b16 %v4771
    %v5653 = vunpack.c.l.b16 %v4772
    %v5654 = vunpack.c.h.b16 %v4772
    %v5655 = vunpack.c.l.b16 %v4773
    %v5656 = vunpack.c.h.b16 %v4773
    %v5657 = vunpack.c.l.b16 %v4774
    %v5658 = vunpack.c.h.b16 %v4774
    %v5659 = vunpack.c.l.b16 %v4775
    %v5660 = vunpack.c.h.b16 %v4775
    %v5661 = vunpack.c.l.b16 %v4776
    %v5662 = vunpack.c.h.b16 %v4776
    %v5663 = vunpack.c.l.b16 %v4777
    %v5664 = vunpack.c.h.b16 %v4777
    %v5665 = vunpack.c.l.b16 %v4778
    %v5666 = vunpack.c.h.b16 %v4778
    %v5667 = vunpack.c.l.b16 %v4779
    %v5668 = vunpack.c.h.b16 %v4779
    %v5669 = vunpack.c.l.b16 %v4780
    %v5670 = vunpack.c.h.b16 %v4780
    %v5671 = vunpack.c.l.b16 %v4781
    %v5672 = vunpack.c.h.b16 %v4781
    %v5673 = vunpack.c.l.b16 %v4782
    %v5674 = vunpack.c.h.b16 %v4782
    %v5675 = vunpack.c.l.b16 %v4783
    %v5676 = vunpack.c.h.b16 %v4783
    %v5677 = vunpack.c.l.b16 %v4784
    %v5678 = vunpack.c.h.b16 %v4784
    %v5679 = vunpack.c.l.b16 %v4785
    %v5680 = vunpack.c.h.b16 %v4785
    %v5681 = vunpack.c.l.b16 %v4786
    %v5682 = vunpack.c.h.b16 %v4786
    %v5683 = vpack.c.b16 %v5113, %v5107
    %v5684 = vpack.c.b16 %v5114, %v5108
    %v5685 = vpack.c.b16 %v5115, %v5109
    %v5686 = vpack.c.b16 %v5116, %v5110
    %v5687 = vpack.c.b16 %v5117, %v5111
    %v5688 = vpack.c.b16 %v5118, %v5112
    %v5689 = vpack.c.b16 %v5125, %v5119
    %v5690 = vpack.c.b16 %v5126, %v5120
    %v5691 = vpack.c.b16 %v5127, %v5121
    %v5692 = vpack.c.b16 %v5128, %v5122
    %v5693 = vpack.c.b16 %v5129, %v5123
    %v5694 = vpack.c.b16 %v5130, %v5124
    %v5695 = vpack.c.b16 %v5137, %v5131
    %v5696 = vpack.c.b16 %v5138, %v5132
    %v5697 = vpack.c.b16 %v5139, %v5133
    %v5698 = vpack.c.b16 %v5140, %v5134
    %v5699 = vpack.c.b16 %v5141, %v5135
    %v5700 = vpack.c.b16 %v5142, %v5136
    %v5701 = vpack.c.b16 %v5149, %v5143
    %v5702 = vpack.c.b16 %v5150, %v5144
    %v5703 = vpack.c.b16 %v5151, %v5145
    %v5704 = vpack.c.b16 %v5152, %v5146
    %v5705 = vpack.c.b16 %v5153, %v5147
    %v5706 = vpack.c.b16 %v5154, %v5148
    %v5707 = vpack.c.b16 %v5161, %v5155
    %v5708 = vpack.c.b16 %v5162, %v5156
    %v5709 = vpack.c.b16 %v5163, %v5157
    %v5710 = vpack.c.b16 %v5164, %v5158
    %v5711 = vpack.c.b16 %v5165, %v5159
    %v5712 = vpack.c.b16 %v5166, %v5160
    %v5713 = vpack.c.b16 %v5173, %v5167
    %v5714 = vpack.c.b16 %v5174, %v5168
    %v5715 = vpack.c.b16 %v5175, %v5169
    %v5716 = vpack.c.b16 %v5176, %v5170
    %v5717 = vpack.c.b16 %v5177, %v5171
    %v5718 = vpack.c.b16 %v5178, %v5172
    %v5719 = vpack.c.b16 %v5185, %v5179
    %v5720 = vpack.c.b16 %v5186, %v5180
    %v5721 = vpack.c.b16 %v5187, %v5181
    %v5722 = vpack.c.b16 %v5188, %v5182
    %v5723 = vpack.c.b16 %v5189, %v5183
    %v5724 = vpack.c.b16 %v5190, %v5184
    %v5725 = vpack.c.b16 %v5197, %v5191
    %v5726 = vpack.c.b16 %v5198, %v5192
    %v5727 = vpack.c.b16 %v5199, %v5193
    %v5728 = vpack.c.b16 %v5200, %v5194
    %v5729 = vpack.c.b16 %v5201, %v5195
    %v5730 = vpack.c.b16 %v5202, %v5196
    %v5731 = vpack.c.b16 %v5209, %v5203
    %v5732 = vpack.c.b16 %v5210, %v5204
    %v5733 = vpack.c.b16 %v5211, %v5205
    %v5734 = vpack.c.b16 %v5212, %v5206
    %v5735 = vpack.c.b16 %v5213, %v5207
    %v5736 = vpack.c.b16 %v5214, %v5208
    %v5737 = vpack.c.b16 %v5221, %v5215
    %v5738 = vpack.c.b16 %v5222, %v5216
    %v5739 = vpack.c.b16 %v5223, %v5217
    %v5740 = vpack.c.b16 %v5224, %v5218
    %v5741 = vpack.c.b16 %v5225, %v5219
    %v5742 = vpack.c.b16 %v5226, %v5220
    %v5743 = vpack.c.b16 %v5233, %v5227
    %v5744 = vpack.c.b16 %v5234, %v5228
    %v5745 = vpack.c.b16 %v5235, %v5229
    %v5746 = vpack.c.b16 %v5236, %v5230
    %v5747 = vpack.c.b16 %v5237, %v5231
    %v5748 = vpack.c.b16 %v5238, %v5232
    %v5749 = vpack.c.b16 %v5245, %v5239
    %v5750 = vpack.c.b16 %v5246, %v5240
    %v5751 = vpack.c.b16 %v5247, %v5241
    %v5752 = vpack.c.b16 %v5248, %v5242
    %v5753 = vpack.c.b16 %v5249, %v5243
    %v5754 = vpack.c.b16 %v5250, %v5244
    %v5755 = vpack.c.b16 %v5257, %v5251
    %v5756 = vpack.c.b16 %v5258, %v5252
    %v5757 = vpack.c.b16 %v5259, %v5253
    %v5758 = vpack.c.b16 %v5260, %v5254
    %v5759 = vpack.c.b16 %v5261, %v5255
    %v5760 = vpack.c.b16 %v5262, %v5256
    %v5761 = vpack.c.b16 %v5269, %v5263
    %v5762 = vpack.c.b16 %v5270, %v5264
    %v5763 = vpack.c.b16 %v5271, %v5265
    %v5764 = vpack.c.b16 %v5272, %v5266
    %v5765 = vpack.c.b16 %v5273, %v5267
    %v5766 = vpack.c.b16 %v5274, %v5268
    %v5767 = vpack.c.b16 %v5281, %v5275
    %v5768 = vpack.c.b16 %v5282, %v5276
    %v5769 = vpack.c.b16 %v5283, %v5277
    %v5770 = vpack.c.b16 %v5284, %v5278
    %v5771 = vpack.c.b16 %v5285, %v5279
    %v5772 = vpack.c.b16 %v5286, %v5280
    %v5773 = vpack.c.b16 %v5293, %v5287
    %v5774 = vpack.c.b16 %v5294, %v5288
    %v5775 = vpack.c.b16 %v5295, %v5289
    %v5776 = vpack.c.b16 %v5296, %v5290
    %v5777 = vpack.c.b16 %v5297, %v5291
    %v5778 = vpack.c.b16 %v5298, %v5292
    %v5779 = vpack.c.b16 %v5305, %v5299
    %v5780 = vpack.c.b16 %v5306, %v5300
    %v5781 = vpack.c.b16 %v5307, %v5301
    %v5782 = vpack.c.b16 %v5308, %v5302
    %v5783 = vpack.c.b16 %v5309, %v5303
    %v5784 = vpack.c.b16 %v5310, %v5304
    %v5785 = vpack.c.b16 %v5317, %v5311
    %v5786 = vpack.c.b16 %v5318, %v5312
    %v5787 = vpack.c.b16 %v5319, %v5313
    %v5788 = vpack.c.b16 %v5320, %v5314
    %v5789 = vpack.c.b16 %v5321, %v5315
    %v5790 = vpack.c.b16 %v5322, %v5316
    %v5791 = vpack.c.b16 %v5329, %v5323
    %v5792 = vpack.c.b16 %v5330, %v5324
    %v5793 = vpack.c.b16 %v5331, %v5325
    %v5794 = vpack.c.b16 %v5332, %v5326
    %v5795 = vpack.c.b16 %v5333, %v5327
    %v5796 = vpack.c.b16 %v5334, %v5328
    %v5797 = vpack.c.b16 %v5341, %v5335
    %v5798 = vpack.c.b16 %v5342, %v5336
    %v5799 = vpack.c.b16 %v5343, %v5337
    %v5800 = vpack.c.b16 %v5344, %v5338
    %v5801 = vpack.c.b16 %v5345, %v5339
    %v5802 = vpack.c.b16 %v5346, %v5340
    %v5803 = vpack.c.b16 %v5353, %v5347
    %v5804 = vpack.c.b16 %v5354, %v5348
    %v5805 = vpack.c.b16 %v5355, %v5349
    %v5806 = vpack.c.b16 %v5356, %v5350
    %v5807 = vpack.c.b16 %v5357, %v5351
    %v5808 = vpack.c.b16 %v5358, %v5352
    %v5809 = vpack.c.b16 %v5365, %v5359
    %v5810 = vpack.c.b16 %v5366, %v5360
    %v5811 = vpack.c.b16 %v5367, %v5361
    %v5812 = vpack.c.b16 %v5368, %v5362
    %v5813 = vpack.c.b16 %v5369, %v5363
    %v5814 = vpack.c.b16 %v5370, %v5364
    %v5815 = vpack.c.b16 %v5377, %v5371
    %v5816 = vpack.c.b16 %v5378, %v5372
    %v5817 = vpack.c.b16 %v5379, %v5373
    %v5818 = vpack.c.b16 %v5380, %v5374
    %v5819 = vpack.c.b16 %v5381, %v5375
    %v5820 = vpack.c.b16 %v5382, %v5376
    %v5821 = vpack.c.b16 %v5389, %v5383
    %v5822 = vpack.c.b16 %v5390, %v5384
    %v5823 = vpack.c.b16 %v5391, %v5385
    %v5824 = vpack.c.b16 %v5392, %v5386
    %v5825 = vpack.c.b16 %v5393, %v5387
    %v5826 = vpack.c.b16 %v5394, %v5388
    %v5827 = vpack.c.b16 %v5401, %v5395
    %v5828 = vpack.c.b16 %v5402, %v5396
    %v5829 = vpack.c.b16 %v5403, %v5397
    %v5830 = vpack.c.b16 %v5404, %v5398
    %v5831 = vpack.c.b16 %v5405, %v5399
    %v5832 = vpack.c.b16 %v5406, %v5400
    %v5833 = vpack.c.b16 %v5413, %v5407
    %v5834 = vpack.c.b16 %v5414, %v5408
    %v5835 = vpack.c.b16 %v5415, %v5409
    %v5836 = vpack.c.b16 %v5416, %v5410
    %v5837 = vpack.c.b16 %v5417, %v5411
    %v5838 = vpack.c.b16 %v5418, %v5412
    %v5839 = vpack.c.b16 %v5425, %v5419
    %v5840 = vpack.c.b16 %v5426, %v5420
    %v5841 = vpack.c.b16 %v5427, %v5421
    %v5842 = vpack.c.b16 %v5428, %v5422
    %v5843 = vpack.c.b16 %v5429, %v5423
    %v5844 = vpack.c.b16 %v5430, %v5424
    %v5845 = vpack.c.b16 %v5437, %v5431
    %v5846 = vpack.c.b16 %v5438, %v5432
    %v5847 = vpack.c.b16 %v5439, %v5433
    %v5848 = vpack.c.b16 %v5440, %v5434
    %v5849 = vpack.c.b16 %v5441, %v5435
    %v5850 = vpack.c.b16 %v5442, %v5436
    %v5851 = vpack.c.b16 %v5449, %v5443
    %v5852 = vpack.c.b16 %v5450, %v5444
    %v5853 = vpack.c.b16 %v5451, %v5445
    %v5854 = vpack.c.b16 %v5452, %v5446
    %v5855 = vpack.c.b16 %v5453, %v5447
    %v5856 = vpack.c.b16 %v5454, %v5448
    %v5857 = vpack.c.b16 %v5461, %v5455
    %v5858 = vpack.c.b16 %v5462, %v5456
    %v5859 = vpack.c.b16 %v5463, %v5457
    %v5860 = vpack.c.b16 %v5464, %v5458
    %v5861 = vpack.c.b16 %v5465, %v5459
    %v5862 = vpack.c.b16 %v5466, %v5460
    %v5863 = vpack.c.b16 %v5473, %v5467
    %v5864 = vpack.c.b16 %v5474, %v5468
    %v5865 = vpack.c.b16 %v5475, %v5469
    %v5866 = vpack.c.b16 %v5476, %v5470
    %v5867 = vpack.c.b16 %v5477, %v5471
    %v5868 = vpack.c.b16 %v5478, %v5472
    %v5869 = vpack.c.b16 %v5485, %v5479
    %v5870 = vpack.c.b16 %v5486, %v5480
    %v5871 = vpack.c.b16 %v5487, %v5481
    %v5872 = vpack.c.b16 %v5488, %v5482
    %v5873 = vpack.c.b16 %v5489, %v5483
    %v5874 = vpack.c.b16 %v5490, %v5484
    %v5875 = vpack.c.b16 %v5497, %v5491
    %v5876 = vpack.c.b16 %v5498, %v5492
    %v5877 = vpack.c.b16 %v5499, %v5493
    %v5878 = vpack.c.b16 %v5500, %v5494
    %v5879 = vpack.c.b16 %v5501, %v5495
    %v5880 = vpack.c.b16 %v5502, %v5496
    %v5881 = vpack.c.b16 %v5509, %v5503
    %v5882 = vpack.c.b16 %v5510, %v5504
    %v5883 = vpack.c.b16 %v5511, %v5505
    %v5884 = vpack.c.b16 %v5512, %v5506
    %v5885 = vpack.c.b16 %v5513, %v5507
    %v5886 = vpack.c.b16 %v5514, %v5508
    %v5887 = vpack.c.b16 %v5521, %v5515
    %v5888 = vpack.c.b16 %v5522, %v5516
    %v5889 = vpack.c.b16 %v5523, %v5517
    %v5890 = vpack.c.b16 %v5524, %v5518
    %v5891 = vpack.c.b16 %v5525, %v5519
    %v5892 = vpack.c.b16 %v5526, %v5520
    %v5893 = vpack.c.b16 %v5533, %v5527
    %v5894 = vpack.c.b16 %v5534, %v5528
    %v5895 = vpack.c.b16 %v5535, %v5529
    %v5896 = vpack.c.b16 %v5536, %v5530
    %v5897 = vpack.c.b16 %v5537, %v5531
    %v5898 = vpack.c.b16 %v5538, %v5532
    %v5899 = vpack.c.b16 %v5545, %v5539
    %v5900 = vpack.c.b16 %v5546, %v5540
    %v5901 = vpack.c.b16 %v5547, %v5541
    %v5902 = vpack.c.b16 %v5548, %v5542
    %v5903 = vpack.c.b16 %v5549, %v5543
    %v5904 = vpack.c.b16 %v5550, %v5544
    %v5905 = vpack.c.b16 %v5557, %v5551
    %v5906 = vpack.c.b16 %v5558, %v5552
    %v5907 = vpack.c.b16 %v5559, %v5553
    %v5908 = vpack.c.b16 %v5560, %v5554
    %v5909 = vpack.c.b16 %v5561, %v5555
    %v5910 = vpack.c.b16 %v5562, %v5556
    %v5911 = vpack.c.b16 %v5569, %v5563
    %v5912 = vpack.c.b16 %v5570, %v5564
    %v5913 = vpack.c.b16 %v5571, %v5565
    %v5914 = vpack.c.b16 %v5572, %v5566
    %v5915 = vpack.c.b16 %v5573, %v5567
    %v5916 = vpack.c.b16 %v5574, %v5568
    %v5917 = vpack.c.b16 %v5581, %v5575
    %v5918 = vpack.c.b16 %v5582, %v5576
    %v5919 = vpack.c.b16 %v5583, %v5577
    %v5920 = vpack.c.b16 %v5584, %v5578
    %v5921 = vpack.c.b16 %v5585, %v5579
    %v5922 = vpack.c.b16 %v5586, %v5580
    %v5923 = vpack.c.b16 %v5593, %v5587
    %v5924 = vpack.c.b16 %v5594, %v5588
    %v5925 = vpack.c.b16 %v5595, %v5589
    %v5926 = vpack.c.b16 %v5596, %v5590
    %v5927 = vpack.c.b16 %v5597, %v5591
    %v5928 = vpack.c.b16 %v5598, %v5592
    %v5929 = vpack.c.b16 %v5605, %v5599
    %v5930 = vpack.c.b16 %v5606, %v5600
    %v5931 = vpack.c.b16 %v5607, %v5601
    %v5932 = vpack.c.b16 %v5608, %v5602
    %v5933 = vpack.c.b16 %v5609, %v5603
    %v5934 = vpack.c.b16 %v5610, %v5604
    %v5935 = vpack.c.b16 %v5617, %v5611
    %v5936 = vpack.c.b16 %v5618, %v5612
    %v5937 = vpack.c.b16 %v5619, %v5613
    %v5938 = vpack.c.b16 %v5620, %v5614
    %v5939 = vpack.c.b16 %v5621, %v5615
    %v5940 = vpack.c.b16 %v5622, %v5616
    %v5941 = vpack.c.b16 %v5629, %v5623
    %v5942 = vpack.c.b16 %v5630, %v5624
    %v5943 = vpack.c.b16 %v5631, %v5625
    %v5944 = vpack.c.b16 %v5632, %v5626
    %v5945 = vpack.c.b16 %v5633, %v5627
    %v5946 = vpack.c.b16 %v5634, %v5628
    %v5947 = vpack.c.b16 %v5641, %v5635
    %v5948 = vpack.c.b16 %v5642, %v5636
    %v5949 = vpack.c.b16 %v5643, %v5637
    %v5950 = vpack.c.b16 %v5644, %v5638
    %v5951 = vpack.c.b16 %v5645, %v5639
    %v5952 = vpack.c.b16 %v5646, %v5640
    %v5953 = vpack.c.b16 %v5653, %v5647
    %v5954 = vpack.c.b16 %v5654, %v5648
    %v5955 = vpack.c.b16 %v5655, %v5649
    %v5956 = vpack.c.b16 %v5656, %v5650
    %v5957 = vpack.c.b16 %v5657, %v5651
    %v5958 = vpack.c.b16 %v5658, %v5652
    %v5959 = vpack.c.b16 %v5665, %v5659
    %v5960 = vpack.c.b16 %v5666, %v5660
    %v5961 = vpack.c.b16 %v5667, %v5661
    %v5962 = vpack.c.b16 %v5668, %v5662
    %v5963 = vpack.c.b16 %v5669, %v5663
    %v5964 = vpack.c.b16 %v5670, %v5664
    %v5965 = vpack.c.b16 %v5677, %v5671
    %v5966 = vpack.c.b16 %v5678, %v5672
    %v5967 = vpack.c.b16 %v5679, %v5673
    %v5968 = vpack.c.b16 %v5680, %v5674
    %v5969 = vpack.c.b16 %v5681, %v5675
    %v5970 = vpack.c.b16 %v5682, %v5676
    %6259 = vmatprep.subr.bf16.mxu0 %v5726
    %6260 = vmatpush1.bf16.msra.mxu0 %v5725
    %6261 = vmatprep.subr.bf16.mxu0 %v5720
    %6262 = vmatpush1.bf16.msra.mxu0 %v5719
    %6263 = vmatprep.subr.bf16.mxu0 %v5714
    %6264 = vmatpush1.bf16.msra.mxu0 %v5713
    %6265 = vmatprep.subr.bf16.mxu0 %v5708
    %6266 = vmatpush1.bf16.msra.mxu0 %v5707
    %6267 = vmatprep.subr.bf16.mxu0 %v5702
    %6268 = vmatpush1.bf16.msra.mxu0 %v5701
    %6269 = vmatprep.subr.bf16.mxu0 %v5696
    %6270 = vmatpush1.bf16.msra.mxu0 %v5695
    %6271 = vmatprep.subr.bf16.mxu0 %v5690
    %6272 = vmatpush1.bf16.msra.mxu0 %v5689
    %6273 = vmatprep.subr.bf16.mxu0 %v5684
    %6274 = vmatpush1.bf16.msra.mxu0 %v5683
    %6275 = vmatprep.subr.bf16.mxu0 %v5774
    %6276 = vmatpush2.bf16.msra.mxu0 %v5773
    %6277 = vmatprep.subr.bf16.mxu0 %v5768
    %6278 = vmatpush2.bf16.msra.mxu0 %v5767
    %6279 = vmatprep.subr.bf16.mxu0 %v5762
    %6280 = vmatpush2.bf16.msra.mxu0 %v5761
    %6281 = vmatprep.subr.bf16.mxu0 %v5756
    %6282 = vmatpush2.bf16.msra.mxu0 %v5755
    %6283 = vmatprep.subr.bf16.mxu0 %v5750
    %6284 = vmatpush2.bf16.msra.mxu0 %v5749
    %6285 = vmatprep.subr.bf16.mxu0 %v5744
    %6286 = vmatpush2.bf16.msra.mxu0 %v5743
    %6287 = vmatprep.subr.bf16.mxu0 %v5738
    %6288 = vmatpush2.bf16.msra.mxu0 %v5737
    %6289 = vmatprep.subr.bf16.mxu0 %v5732
    %6290 = vmatpush2.bf16.msra.mxu0 %v5731
    %6291 = vmatprep.mubr.bf16.mxu0 %v4494
    %6292 = vmatmul.mubr.bf16.gmra.mxu0 %v4493
    %v6293 = vpop.f32.mrf.mxu0
    %v6294 = vadd.f32 %v4792, %v6293
    %v6295 = vpop.f32.mrf.mxu0
    %v6296 = vadd.f32 %v4796, %v6295
    %v6297 = vpop.f32.mrf.mxu0
    %v6298 = vpop.f32.mrf.mxu0
    %6299 = vdwg.mxu0
    %6300 = vmatprep.subr.bf16.mxu0 %v5822
    %6301 = vmatpush1.bf16.msra.mxu0 %v5821
    %6302 = vmatprep.subr.bf16.mxu0 %v5816
    %6303 = vmatpush1.bf16.msra.mxu0 %v5815
    %6304 = vmatprep.subr.bf16.mxu0 %v5810
    %6305 = vmatpush1.bf16.msra.mxu0 %v5809
    %6306 = vmatprep.subr.bf16.mxu0 %v5804
    %6307 = vmatpush1.bf16.msra.mxu0 %v5803
    %6308 = vmatprep.subr.bf16.mxu0 %v5798
    %6309 = vmatpush1.bf16.msra.mxu0 %v5797
    %6310 = vmatprep.subr.bf16.mxu0 %v5792
    %6311 = vmatpush1.bf16.msra.mxu0 %v5791
    %6312 = vmatprep.subr.bf16.mxu0 %v5786
    %6313 = vmatpush1.bf16.msra.mxu0 %v5785
    %6314 = vmatprep.subr.bf16.mxu0 %v5780
    %6315 = vmatpush1.bf16.msra.mxu0 %v5779
    %6316 = vmatprep.subr.bf16.mxu0 %v5870
    %6317 = vmatpush2.bf16.msra.mxu0 %v5869
    %6318 = vmatprep.subr.bf16.mxu0 %v5864
    %6319 = vmatpush2.bf16.msra.mxu0 %v5863
    %6320 = vmatprep.subr.bf16.mxu0 %v5858
    %6321 = vmatpush2.bf16.msra.mxu0 %v5857
    %6322 = vmatprep.subr.bf16.mxu0 %v5852
    %6323 = vmatpush2.bf16.msra.mxu0 %v5851
    %6324 = vmatprep.subr.bf16.mxu0 %v5846
    %6325 = vmatpush2.bf16.msra.mxu0 %v5845
    %6326 = vmatprep.subr.bf16.mxu0 %v5840
    %6327 = vmatpush2.bf16.msra.mxu0 %v5839
    %6328 = vmatprep.subr.bf16.mxu0 %v5834
    %6329 = vmatpush2.bf16.msra.mxu0 %v5833
    %6330 = vmatprep.subr.bf16.mxu0 %v5828
    %6331 = vmatpush2.bf16.msra.mxu0 %v5827
    %6332 = vmatprep.mubr.bf16.mxu0 %v4496
    %6333 = vmatmul.mubr.bf16.gmra.mxu0 %v4495
    %v6334 = vpop.f32.mrf.mxu0
    %v6335 = vadd.f32 %v6294, %v6334
    %v6336 = vpop.f32.mrf.mxu0
    %v6337 = vadd.f32 %v6296, %v6336
    %v6338 = vpop.f32.mrf.mxu0
    %v6339 = vpop.f32.mrf.mxu0
    %6340 = vdwg.mxu0
    %6341 = vmatprep.subr.bf16.mxu0 %v5918
    %6342 = vmatpush1.bf16.msra.mxu0 %v5917
    %6343 = vmatprep.subr.bf16.mxu0 %v5912
    %6344 = vmatpush1.bf16.msra.mxu0 %v5911
    %6345 = vmatprep.subr.bf16.mxu0 %v5906
    %6346 = vmatpush1.bf16.msra.mxu0 %v5905
    %6347 = vmatprep.subr.bf16.mxu0 %v5900
    %6348 = vmatpush1.bf16.msra.mxu0 %v5899
    %6349 = vmatprep.subr.bf16.mxu0 %v5894
    %6350 = vmatpush1.bf16.msra.mxu0 %v5893
    %6351 = vmatprep.subr.bf16.mxu0 %v5888
    %6352 = vmatpush1.bf16.msra.mxu0 %v5887
    %6353 = vmatprep.subr.bf16.mxu0 %v5882
    %6354 = vmatpush1.bf16.msra.mxu0 %v5881
    %6355 = vmatprep.subr.bf16.mxu0 %v5876
    %6356 = vmatpush1.bf16.msra.mxu0 %v5875
    %6357 = vmatprep.subr.bf16.mxu0 %v5966
    %6358 = vmatpush2.bf16.msra.mxu0 %v5965
    %6359 = vmatprep.subr.bf16.mxu0 %v5960
    %6360 = vmatpush2.bf16.msra.mxu0 %v5959
    %6361 = vmatprep.subr.bf16.mxu0 %v5954
    %6362 = vmatpush2.bf16.msra.mxu0 %v5953
    %6363 = vmatprep.subr.bf16.mxu0 %v5948
    %6364 = vmatpush2.bf16.msra.mxu0 %v5947
    %6365 = vmatprep.subr.bf16.mxu0 %v5942
    %6366 = vmatpush2.bf16.msra.mxu0 %v5941
    %6367 = vmatprep.subr.bf16.mxu0 %v5936
    %6368 = vmatpush2.bf16.msra.mxu0 %v5935
    %6369 = vmatprep.subr.bf16.mxu0 %v5930
    %6370 = vmatpush2.bf16.msra.mxu0 %v5929
    %6371 = vmatprep.subr.bf16.mxu0 %v5924
    %6372 = vmatpush2.bf16.msra.mxu0 %v5923
    %6373 = vmatprep.mubr.bf16.mxu0 %v4498
    %6374 = vmatmul.mubr.bf16.gmra.mxu0 %v4497
    %v6375 = vpop.f32.mrf.mxu0
    %v6376 = vadd.f32 %v6335, %v6375
    %v6377 = vpop.f32.mrf.mxu0
    %v6378 = vadd.f32 %v6337, %v6377
    %v6379 = vpop.f32.mrf.mxu0
    %v6380 = vpop.f32.mrf.mxu0
    %6381 = vdwg.mxu0
    %6382 = vmatprep.subr.bf16.mxu0 %v5728
    %6383 = vmatpush1.bf16.msra.mxu0 %v5727
    %6384 = vmatprep.subr.bf16.mxu0 %v5722
    %6385 = vmatpush1.bf16.msra.mxu0 %v5721
    %6386 = vmatprep.subr.bf16.mxu0 %v5716
    %6387 = vmatpush1.bf16.msra.mxu0 %v5715
    %6388 = vmatprep.subr.bf16.mxu0 %v5710
    %6389 = vmatpush1.bf16.msra.mxu0 %v5709
    %6390 = vmatprep.subr.bf16.mxu0 %v5704
    %6391 = vmatpush1.bf16.msra.mxu0 %v5703
    %6392 = vmatprep.subr.bf16.mxu0 %v5698
    %6393 = vmatpush1.bf16.msra.mxu0 %v5697
    %6394 = vmatprep.subr.bf16.mxu0 %v5692
    %6395 = vmatpush1.bf16.msra.mxu0 %v5691
    %6396 = vmatprep.subr.bf16.mxu0 %v5686
    %6397 = vmatpush1.bf16.msra.mxu0 %v5685
    %6398 = vmatprep.subr.bf16.mxu0 %v5776
    %6399 = vmatpush2.bf16.msra.mxu0 %v5775
    %6400 = vmatprep.subr.bf16.mxu0 %v5770
    %6401 = vmatpush2.bf16.msra.mxu0 %v5769
    %6402 = vmatprep.subr.bf16.mxu0 %v5764
    %6403 = vmatpush2.bf16.msra.mxu0 %v5763
    %6404 = vmatprep.subr.bf16.mxu0 %v5758
    %6405 = vmatpush2.bf16.msra.mxu0 %v5757
    %6406 = vmatprep.subr.bf16.mxu0 %v5752
    %6407 = vmatpush2.bf16.msra.mxu0 %v5751
    %6408 = vmatprep.subr.bf16.mxu0 %v5746
    %6409 = vmatpush2.bf16.msra.mxu0 %v5745
    %6410 = vmatprep.subr.bf16.mxu0 %v5740
    %6411 = vmatpush2.bf16.msra.mxu0 %v5739
    %6412 = vmatprep.subr.bf16.mxu0 %v5734
    %6413 = vmatpush2.bf16.msra.mxu0 %v5733
    %6414 = vmatprep.mubr.bf16.mxu0 %v4494
    %6415 = vmatmul.mubr.bf16.gmra.mxu0 %v4493
    %v6416 = vpop.f32.mrf.mxu0
    %v6417 = vadd.f32 %v4800, %v6416
    %v6418 = vpop.f32.mrf.mxu0
    %v6419 = vadd.f32 %v4804, %v6418
    %v6420 = vpop.f32.mrf.mxu0
    %v6421 = vpop.f32.mrf.mxu0
    %6422 = vdwg.mxu0
    %6423 = vmatprep.subr.bf16.mxu0 %v5824
    %6424 = vmatpush1.bf16.msra.mxu0 %v5823
    %6425 = vmatprep.subr.bf16.mxu0 %v5818
    %6426 = vmatpush1.bf16.msra.mxu0 %v5817
    %6427 = vmatprep.subr.bf16.mxu0 %v5812
    %6428 = vmatpush1.bf16.msra.mxu0 %v5811
    %6429 = vmatprep.subr.bf16.mxu0 %v5806
    %6430 = vmatpush1.bf16.msra.mxu0 %v5805
    %6431 = vmatprep.subr.bf16.mxu0 %v5800
    %6432 = vmatpush1.bf16.msra.mxu0 %v5799
    %6433 = vmatprep.subr.bf16.mxu0 %v5794
    %6434 = vmatpush1.bf16.msra.mxu0 %v5793
    %6435 = vmatprep.subr.bf16.mxu0 %v5788
    %6436 = vmatpush1.bf16.msra.mxu0 %v5787
    %6437 = vmatprep.subr.bf16.mxu0 %v5782
    %6438 = vmatpush1.bf16.msra.mxu0 %v5781
    %6439 = vmatprep.subr.bf16.mxu0 %v5872
    %6440 = vmatpush2.bf16.msra.mxu0 %v5871
    %6441 = vmatprep.subr.bf16.mxu0 %v5866
    %6442 = vmatpush2.bf16.msra.mxu0 %v5865
    %6443 = vmatprep.subr.bf16.mxu0 %v5860
    %6444 = vmatpush2.bf16.msra.mxu0 %v5859
    %6445 = vmatprep.subr.bf16.mxu0 %v5854
    %6446 = vmatpush2.bf16.msra.mxu0 %v5853
    %6447 = vmatprep.subr.bf16.mxu0 %v5848
    %6448 = vmatpush2.bf16.msra.mxu0 %v5847
    %6449 = vmatprep.subr.bf16.mxu0 %v5842
    %6450 = vmatpush2.bf16.msra.mxu0 %v5841
    %6451 = vmatprep.subr.bf16.mxu0 %v5836
    %6452 = vmatpush2.bf16.msra.mxu0 %v5835
    %6453 = vmatprep.subr.bf16.mxu0 %v5830
    %6454 = vmatpush2.bf16.msra.mxu0 %v5829
    %6455 = vmatprep.mubr.bf16.mxu0 %v4496
    %6456 = vmatmul.mubr.bf16.gmra.mxu0 %v4495
    %v6457 = vpop.f32.mrf.mxu0
    %v6458 = vadd.f32 %v6417, %v6457
    %v6459 = vpop.f32.mrf.mxu0
    %v6460 = vadd.f32 %v6419, %v6459
    %v6461 = vpop.f32.mrf.mxu0
    %v6462 = vpop.f32.mrf.mxu0
    %6463 = vdwg.mxu0
    %6464 = vmatprep.subr.bf16.mxu0 %v5920
    %6465 = vmatpush1.bf16.msra.mxu0 %v5919
    %6466 = vmatprep.subr.bf16.mxu0 %v5914
    %6467 = vmatpush1.bf16.msra.mxu0 %v5913
    %6468 = vmatprep.subr.bf16.mxu0 %v5908
    %6469 = vmatpush1.bf16.msra.mxu0 %v5907
    %6470 = vmatprep.subr.bf16.mxu0 %v5902
    %6471 = vmatpush1.bf16.msra.mxu0 %v5901
    %6472 = vmatprep.subr.bf16.mxu0 %v5896
    %6473 = vmatpush1.bf16.msra.mxu0 %v5895
    %6474 = vmatprep.subr.bf16.mxu0 %v5890
    %6475 = vmatpush1.bf16.msra.mxu0 %v5889
    %6476 = vmatprep.subr.bf16.mxu0 %v5884
    %6477 = vmatpush1.bf16.msra.mxu0 %v5883
    %6478 = vmatprep.subr.bf16.mxu0 %v5878
    %6479 = vmatpush1.bf16.msra.mxu0 %v5877
    %6480 = vmatprep.subr.bf16.mxu0 %v5968
    %6481 = vmatpush2.bf16.msra.mxu0 %v5967
    %6482 = vmatprep.subr.bf16.mxu0 %v5962
    %6483 = vmatpush2.bf16.msra.mxu0 %v5961
    %6484 = vmatprep.subr.bf16.mxu0 %v5956
    %6485 = vmatpush2.bf16.msra.mxu0 %v5955
    %6486 = vmatprep.subr.bf16.mxu0 %v5950
    %6487 = vmatpush2.bf16.msra.mxu0 %v5949
    %6488 = vmatprep.subr.bf16.mxu0 %v5944
    %6489 = vmatpush2.bf16.msra.mxu0 %v5943
    %6490 = vmatprep.subr.bf16.mxu0 %v5938
    %6491 = vmatpush2.bf16.msra.mxu0 %v5937
    %6492 = vmatprep.subr.bf16.mxu0 %v5932
    %6493 = vmatpush2.bf16.msra.mxu0 %v5931
    %6494 = vmatprep.subr.bf16.mxu0 %v5926
    %6495 = vmatpush2.bf16.msra.mxu0 %v5925
    %6496 = vmatprep.mubr.bf16.mxu0 %v4498
    %6497 = vmatmul.mubr.bf16.gmra.mxu0 %v4497
    %v6498 = vpop.f32.mrf.mxu0
    %v6499 = vadd.f32 %v6458, %v6498
    %v6500 = vpop.f32.mrf.mxu0
    %v6501 = vadd.f32 %v6460, %v6500
    %v6502 = vpop.f32.mrf.mxu0
    %v6503 = vpop.f32.mrf.mxu0
    %6504 = vdwg.mxu0
    %6505 = vmatprep.subr.bf16.mxu0 %v5730
    %6506 = vmatpush1.bf16.msra.mxu0 %v5729
    %6507 = vmatprep.subr.bf16.mxu0 %v5724
    %6508 = vmatpush1.bf16.msra.mxu0 %v5723
    %6509 = vmatprep.subr.bf16.mxu0 %v5718
    %6510 = vmatpush1.bf16.msra.mxu0 %v5717
    %6511 = vmatprep.subr.bf16.mxu0 %v5712
    %6512 = vmatpush1.bf16.msra.mxu0 %v5711
    %6513 = vmatprep.subr.bf16.mxu0 %v5706
    %6514 = vmatpush1.bf16.msra.mxu0 %v5705
    %6515 = vmatprep.subr.bf16.mxu0 %v5700
    %6516 = vmatpush1.bf16.msra.mxu0 %v5699
    %6517 = vmatprep.subr.bf16.mxu0 %v5694
    %6518 = vmatpush1.bf16.msra.mxu0 %v5693
    %6519 = vmatprep.subr.bf16.mxu0 %v5688
    %6520 = vmatpush1.bf16.msra.mxu0 %v5687
    %6521 = vmatprep.subr.bf16.mxu0 %v5778
    %6522 = vmatpush2.bf16.msra.mxu0 %v5777
    %6523 = vmatprep.subr.bf16.mxu0 %v5772
    %6524 = vmatpush2.bf16.msra.mxu0 %v5771
    %6525 = vmatprep.subr.bf16.mxu0 %v5766
    %6526 = vmatpush2.bf16.msra.mxu0 %v5765
    %6527 = vmatprep.subr.bf16.mxu0 %v5760
    %6528 = vmatpush2.bf16.msra.mxu0 %v5759
    %6529 = vmatprep.subr.bf16.mxu0 %v5754
    %6530 = vmatpush2.bf16.msra.mxu0 %v5753
    %6531 = vmatprep.subr.bf16.mxu0 %v5748
    %6532 = vmatpush2.bf16.msra.mxu0 %v5747
    %6533 = vmatprep.subr.bf16.mxu0 %v5742
    %6534 = vmatpush2.bf16.msra.mxu0 %v5741
    %6535 = vmatprep.subr.bf16.mxu0 %v5736
    %6536 = vmatpush2.bf16.msra.mxu0 %v5735
    %6537 = vmatprep.mubr.bf16.mxu0 %v4494
    %6538 = vmatmul.mubr.bf16.gmra.mxu0 %v4493
    %v6539 = vpop.f32.mrf.mxu0
    %v6540 = vadd.f32 %v4808, %v6539
    %v6541 = vpop.f32.mrf.mxu0
    %v6542 = vadd.f32 %v4812, %v6541
    %v6543 = vpop.f32.mrf.mxu0
    %v6544 = vpop.f32.mrf.mxu0
    %6545 = vdwg.mxu0
    %6546 = vmatprep.subr.bf16.mxu0 %v5826
    %6547 = vmatpush1.bf16.msra.mxu0 %v5825
    %6548 = vmatprep.subr.bf16.mxu0 %v5820
    %6549 = vmatpush1.bf16.msra.mxu0 %v5819
    %6550 = vmatprep.subr.bf16.mxu0 %v5814
    %6551 = vmatpush1.bf16.msra.mxu0 %v5813
    %6552 = vmatprep.subr.bf16.mxu0 %v5808
    %6553 = vmatpush1.bf16.msra.mxu0 %v5807
    %6554 = vmatprep.subr.bf16.mxu0 %v5802
    %6555 = vmatpush1.bf16.msra.mxu0 %v5801
    %6556 = vmatprep.subr.bf16.mxu0 %v5796
    %6557 = vmatpush1.bf16.msra.mxu0 %v5795
    %6558 = vmatprep.subr.bf16.mxu0 %v5790
    %6559 = vmatpush1.bf16.msra.mxu0 %v5789
    %6560 = vmatprep.subr.bf16.mxu0 %v5784
    %6561 = vmatpush1.bf16.msra.mxu0 %v5783
    %6562 = vmatprep.subr.bf16.mxu0 %v5874
    %6563 = vmatpush2.bf16.msra.mxu0 %v5873
    %6564 = vmatprep.subr.bf16.mxu0 %v5868
    %6565 = vmatpush2.bf16.msra.mxu0 %v5867
    %6566 = vmatprep.subr.bf16.mxu0 %v5862
    %6567 = vmatpush2.bf16.msra.mxu0 %v5861
    %6568 = vmatprep.subr.bf16.mxu0 %v5856
    %6569 = vmatpush2.bf16.msra.mxu0 %v5855
    %6570 = vmatprep.subr.bf16.mxu0 %v5850
    %6571 = vmatpush2.bf16.msra.mxu0 %v5849
    %6572 = vmatprep.subr.bf16.mxu0 %v5844
    %6573 = vmatpush2.bf16.msra.mxu0 %v5843
    %6574 = vmatprep.subr.bf16.mxu0 %v5838
    %6575 = vmatpush2.bf16.msra.mxu0 %v5837
    %6576 = vmatprep.subr.bf16.mxu0 %v5832
    %6577 = vmatpush2.bf16.msra.mxu0 %v5831
    %6578 = vmatprep.mubr.bf16.mxu0 %v4496
    %6579 = vmatmul.mubr.bf16.gmra.mxu0 %v4495
    %v6580 = vpop.f32.mrf.mxu0
    %v6581 = vadd.f32 %v6540, %v6580
    %v6582 = vpop.f32.mrf.mxu0
    %v6583 = vadd.f32 %v6542, %v6582
    %v6584 = vpop.f32.mrf.mxu0
    %v6585 = vpop.f32.mrf.mxu0
    %6586 = vdwg.mxu0
    %6587 = vmatprep.subr.bf16.mxu0 %v5922
    %6588 = vmatpush1.bf16.msra.mxu0 %v5921
    %6589 = vmatprep.subr.bf16.mxu0 %v5916
    %6590 = vmatpush1.bf16.msra.mxu0 %v5915
    %6591 = vmatprep.subr.bf16.mxu0 %v5910
    %6592 = vmatpush1.bf16.msra.mxu0 %v5909
    %6593 = vmatprep.subr.bf16.mxu0 %v5904
    %6594 = vmatpush1.bf16.msra.mxu0 %v5903
    %6595 = vmatprep.subr.bf16.mxu0 %v5898
    %6596 = vmatpush1.bf16.msra.mxu0 %v5897
    %6597 = vmatprep.subr.bf16.mxu0 %v5892
    %6598 = vmatpush1.bf16.msra.mxu0 %v5891
    %6599 = vmatprep.subr.bf16.mxu0 %v5886
    %6600 = vmatpush1.bf16.msra.mxu0 %v5885
    %6601 = vmatprep.subr.bf16.mxu0 %v5880
    %6602 = vmatpush1.bf16.msra.mxu0 %v5879
    %6603 = vmatprep.subr.bf16.mxu0 %v5970
    %6604 = vmatpush2.bf16.msra.mxu0 %v5969
    %6605 = vmatprep.subr.bf16.mxu0 %v5964
    %6606 = vmatpush2.bf16.msra.mxu0 %v5963
    %6607 = vmatprep.subr.bf16.mxu0 %v5958
    %6608 = vmatpush2.bf16.msra.mxu0 %v5957
    %6609 = vmatprep.subr.bf16.mxu0 %v5952
    %6610 = vmatpush2.bf16.msra.mxu0 %v5951
    %6611 = vmatprep.subr.bf16.mxu0 %v5946
    %6612 = vmatpush2.bf16.msra.mxu0 %v5945
    %6613 = vmatprep.subr.bf16.mxu0 %v5940
    %6614 = vmatpush2.bf16.msra.mxu0 %v5939
    %6615 = vmatprep.subr.bf16.mxu0 %v5934
    %6616 = vmatpush2.bf16.msra.mxu0 %v5933
    %6617 = vmatprep.subr.bf16.mxu0 %v5928
    %6618 = vmatpush2.bf16.msra.mxu0 %v5927
    %6619 = vmatprep.mubr.bf16.mxu0 %v4498
    %6620 = vmatmul.mubr.bf16.gmra.mxu0 %v4497
    %v6621 = vpop.f32.mrf.mxu0
    %v6622 = vadd.f32 %v6581, %v6621
    %v6623 = vpop.f32.mrf.mxu0
    %v6624 = vadd.f32 %v6583, %v6623
    %v6625 = vpop.f32.mrf.mxu0
    %v6626 = vpop.f32.mrf.mxu0
    %6627 = vdwg.mxu0
    %v6628 = vtanh.pop %v6376
    %v6629 = vtanh.pop %v6378
    %v6630 = vtanh.pop %v6499
    %v6631 = vtanh.pop %v6501
    %v6632 = vtanh.pop %v6622
    %v6633 = vtanh.pop %v6624
    %v6634 = vpack.c.bf16 %v6628, %v6628
    %v6635 = vpack.c.bf16 %v6629, %v6629
    %v6636 = vpack.c.bf16 %v6630, %v6630
    %v6637 = vpack.c.bf16 %v6631, %v6631
    %v6638 = vpack.c.bf16 %v6632, %v6632
    %v6639 = vpack.c.bf16 %v6633, %v6633
    %v6640 = vld [vmem:[#allocation8] sm:$0xff]
    %v6641 = vld [vmem:[#allocation8 + $0x8] sm:$0xf]
    %v6642 = vld [vmem:[#allocation8 + $0xc] sm:$0xff]
    %v6643 = vld [vmem:[#allocation8 + $0x14] sm:$0xf]
    %v6644 = vld [vmem:[#allocation8 + $0x18] sm:$0xff]
    %v6645 = vld [vmem:[#allocation8 + $0x20] sm:$0xf]
    %v6646 = vld [vmem:[#allocation8 + $0x24] sm:$0xff]
    %v6647 = vld [vmem:[#allocation8 + $0x2c] sm:$0xf]
    %v6648 = vld [vmem:[#allocation8 + $0x30] sm:$0xff]
    %v6649 = vld [vmem:[#allocation8 + $0x38] sm:$0xf]
    %v6650 = vld [vmem:[#allocation8 + $0x3c] sm:$0xff]
    %v6651 = vld [vmem:[#allocation8 + $0x44] sm:$0xf]
    %v6652 = vld [vmem:[#allocation8 + $0x48] sm:$0xff]
    %v6653 = vld [vmem:[#allocation8 + $0x50] sm:$0xf]
    %v6654 = vld [vmem:[#allocation8 + $0x54] sm:$0xff]
    %v6655 = vld [vmem:[#allocation8 + $0x5c] sm:$0xf]
    %v6656 = vld [vmem:[#allocation8 + $0x60] sm:$0xff]
    %v6657 = vld [vmem:[#allocation8 + $0x68] sm:$0xf]
    %v6658 = vld [vmem:[#allocation8 + $0x6c] sm:$0xff]
    %v6659 = vld [vmem:[#allocation8 + $0x74] sm:$0xf]
    %v6660 = vld [vmem:[#allocation8 + $0x78] sm:$0xff]
    %v6661 = vld [vmem:[#allocation8 + $0x80] sm:$0xf]
    %v6662 = vld [vmem:[#allocation8 + $0x84] sm:$0xff]
    %v6663 = vld [vmem:[#allocation8 + $0x8c] sm:$0xf]
    %v6664 = vld [vmem:[#allocation8 + $0x90] sm:$0xff]
    %v6665 = vld [vmem:[#allocation8 + $0x98] sm:$0xf]
    %v6666 = vld [vmem:[#allocation8 + $0x9c] sm:$0xff]
    %v6667 = vld [vmem:[#allocation8 + $0xa4] sm:$0xf]
    %v6668 = vld [vmem:[#allocation8 + $0xa8] sm:$0xff]
    %v6669 = vld [vmem:[#allocation8 + $0xb0] sm:$0xf]
    %v6670 = vld [vmem:[#allocation8 + $0xb4] sm:$0xff]
    %v6671 = vld [vmem:[#allocation8 + $0xbc] sm:$0xf]
    %v6672 = vld [vmem:[#allocation8 + $0xc0] sm:$0xff]
    %v6673 = vld [vmem:[#allocation8 + $0xc8] sm:$0xf]
    %v6674 = vld [vmem:[#allocation8 + $0xcc] sm:$0xff]
    %v6675 = vld [vmem:[#allocation8 + $0xd4] sm:$0xf]
    %v6676 = vld [vmem:[#allocation8 + $0xd8] sm:$0xff]
    %v6677 = vld [vmem:[#allocation8 + $0xe0] sm:$0xf]
    %v6678 = vld [vmem:[#allocation8 + $0xe4] sm:$0xff]
    %v6679 = vld [vmem:[#allocation8 + $0xec] sm:$0xf]
    %v6680 = vld [vmem:[#allocation8 + $0xf0] sm:$0xff]
    %v6681 = vld [vmem:[#allocation8 + $0xf8] sm:$0xf]
    %v6682 = vld [vmem:[#allocation8 + $0xfc] sm:$0xff]
    %v6683 = vld [vmem:[#allocation8 + $0x104] sm:$0xf]
    %v6684 = vld [vmem:[#allocation8 + $0x108] sm:$0xff]
    %v6685 = vld [vmem:[#allocation8 + $0x110] sm:$0xf]
    %v6686 = vld [vmem:[#allocation8 + $0x114] sm:$0xff]
    %v6687 = vld [vmem:[#allocation8 + $0x11c] sm:$0xf]
    %v6688 = vld [vmem:[#allocation8 + $0x120] sm:$0xff]
    %v6689 = vld [vmem:[#allocation8 + $0x128] sm:$0xf]
    %v6690 = vld [vmem:[#allocation8 + $0x12c] sm:$0xff]
    %v6691 = vld [vmem:[#allocation8 + $0x134] sm:$0xf]
    %v6692 = vld [vmem:[#allocation8 + $0x138] sm:$0xff]
    %v6693 = vld [vmem:[#allocation8 + $0x140] sm:$0xf]
    %v6694 = vld [vmem:[#allocation8 + $0x144] sm:$0xff]
    %v6695 = vld [vmem:[#allocation8 + $0x14c] sm:$0xf]
    %v6696 = vld [vmem:[#allocation8 + $0x150] sm:$0xff]
    %v6697 = vld [vmem:[#allocation8 + $0x158] sm:$0xf]
    %v6698 = vld [vmem:[#allocation8 + $0x15c] sm:$0xff]
    %v6699 = vld [vmem:[#allocation8 + $0x164] sm:$0xf]
    %v6700 = vld [vmem:[#allocation8 + $0x168] sm:$0xff]
    %v6701 = vld [vmem:[#allocation8 + $0x170] sm:$0xf]
    %v6702 = vld [vmem:[#allocation8 + $0x174] sm:$0xff]
    %v6703 = vld [vmem:[#allocation8 + $0x17c] sm:$0xf]
    %v6704 = vld [vmem:[#allocation8 + $0x180] sm:$0xff]
    %v6705 = vld [vmem:[#allocation8 + $0x188] sm:$0xf]
    %v6706 = vld [vmem:[#allocation8 + $0x18c] sm:$0xff]
    %v6707 = vld [vmem:[#allocation8 + $0x194] sm:$0xf]
    %v6708 = vld [vmem:[#allocation8 + $0x198] sm:$0xff]
    %v6709 = vld [vmem:[#allocation8 + $0x1a0] sm:$0xf]
    %v6710 = vld [vmem:[#allocation8 + $0x1a4] sm:$0xff]
    %v6711 = vld [vmem:[#allocation8 + $0x1ac] sm:$0xf]
    %v6712 = vld [vmem:[#allocation8 + $0x1b0] sm:$0xff]
    %v6713 = vld [vmem:[#allocation8 + $0x1b8] sm:$0xf]
    %v6714 = vld [vmem:[#allocation8 + $0x1bc] sm:$0xff]
    %v6715 = vld [vmem:[#allocation8 + $0x1c4] sm:$0xf]
    %v6716 = vld [vmem:[#allocation8 + $0x1c8] sm:$0xff]
    %v6717 = vld [vmem:[#allocation8 + $0x1d0] sm:$0xf]
    %v6718 = vld [vmem:[#allocation8 + $0x1d4] sm:$0xff]
    %v6719 = vld [vmem:[#allocation8 + $0x1dc] sm:$0xf]
    %v6720 = vld [vmem:[#allocation8 + $0x1e0] sm:$0xff]
    %v6721 = vld [vmem:[#allocation8 + $0x1e8] sm:$0xf]
    %v6722 = vld [vmem:[#allocation8 + $0x1ec] sm:$0xff]
    %v6723 = vld [vmem:[#allocation8 + $0x1f4] sm:$0xf]
    %v6724 = vld [vmem:[#allocation8 + $0x1f8] sm:$0xff]
    %v6725 = vld [vmem:[#allocation8 + $0x200] sm:$0xf]
    %v6726 = vld [vmem:[#allocation8 + $0x204] sm:$0xff]
    %v6727 = vld [vmem:[#allocation8 + $0x20c] sm:$0xf]
    %v6728 = vld [vmem:[#allocation8 + $0x210] sm:$0xff]
    %v6729 = vld [vmem:[#allocation8 + $0x218] sm:$0xf]
    %v6730 = vld [vmem:[#allocation8 + $0x21c] sm:$0xff]
    %v6731 = vld [vmem:[#allocation8 + $0x224] sm:$0xf]
    %v6732 = vld [vmem:[#allocation8 + $0x228] sm:$0xff]
    %v6733 = vld [vmem:[#allocation8 + $0x230] sm:$0xf]
    %v6734 = vld [vmem:[#allocation8 + $0x234] sm:$0xff]
    %v6735 = vld [vmem:[#allocation8 + $0x23c] sm:$0xf]
    %v6736 = vld [vmem:[#allocation8 + $0x240] sm:$0xff]
    %v6737 = vld [vmem:[#allocation8 + $0x248] sm:$0xf]
    %v6738 = vld [vmem:[#allocation8 + $0x24c] sm:$0xff]
    %v6739 = vld [vmem:[#allocation8 + $0x254] sm:$0xf]
    %v6740 = vld [vmem:[#allocation8 + $0x258] sm:$0xff]
    %v6741 = vld [vmem:[#allocation8 + $0x260] sm:$0xf]
    %v6742 = vld [vmem:[#allocation8 + $0x264] sm:$0xff]
    %v6743 = vld [vmem:[#allocation8 + $0x26c] sm:$0xf]
    %v6744 = vld [vmem:[#allocation8 + $0x270] sm:$0xff]
    %v6745 = vld [vmem:[#allocation8 + $0x278] sm:$0xf]
    %v6746 = vld [vmem:[#allocation8 + $0x27c] sm:$0xff]
    %v6747 = vld [vmem:[#allocation8 + $0x284] sm:$0xf]
    %v6748 = vld [vmem:[#allocation8 + $0x288] sm:$0xff]
    %v6749 = vld [vmem:[#allocation8 + $0x290] sm:$0xf]
    %v6750 = vld [vmem:[#allocation8 + $0x294] sm:$0xff]
    %v6751 = vld [vmem:[#allocation8 + $0x29c] sm:$0xf]
    %v6752 = vld [vmem:[#allocation8 + $0x2a0] sm:$0xff]
    %v6753 = vld [vmem:[#allocation8 + $0x2a8] sm:$0xf]
    %v6754 = vld [vmem:[#allocation8 + $0x2ac] sm:$0xff]
    %v6755 = vld [vmem:[#allocation8 + $0x2b4] sm:$0xf]
    %v6756 = vld [vmem:[#allocation8 + $0x2b8] sm:$0xff]
    %v6757 = vld [vmem:[#allocation8 + $0x2c0] sm:$0xf]
    %v6758 = vld [vmem:[#allocation8 + $0x2c4] sm:$0xff]
    %v6759 = vld [vmem:[#allocation8 + $0x2cc] sm:$0xf]
    %v6760 = vld [vmem:[#allocation8 + $0x2d0] sm:$0xff]
    %v6761 = vld [vmem:[#allocation8 + $0x2d8] sm:$0xf]
    %v6762 = vld [vmem:[#allocation8 + $0x2dc] sm:$0xff]
    %v6763 = vld [vmem:[#allocation8 + $0x2e4] sm:$0xf]
    %v6764 = vld [vmem:[#allocation8 + $0x2e8] sm:$0xff]
    %v6765 = vld [vmem:[#allocation8 + $0x2f0] sm:$0xf]
    %v6766 = vld [vmem:[#allocation8 + $0x2f4] sm:$0xff]
    %v6767 = vld [vmem:[#allocation8 + $0x2fc] sm:$0xf]
    %v6768 = vld [vmem:[#allocation8 + $0x300] sm:$0xff]
    %v6769 = vld [vmem:[#allocation8 + $0x308] sm:$0xf]
    %v6770 = vld [vmem:[#allocation8 + $0x30c] sm:$0xff]
    %v6771 = vld [vmem:[#allocation8 + $0x314] sm:$0xf]
    %v6772 = vld [vmem:[#allocation8 + $0x318] sm:$0xff]
    %v6773 = vld [vmem:[#allocation8 + $0x320] sm:$0xf]
    %v6774 = vld [vmem:[#allocation8 + $0x324] sm:$0xff]
    %v6775 = vld [vmem:[#allocation8 + $0x32c] sm:$0xf]
    %v6776 = vld [vmem:[#allocation8 + $0x330] sm:$0xff]
    %v6777 = vld [vmem:[#allocation8 + $0x338] sm:$0xf]
    %v6778 = vld [vmem:[#allocation8 + $0x33c] sm:$0xff]
    %v6779 = vld [vmem:[#allocation8 + $0x344] sm:$0xf]
    %v6780 = vld [vmem:[#allocation8 + $0x348] sm:$0xff]
    %v6781 = vld [vmem:[#allocation8 + $0x350] sm:$0xf]
    %v6782 = vld [vmem:[#allocation8 + $0x354] sm:$0xff]
    %v6783 = vld [vmem:[#allocation8 + $0x35c] sm:$0xf]
    %v6784 = vld [vmem:[#allocation8 + $0x360] sm:$0xff]
    %v6785 = vld [vmem:[#allocation8 + $0x368] sm:$0xf]
    %v6786 = vld [vmem:[#allocation8 + $0x36c] sm:$0xff]
    %v6787 = vld [vmem:[#allocation8 + $0x374] sm:$0xf]
    %v6788 = vld [vmem:[#allocation8 + $0x378] sm:$0xff]
    %v6789 = vld [vmem:[#allocation8 + $0x380] sm:$0xf]
    %v6790 = vld [vmem:[#allocation8 + $0x384] sm:$0xff]
    %v6791 = vld [vmem:[#allocation8 + $0x38c] sm:$0xf]
    %v6792 = vld [vmem:[#allocation8 + $0x390] sm:$0xff]
    %v6793 = vld [vmem:[#allocation8 + $0x398] sm:$0xf]
    %v6794 = vld [vmem:[#allocation8 + $0x39c] sm:$0xff]
    %v6795 = vld [vmem:[#allocation8 + $0x3a4] sm:$0xf]
    %v6796 = vld [vmem:[#allocation8 + $0x3a8] sm:$0xff]
    %v6797 = vld [vmem:[#allocation8 + $0x3b0] sm:$0xf]
    %v6798 = vld [vmem:[#allocation8 + $0x3b4] sm:$0xff]
    %v6799 = vld [vmem:[#allocation8 + $0x3bc] sm:$0xf]
    %v6800 = vld [vmem:[#allocation8 + $0x3c0] sm:$0xff]
    %v6801 = vld [vmem:[#allocation8 + $0x3c8] sm:$0xf]
    %v6802 = vld [vmem:[#allocation8 + $0x3cc] sm:$0xff]
    %v6803 = vld [vmem:[#allocation8 + $0x3d4] sm:$0xf]
    %v6804 = vld [vmem:[#allocation8 + $0x3d8] sm:$0xff]
    %v6805 = vld [vmem:[#allocation8 + $0x3e0] sm:$0xf]
    %v6806 = vld [vmem:[#allocation8 + $0x3e4] sm:$0xff]
    %v6807 = vld [vmem:[#allocation8 + $0x3ec] sm:$0xf]
    %v6808 = vld [vmem:[#allocation8 + $0x3f0] sm:$0xff]
    %v6809 = vld [vmem:[#allocation8 + $0x3f8] sm:$0xf]
    %v6810 = vld [vmem:[#allocation8 + $0x3fc] sm:$0xff]
    %v6811 = vld [vmem:[#allocation8 + $0x404] sm:$0xf]
    %v6812 = vld [vmem:[#allocation8 + $0x408] sm:$0xff]
    %v6813 = vld [vmem:[#allocation8 + $0x410] sm:$0xf]
    %v6814 = vld [vmem:[#allocation8 + $0x414] sm:$0xff]
    %v6815 = vld [vmem:[#allocation8 + $0x41c] sm:$0xf]
    %v6816 = vld [vmem:[#allocation8 + $0x420] sm:$0xff]
    %v6817 = vld [vmem:[#allocation8 + $0x428] sm:$0xf]
    %v6818 = vld [vmem:[#allocation8 + $0x42c] sm:$0xff]
    %v6819 = vld [vmem:[#allocation8 + $0x434] sm:$0xf]
    %v6820 = vld [vmem:[#allocation8 + $0x438] sm:$0xff]
    %v6821 = vld [vmem:[#allocation8 + $0x440] sm:$0xf]
    %v6822 = vld [vmem:[#allocation8 + $0x444] sm:$0xff]
    %v6823 = vld [vmem:[#allocation8 + $0x44c] sm:$0xf]
    %v6824 = vld [vmem:[#allocation8 + $0x450] sm:$0xff]
    %v6825 = vld [vmem:[#allocation8 + $0x458] sm:$0xf]
    %v6826 = vld [vmem:[#allocation8 + $0x45c] sm:$0xff]
    %v6827 = vld [vmem:[#allocation8 + $0x464] sm:$0xf]
    %v6828 = vld [vmem:[#allocation8 + $0x468] sm:$0xff]
    %v6829 = vld [vmem:[#allocation8 + $0x470] sm:$0xf]
    %v6830 = vld [vmem:[#allocation8 + $0x474] sm:$0xff]
    %v6831 = vld [vmem:[#allocation8 + $0x47c] sm:$0xf]
    %v6832 = vld [vmem:[#allocation10] sm:$0x7]
    %v6834 = vlaneseq
    %v6835 = vshrl.u32 %v6834, 7
    %v6836 = vsub.s32 0, %v6835
    %v6837 = vrot.slane %v6832, %v6836
    %v6838 = vlaneseq
    %v6839 = vshrl.u32 %v6838, 7
    %v6840 = vsub.s32 1, %v6839
    %v6841 = vrot.slane %v6832, %v6840
    %v6842 = vlaneseq
    %v6843 = vshrl.u32 %v6842, 7
    %v6844 = vsub.s32 2, %v6843
    %v6845 = vrot.slane %v6832, %v6844
    %v7041 = vunpack.c.l.b16 %v6640
    %v7042 = vunpack.c.h.b16 %v6640
    %v7043 = vunpack.c.l.b16 %v6641
    %v7044 = vunpack.c.l.b16 %v6642
    %v7045 = vunpack.c.h.b16 %v6642
    %v7046 = vunpack.c.l.b16 %v6643
    %v7047 = vunpack.c.l.b16 %v6644
    %v7048 = vunpack.c.h.b16 %v6644
    %v7049 = vunpack.c.l.b16 %v6645
    %v7050 = vunpack.c.l.b16 %v6646
    %v7051 = vunpack.c.h.b16 %v6646
    %v7052 = vunpack.c.l.b16 %v6647
    %v7053 = vunpack.c.l.b16 %v6648
    %v7054 = vunpack.c.h.b16 %v6648
    %v7055 = vunpack.c.l.b16 %v6649
    %v7056 = vunpack.c.l.b16 %v6650
    %v7057 = vunpack.c.h.b16 %v6650
    %v7058 = vunpack.c.l.b16 %v6651
    %v7059 = vunpack.c.l.b16 %v6652
    %v7060 = vunpack.c.h.b16 %v6652
    %v7061 = vunpack.c.l.b16 %v6653
    %v7062 = vunpack.c.l.b16 %v6654
    %v7063 = vunpack.c.h.b16 %v6654
    %v7064 = vunpack.c.l.b16 %v6655
    %v7065 = vunpack.c.l.b16 %v6656
    %v7066 = vunpack.c.h.b16 %v6656
    %v7067 = vunpack.c.l.b16 %v6657
    %v7068 = vunpack.c.l.b16 %v6658
    %v7069 = vunpack.c.h.b16 %v6658
    %v7070 = vunpack.c.l.b16 %v6659
    %v7071 = vunpack.c.l.b16 %v6660
    %v7072 = vunpack.c.h.b16 %v6660
    %v7073 = vunpack.c.l.b16 %v6661
    %v7074 = vunpack.c.l.b16 %v6662
    %v7075 = vunpack.c.h.b16 %v6662
    %v7076 = vunpack.c.l.b16 %v6663
    %v7077 = vunpack.c.l.b16 %v6664
    %v7078 = vunpack.c.h.b16 %v6664
    %v7079 = vunpack.c.l.b16 %v6665
    %v7080 = vunpack.c.l.b16 %v6666
    %v7081 = vunpack.c.h.b16 %v6666
    %v7082 = vunpack.c.l.b16 %v6667
    %v7083 = vunpack.c.l.b16 %v6668
    %v7084 = vunpack.c.h.b16 %v6668
    %v7085 = vunpack.c.l.b16 %v6669
    %v7086 = vunpack.c.l.b16 %v6670
    %v7087 = vunpack.c.h.b16 %v6670
    %v7088 = vunpack.c.l.b16 %v6671
    %v7089 = vunpack.c.l.b16 %v6672
    %v7090 = vunpack.c.h.b16 %v6672
    %v7091 = vunpack.c.l.b16 %v6673
    %v7092 = vunpack.c.l.b16 %v6674
    %v7093 = vunpack.c.h.b16 %v6674
    %v7094 = vunpack.c.l.b16 %v6675
    %v7095 = vunpack.c.l.b16 %v6676
    %v7096 = vunpack.c.h.b16 %v6676
    %v7097 = vunpack.c.l.b16 %v6677
    %v7098 = vunpack.c.l.b16 %v6678
    %v7099 = vunpack.c.h.b16 %v6678
    %v7100 = vunpack.c.l.b16 %v6679
    %v7101 = vunpack.c.l.b16 %v6680
    %v7102 = vunpack.c.h.b16 %v6680
    %v7103 = vunpack.c.l.b16 %v6681
    %v7104 = vunpack.c.l.b16 %v6682
    %v7105 = vunpack.c.h.b16 %v6682
    %v7106 = vunpack.c.l.b16 %v6683
    %v7107 = vunpack.c.l.b16 %v6684
    %v7108 = vunpack.c.h.b16 %v6684
    %v7109 = vunpack.c.l.b16 %v6685
    %v7110 = vunpack.c.l.b16 %v6686
    %v7111 = vunpack.c.h.b16 %v6686
    %v7112 = vunpack.c.l.b16 %v6687
    %v7113 = vunpack.c.l.b16 %v6688
    %v7114 = vunpack.c.h.b16 %v6688
    %v7115 = vunpack.c.l.b16 %v6689
    %v7116 = vunpack.c.l.b16 %v6690
    %v7117 = vunpack.c.h.b16 %v6690
    %v7118 = vunpack.c.l.b16 %v6691
    %v7119 = vunpack.c.l.b16 %v6692
    %v7120 = vunpack.c.h.b16 %v6692
    %v7121 = vunpack.c.l.b16 %v6693
    %v7122 = vunpack.c.l.b16 %v6694
    %v7123 = vunpack.c.h.b16 %v6694
    %v7124 = vunpack.c.l.b16 %v6695
    %v7125 = vunpack.c.l.b16 %v6696
    %v7126 = vunpack.c.h.b16 %v6696
    %v7127 = vunpack.c.l.b16 %v6697
    %v7128 = vunpack.c.l.b16 %v6698
    %v7129 = vunpack.c.h.b16 %v6698
    %v7130 = vunpack.c.l.b16 %v6699
    %v7131 = vunpack.c.l.b16 %v6700
    %v7132 = vunpack.c.h.b16 %v6700
    %v7133 = vunpack.c.l.b16 %v6701
    %v7134 = vunpack.c.l.b16 %v6702
    %v7135 = vunpack.c.h.b16 %v6702
    %v7136 = vunpack.c.l.b16 %v6703
    %v7137 = vunpack.c.l.b16 %v6704
    %v7138 = vunpack.c.h.b16 %v6704
    %v7139 = vunpack.c.l.b16 %v6705
    %v7140 = vunpack.c.l.b16 %v6706
    %v7141 = vunpack.c.h.b16 %v6706
    %v7142 = vunpack.c.l.b16 %v6707
    %v7143 = vunpack.c.l.b16 %v6708
    %v7144 = vunpack.c.h.b16 %v6708
    %v7145 = vunpack.c.l.b16 %v6709
    %v7146 = vunpack.c.l.b16 %v6710
    %v7147 = vunpack.c.h.b16 %v6710
    %v7148 = vunpack.c.l.b16 %v6711
    %v7149 = vunpack.c.l.b16 %v6712
    %v7150 = vunpack.c.h.b16 %v6712
    %v7151 = vunpack.c.l.b16 %v6713
    %v7152 = vunpack.c.l.b16 %v6714
    %v7153 = vunpack.c.h.b16 %v6714
    %v7154 = vunpack.c.l.b16 %v6715
    %v7155 = vunpack.c.l.b16 %v6716
    %v7156 = vunpack.c.h.b16 %v6716
    %v7157 = vunpack.c.l.b16 %v6717
    %v7158 = vunpack.c.l.b16 %v6718
    %v7159 = vunpack.c.h.b16 %v6718
    %v7160 = vunpack.c.l.b16 %v6719
    %v7161 = vunpack.c.l.b16 %v6720
    %v7162 = vunpack.c.h.b16 %v6720
    %v7163 = vunpack.c.l.b16 %v6721
    %v7164 = vunpack.c.l.b16 %v6722
    %v7165 = vunpack.c.h.b16 %v6722
    %v7166 = vunpack.c.l.b16 %v6723
    %v7167 = vunpack.c.l.b16 %v6724
    %v7168 = vunpack.c.h.b16 %v6724
    %v7169 = vunpack.c.l.b16 %v6725
    %v7170 = vunpack.c.l.b16 %v6726
    %v7171 = vunpack.c.h.b16 %v6726
    %v7172 = vunpack.c.l.b16 %v6727
    %v7173 = vunpack.c.l.b16 %v6728
    %v7174 = vunpack.c.h.b16 %v6728
    %v7175 = vunpack.c.l.b16 %v6729
    %v7176 = vunpack.c.l.b16 %v6730
    %v7177 = vunpack.c.h.b16 %v6730
    %v7178 = vunpack.c.l.b16 %v6731
    %v7179 = vunpack.c.l.b16 %v6732
    %v7180 = vunpack.c.h.b16 %v6732
    %v7181 = vunpack.c.l.b16 %v6733
    %v7182 = vunpack.c.l.b16 %v6734
    %v7183 = vunpack.c.h.b16 %v6734
    %v7184 = vunpack.c.l.b16 %v6735
    %v7185 = vunpack.c.l.b16 %v6736
    %v7186 = vunpack.c.h.b16 %v6736
    %v7187 = vunpack.c.l.b16 %v6737
    %v7188 = vunpack.c.l.b16 %v6738
    %v7189 = vunpack.c.h.b16 %v6738
    %v7190 = vunpack.c.l.b16 %v6739
    %v7191 = vunpack.c.l.b16 %v6740
    %v7192 = vunpack.c.h.b16 %v6740
    %v7193 = vunpack.c.l.b16 %v6741
    %v7194 = vunpack.c.l.b16 %v6742
    %v7195 = vunpack.c.h.b16 %v6742
    %v7196 = vunpack.c.l.b16 %v6743
    %v7197 = vunpack.c.l.b16 %v6744
    %v7198 = vunpack.c.h.b16 %v6744
    %v7199 = vunpack.c.l.b16 %v6745
    %v7200 = vunpack.c.l.b16 %v6746
    %v7201 = vunpack.c.h.b16 %v6746
    %v7202 = vunpack.c.l.b16 %v6747
    %v7203 = vunpack.c.l.b16 %v6748
    %v7204 = vunpack.c.h.b16 %v6748
    %v7205 = vunpack.c.l.b16 %v6749
    %v7206 = vunpack.c.l.b16 %v6750
    %v7207 = vunpack.c.h.b16 %v6750
    %v7208 = vunpack.c.l.b16 %v6751
    %v7209 = vunpack.c.l.b16 %v6752
    %v7210 = vunpack.c.h.b16 %v6752
    %v7211 = vunpack.c.l.b16 %v6753
    %v7212 = vunpack.c.l.b16 %v6754
    %v7213 = vunpack.c.h.b16 %v6754
    %v7214 = vunpack.c.l.b16 %v6755
    %v7215 = vunpack.c.l.b16 %v6756
    %v7216 = vunpack.c.h.b16 %v6756
    %v7217 = vunpack.c.l.b16 %v6757
    %v7218 = vunpack.c.l.b16 %v6758
    %v7219 = vunpack.c.h.b16 %v6758
    %v7220 = vunpack.c.l.b16 %v6759
    %v7221 = vunpack.c.l.b16 %v6760
    %v7222 = vunpack.c.h.b16 %v6760
    %v7223 = vunpack.c.l.b16 %v6761
    %v7224 = vunpack.c.l.b16 %v6762
    %v7225 = vunpack.c.h.b16 %v6762
    %v7226 = vunpack.c.l.b16 %v6763
    %v7227 = vunpack.c.l.b16 %v6764
    %v7228 = vunpack.c.h.b16 %v6764
    %v7229 = vunpack.c.l.b16 %v6765
    %v7230 = vunpack.c.l.b16 %v6766
    %v7231 = vunpack.c.h.b16 %v6766
    %v7232 = vunpack.c.l.b16 %v6767
    %v7233 = vunpack.c.l.b16 %v6768
    %v7234 = vunpack.c.h.b16 %v6768
    %v7235 = vunpack.c.l.b16 %v6769
    %v7236 = vunpack.c.l.b16 %v6770
    %v7237 = vunpack.c.h.b16 %v6770
    %v7238 = vunpack.c.l.b16 %v6771
    %v7239 = vunpack.c.l.b16 %v6772
    %v7240 = vunpack.c.h.b16 %v6772
    %v7241 = vunpack.c.l.b16 %v6773
    %v7242 = vunpack.c.l.b16 %v6774
    %v7243 = vunpack.c.h.b16 %v6774
    %v7244 = vunpack.c.l.b16 %v6775
    %v7245 = vunpack.c.l.b16 %v6776
    %v7246 = vunpack.c.h.b16 %v6776
    %v7247 = vunpack.c.l.b16 %v6777
    %v7248 = vunpack.c.l.b16 %v6778
    %v7249 = vunpack.c.h.b16 %v6778
    %v7250 = vunpack.c.l.b16 %v6779
    %v7251 = vunpack.c.l.b16 %v6780
    %v7252 = vunpack.c.h.b16 %v6780
    %v7253 = vunpack.c.l.b16 %v6781
    %v7254 = vunpack.c.l.b16 %v6782
    %v7255 = vunpack.c.h.b16 %v6782
    %v7256 = vunpack.c.l.b16 %v6783
    %v7257 = vunpack.c.l.b16 %v6784
    %v7258 = vunpack.c.h.b16 %v6784
    %v7259 = vunpack.c.l.b16 %v6785
    %v7260 = vunpack.c.l.b16 %v6786
    %v7261 = vunpack.c.h.b16 %v6786
    %v7262 = vunpack.c.l.b16 %v6787
    %v7263 = vunpack.c.l.b16 %v6788
    %v7264 = vunpack.c.h.b16 %v6788
    %v7265 = vunpack.c.l.b16 %v6789
    %v7266 = vunpack.c.l.b16 %v6790
    %v7267 = vunpack.c.h.b16 %v6790
    %v7268 = vunpack.c.l.b16 %v6791
    %v7269 = vunpack.c.l.b16 %v6792
    %v7270 = vunpack.c.h.b16 %v6792
    %v7271 = vunpack.c.l.b16 %v6793
    %v7272 = vunpack.c.l.b16 %v6794
    %v7273 = vunpack.c.h.b16 %v6794
    %v7274 = vunpack.c.l.b16 %v6795
    %v7275 = vunpack.c.l.b16 %v6796
    %v7276 = vunpack.c.h.b16 %v6796
    %v7277 = vunpack.c.l.b16 %v6797
    %v7278 = vunpack.c.l.b16 %v6798
    %v7279 = vunpack.c.h.b16 %v6798
    %v7280 = vunpack.c.l.b16 %v6799
    %v7281 = vunpack.c.l.b16 %v6800
    %v7282 = vunpack.c.h.b16 %v6800
    %v7283 = vunpack.c.l.b16 %v6801
    %v7284 = vunpack.c.l.b16 %v6802
    %v7285 = vunpack.c.h.b16 %v6802
    %v7286 = vunpack.c.l.b16 %v6803
    %v7287 = vunpack.c.l.b16 %v6804
    %v7288 = vunpack.c.h.b16 %v6804
    %v7289 = vunpack.c.l.b16 %v6805
    %v7290 = vunpack.c.l.b16 %v6806
    %v7291 = vunpack.c.h.b16 %v6806
    %v7292 = vunpack.c.l.b16 %v6807
    %v7293 = vunpack.c.l.b16 %v6808
    %v7294 = vunpack.c.h.b16 %v6808
    %v7295 = vunpack.c.l.b16 %v6809
    %v7296 = vunpack.c.l.b16 %v6810
    %v7297 = vunpack.c.h.b16 %v6810
    %v7298 = vunpack.c.l.b16 %v6811
    %v7299 = vunpack.c.l.b16 %v6812
    %v7300 = vunpack.c.h.b16 %v6812
    %v7301 = vunpack.c.l.b16 %v6813
    %v7302 = vunpack.c.l.b16 %v6814
    %v7303 = vunpack.c.h.b16 %v6814
    %v7304 = vunpack.c.l.b16 %v6815
    %v7305 = vunpack.c.l.b16 %v6816
    %v7306 = vunpack.c.h.b16 %v6816
    %v7307 = vunpack.c.l.b16 %v6817
    %v7308 = vunpack.c.l.b16 %v6818
    %v7309 = vunpack.c.h.b16 %v6818
    %v7310 = vunpack.c.l.b16 %v6819
    %v7311 = vunpack.c.l.b16 %v6820
    %v7312 = vunpack.c.h.b16 %v6820
    %v7313 = vunpack.c.l.b16 %v6821
    %v7314 = vunpack.c.l.b16 %v6822
    %v7315 = vunpack.c.h.b16 %v6822
    %v7316 = vunpack.c.l.b16 %v6823
    %v7317 = vunpack.c.l.b16 %v6824
    %v7318 = vunpack.c.h.b16 %v6824
    %v7319 = vunpack.c.l.b16 %v6825
    %v7320 = vunpack.c.l.b16 %v6826
    %v7321 = vunpack.c.h.b16 %v6826
    %v7322 = vunpack.c.l.b16 %v6827
    %v7323 = vunpack.c.l.b16 %v6828
    %v7324 = vunpack.c.h.b16 %v6828
    %v7325 = vunpack.c.l.b16 %v6829
    %v7326 = vunpack.c.l.b16 %v6830
    %v7327 = vunpack.c.h.b16 %v6830
    %v7328 = vunpack.c.l.b16 %v6831
    %v7329 = vpack.c.b16 %v7044, %v7041
    %v7330 = vpack.c.b16 %v7045, %v7042
    %v7331 = vpack.c.b16 %v7046, %v7043
    %v7332 = vpack.c.b16 %v7050, %v7047
    %v7333 = vpack.c.b16 %v7051, %v7048
    %v7334 = vpack.c.b16 %v7052, %v7049
    %v7335 = vpack.c.b16 %v7056, %v7053
    %v7336 = vpack.c.b16 %v7057, %v7054
    %v7337 = vpack.c.b16 %v7058, %v7055
    %v7338 = vpack.c.b16 %v7062, %v7059
    %v7339 = vpack.c.b16 %v7063, %v7060
    %v7340 = vpack.c.b16 %v7064, %v7061
    %v7341 = vpack.c.b16 %v7068, %v7065
    %v7342 = vpack.c.b16 %v7069, %v7066
    %v7343 = vpack.c.b16 %v7070, %v7067
    %v7344 = vpack.c.b16 %v7074, %v7071
    %v7345 = vpack.c.b16 %v7075, %v7072
    %v7346 = vpack.c.b16 %v7076, %v7073
    %v7347 = vpack.c.b16 %v7080, %v7077
    %v7348 = vpack.c.b16 %v7081, %v7078
    %v7349 = vpack.c.b16 %v7082, %v7079
    %v7350 = vpack.c.b16 %v7086, %v7083
    %v7351 = vpack.c.b16 %v7087, %v7084
    %v7352 = vpack.c.b16 %v7088, %v7085
    %v7353 = vpack.c.b16 %v7092, %v7089
    %v7354 = vpack.c.b16 %v7093, %v7090
    %v7355 = vpack.c.b16 %v7094, %v7091
    %v7356 = vpack.c.b16 %v7098, %v7095
    %v7357 = vpack.c.b16 %v7099, %v7096
    %v7358 = vpack.c.b16 %v7100, %v7097
    %v7359 = vpack.c.b16 %v7104, %v7101
    %v7360 = vpack.c.b16 %v7105, %v7102
    %v7361 = vpack.c.b16 %v7106, %v7103
    %v7362 = vpack.c.b16 %v7110, %v7107
    %v7363 = vpack.c.b16 %v7111, %v7108
    %v7364 = vpack.c.b16 %v7112, %v7109
    %v7365 = vpack.c.b16 %v7116, %v7113
    %v7366 = vpack.c.b16 %v7117, %v7114
    %v7367 = vpack.c.b16 %v7118, %v7115
    %v7368 = vpack.c.b16 %v7122, %v7119
    %v7369 = vpack.c.b16 %v7123, %v7120
    %v7370 = vpack.c.b16 %v7124, %v7121
    %v7371 = vpack.c.b16 %v7128, %v7125
    %v7372 = vpack.c.b16 %v7129, %v7126
    %v7373 = vpack.c.b16 %v7130, %v7127
    %v7374 = vpack.c.b16 %v7134, %v7131
    %v7375 = vpack.c.b16 %v7135, %v7132
    %v7376 = vpack.c.b16 %v7136, %v7133
    %v7377 = vpack.c.b16 %v7140, %v7137
    %v7378 = vpack.c.b16 %v7141, %v7138
    %v7379 = vpack.c.b16 %v7142, %v7139
    %v7380 = vpack.c.b16 %v7146, %v7143
    %v7381 = vpack.c.b16 %v7147, %v7144
    %v7382 = vpack.c.b16 %v7148, %v7145
    %v7383 = vpack.c.b16 %v7152, %v7149
    %v7384 = vpack.c.b16 %v7153, %v7150
    %v7385 = vpack.c.b16 %v7154, %v7151
    %v7386 = vpack.c.b16 %v7158, %v7155
    %v7387 = vpack.c.b16 %v7159, %v7156
    %v7388 = vpack.c.b16 %v7160, %v7157
    %v7389 = vpack.c.b16 %v7164, %v7161
    %v7390 = vpack.c.b16 %v7165, %v7162
    %v7391 = vpack.c.b16 %v7166, %v7163
    %v7392 = vpack.c.b16 %v7170, %v7167
    %v7393 = vpack.c.b16 %v7171, %v7168
    %v7394 = vpack.c.b16 %v7172, %v7169
    %v7395 = vpack.c.b16 %v7176, %v7173
    %v7396 = vpack.c.b16 %v7177, %v7174
    %v7397 = vpack.c.b16 %v7178, %v7175
    %v7398 = vpack.c.b16 %v7182, %v7179
    %v7399 = vpack.c.b16 %v7183, %v7180
    %v7400 = vpack.c.b16 %v7184, %v7181
    %v7401 = vpack.c.b16 %v7188, %v7185
    %v7402 = vpack.c.b16 %v7189, %v7186
    %v7403 = vpack.c.b16 %v7190, %v7187
    %v7404 = vpack.c.b16 %v7194, %v7191
    %v7405 = vpack.c.b16 %v7195, %v7192
    %v7406 = vpack.c.b16 %v7196, %v7193
    %v7407 = vpack.c.b16 %v7200, %v7197
    %v7408 = vpack.c.b16 %v7201, %v7198
    %v7409 = vpack.c.b16 %v7202, %v7199
    %v7410 = vpack.c.b16 %v7206, %v7203
    %v7411 = vpack.c.b16 %v7207, %v7204
    %v7412 = vpack.c.b16 %v7208, %v7205
    %v7413 = vpack.c.b16 %v7212, %v7209
    %v7414 = vpack.c.b16 %v7213, %v7210
    %v7415 = vpack.c.b16 %v7214, %v7211
    %v7416 = vpack.c.b16 %v7218, %v7215
    %v7417 = vpack.c.b16 %v7219, %v7216
    %v7418 = vpack.c.b16 %v7220, %v7217
    %v7419 = vpack.c.b16 %v7224, %v7221
    %v7420 = vpack.c.b16 %v7225, %v7222
    %v7421 = vpack.c.b16 %v7226, %v7223
    %v7422 = vpack.c.b16 %v7230, %v7227
    %v7423 = vpack.c.b16 %v7231, %v7228
    %v7424 = vpack.c.b16 %v7232, %v7229
    %v7425 = vpack.c.b16 %v7236, %v7233
    %v7426 = vpack.c.b16 %v7237, %v7234
    %v7427 = vpack.c.b16 %v7238, %v7235
    %v7428 = vpack.c.b16 %v7242, %v7239
    %v7429 = vpack.c.b16 %v7243, %v7240
    %v7430 = vpack.c.b16 %v7244, %v7241
    %v7431 = vpack.c.b16 %v7248, %v7245
    %v7432 = vpack.c.b16 %v7249, %v7246
    %v7433 = vpack.c.b16 %v7250, %v7247
    %v7434 = vpack.c.b16 %v7254, %v7251
    %v7435 = vpack.c.b16 %v7255, %v7252
    %v7436 = vpack.c.b16 %v7256, %v7253
    %v7437 = vpack.c.b16 %v7260, %v7257
    %v7438 = vpack.c.b16 %v7261, %v7258
    %v7439 = vpack.c.b16 %v7262, %v7259
    %v7440 = vpack.c.b16 %v7266, %v7263
    %v7441 = vpack.c.b16 %v7267, %v7264
    %v7442 = vpack.c.b16 %v7268, %v7265
    %v7443 = vpack.c.b16 %v7272, %v7269
    %v7444 = vpack.c.b16 %v7273, %v7270
    %v7445 = vpack.c.b16 %v7274, %v7271
    %v7446 = vpack.c.b16 %v7278, %v7275
    %v7447 = vpack.c.b16 %v7279, %v7276
    %v7448 = vpack.c.b16 %v7280, %v7277
    %v7449 = vpack.c.b16 %v7284, %v7281
    %v7450 = vpack.c.b16 %v7285, %v7282
    %v7451 = vpack.c.b16 %v7286, %v7283
    %v7452 = vpack.c.b16 %v7290, %v7287
    %v7453 = vpack.c.b16 %v7291, %v7288
    %v7454 = vpack.c.b16 %v7292, %v7289
    %v7455 = vpack.c.b16 %v7296, %v7293
    %v7456 = vpack.c.b16 %v7297, %v7294
    %v7457 = vpack.c.b16 %v7298, %v7295
    %v7458 = vpack.c.b16 %v7302, %v7299
    %v7459 = vpack.c.b16 %v7303, %v7300
    %v7460 = vpack.c.b16 %v7304, %v7301
    %v7461 = vpack.c.b16 %v7308, %v7305
    %v7462 = vpack.c.b16 %v7309, %v7306
    %v7463 = vpack.c.b16 %v7310, %v7307
    %v7464 = vpack.c.b16 %v7314, %v7311
    %v7465 = vpack.c.b16 %v7315, %v7312
    %v7466 = vpack.c.b16 %v7316, %v7313
    %v7467 = vpack.c.b16 %v7320, %v7317
    %v7468 = vpack.c.b16 %v7321, %v7318
    %v7469 = vpack.c.b16 %v7322, %v7319
    %v7470 = vpack.c.b16 %v7326, %v7323
    %v7471 = vpack.c.b16 %v7327, %v7324
    %v7472 = vpack.c.b16 %v7328, %v7325
    %7617 = vmatprep.subr.bf16.mxu0 %v7351
    %7618 = vmatpush1.bf16.msra.mxu0 %v7350
    %7619 = vmatprep.subr.bf16.mxu0 %v7348
    %7620 = vmatpush1.bf16.msra.mxu0 %v7347
    %7621 = vmatprep.subr.bf16.mxu0 %v7345
    %7622 = vmatpush1.bf16.msra.mxu0 %v7344
    %7623 = vmatprep.subr.bf16.mxu0 %v7342
    %7624 = vmatpush1.bf16.msra.mxu0 %v7341
    %7625 = vmatprep.subr.bf16.mxu0 %v7339
    %7626 = vmatpush1.bf16.msra.mxu0 %v7338
    %7627 = vmatprep.subr.bf16.mxu0 %v7336
    %7628 = vmatpush1.bf16.msra.mxu0 %v7335
    %7629 = vmatprep.subr.bf16.mxu0 %v7333
    %7630 = vmatpush1.bf16.msra.mxu0 %v7332
    %7631 = vmatprep.subr.bf16.mxu0 %v7330
    %7632 = vmatpush1.bf16.msra.mxu0 %v7329
    %7633 = vmatprep.subr.bf16.mxu0 %v7375
    %7634 = vmatpush2.bf16.msra.mxu0 %v7374
    %7635 = vmatprep.subr.bf16.mxu0 %v7372
    %7636 = vmatpush2.bf16.msra.mxu0 %v7371
    %7637 = vmatprep.subr.bf16.mxu0 %v7369
    %7638 = vmatpush2.bf16.msra.mxu0 %v7368
    %7639 = vmatprep.subr.bf16.mxu0 %v7366
    %7640 = vmatpush2.bf16.msra.mxu0 %v7365
    %7641 = vmatprep.subr.bf16.mxu0 %v7363
    %7642 = vmatpush2.bf16.msra.mxu0 %v7362
    %7643 = vmatprep.subr.bf16.mxu0 %v7360
    %7644 = vmatpush2.bf16.msra.mxu0 %v7359
    %7645 = vmatprep.subr.bf16.mxu0 %v7357
    %7646 = vmatpush2.bf16.msra.mxu0 %v7356
    %7647 = vmatprep.subr.bf16.mxu0 %v7354
    %7648 = vmatpush2.bf16.msra.mxu0 %v7353
    %7649 = vmatprep.mubr.bf16.mxu0 %v6635
    %7650 = vmatmul.mubr.bf16.gmra.mxu0 %v6634
    %v7651 = vpop.f32.mrf.mxu0
    %v7652 = vadd.f32 %v6837, %v7651
    %v7653 = vpop.f32.mrf.mxu0
    %v7654 = vadd.f32 %v6841, %v7653
    %v7655 = vpop.f32.mrf.mxu0
    %v7656 = vpop.f32.mrf.mxu0
    %7657 = vdwg.mxu0
    %7658 = vmatprep.subr.bf16.mxu0 %v7399
    %7659 = vmatpush1.bf16.msra.mxu0 %v7398
    %7660 = vmatprep.subr.bf16.mxu0 %v7396
    %7661 = vmatpush1.bf16.msra.mxu0 %v7395
    %7662 = vmatprep.subr.bf16.mxu0 %v7393
    %7663 = vmatpush1.bf16.msra.mxu0 %v7392
    %7664 = vmatprep.subr.bf16.mxu0 %v7390
    %7665 = vmatpush1.bf16.msra.mxu0 %v7389
    %7666 = vmatprep.subr.bf16.mxu0 %v7387
    %7667 = vmatpush1.bf16.msra.mxu0 %v7386
    %7668 = vmatprep.subr.bf16.mxu0 %v7384
    %7669 = vmatpush1.bf16.msra.mxu0 %v7383
    %7670 = vmatprep.subr.bf16.mxu0 %v7381
    %7671 = vmatpush1.bf16.msra.mxu0 %v7380
    %7672 = vmatprep.subr.bf16.mxu0 %v7378
    %7673 = vmatpush1.bf16.msra.mxu0 %v7377
    %7674 = vmatprep.subr.bf16.mxu0 %v7423
    %7675 = vmatpush2.bf16.msra.mxu0 %v7422
    %7676 = vmatprep.subr.bf16.mxu0 %v7420
    %7677 = vmatpush2.bf16.msra.mxu0 %v7419
    %7678 = vmatprep.subr.bf16.mxu0 %v7417
    %7679 = vmatpush2.bf16.msra.mxu0 %v7416
    %7680 = vmatprep.subr.bf16.mxu0 %v7414
    %7681 = vmatpush2.bf16.msra.mxu0 %v7413
    %7682 = vmatprep.subr.bf16.mxu0 %v7411
    %7683 = vmatpush2.bf16.msra.mxu0 %v7410
    %7684 = vmatprep.subr.bf16.mxu0 %v7408
    %7685 = vmatpush2.bf16.msra.mxu0 %v7407
    %7686 = vmatprep.subr.bf16.mxu0 %v7405
    %7687 = vmatpush2.bf16.msra.mxu0 %v7404
    %7688 = vmatprep.subr.bf16.mxu0 %v7402
    %7689 = vmatpush2.bf16.msra.mxu0 %v7401
    %7690 = vmatprep.mubr.bf16.mxu0 %v6637
    %7691 = vmatmul.mubr.bf16.gmra.mxu0 %v6636
    %v7692 = vpop.f32.mrf.mxu0
    %v7693 = vadd.f32 %v7652, %v7692
    %v7694 = vpop.f32.mrf.mxu0
    %v7695 = vadd.f32 %v7654, %v7694
    %v7696 = vpop.f32.mrf.mxu0
    %v7697 = vpop.f32.mrf.mxu0
    %7698 = vdwg.mxu0
    %7699 = vmatprep.subr.bf16.mxu0 %v7447
    %7700 = vmatpush1.bf16.msra.mxu0 %v7446
    %7701 = vmatprep.subr.bf16.mxu0 %v7444
    %7702 = vmatpush1.bf16.msra.mxu0 %v7443
    %7703 = vmatprep.subr.bf16.mxu0 %v7441
    %7704 = vmatpush1.bf16.msra.mxu0 %v7440
    %7705 = vmatprep.subr.bf16.mxu0 %v7438
    %7706 = vmatpush1.bf16.msra.mxu0 %v7437
    %7707 = vmatprep.subr.bf16.mxu0 %v7435
    %7708 = vmatpush1.bf16.msra.mxu0 %v7434
    %7709 = vmatprep.subr.bf16.mxu0 %v7432
    %7710 = vmatpush1.bf16.msra.mxu0 %v7431
    %7711 = vmatprep.subr.bf16.mxu0 %v7429
    %7712 = vmatpush1.bf16.msra.mxu0 %v7428
    %7713 = vmatprep.subr.bf16.mxu0 %v7426
    %7714 = vmatpush1.bf16.msra.mxu0 %v7425
    %7715 = vmatprep.subr.bf16.mxu0 %v7471
    %7716 = vmatpush2.bf16.msra.mxu0 %v7470
    %7717 = vmatprep.subr.bf16.mxu0 %v7468
    %7718 = vmatpush2.bf16.msra.mxu0 %v7467
    %7719 = vmatprep.subr.bf16.mxu0 %v7465
    %7720 = vmatpush2.bf16.msra.mxu0 %v7464
    %7721 = vmatprep.subr.bf16.mxu0 %v7462
    %7722 = vmatpush2.bf16.msra.mxu0 %v7461
    %7723 = vmatprep.subr.bf16.mxu0 %v7459
    %7724 = vmatpush2.bf16.msra.mxu0 %v7458
    %7725 = vmatprep.subr.bf16.mxu0 %v7456
    %7726 = vmatpush2.bf16.msra.mxu0 %v7455
    %7727 = vmatprep.subr.bf16.mxu0 %v7453
    %7728 = vmatpush2.bf16.msra.mxu0 %v7452
    %7729 = vmatprep.subr.bf16.mxu0 %v7450
    %7730 = vmatpush2.bf16.msra.mxu0 %v7449
    %7731 = vmatprep.mubr.bf16.mxu0 %v6639
    %7732 = vmatmul.mubr.bf16.gmra.mxu0 %v6638
    %v7733 = vpop.f32.mrf.mxu0
    %v7734 = vadd.f32 %v7693, %v7733
    %v7735 = vpop.f32.mrf.mxu0
    %v7736 = vadd.f32 %v7695, %v7735
    %v7737 = vpop.f32.mrf.mxu0
    %v7738 = vpop.f32.mrf.mxu0
    %7739 = vdwg.mxu0
    %7740 = vmatprep.subr.bf16.mxu0 0
    %7741 = vmatpush1.bf16.msra.mxu0 %v7352
    %7742 = vmatprep.subr.bf16.mxu0 0
    %7743 = vmatpush1.bf16.msra.mxu0 %v7349
    %7744 = vmatprep.subr.bf16.mxu0 0
    %7745 = vmatpush1.bf16.msra.mxu0 %v7346
    %7746 = vmatprep.subr.bf16.mxu0 0
    %7747 = vmatpush1.bf16.msra.mxu0 %v7343
    %7748 = vmatprep.subr.bf16.mxu0 0
    %7749 = vmatpush1.bf16.msra.mxu0 %v7340
    %7750 = vmatprep.subr.bf16.mxu0 0
    %7751 = vmatpush1.bf16.msra.mxu0 %v7337
    %7752 = vmatprep.subr.bf16.mxu0 0
    %7753 = vmatpush1.bf16.msra.mxu0 %v7334
    %7754 = vmatprep.subr.bf16.mxu0 0
    %7755 = vmatpush1.bf16.msra.mxu0 %v7331
    %7756 = vmatprep.subr.bf16.mxu0 0
    %7757 = vmatpush2.bf16.msra.mxu0 %v7376
    %7758 = vmatprep.subr.bf16.mxu0 0
    %7759 = vmatpush2.bf16.msra.mxu0 %v7373
    %7760 = vmatprep.subr.bf16.mxu0 0
    %7761 = vmatpush2.bf16.msra.mxu0 %v7370
    %7762 = vmatprep.subr.bf16.mxu0 0
    %7763 = vmatpush2.bf16.msra.mxu0 %v7367
    %7764 = vmatprep.subr.bf16.mxu0 0
    %7765 = vmatpush2.bf16.msra.mxu0 %v7364
    %7766 = vmatprep.subr.bf16.mxu0 0
    %7767 = vmatpush2.bf16.msra.mxu0 %v7361
    %7768 = vmatprep.subr.bf16.mxu0 0
    %7769 = vmatpush2.bf16.msra.mxu0 %v7358
    %7770 = vmatprep.subr.bf16.mxu0 0
    %7771 = vmatpush2.bf16.msra.mxu0 %v7355
    %7772 = vmatprep.mubr.bf16.mxu0 %v6635
    %7773 = vmatmul.mubr.bf16.gmra.mxu0 %v6634
    %v7774 = vpop.f32.mrf.mxu0
    %v7775 = vadd.f32 %v6845, %v7774
    %v7776 = vpop.f32.mrf.mxu0
    %v7777 = vpop.f32.mrf.mxu0
    %v7778 = vpop.f32.mrf.mxu0
    %7779 = vdwg.mxu0
    %7780 = vmatprep.subr.bf16.mxu0 0
    %7781 = vmatpush1.bf16.msra.mxu0 %v7400
    %7782 = vmatprep.subr.bf16.mxu0 0
    %7783 = vmatpush1.bf16.msra.mxu0 %v7397
    %7784 = vmatprep.subr.bf16.mxu0 0
    %7785 = vmatpush1.bf16.msra.mxu0 %v7394
    %7786 = vmatprep.subr.bf16.mxu0 0
    %7787 = vmatpush1.bf16.msra.mxu0 %v7391
    %7788 = vmatprep.subr.bf16.mxu0 0
    %7789 = vmatpush1.bf16.msra.mxu0 %v7388
    %7790 = vmatprep.subr.bf16.mxu0 0
    %7791 = vmatpush1.bf16.msra.mxu0 %v7385
    %7792 = vmatprep.subr.bf16.mxu0 0
    %7793 = vmatpush1.bf16.msra.mxu0 %v7382
    %7794 = vmatprep.subr.bf16.mxu0 0
    %7795 = vmatpush1.bf16.msra.mxu0 %v7379
    %7796 = vmatprep.subr.bf16.mxu0 0
    %7797 = vmatpush2.bf16.msra.mxu0 %v7424
    %7798 = vmatprep.subr.bf16.mxu0 0
    %7799 = vmatpush2.bf16.msra.mxu0 %v7421
    %7800 = vmatprep.subr.bf16.mxu0 0
    %7801 = vmatpush2.bf16.msra.mxu0 %v7418
    %7802 = vmatprep.subr.bf16.mxu0 0
    %7803 = vmatpush2.bf16.msra.mxu0 %v7415
    %7804 = vmatprep.subr.bf16.mxu0 0
    %7805 = vmatpush2.bf16.msra.mxu0 %v7412
    %7806 = vmatprep.subr.bf16.mxu0 0
    %7807 = vmatpush2.bf16.msra.mxu0 %v7409
    %7808 = vmatprep.subr.bf16.mxu0 0
    %7809 = vmatpush2.bf16.msra.mxu0 %v7406
    %7810 = vmatprep.subr.bf16.mxu0 0
    %7811 = vmatpush2.bf16.msra.mxu0 %v7403
    %7812 = vmatprep.mubr.bf16.mxu0 %v6637
    %7813 = vmatmul.mubr.bf16.gmra.mxu0 %v6636
    %v7814 = vpop.f32.mrf.mxu0
    %v7815 = vadd.f32 %v7775, %v7814
    %v7816 = vpop.f32.mrf.mxu0
    %v7817 = vpop.f32.mrf.mxu0
    %v7818 = vpop.f32.mrf.mxu0
    %7819 = vdwg.mxu0
    %7820 = vmatprep.subr.bf16.mxu0 0
    %7821 = vmatpush1.bf16.msra.mxu0 %v7448
    %7822 = vmatprep.subr.bf16.mxu0 0
    %7823 = vmatpush1.bf16.msra.mxu0 %v7445
    %7824 = vmatprep.subr.bf16.mxu0 0
    %7825 = vmatpush1.bf16.msra.mxu0 %v7442
    %7826 = vmatprep.subr.bf16.mxu0 0
    %7827 = vmatpush1.bf16.msra.mxu0 %v7439
    %7828 = vmatprep.subr.bf16.mxu0 0
    %7829 = vmatpush1.bf16.msra.mxu0 %v7436
    %7830 = vmatprep.subr.bf16.mxu0 0
    %7831 = vmatpush1.bf16.msra.mxu0 %v7433
    %7832 = vmatprep.subr.bf16.mxu0 0
    %7833 = vmatpush1.bf16.msra.mxu0 %v7430
    %7834 = vmatprep.subr.bf16.mxu0 0
    %7835 = vmatpush1.bf16.msra.mxu0 %v7427
    %7836 = vmatprep.subr.bf16.mxu0 0
    %7837 = vmatpush2.bf16.msra.mxu0 %v7472
    %7838 = vmatprep.subr.bf16.mxu0 0
    %7839 = vmatpush2.bf16.msra.mxu0 %v7469
    %7840 = vmatprep.subr.bf16.mxu0 0
    %7841 = vmatpush2.bf16.msra.mxu0 %v7466
    %7842 = vmatprep.subr.bf16.mxu0 0
    %7843 = vmatpush2.bf16.msra.mxu0 %v7463
    %7844 = vmatprep.subr.bf16.mxu0 0
    %7845 = vmatpush2.bf16.msra.mxu0 %v7460
    %7846 = vmatprep.subr.bf16.mxu0 0
    %7847 = vmatpush2.bf16.msra.mxu0 %v7457
    %7848 = vmatprep.subr.bf16.mxu0 0
    %7849 = vmatpush2.bf16.msra.mxu0 %v7454
    %7850 = vmatprep.subr.bf16.mxu0 0
    %7851 = vmatpush2.bf16.msra.mxu0 %v7451
    %7852 = vmatprep.mubr.bf16.mxu0 %v6639
    %7853 = vmatmul.mubr.bf16.gmra.mxu0 %v6638
    %v7854 = vpop.f32.mrf.mxu0
    %v7855 = vadd.f32 %v7815, %v7854
    %v7856 = vpop.f32.mrf.mxu0
    %v7857 = vpop.f32.mrf.mxu0
    %v7858 = vpop.f32.mrf.mxu0
    %7859 = vdwg.mxu0
    %v7860 = vmax.f32 %v7734, 0.0
    %v7861 = vmax.f32 %v7736, 0.0
    %v7862 = vmax.f32 %v7855, 0.0
    %v7863 = vpack.c.bf16 %v7860, %v7860
    %v7864 = vpack.c.bf16 %v7861, %v7861
    %v7865 = vpack.c.bf16 %v7862, %v7862
    %v7866 = vld [vmem:[#allocation11] sm:$0xff]
    %v7867 = vld [vmem:[#allocation11 + $0x8] sm:$0xff]
    %v7868 = vld [vmem:[#allocation11 + $0x10] sm:$0xff]
    %v7869 = vld [vmem:[#allocation11 + $0x18] sm:$0xff]
    %v7870 = vld [vmem:[#allocation11 + $0x20] sm:$0xff]
    %v7871 = vld [vmem:[#allocation11 + $0x28] sm:$0xff]
    %v7872 = vld [vmem:[#allocation11 + $0x30] sm:$0xff]
    %v7873 = vld [vmem:[#allocation11 + $0x38] sm:$0xff]
    %v7874 = vld [vmem:[#allocation11 + $0x40] sm:$0xff]
    %v7875 = vld [vmem:[#allocation11 + $0x48] sm:$0xff]
    %v7876 = vld [vmem:[#allocation11 + $0x50] sm:$0xff]
    %v7877 = vld [vmem:[#allocation11 + $0x58] sm:$0xff]
    %v7878 = vld [vmem:[#allocation11 + $0x60] sm:$0xff]
    %v7879 = vld [vmem:[#allocation11 + $0x68] sm:$0xff]
    %v7880 = vld [vmem:[#allocation11 + $0x70] sm:$0xff]
    %v7881 = vld [vmem:[#allocation11 + $0x78] sm:$0xff]
    %v7882 = vld [vmem:[#allocation11 + $0x80] sm:$0xff]
    %v7883 = vld [vmem:[#allocation11 + $0x88] sm:$0xff]
    %v7884 = vld [vmem:[#allocation11 + $0x90] sm:$0xff]
    %v7885 = vld [vmem:[#allocation11 + $0x98] sm:$0xff]
    %v7886 = vld [vmem:[#allocation11 + $0xa0] sm:$0xff]
    %v7887 = vld [vmem:[#allocation11 + $0xa8] sm:$0xff]
    %v7888 = vld [vmem:[#allocation11 + $0xb0] sm:$0xff]
    %v7889 = vld [vmem:[#allocation11 + $0xb8] sm:$0xff]
    %v7890 = vld [vmem:[#allocation11 + $0xc0] sm:$0xff]
    %v7891 = vld [vmem:[#allocation11 + $0xc8] sm:$0xff]
    %v7892 = vld [vmem:[#allocation11 + $0xd0] sm:$0xff]
    %v7893 = vld [vmem:[#allocation11 + $0xd8] sm:$0xff]
    %v7894 = vld [vmem:[#allocation11 + $0xe0] sm:$0xff]
    %v7895 = vld [vmem:[#allocation11 + $0xe8] sm:$0xff]
    %v7896 = vld [vmem:[#allocation11 + $0xf0] sm:$0xff]
    %v7897 = vld [vmem:[#allocation11 + $0xf8] sm:$0xff]
    %v7898 = vld [vmem:[#allocation11 + $0x100] sm:$0xff]
    %v7899 = vld [vmem:[#allocation11 + $0x108] sm:$0xff]
    %v7900 = vld [vmem:[#allocation11 + $0x110] sm:$0xff]
    %v7901 = vld [vmem:[#allocation11 + $0x118] sm:$0xff]
    %v7902 = vld [vmem:[#allocation11 + $0x120] sm:$0xff]
    %v7903 = vld [vmem:[#allocation11 + $0x128] sm:$0xff]
    %v7904 = vld [vmem:[#allocation11 + $0x130] sm:$0xff]
    %v7905 = vld [vmem:[#allocation11 + $0x138] sm:$0xff]
    %v7906 = vld [vmem:[#allocation11 + $0x140] sm:$0xff]
    %v7907 = vld [vmem:[#allocation11 + $0x148] sm:$0xff]
    %v7908 = vld [vmem:[#allocation11 + $0x150] sm:$0xff]
    %v7909 = vld [vmem:[#allocation11 + $0x158] sm:$0xff]
    %v7910 = vld [vmem:[#allocation11 + $0x160] sm:$0xff]
    %v7911 = vld [vmem:[#allocation11 + $0x168] sm:$0xff]
    %v7912 = vld [vmem:[#allocation11 + $0x170] sm:$0xff]
    %v7913 = vld [vmem:[#allocation11 + $0x178] sm:$0xff]
    %v7914 = vld [vmem:[#allocation13] sm:$0x3]
    %v7916 = vlaneseq
    %v7917 = vshrl.u32 %v7916, 7
    %v7918 = vsub.s32 0, %v7917
    %v7919 = vrot.slane %v7914, %v7918
    %v7920 = vlaneseq
    %v7921 = vshrl.u32 %v7920, 7
    %v7922 = vsub.s32 1, %v7921
    %v7923 = vrot.slane %v7914, %v7922
    %v7974 = vunpack.c.l.b16 %v7866
    %v7975 = vunpack.c.h.b16 %v7866
    %v7976 = vunpack.c.l.b16 %v7867
    %v7977 = vunpack.c.h.b16 %v7867
    %v7978 = vunpack.c.l.b16 %v7868
    %v7979 = vunpack.c.h.b16 %v7868
    %v7980 = vunpack.c.l.b16 %v7869
    %v7981 = vunpack.c.h.b16 %v7869
    %v7982 = vunpack.c.l.b16 %v7870
    %v7983 = vunpack.c.h.b16 %v7870
    %v7984 = vunpack.c.l.b16 %v7871
    %v7985 = vunpack.c.h.b16 %v7871
    %v7986 = vunpack.c.l.b16 %v7872
    %v7987 = vunpack.c.h.b16 %v7872
    %v7988 = vunpack.c.l.b16 %v7873
    %v7989 = vunpack.c.h.b16 %v7873
    %v7990 = vunpack.c.l.b16 %v7874
    %v7991 = vunpack.c.h.b16 %v7874
    %v7992 = vunpack.c.l.b16 %v7875
    %v7993 = vunpack.c.h.b16 %v7875
    %v7994 = vunpack.c.l.b16 %v7876
    %v7995 = vunpack.c.h.b16 %v7876
    %v7996 = vunpack.c.l.b16 %v7877
    %v7997 = vunpack.c.h.b16 %v7877
    %v7998 = vunpack.c.l.b16 %v7878
    %v7999 = vunpack.c.h.b16 %v7878
    %v8000 = vunpack.c.l.b16 %v7879
    %v8001 = vunpack.c.h.b16 %v7879
    %v8002 = vunpack.c.l.b16 %v7880
    %v8003 = vunpack.c.h.b16 %v7880
    %v8004 = vunpack.c.l.b16 %v7881
    %v8005 = vunpack.c.h.b16 %v7881
    %v8006 = vunpack.c.l.b16 %v7882
    %v8007 = vunpack.c.h.b16 %v7882
    %v8008 = vunpack.c.l.b16 %v7883
    %v8009 = vunpack.c.h.b16 %v7883
    %v8010 = vunpack.c.l.b16 %v7884
    %v8011 = vunpack.c.h.b16 %v7884
    %v8012 = vunpack.c.l.b16 %v7885
    %v8013 = vunpack.c.h.b16 %v7885
    %v8014 = vunpack.c.l.b16 %v7886
    %v8015 = vunpack.c.h.b16 %v7886
    %v8016 = vunpack.c.l.b16 %v7887
    %v8017 = vunpack.c.h.b16 %v7887
    %v8018 = vunpack.c.l.b16 %v7888
    %v8019 = vunpack.c.h.b16 %v7888
    %v8020 = vunpack.c.l.b16 %v7889
    %v8021 = vunpack.c.h.b16 %v7889
    %v8022 = vunpack.c.l.b16 %v7890
    %v8023 = vunpack.c.h.b16 %v7890
    %v8024 = vunpack.c.l.b16 %v7891
    %v8025 = vunpack.c.h.b16 %v7891
    %v8026 = vunpack.c.l.b16 %v7892
    %v8027 = vunpack.c.h.b16 %v7892
    %v8028 = vunpack.c.l.b16 %v7893
    %v8029 = vunpack.c.h.b16 %v7893
    %v8030 = vunpack.c.l.b16 %v7894
    %v8031 = vunpack.c.h.b16 %v7894
    %v8032 = vunpack.c.l.b16 %v7895
    %v8033 = vunpack.c.h.b16 %v7895
    %v8034 = vunpack.c.l.b16 %v7896
    %v8035 = vunpack.c.h.b16 %v7896
    %v8036 = vunpack.c.l.b16 %v7897
    %v8037 = vunpack.c.h.b16 %v7897
    %v8038 = vunpack.c.l.b16 %v7898
    %v8039 = vunpack.c.h.b16 %v7898
    %v8040 = vunpack.c.l.b16 %v7899
    %v8041 = vunpack.c.h.b16 %v7899
    %v8042 = vunpack.c.l.b16 %v7900
    %v8043 = vunpack.c.h.b16 %v7900
    %v8044 = vunpack.c.l.b16 %v7901
    %v8045 = vunpack.c.h.b16 %v7901
    %v8046 = vunpack.c.l.b16 %v7902
    %v8047 = vunpack.c.h.b16 %v7902
    %v8048 = vunpack.c.l.b16 %v7903
    %v8049 = vunpack.c.h.b16 %v7903
    %v8050 = vunpack.c.l.b16 %v7904
    %v8051 = vunpack.c.h.b16 %v7904
    %v8052 = vunpack.c.l.b16 %v7905
    %v8053 = vunpack.c.h.b16 %v7905
    %v8054 = vunpack.c.l.b16 %v7906
    %v8055 = vunpack.c.h.b16 %v7906
    %v8056 = vunpack.c.l.b16 %v7907
    %v8057 = vunpack.c.h.b16 %v7907
    %v8058 = vunpack.c.l.b16 %v7908
    %v8059 = vunpack.c.h.b16 %v7908
    %v8060 = vunpack.c.l.b16 %v7909
    %v8061 = vunpack.c.h.b16 %v7909
    %v8062 = vunpack.c.l.b16 %v7910
    %v8063 = vunpack.c.h.b16 %v7910
    %v8064 = vunpack.c.l.b16 %v7911
    %v8065 = vunpack.c.h.b16 %v7911
    %v8066 = vunpack.c.l.b16 %v7912
    %v8067 = vunpack.c.h.b16 %v7912
    %v8068 = vunpack.c.l.b16 %v7913
    %v8069 = vunpack.c.h.b16 %v7913
    %v8070 = vpack.c.b16 %v7976, %v7974
    %v8071 = vpack.c.b16 %v7977, %v7975
    %v8072 = vpack.c.b16 %v7980, %v7978
    %v8073 = vpack.c.b16 %v7981, %v7979
    %v8074 = vpack.c.b16 %v7984, %v7982
    %v8075 = vpack.c.b16 %v7985, %v7983
    %v8076 = vpack.c.b16 %v7988, %v7986
    %v8077 = vpack.c.b16 %v7989, %v7987
    %v8078 = vpack.c.b16 %v7992, %v7990
    %v8079 = vpack.c.b16 %v7993, %v7991
    %v8080 = vpack.c.b16 %v7996, %v7994
    %v8081 = vpack.c.b16 %v7997, %v7995
    %v8082 = vpack.c.b16 %v8000, %v7998
    %v8083 = vpack.c.b16 %v8001, %v7999
    %v8084 = vpack.c.b16 %v8004, %v8002
    %v8085 = vpack.c.b16 %v8005, %v8003
    %v8086 = vpack.c.b16 %v8008, %v8006
    %v8087 = vpack.c.b16 %v8009, %v8007
    %v8088 = vpack.c.b16 %v8012, %v8010
    %v8089 = vpack.c.b16 %v8013, %v8011
    %v8090 = vpack.c.b16 %v8016, %v8014
    %v8091 = vpack.c.b16 %v8017, %v8015
    %v8092 = vpack.c.b16 %v8020, %v8018
    %v8093 = vpack.c.b16 %v8021, %v8019
    %v8094 = vpack.c.b16 %v8024, %v8022
    %v8095 = vpack.c.b16 %v8025, %v8023
    %v8096 = vpack.c.b16 %v8028, %v8026
    %v8097 = vpack.c.b16 %v8029, %v8027
    %v8098 = vpack.c.b16 %v8032, %v8030
    %v8099 = vpack.c.b16 %v8033, %v8031
    %v8100 = vpack.c.b16 %v8036, %v8034
    %v8101 = vpack.c.b16 %v8037, %v8035
    %v8102 = vpack.c.b16 %v8040, %v8038
    %v8103 = vpack.c.b16 %v8041, %v8039
    %v8104 = vpack.c.b16 %v8044, %v8042
    %v8105 = vpack.c.b16 %v8045, %v8043
    %v8106 = vpack.c.b16 %v8048, %v8046
    %v8107 = vpack.c.b16 %v8049, %v8047
    %v8108 = vpack.c.b16 %v8052, %v8050
    %v8109 = vpack.c.b16 %v8053, %v8051
    %v8110 = vpack.c.b16 %v8056, %v8054
    %v8111 = vpack.c.b16 %v8057, %v8055
    %v8112 = vpack.c.b16 %v8060, %v8058
    %v8113 = vpack.c.b16 %v8061, %v8059
    %v8114 = vpack.c.b16 %v8064, %v8062
    %v8115 = vpack.c.b16 %v8065, %v8063
    %v8116 = vpack.c.b16 %v8068, %v8066
    %v8117 = vpack.c.b16 %v8069, %v8067
    %8166 = vmatprep.subr.bf16.mxu0 %v8085
    %8167 = vmatpush1.bf16.msra.mxu0 %v8084
    %8168 = vmatprep.subr.bf16.mxu0 %v8083
    %8169 = vmatpush1.bf16.msra.mxu0 %v8082
    %8170 = vmatprep.subr.bf16.mxu0 %v8081
    %8171 = vmatpush1.bf16.msra.mxu0 %v8080
    %8172 = vmatprep.subr.bf16.mxu0 %v8079
    %8173 = vmatpush1.bf16.msra.mxu0 %v8078
    %8174 = vmatprep.subr.bf16.mxu0 %v8077
    %8175 = vmatpush1.bf16.msra.mxu0 %v8076
    %8176 = vmatprep.subr.bf16.mxu0 %v8075
    %8177 = vmatpush1.bf16.msra.mxu0 %v8074
    %8178 = vmatprep.subr.bf16.mxu0 %v8073
    %8179 = vmatpush1.bf16.msra.mxu0 %v8072
    %8180 = vmatprep.subr.bf16.mxu0 %v8071
    %8181 = vmatpush1.bf16.msra.mxu0 %v8070
    %8182 = vmatprep.subr.bf16.mxu0 %v8101
    %8183 = vmatpush2.bf16.msra.mxu0 %v8100
    %8184 = vmatprep.subr.bf16.mxu0 %v8099
    %8185 = vmatpush2.bf16.msra.mxu0 %v8098
    %8186 = vmatprep.subr.bf16.mxu0 %v8097
    %8187 = vmatpush2.bf16.msra.mxu0 %v8096
    %8188 = vmatprep.subr.bf16.mxu0 %v8095
    %8189 = vmatpush2.bf16.msra.mxu0 %v8094
    %8190 = vmatprep.subr.bf16.mxu0 %v8093
    %8191 = vmatpush2.bf16.msra.mxu0 %v8092
    %8192 = vmatprep.subr.bf16.mxu0 %v8091
    %8193 = vmatpush2.bf16.msra.mxu0 %v8090
    %8194 = vmatprep.subr.bf16.mxu0 %v8089
    %8195 = vmatpush2.bf16.msra.mxu0 %v8088
    %8196 = vmatprep.subr.bf16.mxu0 %v8087
    %8197 = vmatpush2.bf16.msra.mxu0 %v8086
    %8198 = vmatprep.mubr.bf16.mxu0 %v7864
    %8199 = vmatmul.mubr.bf16.gmra.mxu0 %v7863
    %v8200 = vpop.f32.mrf.mxu0
    %v8201 = vadd.f32 %v7919, %v8200
    %v8202 = vpop.f32.mrf.mxu0
    %v8203 = vadd.f32 %v7923, %v8202
    %v8204 = vpop.f32.mrf.mxu0
    %v8205 = vpop.f32.mrf.mxu0
    %8206 = vdwg.mxu0
    %8207 = vmatprep.subr.bf16.mxu0 %v8117
    %8208 = vmatpush1.bf16.msra.mxu0 %v8116
    %8209 = vmatprep.subr.bf16.mxu0 %v8115
    %8210 = vmatpush1.bf16.msra.mxu0 %v8114
    %8211 = vmatprep.subr.bf16.mxu0 %v8113
    %8212 = vmatpush1.bf16.msra.mxu0 %v8112
    %8213 = vmatprep.subr.bf16.mxu0 %v8111
    %8214 = vmatpush1.bf16.msra.mxu0 %v8110
    %8215 = vmatprep.subr.bf16.mxu0 %v8109
    %8216 = vmatpush1.bf16.msra.mxu0 %v8108
    %8217 = vmatprep.subr.bf16.mxu0 %v8107
    %8218 = vmatpush1.bf16.msra.mxu0 %v8106
    %8219 = vmatprep.subr.bf16.mxu0 %v8105
    %8220 = vmatpush1.bf16.msra.mxu0 %v8104
    %8221 = vmatprep.subr.bf16.mxu0 %v8103
    %8222 = vmatpush1.bf16.msra.mxu0 %v8102
    %8223 = vmatprep.subr.bf16.mxu0 0
    %8224 = vmatpush2.bf16.msra.mxu0 0
    %8225 = vmatprep.subr.bf16.mxu0 0
    %8226 = vmatpush2.bf16.msra.mxu0 0
    %8227 = vmatprep.subr.bf16.mxu0 0
    %8228 = vmatpush2.bf16.msra.mxu0 0
    %8229 = vmatprep.subr.bf16.mxu0 0
    %8230 = vmatpush2.bf16.msra.mxu0 0
    %8231 = vmatprep.subr.bf16.mxu0 0
    %8232 = vmatpush2.bf16.msra.mxu0 0
    %8233 = vmatprep.subr.bf16.mxu0 0
    %8234 = vmatpush2.bf16.msra.mxu0 0
    %8235 = vmatprep.subr.bf16.mxu0 0
    %8236 = vmatpush2.bf16.msra.mxu0 0
    %8237 = vmatprep.subr.bf16.mxu0 0
    %8238 = vmatpush2.bf16.msra.mxu0 0
    %8239 = vmatprep.mubr.bf16.mxu0 0
    %8240 = vmatmul.mubr.bf16.gmra.mxu0 %v7865
    %v8241 = vpop.f32.mrf.mxu0
    %v8242 = vadd.f32 %v8201, %v8241
    %v8243 = vpop.f32.mrf.mxu0
    %v8244 = vadd.f32 %v8203, %v8243
    %v8245 = vpop.f32.mrf.mxu0
    %v8246 = vpop.f32.mrf.mxu0
    %8247 = vdwg.mxu0
    %v8248 = vmax.f32 %v8242, 0.0
    %v8249 = vmax.f32 %v8244, 0.0
    %v8250 = vpack.c.bf16 %v8248, %v8248
    %v8251 = vpack.c.bf16 %v8249, %v8249
    %v8252 = vld [vmem:[#allocation14] sm:$0xf]
    %v8253 = vld [vmem:[#allocation14 + $0x4] sm:$0xf]
    %v8254 = vld [vmem:[#allocation14 + $0x8] sm:$0xf]
    %v8255 = vld [vmem:[#allocation14 + $0xc] sm:$0xf]
    %v8256 = vld [vmem:[#allocation14 + $0x10] sm:$0xf]
    %v8257 = vld [vmem:[#allocation14 + $0x14] sm:$0xf]
    %v8258 = vld [vmem:[#allocation14 + $0x18] sm:$0xf]
    %v8259 = vld [vmem:[#allocation14 + $0x1c] sm:$0xf]
    %v8260 = vld [vmem:[#allocation14 + $0x20] sm:$0xf]
    %v8261 = vld [vmem:[#allocation14 + $0x24] sm:$0xf]
    %v8262 = vld [vmem:[#allocation14 + $0x28] sm:$0xf]
    %v8263 = vld [vmem:[#allocation14 + $0x2c] sm:$0xf]
    %v8264 = vld [vmem:[#allocation14 + $0x30] sm:$0xf]
    %v8265 = vld [vmem:[#allocation14 + $0x34] sm:$0xf]
    %v8266 = vld [vmem:[#allocation14 + $0x38] sm:$0xf]
    %v8267 = vld [vmem:[#allocation14 + $0x3c] sm:$0xf]
    %v8268 = vld [vmem:[#allocation14 + $0x40] sm:$0xf]
    %v8269 = vld [vmem:[#allocation14 + $0x44] sm:$0xf]
    %v8270 = vld [vmem:[#allocation14 + $0x48] sm:$0xf]
    %v8271 = vld [vmem:[#allocation14 + $0x4c] sm:$0xf]
    %v8272 = vld [vmem:[#allocation14 + $0x50] sm:$0xf]
    %v8273 = vld [vmem:[#allocation14 + $0x54] sm:$0xf]
    %v8274 = vld [vmem:[#allocation14 + $0x58] sm:$0xf]
    %v8275 = vld [vmem:[#allocation14 + $0x5c] sm:$0xf]
    %v8276 = vld [vmem:[#allocation14 + $0x60] sm:$0xf]
    %v8277 = vld [vmem:[#allocation14 + $0x64] sm:$0xf]
    %v8278 = vld [vmem:[#allocation14 + $0x68] sm:$0xf]
    %v8279 = vld [vmem:[#allocation14 + $0x6c] sm:$0xf]
    %v8280 = vld [vmem:[#allocation14 + $0x70] sm:$0xf]
    %v8281 = vld [vmem:[#allocation14 + $0x74] sm:$0xf]
    %v8282 = vld [vmem:[#allocation14 + $0x78] sm:$0xf]
    %v8283 = vld [vmem:[#allocation14 + $0x7c] sm:$0xf]
    %v8284 = vld [vmem:[#allocation16] sm:$0x1]
    %v8286 = vlaneseq
    %v8287 = vshrl.u32 %v8286, 7
    %v8288 = vsub.s32 0, %v8287
    %v8289 = vrot.slane %v8284, %v8288
    %v8323 = vunpack.c.l.b16 %v8252
    %v8324 = vunpack.c.l.b16 %v8253
    %v8325 = vunpack.c.l.b16 %v8254
    %v8326 = vunpack.c.l.b16 %v8255
    %v8327 = vunpack.c.l.b16 %v8256
    %v8328 = vunpack.c.l.b16 %v8257
    %v8329 = vunpack.c.l.b16 %v8258
    %v8330 = vunpack.c.l.b16 %v8259
    %v8331 = vunpack.c.l.b16 %v8260
    %v8332 = vunpack.c.l.b16 %v8261
    %v8333 = vunpack.c.l.b16 %v8262
    %v8334 = vunpack.c.l.b16 %v8263
    %v8335 = vunpack.c.l.b16 %v8264
    %v8336 = vunpack.c.l.b16 %v8265
    %v8337 = vunpack.c.l.b16 %v8266
    %v8338 = vunpack.c.l.b16 %v8267
    %v8339 = vunpack.c.l.b16 %v8268
    %v8340 = vunpack.c.l.b16 %v8269
    %v8341 = vunpack.c.l.b16 %v8270
    %v8342 = vunpack.c.l.b16 %v8271
    %v8343 = vunpack.c.l.b16 %v8272
    %v8344 = vunpack.c.l.b16 %v8273
    %v8345 = vunpack.c.l.b16 %v8274
    %v8346 = vunpack.c.l.b16 %v8275
    %v8347 = vunpack.c.l.b16 %v8276
    %v8348 = vunpack.c.l.b16 %v8277
    %v8349 = vunpack.c.l.b16 %v8278
    %v8350 = vunpack.c.l.b16 %v8279
    %v8351 = vunpack.c.l.b16 %v8280
    %v8352 = vunpack.c.l.b16 %v8281
    %v8353 = vunpack.c.l.b16 %v8282
    %v8354 = vunpack.c.l.b16 %v8283
    %v8355 = vpack.c.b16 %v8324, %v8323
    %v8356 = vpack.c.b16 %v8326, %v8325
    %v8357 = vpack.c.b16 %v8328, %v8327
    %v8358 = vpack.c.b16 %v8330, %v8329
    %v8359 = vpack.c.b16 %v8332, %v8331
    %v8360 = vpack.c.b16 %v8334, %v8333
    %v8361 = vpack.c.b16 %v8336, %v8335
    %v8362 = vpack.c.b16 %v8338, %v8337
    %v8363 = vpack.c.b16 %v8340, %v8339
    %v8364 = vpack.c.b16 %v8342, %v8341
    %v8365 = vpack.c.b16 %v8344, %v8343
    %v8366 = vpack.c.b16 %v8346, %v8345
    %v8367 = vpack.c.b16 %v8348, %v8347
    %v8368 = vpack.c.b16 %v8350, %v8349
    %v8369 = vpack.c.b16 %v8352, %v8351
    %v8370 = vpack.c.b16 %v8354, %v8353
    %8387 = vmatprep.subr.bf16.mxu0 0
    %8388 = vmatpush1.bf16.msra.mxu0 %v8362
    %8389 = vmatprep.subr.bf16.mxu0 0
    %8390 = vmatpush1.bf16.msra.mxu0 %v8361
    %8391 = vmatprep.subr.bf16.mxu0 0
    %8392 = vmatpush1.bf16.msra.mxu0 %v8360
    %8393 = vmatprep.subr.bf16.mxu0 0
    %8394 = vmatpush1.bf16.msra.mxu0 %v8359
    %8395 = vmatprep.subr.bf16.mxu0 0
    %8396 = vmatpush1.bf16.msra.mxu0 %v8358
    %8397 = vmatprep.subr.bf16.mxu0 0
    %8398 = vmatpush1.bf16.msra.mxu0 %v8357
    %8399 = vmatprep.subr.bf16.mxu0 0
    %8400 = vmatpush1.bf16.msra.mxu0 %v8356
    %8401 = vmatprep.subr.bf16.mxu0 0
    %8402 = vmatpush1.bf16.msra.mxu0 %v8355
    %8403 = vmatprep.subr.bf16.mxu0 0
    %8404 = vmatpush2.bf16.msra.mxu0 %v8370
    %8405 = vmatprep.subr.bf16.mxu0 0
    %8406 = vmatpush2.bf16.msra.mxu0 %v8369
    %8407 = vmatprep.subr.bf16.mxu0 0
    %8408 = vmatpush2.bf16.msra.mxu0 %v8368
    %8409 = vmatprep.subr.bf16.mxu0 0
    %8410 = vmatpush2.bf16.msra.mxu0 %v8367
    %8411 = vmatprep.subr.bf16.mxu0 0
    %8412 = vmatpush2.bf16.msra.mxu0 %v8366
    %8413 = vmatprep.subr.bf16.mxu0 0
    %8414 = vmatpush2.bf16.msra.mxu0 %v8365
    %8415 = vmatprep.subr.bf16.mxu0 0
    %8416 = vmatpush2.bf16.msra.mxu0 %v8364
    %8417 = vmatprep.subr.bf16.mxu0 0
    %8418 = vmatpush2.bf16.msra.mxu0 %v8363
    %8419 = vmatprep.mubr.bf16.mxu0 %v8251
    %8420 = vmatmul.mubr.bf16.gmra.mxu0 %v8250
    %v8421 = vpop.f32.mrf.mxu0
    %v8422 = vadd.f32 %v8289, %v8421
    %v8423 = vpop.f32.mrf.mxu0
    %v8424 = vpop.f32.mrf.mxu0
    %v8425 = vpop.f32.mrf.mxu0
    %8426 = vdwg.mxu0
    %v8427 = vmax.f32 %v8422, 0.0
    %v8428 = vpack.c.bf16 %v8427, %v8427
    %v8429 = vld [vmem:[#allocation17] sm:$0xf]
    %v8430 = vld [vmem:[#allocation17 + $0x4] sm:$0xf]
    %v8431 = vld [vmem:[#allocation17 + $0x8] sm:$0xf]
    %v8432 = vld [vmem:[#allocation17 + $0xc] sm:$0xf]
    %v8433 = vld [vmem:[#allocation17 + $0x10] sm:$0xf]
    %v8434 = vld [vmem:[#allocation17 + $0x14] sm:$0xf]
    %v8435 = vld [vmem:[#allocation17 + $0x18] sm:$0xf]
    %v8436 = vld [vmem:[#allocation17 + $0x1c] sm:$0xf]
    %v8437 = vld [vmem:[#allocation17 + $0x20] sm:$0xf]
    %v8438 = vld [vmem:[#allocation17 + $0x24] sm:$0xf]
    %v8439 = vld [vmem:[#allocation17 + $0x28] sm:$0xf]
    %v8440 = vld [vmem:[#allocation17 + $0x2c] sm:$0xf]
    %v8441 = vld [vmem:[#allocation17 + $0x30] sm:$0xf]
    %v8442 = vld [vmem:[#allocation17 + $0x34] sm:$0xf]
    %v8443 = vld [vmem:[#allocation17 + $0x38] sm:$0xf]
    %v8444 = vld [vmem:[#allocation17 + $0x3c] sm:$0xf]
    %v8445 = vld [vmem:[#allocation19] sm:$0x1]
    %v8447 = vlaneseq
    %v8448 = vshrl.u32 %v8447, 7
    %v8449 = vsub.s32 0, %v8448
    %v8450 = vrot.slane %v8445, %v8449
    %v8468 = vunpack.c.l.b16 %v8429
    %v8469 = vunpack.c.l.b16 %v8430
    %v8470 = vunpack.c.l.b16 %v8431
    %v8471 = vunpack.c.l.b16 %v8432
    %v8472 = vunpack.c.l.b16 %v8433
    %v8473 = vunpack.c.l.b16 %v8434
    %v8474 = vunpack.c.l.b16 %v8435
    %v8475 = vunpack.c.l.b16 %v8436
    %v8476 = vunpack.c.l.b16 %v8437
    %v8477 = vunpack.c.l.b16 %v8438
    %v8478 = vunpack.c.l.b16 %v8439
    %v8479 = vunpack.c.l.b16 %v8440
    %v8480 = vunpack.c.l.b16 %v8441
    %v8481 = vunpack.c.l.b16 %v8442
    %v8482 = vunpack.c.l.b16 %v8443
    %v8483 = vunpack.c.l.b16 %v8444
    %v8484 = vpack.c.b16 %v8469, %v8468
    %v8485 = vpack.c.b16 %v8471, %v8470
    %v8486 = vpack.c.b16 %v8473, %v8472
    %v8487 = vpack.c.b16 %v8475, %v8474
    %v8488 = vpack.c.b16 %v8477, %v8476
    %v8489 = vpack.c.b16 %v8479, %v8478
    %v8490 = vpack.c.b16 %v8481, %v8480
    %v8491 = vpack.c.b16 %v8483, %v8482
    %8500 = vmatprep.subr.bf16.mxu0 0
    %8501 = vmatpush1.bf16.msra.mxu0 %v8491
    %8502 = vmatprep.subr.bf16.mxu0 0
    %8503 = vmatpush1.bf16.msra.mxu0 %v8490
    %8504 = vmatprep.subr.bf16.mxu0 0
    %8505 = vmatpush1.bf16.msra.mxu0 %v8489
    %8506 = vmatprep.subr.bf16.mxu0 0
    %8507 = vmatpush1.bf16.msra.mxu0 %v8488
    %8508 = vmatprep.subr.bf16.mxu0 0
    %8509 = vmatpush1.bf16.msra.mxu0 %v8487
    %8510 = vmatprep.subr.bf16.mxu0 0
    %8511 = vmatpush1.bf16.msra.mxu0 %v8486
    %8512 = vmatprep.subr.bf16.mxu0 0
    %8513 = vmatpush1.bf16.msra.mxu0 %v8485
    %8514 = vmatprep.subr.bf16.mxu0 0
    %8515 = vmatpush1.bf16.msra.mxu0 %v8484
    %8516 = vmatprep.subr.bf16.mxu0 0
    %8517 = vmatpush2.bf16.msra.mxu0 0
    %8518 = vmatprep.subr.bf16.mxu0 0
    %8519 = vmatpush2.bf16.msra.mxu0 0
    %8520 = vmatprep.subr.bf16.mxu0 0
    %8521 = vmatpush2.bf16.msra.mxu0 0
    %8522 = vmatprep.subr.bf16.mxu0 0
    %8523 = vmatpush2.bf16.msra.mxu0 0
    %8524 = vmatprep.subr.bf16.mxu0 0
    %8525 = vmatpush2.bf16.msra.mxu0 0
    %8526 = vmatprep.subr.bf16.mxu0 0
    %8527 = vmatpush2.bf16.msra.mxu0 0
    %8528 = vmatprep.subr.bf16.mxu0 0
    %8529 = vmatpush2.bf16.msra.mxu0 0
    %8530 = vmatprep.subr.bf16.mxu0 0
    %8531 = vmatpush2.bf16.msra.mxu0 0
    %8532 = vmatprep.mubr.bf16.mxu0 0
    %8533 = vmatmul.mubr.bf16.gmra.mxu0 %v8428
    %v8534 = vpop.f32.mrf.mxu0
    %v8535 = vadd.f32 %v8450, %v8534
    %v8536 = vpop.f32.mrf.mxu0
    %v8537 = vpop.f32.mrf.mxu0
    %v8538 = vpop.f32.mrf.mxu0
    %8539 = vdwg.mxu0
    %8540 = vst [vmem:[#allocation20] sm:$0x3] %v8535
    // Predicated region
    $region98: #{transformer_vanilla_forward.3} parent=1 // pred_check
      _
    $region99: #{transformer_vanilla_forward.3} parent=1 // pred_check_branch
      %8542 = sbr.rel (0) target = $region101
    $region100: #{transformer_vanilla_forward.3} parent=1 // pred_region
      %s8544 = ssub.s32 32, 32
      %8545 = vsyncadd [#allocation4], %s8544
      %s8547 = sshll.u32 [#allocation20], 4
      %s8548 = int_to_ptr.vmem [resolvable:$true] %s8547
      %8550 = dma.vmem_to_hbm [thread:$0]  %s8548, 32, %s13, [#allocation4]
    $region101: #{transformer_vanilla_forward.3} parent=1 // pred_fallthru
      _
    // Predicated region
    $region102: #{transformer_vanilla_forward.3} parent=1 // pred_check
      _
    $region103: #{transformer_vanilla_forward.3} parent=1 // pred_check_branch
      %8552 = sbr.rel (0) target = $region105
    $region104: #{transformer_vanilla_forward.3} parent=1 // pred_region
      %8553 = dma.done [#allocation4], 32
    $region105: #{transformer_vanilla_forward.3} parent=1 // pred_fallthru
      _
    %8554 = vsyncpa [#allocation3], 1
    %8555 = vsyncpa [#allocation6], 1
    %8556 = vsyncpa [#allocation9], 1
    %8557 = vsyncpa [#allocation12], 1
    %8558 = vsyncpa [#allocation15], 1
    %8559 = vsyncpa [#allocation18], 1
    %8560 = vsyncpa [#allocation4], 1

</llo_original>
